<compile_context>
chip_gen: v5e
topology: v5e:2x2
jax: 0.10.0
libtpu: 0.0.40
codegen_flags: <defaults>
</compile_context>

<pallas_src>
import numpy as np
import jax
import jax.numpy as jnp
from jax import lax
from jax.experimental import pallas as pl
from jax.experimental.pallas import tpu as pltpu


def _dhfe_kernel(x_ref, lup_ref, rup_ref, w1l_ref, w2l_ref, mask_ref,
                 gamma_ref, beta_ref, wpw_ref, bpw_ref,
                 out_ref,
                 xpk_ref, xu_ref, a1_ref, y_ref):
    """Whole DHFE forward, batch resident in VMEM (grid=())."""
    B, C, H, W = x_ref.shape
    Cout = out_ref.shape[1]
    H2, W2 = 2 * H, 2 * W
    R, S = H2 + 2, W2 + 2                 # per-(batch, channel) canvas strip sizes
    WIN_R, WIN_C = B * R - 2, C * S - 2   # interior "window" covering all outputs
    f32 = jnp.float32

    # ---- 1) pack x into the (B*H, C*W) layout used by the selection matmuls
    for b in range(B):
        for c in range(C):
            xpk_ref[b * H:(b + 1) * H, c * W:(c + 1) * W] = x_ref[b, c]

    # ---- 2) 2x nearest upsample + 1-px zero pad for ALL (b, c) at once:
    #         xu_canvas (B*R, C*S) = Lup @ x_packed @ Rup  (two exact matmuls;
    #         HIGHEST keeps the 0/1 selection exact in f32)
    t = jnp.dot(xpk_ref[...], rup_ref[...], preferred_element_type=f32,
                precision=lax.Precision.HIGHEST)
    xu_ref[...] = jnp.dot(lup_ref[...], t, preferred_element_type=f32,
                          precision=lax.Precision.HIGHEST)

    # a1 canvas: zero once; the interior is fully rewritten for each m below,
    # only the outer ring must stay zero (it is conv2's zero padding).
    a1_ref[...] = jnp.zeros(a1_ref.shape, f32)

    mask = mask_ref[...]                  # 1 on valid (b,c,h,w) positions, 0 on pads

    def conv3x3(src_ref, wl_ref, base):
        # One 3x3 conv over every batch/channel strip at once; tap (kh, kw) is a
        # single lane-dense FMA with a per-lane weight vector.
        acc = None
        for kh in range(3):
            for kw in range(3):
                idx = base + kh * 3 + kw
                w_row = wl_ref[idx:idx + 1, :]                       # (1, WIN_C)
                tap = src_ref[kh:kh + WIN_R, kw:kw + WIN_C]          # (WIN_R, WIN_C)
                term = tap * w_row
                acc = term if acc is None else acc + term
        return acc

    # ---- 3) depthwise 3x3 (intermediate m = 0, 1) fused with grouped 3x3
    for m in range(2):
        a1 = conv3x3(xu_ref, w1l_ref, 9 * m)
        # write masked intermediate into the canvas interior (pad ring stays 0)
        a1_ref[1:1 + WIN_R, 1:1 + WIN_C] = a1 * mask
        a2 = conv3x3(a1_ref, w2l_ref, 9 * m)
        if m == 0:
            y_ref[...] = a2
        else:
            y_ref[...] = y_ref[...] + a2

    # ---- 4) BatchNorm2d training-mode stats (centered two-pass), affine + ReLU
    inv_n = 1.0 / float(B * H2 * W2)
    eps = 1e-5
    yb = [[y_ref[b * R:b * R + H2, c * S:c * S + W2] for c in range(C)]
          for b in range(B)]
    a_blk = [[None] * C for _ in range(B)]
    for c in range(C):
        mean_c = sum(jnp.sum(yb[b][c], keepdims=True) for b in range(B)) * inv_n
        var_c = sum(jnp.sum((yb[b][c] - mean_c) ** 2, keepdims=True)
                    for b in range(B)) * inv_n
        scale_c = gamma_ref[c] * lax.rsqrt(var_c + eps)
        shift_c = beta_ref[c] - mean_c * scale_c
        for b in range(B):
            a_blk[b][c] = jnp.maximum(yb[b][c] * scale_c + shift_c, 0.0)

    # channel_shuffle(groups=C) with C channels (1 channel per group) == identity

    # ---- 5) 1x1 conv (C -> Cout, bias) + exact sigmoid
    for b in range(B):
        for o in range(Cout):
            z = a_blk[b][0] * wpw_ref[o, 0]
            for c in range(1, C):
                z = z + a_blk[b][c] * wpw_ref[o, c]
            z = z + bpw_ref[o]
            out_ref[b, o] = 1.0 / (1.0 + jnp.exp(-z))


def _selection_constants(B, C, H, W):
    """Host-side (numpy, trace-time) 0/1 selection matrices, masks, lane map."""
    H2, W2 = 2 * H, 2 * W
    R, S = H2 + 2, W2 + 2
    WIN_R, WIN_C = B * R - 2, C * S - 2

    # Lup (B*R, B*H): canvas row b*R + 1 + r  <-  input row b*H + r//2
    lup = np.zeros((B * R, B * H), np.float32)
    for b in range(B):
        for r in range(H2):
            lup[b * R + 1 + r, b * H + r // 2] = 1.0

    # Rup (C*W, C*S): canvas lane c*S + 1 + s  <-  input lane c*W + s//2
    rup = np.zeros((C * W, C * S), np.float32)
    for c in range(C):
        for s in range(W2):
            rup[c * W + s // 2, c * S + 1 + s] = 1.0

    # valid-position mask in window coordinates (window (i,j) <-> canvas (i+1,j+1))
    ii = np.arange(WIN_R)[:, None] % R
    jj = np.arange(WIN_C)[None, :] % S
    mask = ((ii < H2) & (jj < W2)).astype(np.float32)

    ch_of_lane = (np.arange(WIN_C) // S).astype(np.int32)   # channel owning each lane
    return lup, rup, mask, ch_of_lane


@jax.jit
def dhfe_forward(x, params):
    """DHFE forward. x: (B, C, H, W) float32 -> (B, Cout, 2H, 2W) float32."""
    w1, w2, gamma, beta, w_pw, b_pw = params
    B, C, H, W = x.shape
    Cout = w_pw.shape[0]
    H2, W2 = 2 * H, 2 * W
    WIN_C = C * (W2 + 2) - 2

    lup, rup, mask, ch_of_lane = _selection_constants(B, C, H, W)

    # Per-lane conv weights: lane j belongs to channel ch_of_lane[j]; the
    # intermediate channel for (c, m) is oc = 2c + m.
    # w1: (2C,1,3,3) -> (C,2,9); w2: (C,2,3,3) -> (C,2,9); rows = m*9 + tap.
    idx = jnp.asarray(ch_of_lane)
    w1_cm = jnp.transpose(w1.reshape(C, 2, 9).astype(jnp.float32), (1, 2, 0))  # (2,9,C)
    w2_cm = jnp.transpose(w2.reshape(C, 2, 9).astype(jnp.float32), (1, 2, 0))  # (2,9,C)
    w1_lane = jnp.take(w1_cm, idx, axis=2).reshape(18, WIN_C)
    w2_lane = jnp.take(w2_cm, idx, axis=2).reshape(18, WIN_C)

    vmem = pl.BlockSpec(memory_space=pltpu.MemorySpace.VMEM)
    smem = pl.BlockSpec(memory_space=pltpu.MemorySpace.SMEM)

    out = pl.pallas_call(
        _dhfe_kernel,
        out_shape=jax.ShapeDtypeStruct((B, Cout, H2, W2), jnp.float32),
        in_specs=[vmem,          # x (B,C,H,W)
                  vmem, vmem,    # Lup, Rup selection matrices
                  vmem, vmem,    # per-lane conv weights (18, WIN_C) each
                  vmem,          # valid-position mask (WIN_R, WIN_C)
                  smem, smem,    # gamma (C,), beta (C,)
                  smem, smem],   # w_pw (Cout,C), b_pw (Cout,)
        out_specs=vmem,
        scratch_shapes=[
            pltpu.VMEM((B * H, C * W), jnp.float32),                        # packed x
            pltpu.VMEM((B * (H2 + 2), C * (W2 + 2)), jnp.float32),          # xu canvas
            pltpu.VMEM((B * (H2 + 2), C * (W2 + 2)), jnp.float32),          # a1 canvas
            pltpu.VMEM((B * (H2 + 2) - 2, C * (W2 + 2) - 2), jnp.float32),  # y window
        ],
        compiler_params=pltpu.CompilerParams(vmem_limit_bytes=32 * 1024 * 1024),
    )(x.astype(jnp.float32), jnp.asarray(lup), jnp.asarray(rup),
      w1_lane, w2_lane, jnp.asarray(mask),
      gamma.astype(jnp.float32), beta.astype(jnp.float32),
      w_pw.reshape(Cout, C).astype(jnp.float32), b_pw.astype(jnp.float32))

    return out


def reference(x, params):
    """Pure-JAX reference (training-mode BN), high-precision convs."""
    w1, w2, gamma, beta, w_pw, b_pw = params
    B, C, H, W = x.shape
    hp = lax.Precision.HIGHEST
    x_up = jnp.repeat(jnp.repeat(x, 2, axis=2), 2, axis=3)
    dn = ('NCHW', 'OIHW', 'NCHW')
    y1 = lax.conv_general_dilated(x_up, w1, (1, 1), ((1, 1), (1, 1)),
                                  dimension_numbers=dn, feature_group_count=C,
                                  precision=hp)
    y2 = lax.conv_general_dilated(y1, w2, (1, 1), ((1, 1), (1, 1)),
                                  dimension_numbers=dn, feature_group_count=C,
                                  precision=hp)
    mean = jnp.mean(y2, axis=(0, 2, 3), keepdims=True)
    var = jnp.var(y2, axis=(0, 2, 3), keepdims=True)
    yb = (y2 - mean) / jnp.sqrt(var + 1e-5) * gamma.reshape(1, C, 1, 1) \
        + beta.reshape(1, C, 1, 1)
    yr = jnp.maximum(yb, 0.0)
    # channel_shuffle with groups == C is the identity
    z = jnp.einsum('oc,bchw->bohw', w_pw.reshape(-1, C), yr, precision=hp) \
        + b_pw.reshape(1, -1, 1, 1)
    return 1.0 / (1.0 + jnp.exp(-z))


if __name__ == "__main__":
    B, C, H, W = 2, 4, 16, 16        # in_channels = 4
    Cout = 8                         # out_channels = 8

    key = jax.random.PRNGKey(0)
    ks = jax.random.split(key, 7)
    x = jax.random.normal(ks[0], (B, C, H, W), jnp.float32)
    # deterministic synthetic parameters (shapes per module __init__)
    w1 = 0.2 * jax.random.normal(ks[1], (2 * C, 1, 3, 3), jnp.float32)   # depthwise conv 1
    w2 = 0.2 * jax.random.normal(ks[2], (C, 2, 3, 3), jnp.float32)       # grouped conv 2
    gamma = 1.0 + 0.1 * jax.random.normal(ks[3], (C,), jnp.float32)      # BN weight
    beta = 0.1 * jax.random.normal(ks[4], (C,), jnp.float32)             # BN bias
    w_pw = 0.3 * jax.random.normal(ks[5], (Cout, C, 1, 1), jnp.float32)  # 1x1 conv weight
    b_pw = 0.1 * jax.random.normal(ks[6], (Cout,), jnp.float32)          # 1x1 conv bias
    params = (w1, w2, gamma, beta, w_pw, b_pw)

    out = jax.block_until_ready(dhfe_forward(x, params))
    assert out.shape == (B, Cout, 2 * H, 2 * W)

    ref = jax.block_until_ready(reference(x, params))
    np.testing.assert_allclose(np.asarray(out), np.asarray(ref), rtol=1e-3, atol=1e-3)
    print("KERNEL_OK")
</pallas_src>

<mosaic_0001>
module attributes {stable_mosaic.version = 11 : i64} {
  func.func @_dhfe_kernel(%arg0: memref<2x4x16x16xf32, #tpu.memory_space<vmem>>, %arg1: memref<68x32xf32, #tpu.memory_space<vmem>>, %arg2: memref<64x136xf32, #tpu.memory_space<vmem>>, %arg3: memref<18x134xf32, #tpu.memory_space<vmem>>, %arg4: memref<18x134xf32, #tpu.memory_space<vmem>>, %arg5: memref<66x134xf32, #tpu.memory_space<vmem>>, %arg6: memref<4xf32, #tpu.memory_space<smem>>, %arg7: memref<4xf32, #tpu.memory_space<smem>>, %arg8: memref<8x4xf32, #tpu.memory_space<smem>>, %arg9: memref<8xf32, #tpu.memory_space<smem>>, %arg10: memref<2x8x32x32xf32, #tpu.memory_space<vmem>>, %arg11: memref<32x64xf32, #tpu.memory_space<vmem>>, %arg12: memref<68x136xf32, #tpu.memory_space<vmem>>, %arg13: memref<68x136xf32, #tpu.memory_space<vmem>>, %arg14: memref<66x134xf32, #tpu.memory_space<vmem>>) attributes {dimension_semantics = [], scalar_prefetch = 0 : i64, scratch_operands = 4 : i64, tpu.core_type = #tpu.core_type<tc>} {
    %c0 = arith.constant 0 : index
    %c0_0 = arith.constant 0 : index
    %c0_1 = arith.constant 0 : index
    %c0_2 = arith.constant 0 : index
    %0 = vector.load %arg0[%c0, %c0_0, %c0_1, %c0_2] : memref<2x4x16x16xf32, #tpu.memory_space<vmem>>, vector<1x1x16x16xf32>
    %1 = vector.shape_cast %0 : vector<1x1x16x16xf32> to vector<16x16xf32>
    %c0_3 = arith.constant 0 : index
    %c0_4 = arith.constant 0 : index
    %2 = vector.load %arg11[%c0_3, %c0_4] : memref<32x64xf32, #tpu.memory_space<vmem>>, vector<16x16xf32>
    tpu.vector_store %arg11[%c0_3, %c0_4], %1 {strides = array<i32>} : memref<32x64xf32, #tpu.memory_space<vmem>>, vector<16x16xf32>,
    %c0_5 = arith.constant 0 : index
    %c1 = arith.constant 1 : index
    %c0_6 = arith.constant 0 : index
    %c0_7 = arith.constant 0 : index
    %3 = vector.load %arg0[%c0_5, %c1, %c0_6, %c0_7] : memref<2x4x16x16xf32, #tpu.memory_space<vmem>>, vector<1x1x16x16xf32>
    %4 = vector.shape_cast %3 : vector<1x1x16x16xf32> to vector<16x16xf32>
    %c0_8 = arith.constant 0 : index
    %c16 = arith.constant 16 : index
    %5 = vector.load %arg11[%c0_8, %c16] : memref<32x64xf32, #tpu.memory_space<vmem>>, vector<16x16xf32>
    tpu.vector_store %arg11[%c0_8, %c16], %4 {strides = array<i32>} : memref<32x64xf32, #tpu.memory_space<vmem>>, vector<16x16xf32>,
    %c0_9 = arith.constant 0 : index
    %c2 = arith.constant 2 : index
    %c0_10 = arith.constant 0 : index
    %c0_11 = arith.constant 0 : index
    %6 = vector.load %arg0[%c0_9, %c2, %c0_10, %c0_11] : memref<2x4x16x16xf32, #tpu.memory_space<vmem>>, vector<1x1x16x16xf32>
    %7 = vector.shape_cast %6 : vector<1x1x16x16xf32> to vector<16x16xf32>
    %c0_12 = arith.constant 0 : index
    %c32 = arith.constant 32 : index
    %8 = vector.load %arg11[%c0_12, %c32] : memref<32x64xf32, #tpu.memory_space<vmem>>, vector<16x16xf32>
    tpu.vector_store %arg11[%c0_12, %c32], %7 {strides = array<i32>} : memref<32x64xf32, #tpu.memory_space<vmem>>, vector<16x16xf32>,
    %c0_13 = arith.constant 0 : index
    %c3 = arith.constant 3 : index
    %c0_14 = arith.constant 0 : index
    %c0_15 = arith.constant 0 : index
    %9 = vector.load %arg0[%c0_13, %c3, %c0_14, %c0_15] : memref<2x4x16x16xf32, #tpu.memory_space<vmem>>, vector<1x1x16x16xf32>
    %10 = vector.shape_cast %9 : vector<1x1x16x16xf32> to vector<16x16xf32>
    %c0_16 = arith.constant 0 : index
    %c48 = arith.constant 48 : index
    %11 = vector.load %arg11[%c0_16, %c48] : memref<32x64xf32, #tpu.memory_space<vmem>>, vector<16x16xf32>
    tpu.vector_store %arg11[%c0_16, %c48], %10 {strides = array<i32>} : memref<32x64xf32, #tpu.memory_space<vmem>>, vector<16x16xf32>,
    %c1_17 = arith.constant 1 : index
    %c0_18 = arith.constant 0 : index
    %c0_19 = arith.constant 0 : index
    %c0_20 = arith.constant 0 : index
    %12 = vector.load %arg0[%c1_17, %c0_18, %c0_19, %c0_20] : memref<2x4x16x16xf32, #tpu.memory_space<vmem>>, vector<1x1x16x16xf32>
    %13 = vector.shape_cast %12 : vector<1x1x16x16xf32> to vector<16x16xf32>
    %c16_21 = arith.constant 16 : index
    %c0_22 = arith.constant 0 : index
    %14 = vector.load %arg11[%c16_21, %c0_22] : memref<32x64xf32, #tpu.memory_space<vmem>>, vector<16x16xf32>
    tpu.vector_store %arg11[%c16_21, %c0_22], %13 {strides = array<i32>} : memref<32x64xf32, #tpu.memory_space<vmem>>, vector<16x16xf32>,
    %c1_23 = arith.constant 1 : index
    %c1_24 = arith.constant 1 : index
    %c0_25 = arith.constant 0 : index
    %c0_26 = arith.constant 0 : index
    %15 = vector.load %arg0[%c1_23, %c1_24, %c0_25, %c0_26] : memref<2x4x16x16xf32, #tpu.memory_space<vmem>>, vector<1x1x16x16xf32>
    %16 = vector.shape_cast %15 : vector<1x1x16x16xf32> to vector<16x16xf32>
    %c16_27 = arith.constant 16 : index
    %c16_28 = arith.constant 16 : index
    %17 = vector.load %arg11[%c16_27, %c16_28] : memref<32x64xf32, #tpu.memory_space<vmem>>, vector<16x16xf32>
    tpu.vector_store %arg11[%c16_27, %c16_28], %16 {strides = array<i32>} : memref<32x64xf32, #tpu.memory_space<vmem>>, vector<16x16xf32>,
    %c1_29 = arith.constant 1 : index
    %c2_30 = arith.constant 2 : index
    %c0_31 = arith.constant 0 : index
    %c0_32 = arith.constant 0 : index
    %18 = vector.load %arg0[%c1_29, %c2_30, %c0_31, %c0_32] : memref<2x4x16x16xf32, #tpu.memory_space<vmem>>, vector<1x1x16x16xf32>
    %19 = vector.shape_cast %18 : vector<1x1x16x16xf32> to vector<16x16xf32>
    %c16_33 = arith.constant 16 : index
    %c32_34 = arith.constant 32 : index
    %20 = vector.load %arg11[%c16_33, %c32_34] : memref<32x64xf32, #tpu.memory_space<vmem>>, vector<16x16xf32>
    tpu.vector_store %arg11[%c16_33, %c32_34], %19 {strides = array<i32>} : memref<32x64xf32, #tpu.memory_space<vmem>>, vector<16x16xf32>,
    %c1_35 = arith.constant 1 : index
    %c3_36 = arith.constant 3 : index
    %c0_37 = arith.constant 0 : index
    %c0_38 = arith.constant 0 : index
    %21 = vector.load %arg0[%c1_35, %c3_36, %c0_37, %c0_38] : memref<2x4x16x16xf32, #tpu.memory_space<vmem>>, vector<1x1x16x16xf32>
    %22 = vector.shape_cast %21 : vector<1x1x16x16xf32> to vector<16x16xf32>
    %c16_39 = arith.constant 16 : index
    %c48_40 = arith.constant 48 : index
    %23 = vector.load %arg11[%c16_39, %c48_40] : memref<32x64xf32, #tpu.memory_space<vmem>>, vector<16x16xf32>
    tpu.vector_store %arg11[%c16_39, %c48_40], %22 {strides = array<i32>} : memref<32x64xf32, #tpu.memory_space<vmem>>, vector<16x16xf32>,
    %c0_41 = arith.constant 0 : index
    %c0_42 = arith.constant 0 : index
    %24 = vector.load %arg11[%c0_41, %c0_42] : memref<32x64xf32, #tpu.memory_space<vmem>>, vector<32x64xf32>
    %c0_43 = arith.constant 0 : index
    %c0_44 = arith.constant 0 : index
    %25 = vector.load %arg2[%c0_43, %c0_44] : memref<64x136xf32, #tpu.memory_space<vmem>>, vector<64x136xf32>
    %cst = arith.constant dense<0.000000e+00> : vector<32x136xf32>
    %26 = tpu.matmul %24, %25, %cst {dimension_numbers = #tpu.dot_dimension_numbers<[1], [0], [0], [1], [0, 0, 1, 1], [], []>, precision = #tpu.contract_precision<fp32>} : vector<32x64xf32>, vector<64x136xf32>, vector<32x136xf32> -> vector<32x136xf32>
    %c0_45 = arith.constant 0 : index
    %c0_46 = arith.constant 0 : index
    %27 = vector.load %arg1[%c0_45, %c0_46] : memref<68x32xf32, #tpu.memory_space<vmem>>, vector<68x32xf32>
    %cst_47 = arith.constant dense<0.000000e+00> : vector<68x136xf32>
    %28 = tpu.matmul %27, %26, %cst_47 {dimension_numbers = #tpu.dot_dimension_numbers<[1], [0], [0], [1], [0, 0, 1, 1], [], []>, precision = #tpu.contract_precision<fp32>} : vector<68x32xf32>, vector<32x136xf32>, vector<68x136xf32> -> vector<68x136xf32>
    %c0_48 = arith.constant 0 : index
    %c0_49 = arith.constant 0 : index
    %29 = vector.load %arg12[%c0_48, %c0_49] : memref<68x136xf32, #tpu.memory_space<vmem>>, vector<68x136xf32>
    tpu.vector_store %arg12[%c0_48, %c0_49], %28 {strides = array<i32>} : memref<68x136xf32, #tpu.memory_space<vmem>>, vector<68x136xf32>,
    %cst_50 = arith.constant 0.000000e+00 : f32
    %30 = vector.broadcast %cst_50 : f32 to vector<68x136xf32>
    %c0_51 = arith.constant 0 : index
    %c0_52 = arith.constant 0 : index
    %31 = vector.load %arg13[%c0_51, %c0_52] : memref<68x136xf32, #tpu.memory_space<vmem>>, vector<68x136xf32>
    tpu.vector_store %arg13[%c0_51, %c0_52], %30 {strides = array<i32>} : memref<68x136xf32, #tpu.memory_space<vmem>>, vector<68x136xf32>,
    %c0_53 = arith.constant 0 : index
    %c0_54 = arith.constant 0 : index
    %32 = vector.load %arg5[%c0_53, %c0_54] : memref<66x134xf32, #tpu.memory_space<vmem>>, vector<66x134xf32>
    %c0_55 = arith.constant 0 : index
    %c0_56 = arith.constant 0 : index
    %33 = vector.load %arg3[%c0_55, %c0_56] : memref<18x134xf32, #tpu.memory_space<vmem>>, vector<1x134xf32>
    %c0_57 = arith.constant 0 : index
    %c0_58 = arith.constant 0 : index
    %34 = vector.load %arg12[%c0_57, %c0_58] : memref<68x136xf32, #tpu.memory_space<vmem>>, vector<66x134xf32>
    %35 = vector.broadcast %33 : vector<1x134xf32> to vector<66x134xf32>
    %36 = arith.mulf %34, %35 : vector<66x134xf32>
    %c1_59 = arith.constant 1 : index
    %c0_60 = arith.constant 0 : index
    %37 = vector.load %arg3[%c1_59, %c0_60] : memref<18x134xf32, #tpu.memory_space<vmem>>, vector<1x134xf32>
    %c0_61 = arith.constant 0 : index
    %c1_62 = arith.constant 1 : index
    %38 = vector.load %arg12[%c0_61, %c1_62] : memref<68x136xf32, #tpu.memory_space<vmem>>, vector<66x134xf32>
    %39 = vector.broadcast %37 : vector<1x134xf32> to vector<66x134xf32>
    %40 = arith.mulf %38, %39 : vector<66x134xf32>
    %41 = arith.addf %36, %40 : vector<66x134xf32>
    %c2_63 = arith.constant 2 : index
    %c0_64 = arith.constant 0 : index
    %42 = vector.load %arg3[%c2_63, %c0_64] : memref<18x134xf32, #tpu.memory_space<vmem>>, vector<1x134xf32>
    %c0_65 = arith.constant 0 : index
    %c2_66 = arith.constant 2 : index
    %43 = vector.load %arg12[%c0_65, %c2_66] : memref<68x136xf32, #tpu.memory_space<vmem>>, vector<66x134xf32>
    %44 = vector.broadcast %42 : vector<1x134xf32> to vector<66x134xf32>
    %45 = arith.mulf %43, %44 : vector<66x134xf32>
    %46 = arith.addf %41, %45 : vector<66x134xf32>
    %c3_67 = arith.constant 3 : index
    %c0_68 = arith.constant 0 : index
    %47 = vector.load %arg3[%c3_67, %c0_68] : memref<18x134xf32, #tpu.memory_space<vmem>>, vector<1x134xf32>
    %c1_69 = arith.constant 1 : index
    %c0_70 = arith.constant 0 : index
    %48 = vector.load %arg12[%c1_69, %c0_70] : memref<68x136xf32, #tpu.memory_space<vmem>>, vector<66x134xf32>
    %49 = vector.broadcast %47 : vector<1x134xf32> to vector<66x134xf32>
    %50 = arith.mulf %48, %49 : vector<66x134xf32>
    %51 = arith.addf %46, %50 : vector<66x134xf32>
    %c4 = arith.constant 4 : index
    %c0_71 = arith.constant 0 : index
    %52 = vector.load %arg3[%c4, %c0_71] : memref<18x134xf32, #tpu.memory_space<vmem>>, vector<1x134xf32>
    %c1_72 = arith.constant 1 : index
    %c1_73 = arith.constant 1 : index
    %53 = vector.load %arg12[%c1_72, %c1_73] : memref<68x136xf32, #tpu.memory_space<vmem>>, vector<66x134xf32>
    %54 = vector.broadcast %52 : vector<1x134xf32> to vector<66x134xf32>
    %55 = arith.mulf %53, %54 : vector<66x134xf32>
    %56 = arith.addf %51, %55 : vector<66x134xf32>
    %c5 = arith.constant 5 : index
    %c0_74 = arith.constant 0 : index
    %57 = vector.load %arg3[%c5, %c0_74] : memref<18x134xf32, #tpu.memory_space<vmem>>, vector<1x134xf32>
    %c1_75 = arith.constant 1 : index
    %c2_76 = arith.constant 2 : index
    %58 = vector.load %arg12[%c1_75, %c2_76] : memref<68x136xf32, #tpu.memory_space<vmem>>, vector<66x134xf32>
    %59 = vector.broadcast %57 : vector<1x134xf32> to vector<66x134xf32>
    %60 = arith.mulf %58, %59 : vector<66x134xf32>
    %61 = arith.addf %56, %60 : vector<66x134xf32>
    %c6 = arith.constant 6 : index
    %c0_77 = arith.constant 0 : index
    %62 = vector.load %arg3[%c6, %c0_77] : memref<18x134xf32, #tpu.memory_space<vmem>>, vector<1x134xf32>
    %c2_78 = arith.constant 2 : index
    %c0_79 = arith.constant 0 : index
    %63 = vector.load %arg12[%c2_78, %c0_79] : memref<68x136xf32, #tpu.memory_space<vmem>>, vector<66x134xf32>
    %64 = vector.broadcast %62 : vector<1x134xf32> to vector<66x134xf32>
    %65 = arith.mulf %63, %64 : vector<66x134xf32>
    %66 = arith.addf %61, %65 : vector<66x134xf32>
    %c7 = arith.constant 7 : index
    %c0_80 = arith.constant 0 : index
    %67 = vector.load %arg3[%c7, %c0_80] : memref<18x134xf32, #tpu.memory_space<vmem>>, vector<1x134xf32>
    %c2_81 = arith.constant 2 : index
    %c1_82 = arith.constant 1 : index
    %68 = vector.load %arg12[%c2_81, %c1_82] : memref<68x136xf32, #tpu.memory_space<vmem>>, vector<66x134xf32>
    %69 = vector.broadcast %67 : vector<1x134xf32> to vector<66x134xf32>
    %70 = arith.mulf %68, %69 : vector<66x134xf32>
    %71 = arith.addf %66, %70 : vector<66x134xf32>
    %c8 = arith.constant 8 : index
    %c0_83 = arith.constant 0 : index
    %72 = vector.load %arg3[%c8, %c0_83] : memref<18x134xf32, #tpu.memory_space<vmem>>, vector<1x134xf32>
    %c2_84 = arith.constant 2 : index
    %c2_85 = arith.constant 2 : index
    %73 = vector.load %arg12[%c2_84, %c2_85] : memref<68x136xf32, #tpu.memory_space<vmem>>, vector<66x134xf32>
    %74 = vector.broadcast %72 : vector<1x134xf32> to vector<66x134xf32>
    %75 = arith.mulf %73, %74 : vector<66x134xf32>
    %76 = arith.addf %71, %75 : vector<66x134xf32>
    %77 = arith.mulf %76, %32 : vector<66x134xf32>
    %c1_86 = arith.constant 1 : index
    %c1_87 = arith.constant 1 : index
    %78 = vector.load %arg13[%c1_86, %c1_87] : memref<68x136xf32, #tpu.memory_space<vmem>>, vector<66x134xf32>
    tpu.vector_store %arg13[%c1_86, %c1_87], %77 {strides = array<i32>} : memref<68x136xf32, #tpu.memory_space<vmem>>, vector<66x134xf32>,
    %c0_88 = arith.constant 0 : index
    %c0_89 = arith.constant 0 : index
    %79 = vector.load %arg4[%c0_88, %c0_89] : memref<18x134xf32, #tpu.memory_space<vmem>>, vector<1x134xf32>
    %c0_90 = arith.constant 0 : index
    %c0_91 = arith.constant 0 : index
    %80 = vector.load %arg13[%c0_90, %c0_91] : memref<68x136xf32, #tpu.memory_space<vmem>>, vector<66x134xf32>
    %81 = vector.broadcast %79 : vector<1x134xf32> to vector<66x134xf32>
    %82 = arith.mulf %80, %81 : vector<66x134xf32>
    %c1_92 = arith.constant 1 : index
    %c0_93 = arith.constant 0 : index
    %83 = vector.load %arg4[%c1_92, %c0_93] : memref<18x134xf32, #tpu.memory_space<vmem>>, vector<1x134xf32>
    %c0_94 = arith.constant 0 : index
    %c1_95 = arith.constant 1 : index
    %84 = vector.load %arg13[%c0_94, %c1_95] : memref<68x136xf32, #tpu.memory_space<vmem>>, vector<66x134xf32>
    %85 = vector.broadcast %83 : vector<1x134xf32> to vector<66x134xf32>
    %86 = arith.mulf %84, %85 : vector<66x134xf32>
    %87 = arith.addf %82, %86 : vector<66x134xf32>
    %c2_96 = arith.constant 2 : index
    %c0_97 = arith.constant 0 : index
    %88 = vector.load %arg4[%c2_96, %c0_97] : memref<18x134xf32, #tpu.memory_space<vmem>>, vector<1x134xf32>
    %c0_98 = arith.constant 0 : index
    %c2_99 = arith.constant 2 : index
    %89 = vector.load %arg13[%c0_98, %c2_99] : memref<68x136xf32, #tpu.memory_space<vmem>>, vector<66x134xf32>
    %90 = vector.broadcast %88 : vector<1x134xf32> to vector<66x134xf32>
    %91 = arith.mulf %89, %90 : vector<66x134xf32>
    %92 = arith.addf %87, %91 : vector<66x134xf32>
    %c3_100 = arith.constant 3 : index
    %c0_101 = arith.constant 0 : index
    %93 = vector.load %arg4[%c3_100, %c0_101] : memref<18x134xf32, #tpu.memory_space<vmem>>, vector<1x134xf32>
    %c1_102 = arith.constant 1 : index
    %c0_103 = arith.constant 0 : index
    %94 = vector.load %arg13[%c1_102, %c0_103] : memref<68x136xf32, #tpu.memory_space<vmem>>, vector<66x134xf32>
    %95 = vector.broadcast %93 : vector<1x134xf32> to vector<66x134xf32>
    %96 = arith.mulf %94, %95 : vector<66x134xf32>
    %97 = arith.addf %92, %96 : vector<66x134xf32>
    %c4_104 = arith.constant 4 : index
    %c0_105 = arith.constant 0 : index
    %98 = vector.load %arg4[%c4_104, %c0_105] : memref<18x134xf32, #tpu.memory_space<vmem>>, vector<1x134xf32>
    %c1_106 = arith.constant 1 : index
    %c1_107 = arith.constant 1 : index
    %99 = vector.load %arg13[%c1_106, %c1_107] : memref<68x136xf32, #tpu.memory_space<vmem>>, vector<66x134xf32>
    %100 = vector.broadcast %98 : vector<1x134xf32> to vector<66x134xf32>
    %101 = arith.mulf %99, %100 : vector<66x134xf32>
    %102 = arith.addf %97, %101 : vector<66x134xf32>
    %c5_108 = arith.constant 5 : index
    %c0_109 = arith.constant 0 : index
    %103 = vector.load %arg4[%c5_108, %c0_109] : memref<18x134xf32, #tpu.memory_space<vmem>>, vector<1x134xf32>
    %c1_110 = arith.constant 1 : index
    %c2_111 = arith.constant 2 : index
    %104 = vector.load %arg13[%c1_110, %c2_111] : memref<68x136xf32, #tpu.memory_space<vmem>>, vector<66x134xf32>
    %105 = vector.broadcast %103 : vector<1x134xf32> to vector<66x134xf32>
    %106 = arith.mulf %104, %105 : vector<66x134xf32>
    %107 = arith.addf %102, %106 : vector<66x134xf32>
    %c6_112 = arith.constant 6 : index
    %c0_113 = arith.constant 0 : index
    %108 = vector.load %arg4[%c6_112, %c0_113] : memref<18x134xf32, #tpu.memory_space<vmem>>, vector<1x134xf32>
    %c2_114 = arith.constant 2 : index
    %c0_115 = arith.constant 0 : index
    %109 = vector.load %arg13[%c2_114, %c0_115] : memref<68x136xf32, #tpu.memory_space<vmem>>, vector<66x134xf32>
    %110 = vector.broadcast %108 : vector<1x134xf32> to vector<66x134xf32>
    %111 = arith.mulf %109, %110 : vector<66x134xf32>
    %112 = arith.addf %107, %111 : vector<66x134xf32>
    %c7_116 = arith.constant 7 : index
    %c0_117 = arith.constant 0 : index
    %113 = vector.load %arg4[%c7_116, %c0_117] : memref<18x134xf32, #tpu.memory_space<vmem>>, vector<1x134xf32>
    %c2_118 = arith.constant 2 : index
    %c1_119 = arith.constant 1 : index
    %114 = vector.load %arg13[%c2_118, %c1_119] : memref<68x136xf32, #tpu.memory_space<vmem>>, vector<66x134xf32>
    %115 = vector.broadcast %113 : vector<1x134xf32> to vector<66x134xf32>
    %116 = arith.mulf %114, %115 : vector<66x134xf32>
    %117 = arith.addf %112, %116 : vector<66x134xf32>
    %c8_120 = arith.constant 8 : index
    %c0_121 = arith.constant 0 : index
    %118 = vector.load %arg4[%c8_120, %c0_121] : memref<18x134xf32, #tpu.memory_space<vmem>>, vector<1x134xf32>
    %c2_122 = arith.constant 2 : index
    %c2_123 = arith.constant 2 : index
    %119 = vector.load %arg13[%c2_122, %c2_123] : memref<68x136xf32, #tpu.memory_space<vmem>>, vector<66x134xf32>
    %120 = vector.broadcast %118 : vector<1x134xf32> to vector<66x134xf32>
    %121 = arith.mulf %119, %120 : vector<66x134xf32>
    %122 = arith.addf %117, %121 : vector<66x134xf32>
    %c0_124 = arith.constant 0 : index
    %c0_125 = arith.constant 0 : index
    %123 = vector.load %arg14[%c0_124, %c0_125] : memref<66x134xf32, #tpu.memory_space<vmem>>, vector<66x134xf32>
    tpu.vector_store %arg14[%c0_124, %c0_125], %122 {strides = array<i32>} : memref<66x134xf32, #tpu.memory_space<vmem>>, vector<66x134xf32>,
    %c9 = arith.constant 9 : index
    %c0_126 = arith.constant 0 : index
    %124 = vector.load %arg3[%c9, %c0_126] : memref<18x134xf32, #tpu.memory_space<vmem>>, vector<1x134xf32>
    %c0_127 = arith.constant 0 : index
    %c0_128 = arith.constant 0 : index
    %125 = vector.load %arg12[%c0_127, %c0_128] : memref<68x136xf32, #tpu.memory_space<vmem>>, vector<66x134xf32>
    %126 = vector.broadcast %124 : vector<1x134xf32> to vector<66x134xf32>
    %127 = arith.mulf %125, %126 : vector<66x134xf32>
    %c10 = arith.constant 10 : index
    %c0_129 = arith.constant 0 : index
    %128 = vector.load %arg3[%c10, %c0_129] : memref<18x134xf32, #tpu.memory_space<vmem>>, vector<1x134xf32>
    %c0_130 = arith.constant 0 : index
    %c1_131 = arith.constant 1 : index
    %129 = vector.load %arg12[%c0_130, %c1_131] : memref<68x136xf32, #tpu.memory_space<vmem>>, vector<66x134xf32>
    %130 = vector.broadcast %128 : vector<1x134xf32> to vector<66x134xf32>
    %131 = arith.mulf %129, %130 : vector<66x134xf32>
    %132 = arith.addf %127, %131 : vector<66x134xf32>
    %c11 = arith.constant 11 : index
    %c0_132 = arith.constant 0 : index
    %133 = vector.load %arg3[%c11, %c0_132] : memref<18x134xf32, #tpu.memory_space<vmem>>, vector<1x134xf32>
    %c0_133 = arith.constant 0 : index
    %c2_134 = arith.constant 2 : index
    %134 = vector.load %arg12[%c0_133, %c2_134] : memref<68x136xf32, #tpu.memory_space<vmem>>, vector<66x134xf32>
    %135 = vector.broadcast %133 : vector<1x134xf32> to vector<66x134xf32>
    %136 = arith.mulf %134, %135 : vector<66x134xf32>
    %137 = arith.addf %132, %136 : vector<66x134xf32>
    %c12 = arith.constant 12 : index
    %c0_135 = arith.constant 0 : index
    %138 = vector.load %arg3[%c12, %c0_135] : memref<18x134xf32, #tpu.memory_space<vmem>>, vector<1x134xf32>
    %c1_136 = arith.constant 1 : index
    %c0_137 = arith.constant 0 : index
    %139 = vector.load %arg12[%c1_136, %c0_137] : memref<68x136xf32, #tpu.memory_space<vmem>>, vector<66x134xf32>
    %140 = vector.broadcast %138 : vector<1x134xf32> to vector<66x134xf32>
    %141 = arith.mulf %139, %140 : vector<66x134xf32>
    %142 = arith.addf %137, %141 : vector<66x134xf32>
    %c13 = arith.constant 13 : index
    %c0_138 = arith.constant 0 : index
    %143 = vector.load %arg3[%c13, %c0_138] : memref<18x134xf32, #tpu.memory_space<vmem>>, vector<1x134xf32>
    %c1_139 = arith.constant 1 : index
    %c1_140 = arith.constant 1 : index
    %144 = vector.load %arg12[%c1_139, %c1_140] : memref<68x136xf32, #tpu.memory_space<vmem>>, vector<66x134xf32>
    %145 = vector.broadcast %143 : vector<1x134xf32> to vector<66x134xf32>
    %146 = arith.mulf %144, %145 : vector<66x134xf32>
    %147 = arith.addf %142, %146 : vector<66x134xf32>
    %c14 = arith.constant 14 : index
    %c0_141 = arith.constant 0 : index
    %148 = vector.load %arg3[%c14, %c0_141] : memref<18x134xf32, #tpu.memory_space<vmem>>, vector<1x134xf32>
    %c1_142 = arith.constant 1 : index
    %c2_143 = arith.constant 2 : index
    %149 = vector.load %arg12[%c1_142, %c2_143] : memref<68x136xf32, #tpu.memory_space<vmem>>, vector<66x134xf32>
    %150 = vector.broadcast %148 : vector<1x134xf32> to vector<66x134xf32>
    %151 = arith.mulf %149, %150 : vector<66x134xf32>
    %152 = arith.addf %147, %151 : vector<66x134xf32>
    %c15 = arith.constant 15 : index
    %c0_144 = arith.constant 0 : index
    %153 = vector.load %arg3[%c15, %c0_144] : memref<18x134xf32, #tpu.memory_space<vmem>>, vector<1x134xf32>
    %c2_145 = arith.constant 2 : index
    %c0_146 = arith.constant 0 : index
    %154 = vector.load %arg12[%c2_145, %c0_146] : memref<68x136xf32, #tpu.memory_space<vmem>>, vector<66x134xf32>
    %155 = vector.broadcast %153 : vector<1x134xf32> to vector<66x134xf32>
    %156 = arith.mulf %154, %155 : vector<66x134xf32>
    %157 = arith.addf %152, %156 : vector<66x134xf32>
    %c16_147 = arith.constant 16 : index
    %c0_148 = arith.constant 0 : index
    %158 = vector.load %arg3[%c16_147, %c0_148] : memref<18x134xf32, #tpu.memory_space<vmem>>, vector<1x134xf32>
    %c2_149 = arith.constant 2 : index
    %c1_150 = arith.constant 1 : index
    %159 = vector.load %arg12[%c2_149, %c1_150] : memref<68x136xf32, #tpu.memory_space<vmem>>, vector<66x134xf32>
    %160 = vector.broadcast %158 : vector<1x134xf32> to vector<66x134xf32>
    %161 = arith.mulf %159, %160 : vector<66x134xf32>
    %162 = arith.addf %157, %161 : vector<66x134xf32>
    %c17 = arith.constant 17 : index
    %c0_151 = arith.constant 0 : index
    %163 = vector.load %arg3[%c17, %c0_151] : memref<18x134xf32, #tpu.memory_space<vmem>>, vector<1x134xf32>
    %c2_152 = arith.constant 2 : index
    %c2_153 = arith.constant 2 : index
    %164 = vector.load %arg12[%c2_152, %c2_153] : memref<68x136xf32, #tpu.memory_space<vmem>>, vector<66x134xf32>
    %165 = vector.broadcast %163 : vector<1x134xf32> to vector<66x134xf32>
    %166 = arith.mulf %164, %165 : vector<66x134xf32>
    %167 = arith.addf %162, %166 : vector<66x134xf32>
    %168 = arith.mulf %167, %32 : vector<66x134xf32>
    %c1_154 = arith.constant 1 : index
    %c1_155 = arith.constant 1 : index
    %169 = vector.load %arg13[%c1_154, %c1_155] : memref<68x136xf32, #tpu.memory_space<vmem>>, vector<66x134xf32>
    tpu.vector_store %arg13[%c1_154, %c1_155], %168 {strides = array<i32>} : memref<68x136xf32, #tpu.memory_space<vmem>>, vector<66x134xf32>,
    %c9_156 = arith.constant 9 : index
    %c0_157 = arith.constant 0 : index
    %170 = vector.load %arg4[%c9_156, %c0_157] : memref<18x134xf32, #tpu.memory_space<vmem>>, vector<1x134xf32>
    %c0_158 = arith.constant 0 : index
    %c0_159 = arith.constant 0 : index
    %171 = vector.load %arg13[%c0_158, %c0_159] : memref<68x136xf32, #tpu.memory_space<vmem>>, vector<66x134xf32>
    %172 = vector.broadcast %170 : vector<1x134xf32> to vector<66x134xf32>
    %173 = arith.mulf %171, %172 : vector<66x134xf32>
    %c10_160 = arith.constant 10 : index
    %c0_161 = arith.constant 0 : index
    %174 = vector.load %arg4[%c10_160, %c0_161] : memref<18x134xf32, #tpu.memory_space<vmem>>, vector<1x134xf32>
    %c0_162 = arith.constant 0 : index
    %c1_163 = arith.constant 1 : index
    %175 = vector.load %arg13[%c0_162, %c1_163] : memref<68x136xf32, #tpu.memory_space<vmem>>, vector<66x134xf32>
    %176 = vector.broadcast %174 : vector<1x134xf32> to vector<66x134xf32>
    %177 = arith.mulf %175, %176 : vector<66x134xf32>
    %178 = arith.addf %173, %177 : vector<66x134xf32>
    %c11_164 = arith.constant 11 : index
    %c0_165 = arith.constant 0 : index
    %179 = vector.load %arg4[%c11_164, %c0_165] : memref<18x134xf32, #tpu.memory_space<vmem>>, vector<1x134xf32>
    %c0_166 = arith.constant 0 : index
    %c2_167 = arith.constant 2 : index
    %180 = vector.load %arg13[%c0_166, %c2_167] : memref<68x136xf32, #tpu.memory_space<vmem>>, vector<66x134xf32>
    %181 = vector.broadcast %179 : vector<1x134xf32> to vector<66x134xf32>
    %182 = arith.mulf %180, %181 : vector<66x134xf32>
    %183 = arith.addf %178, %182 : vector<66x134xf32>
    %c12_168 = arith.constant 12 : index
    %c0_169 = arith.constant 0 : index
    %184 = vector.load %arg4[%c12_168, %c0_169] : memref<18x134xf32, #tpu.memory_space<vmem>>, vector<1x134xf32>
    %c1_170 = arith.constant 1 : index
    %c0_171 = arith.constant 0 : index
    %185 = vector.load %arg13[%c1_170, %c0_171] : memref<68x136xf32, #tpu.memory_space<vmem>>, vector<66x134xf32>
    %186 = vector.broadcast %184 : vector<1x134xf32> to vector<66x134xf32>
    %187 = arith.mulf %185, %186 : vector<66x134xf32>
    %188 = arith.addf %183, %187 : vector<66x134xf32>
    %c13_172 = arith.constant 13 : index
    %c0_173 = arith.constant 0 : index
    %189 = vector.load %arg4[%c13_172, %c0_173] : memref<18x134xf32, #tpu.memory_space<vmem>>, vector<1x134xf32>
    %c1_174 = arith.constant 1 : index
    %c1_175 = arith.constant 1 : index
    %190 = vector.load %arg13[%c1_174, %c1_175] : memref<68x136xf32, #tpu.memory_space<vmem>>, vector<66x134xf32>
    %191 = vector.broadcast %189 : vector<1x134xf32> to vector<66x134xf32>
    %192 = arith.mulf %190, %191 : vector<66x134xf32>
    %193 = arith.addf %188, %192 : vector<66x134xf32>
    %c14_176 = arith.constant 14 : index
    %c0_177 = arith.constant 0 : index
    %194 = vector.load %arg4[%c14_176, %c0_177] : memref<18x134xf32, #tpu.memory_space<vmem>>, vector<1x134xf32>
    %c1_178 = arith.constant 1 : index
    %c2_179 = arith.constant 2 : index
    %195 = vector.load %arg13[%c1_178, %c2_179] : memref<68x136xf32, #tpu.memory_space<vmem>>, vector<66x134xf32>
    %196 = vector.broadcast %194 : vector<1x134xf32> to vector<66x134xf32>
    %197 = arith.mulf %195, %196 : vector<66x134xf32>
    %198 = arith.addf %193, %197 : vector<66x134xf32>
    %c15_180 = arith.constant 15 : index
    %c0_181 = arith.constant 0 : index
    %199 = vector.load %arg4[%c15_180, %c0_181] : memref<18x134xf32, #tpu.memory_space<vmem>>, vector<1x134xf32>
    %c2_182 = arith.constant 2 : index
    %c0_183 = arith.constant 0 : index
    %200 = vector.load %arg13[%c2_182, %c0_183] : memref<68x136xf32, #tpu.memory_space<vmem>>, vector<66x134xf32>
    %201 = vector.broadcast %199 : vector<1x134xf32> to vector<66x134xf32>
    %202 = arith.mulf %200, %201 : vector<66x134xf32>
    %203 = arith.addf %198, %202 : vector<66x134xf32>
    %c16_184 = arith.constant 16 : index
    %c0_185 = arith.constant 0 : index
    %204 = vector.load %arg4[%c16_184, %c0_185] : memref<18x134xf32, #tpu.memory_space<vmem>>, vector<1x134xf32>
    %c2_186 = arith.constant 2 : index
    %c1_187 = arith.constant 1 : index
    %205 = vector.load %arg13[%c2_186, %c1_187] : memref<68x136xf32, #tpu.memory_space<vmem>>, vector<66x134xf32>
    %206 = vector.broadcast %204 : vector<1x134xf32> to vector<66x134xf32>
    %207 = arith.mulf %205, %206 : vector<66x134xf32>
    %208 = arith.addf %203, %207 : vector<66x134xf32>
    %c17_188 = arith.constant 17 : index
    %c0_189 = arith.constant 0 : index
    %209 = vector.load %arg4[%c17_188, %c0_189] : memref<18x134xf32, #tpu.memory_space<vmem>>, vector<1x134xf32>
    %c2_190 = arith.constant 2 : index
    %c2_191 = arith.constant 2 : index
    %210 = vector.load %arg13[%c2_190, %c2_191] : memref<68x136xf32, #tpu.memory_space<vmem>>, vector<66x134xf32>
    %211 = vector.broadcast %209 : vector<1x134xf32> to vector<66x134xf32>
    %212 = arith.mulf %210, %211 : vector<66x134xf32>
    %213 = arith.addf %208, %212 : vector<66x134xf32>
    %c0_192 = arith.constant 0 : index
    %c0_193 = arith.constant 0 : index
    %214 = vector.load %arg14[%c0_192, %c0_193] : memref<66x134xf32, #tpu.memory_space<vmem>>, vector<66x134xf32>
    %215 = arith.addf %214, %213 : vector<66x134xf32>
    %c0_194 = arith.constant 0 : index
    %c0_195 = arith.constant 0 : index
    %216 = vector.load %arg14[%c0_194, %c0_195] : memref<66x134xf32, #tpu.memory_space<vmem>>, vector<66x134xf32>
    tpu.vector_store %arg14[%c0_194, %c0_195], %215 {strides = array<i32>} : memref<66x134xf32, #tpu.memory_space<vmem>>, vector<66x134xf32>,
    %c0_196 = arith.constant 0 : index
    %c0_197 = arith.constant 0 : index
    %217 = vector.load %arg14[%c0_196, %c0_197] : memref<66x134xf32, #tpu.memory_space<vmem>>, vector<32x32xf32>
    %c0_198 = arith.constant 0 : index
    %c34 = arith.constant 34 : index
    %218 = vector.load %arg14[%c0_198, %c34] : memref<66x134xf32, #tpu.memory_space<vmem>>, vector<32x32xf32>
    %c0_199 = arith.constant 0 : index
    %c68 = arith.constant 68 : index
    %219 = vector.load %arg14[%c0_199, %c68] : memref<66x134xf32, #tpu.memory_space<vmem>>, vector<32x32xf32>
    %c0_200 = arith.constant 0 : index
    %c102 = arith.constant 102 : index
    %220 = vector.load %arg14[%c0_200, %c102] : memref<66x134xf32, #tpu.memory_space<vmem>>, vector<32x32xf32>
    %c34_201 = arith.constant 34 : index
    %c0_202 = arith.constant 0 : index
    %221 = vector.load %arg14[%c34_201, %c0_202] : memref<66x134xf32, #tpu.memory_space<vmem>>, vector<32x32xf32>
    %c34_203 = arith.constant 34 : index
    %c34_204 = arith.constant 34 : index
    %222 = vector.load %arg14[%c34_203, %c34_204] : memref<66x134xf32, #tpu.memory_space<vmem>>, vector<32x32xf32>
    %c34_205 = arith.constant 34 : index
    %c68_206 = arith.constant 68 : index
    %223 = vector.load %arg14[%c34_205, %c68_206] : memref<66x134xf32, #tpu.memory_space<vmem>>, vector<32x32xf32>
    %c34_207 = arith.constant 34 : index
    %c102_208 = arith.constant 102 : index
    %224 = vector.load %arg14[%c34_207, %c102_208] : memref<66x134xf32, #tpu.memory_space<vmem>>, vector<32x32xf32>
    %225 = vector.shape_cast %217 : vector<32x32xf32> to vector<1x32x32xf32>
    %cst_209 = arith.constant dense<0.000000e+00> : vector<1xf32>
    %226 = vector.multi_reduction <add>, %225, %cst_209 [1, 2] : vector<1x32x32xf32> to vector<1xf32>
    %227 = vector.shape_cast %226 : vector<1xf32> to vector<1x1x1xf32>
    %228 = vector.extract %227[0, 0, 0] : f32 from vector<1x1x1xf32>
    %229 = vector.broadcast %228 : f32 to vector<1x1xf32>
    %cst_210 = arith.constant 0.000000e+00 : f32
    %230 = vector.broadcast %cst_210 : f32 to vector<1x1xf32>
    %231 = arith.addf %230, %229 : vector<1x1xf32>
    %232 = vector.shape_cast %221 : vector<32x32xf32> to vector<1x32x32xf32>
    %cst_211 = arith.constant dense<0.000000e+00> : vector<1xf32>
    %233 = vector.multi_reduction <add>, %232, %cst_211 [1, 2] : vector<1x32x32xf32> to vector<1xf32>
    %234 = vector.shape_cast %233 : vector<1xf32> to vector<1x1x1xf32>
    %235 = vector.extract %234[0, 0, 0] : f32 from vector<1x1x1xf32>
    %236 = vector.broadcast %235 : f32 to vector<1x1xf32>
    %237 = arith.addf %231, %236 : vector<1x1xf32>
    %cst_212 = arith.constant 4.8828125E-4 : f32
    %238 = vector.broadcast %cst_212 : f32 to vector<1x1xf32>
    %239 = arith.mulf %237, %238 : vector<1x1xf32>
    %240 = vector.broadcast %239 : vector<1x1xf32> to vector<32x32xf32>
    %241 = arith.subf %217, %240 : vector<32x32xf32>
    %242 = arith.mulf %241, %241 : vector<32x32xf32>
    %243 = vector.shape_cast %242 : vector<32x32xf32> to vector<1x32x32xf32>
    %cst_213 = arith.constant dense<0.000000e+00> : vector<1xf32>
    %244 = vector.multi_reduction <add>, %243, %cst_213 [1, 2] : vector<1x32x32xf32> to vector<1xf32>
    %245 = vector.shape_cast %244 : vector<1xf32> to vector<1x1x1xf32>
    %246 = vector.extract %245[0, 0, 0] : f32 from vector<1x1x1xf32>
    %247 = vector.broadcast %246 : f32 to vector<1x1xf32>
    %cst_214 = arith.constant 0.000000e+00 : f32
    %248 = vector.broadcast %cst_214 : f32 to vector<1x1xf32>
    %249 = arith.addf %248, %247 : vector<1x1xf32>
    %250 = vector.broadcast %239 : vector<1x1xf32> to vector<32x32xf32>
    %251 = arith.subf %221, %250 : vector<32x32xf32>
    %252 = arith.mulf %251, %251 : vector<32x32xf32>
    %253 = vector.shape_cast %252 : vector<32x32xf32> to vector<1x32x32xf32>
    %cst_215 = arith.constant dense<0.000000e+00> : vector<1xf32>
    %254 = vector.multi_reduction <add>, %253, %cst_215 [1, 2] : vector<1x32x32xf32> to vector<1xf32>
    %255 = vector.shape_cast %254 : vector<1xf32> to vector<1x1x1xf32>
    %256 = vector.extract %255[0, 0, 0] : f32 from vector<1x1x1xf32>
    %257 = vector.broadcast %256 : f32 to vector<1x1xf32>
    %258 = arith.addf %249, %257 : vector<1x1xf32>
    %cst_216 = arith.constant 4.8828125E-4 : f32
    %259 = vector.broadcast %cst_216 : f32 to vector<1x1xf32>
    %260 = arith.mulf %258, %259 : vector<1x1xf32>
    %c0_217 = arith.constant 0 : index
    %261 = memref.load %arg6[%c0_217] : memref<4xf32, #tpu.memory_space<smem>>
    %cst_218 = arith.constant 9.99999974E-6 : f32
    %262 = vector.broadcast %cst_218 : f32 to vector<1x1xf32>
    %263 = arith.addf %260, %262 : vector<1x1xf32>
    %264 = math.rsqrt %263 : vector<1x1xf32>
    %265 = vector.broadcast %261 : f32 to vector<1x1xf32>
    %266 = arith.mulf %265, %264 : vector<1x1xf32>
    %c0_219 = arith.constant 0 : index
    %267 = memref.load %arg7[%c0_219] : memref<4xf32, #tpu.memory_space<smem>>
    %268 = arith.mulf %239, %266 : vector<1x1xf32>
    %269 = vector.broadcast %267 : f32 to vector<1x1xf32>
    %270 = arith.subf %269, %268 : vector<1x1xf32>
    %271 = vector.broadcast %266 : vector<1x1xf32> to vector<32x32xf32>
    %272 = arith.mulf %217, %271 : vector<32x32xf32>
    %273 = vector.broadcast %270 : vector<1x1xf32> to vector<32x32xf32>
    %274 = arith.addf %272, %273 : vector<32x32xf32>
    %cst_220 = arith.constant 0.000000e+00 : f32
    %275 = vector.broadcast %cst_220 : f32 to vector<32x32xf32>
    %276 = arith.maximumf %274, %275 : vector<32x32xf32>
    %277 = vector.broadcast %266 : vector<1x1xf32> to vector<32x32xf32>
    %278 = arith.mulf %221, %277 : vector<32x32xf32>
    %279 = vector.broadcast %270 : vector<1x1xf32> to vector<32x32xf32>
    %280 = arith.addf %278, %279 : vector<32x32xf32>
    %cst_221 = arith.constant 0.000000e+00 : f32
    %281 = vector.broadcast %cst_221 : f32 to vector<32x32xf32>
    %282 = arith.maximumf %280, %281 : vector<32x32xf32>
    %283 = vector.shape_cast %218 : vector<32x32xf32> to vector<1x32x32xf32>
    %cst_222 = arith.constant dense<0.000000e+00> : vector<1xf32>
    %284 = vector.multi_reduction <add>, %283, %cst_222 [1, 2] : vector<1x32x32xf32> to vector<1xf32>
    %285 = vector.shape_cast %284 : vector<1xf32> to vector<1x1x1xf32>
    %286 = vector.extract %285[0, 0, 0] : f32 from vector<1x1x1xf32>
    %287 = vector.broadcast %286 : f32 to vector<1x1xf32>
    %cst_223 = arith.constant 0.000000e+00 : f32
    %288 = vector.broadcast %cst_223 : f32 to vector<1x1xf32>
    %289 = arith.addf %288, %287 : vector<1x1xf32>
    %290 = vector.shape_cast %222 : vector<32x32xf32> to vector<1x32x32xf32>
    %cst_224 = arith.constant dense<0.000000e+00> : vector<1xf32>
    %291 = vector.multi_reduction <add>, %290, %cst_224 [1, 2] : vector<1x32x32xf32> to vector<1xf32>
    %292 = vector.shape_cast %291 : vector<1xf32> to vector<1x1x1xf32>
    %293 = vector.extract %292[0, 0, 0] : f32 from vector<1x1x1xf32>
    %294 = vector.broadcast %293 : f32 to vector<1x1xf32>
    %295 = arith.addf %289, %294 : vector<1x1xf32>
    %cst_225 = arith.constant 4.8828125E-4 : f32
    %296 = vector.broadcast %cst_225 : f32 to vector<1x1xf32>
    %297 = arith.mulf %295, %296 : vector<1x1xf32>
    %298 = vector.broadcast %297 : vector<1x1xf32> to vector<32x32xf32>
    %299 = arith.subf %218, %298 : vector<32x32xf32>
    %300 = arith.mulf %299, %299 : vector<32x32xf32>
    %301 = vector.shape_cast %300 : vector<32x32xf32> to vector<1x32x32xf32>
    %cst_226 = arith.constant dense<0.000000e+00> : vector<1xf32>
    %302 = vector.multi_reduction <add>, %301, %cst_226 [1, 2] : vector<1x32x32xf32> to vector<1xf32>
    %303 = vector.shape_cast %302 : vector<1xf32> to vector<1x1x1xf32>
    %304 = vector.extract %303[0, 0, 0] : f32 from vector<1x1x1xf32>
    %305 = vector.broadcast %304 : f32 to vector<1x1xf32>
    %cst_227 = arith.constant 0.000000e+00 : f32
    %306 = vector.broadcast %cst_227 : f32 to vector<1x1xf32>
    %307 = arith.addf %306, %305 : vector<1x1xf32>
    %308 = vector.broadcast %297 : vector<1x1xf32> to vector<32x32xf32>
    %309 = arith.subf %222, %308 : vector<32x32xf32>
    %310 = arith.mulf %309, %309 : vector<32x32xf32>
    %311 = vector.shape_cast %310 : vector<32x32xf32> to vector<1x32x32xf32>
    %cst_228 = arith.constant dense<0.000000e+00> : vector<1xf32>
    %312 = vector.multi_reduction <add>, %311, %cst_228 [1, 2] : vector<1x32x32xf32> to vector<1xf32>
    %313 = vector.shape_cast %312 : vector<1xf32> to vector<1x1x1xf32>
    %314 = vector.extract %313[0, 0, 0] : f32 from vector<1x1x1xf32>
    %315 = vector.broadcast %314 : f32 to vector<1x1xf32>
    %316 = arith.addf %307, %315 : vector<1x1xf32>
    %cst_229 = arith.constant 4.8828125E-4 : f32
    %317 = vector.broadcast %cst_229 : f32 to vector<1x1xf32>
    %318 = arith.mulf %316, %317 : vector<1x1xf32>
    %c1_230 = arith.constant 1 : index
    %319 = memref.load %arg6[%c1_230] : memref<4xf32, #tpu.memory_space<smem>>
    %cst_231 = arith.constant 9.99999974E-6 : f32
    %320 = vector.broadcast %cst_231 : f32 to vector<1x1xf32>
    %321 = arith.addf %318, %320 : vector<1x1xf32>
    %322 = math.rsqrt %321 : vector<1x1xf32>
    %323 = vector.broadcast %319 : f32 to vector<1x1xf32>
    %324 = arith.mulf %323, %322 : vector<1x1xf32>
    %c1_232 = arith.constant 1 : index
    %325 = memref.load %arg7[%c1_232] : memref<4xf32, #tpu.memory_space<smem>>
    %326 = arith.mulf %297, %324 : vector<1x1xf32>
    %327 = vector.broadcast %325 : f32 to vector<1x1xf32>
    %328 = arith.subf %327, %326 : vector<1x1xf32>
    %329 = vector.broadcast %324 : vector<1x1xf32> to vector<32x32xf32>
    %330 = arith.mulf %218, %329 : vector<32x32xf32>
    %331 = vector.broadcast %328 : vector<1x1xf32> to vector<32x32xf32>
    %332 = arith.addf %330, %331 : vector<32x32xf32>
    %cst_233 = arith.constant 0.000000e+00 : f32
    %333 = vector.broadcast %cst_233 : f32 to vector<32x32xf32>
    %334 = arith.maximumf %332, %333 : vector<32x32xf32>
    %335 = vector.broadcast %324 : vector<1x1xf32> to vector<32x32xf32>
    %336 = arith.mulf %222, %335 : vector<32x32xf32>
    %337 = vector.broadcast %328 : vector<1x1xf32> to vector<32x32xf32>
    %338 = arith.addf %336, %337 : vector<32x32xf32>
    %cst_234 = arith.constant 0.000000e+00 : f32
    %339 = vector.broadcast %cst_234 : f32 to vector<32x32xf32>
    %340 = arith.maximumf %338, %339 : vector<32x32xf32>
    %341 = vector.shape_cast %219 : vector<32x32xf32> to vector<1x32x32xf32>
    %cst_235 = arith.constant dense<0.000000e+00> : vector<1xf32>
    %342 = vector.multi_reduction <add>, %341, %cst_235 [1, 2] : vector<1x32x32xf32> to vector<1xf32>
    %343 = vector.shape_cast %342 : vector<1xf32> to vector<1x1x1xf32>
    %344 = vector.extract %343[0, 0, 0] : f32 from vector<1x1x1xf32>
    %345 = vector.broadcast %344 : f32 to vector<1x1xf32>
    %cst_236 = arith.constant 0.000000e+00 : f32
    %346 = vector.broadcast %cst_236 : f32 to vector<1x1xf32>
    %347 = arith.addf %346, %345 : vector<1x1xf32>
    %348 = vector.shape_cast %223 : vector<32x32xf32> to vector<1x32x32xf32>
    %cst_237 = arith.constant dense<0.000000e+00> : vector<1xf32>
    %349 = vector.multi_reduction <add>, %348, %cst_237 [1, 2] : vector<1x32x32xf32> to vector<1xf32>
    %350 = vector.shape_cast %349 : vector<1xf32> to vector<1x1x1xf32>
    %351 = vector.extract %350[0, 0, 0] : f32 from vector<1x1x1xf32>
    %352 = vector.broadcast %351 : f32 to vector<1x1xf32>
    %353 = arith.addf %347, %352 : vector<1x1xf32>
    %cst_238 = arith.constant 4.8828125E-4 : f32
    %354 = vector.broadcast %cst_238 : f32 to vector<1x1xf32>
    %355 = arith.mulf %353, %354 : vector<1x1xf32>
    %356 = vector.broadcast %355 : vector<1x1xf32> to vector<32x32xf32>
    %357 = arith.subf %219, %356 : vector<32x32xf32>
    %358 = arith.mulf %357, %357 : vector<32x32xf32>
    %359 = vector.shape_cast %358 : vector<32x32xf32> to vector<1x32x32xf32>
    %cst_239 = arith.constant dense<0.000000e+00> : vector<1xf32>
    %360 = vector.multi_reduction <add>, %359, %cst_239 [1, 2] : vector<1x32x32xf32> to vector<1xf32>
    %361 = vector.shape_cast %360 : vector<1xf32> to vector<1x1x1xf32>
    %362 = vector.extract %361[0, 0, 0] : f32 from vector<1x1x1xf32>
    %363 = vector.broadcast %362 : f32 to vector<1x1xf32>
    %cst_240 = arith.constant 0.000000e+00 : f32
    %364 = vector.broadcast %cst_240 : f32 to vector<1x1xf32>
    %365 = arith.addf %364, %363 : vector<1x1xf32>
    %366 = vector.broadcast %355 : vector<1x1xf32> to vector<32x32xf32>
    %367 = arith.subf %223, %366 : vector<32x32xf32>
    %368 = arith.mulf %367, %367 : vector<32x32xf32>
    %369 = vector.shape_cast %368 : vector<32x32xf32> to vector<1x32x32xf32>
    %cst_241 = arith.constant dense<0.000000e+00> : vector<1xf32>
    %370 = vector.multi_reduction <add>, %369, %cst_241 [1, 2] : vector<1x32x32xf32> to vector<1xf32>
    %371 = vector.shape_cast %370 : vector<1xf32> to vector<1x1x1xf32>
    %372 = vector.extract %371[0, 0, 0] : f32 from vector<1x1x1xf32>
    %373 = vector.broadcast %372 : f32 to vector<1x1xf32>
    %374 = arith.addf %365, %373 : vector<1x1xf32>
    %cst_242 = arith.constant 4.8828125E-4 : f32
    %375 = vector.broadcast %cst_242 : f32 to vector<1x1xf32>
    %376 = arith.mulf %374, %375 : vector<1x1xf32>
    %c2_243 = arith.constant 2 : index
    %377 = memref.load %arg6[%c2_243] : memref<4xf32, #tpu.memory_space<smem>>
    %cst_244 = arith.constant 9.99999974E-6 : f32
    %378 = vector.broadcast %cst_244 : f32 to vector<1x1xf32>
    %379 = arith.addf %376, %378 : vector<1x1xf32>
    %380 = math.rsqrt %379 : vector<1x1xf32>
    %381 = vector.broadcast %377 : f32 to vector<1x1xf32>
    %382 = arith.mulf %381, %380 : vector<1x1xf32>
    %c2_245 = arith.constant 2 : index
    %383 = memref.load %arg7[%c2_245] : memref<4xf32, #tpu.memory_space<smem>>
    %384 = arith.mulf %355, %382 : vector<1x1xf32>
    %385 = vector.broadcast %383 : f32 to vector<1x1xf32>
    %386 = arith.subf %385, %384 : vector<1x1xf32>
    %387 = vector.broadcast %382 : vector<1x1xf32> to vector<32x32xf32>
    %388 = arith.mulf %219, %387 : vector<32x32xf32>
    %389 = vector.broadcast %386 : vector<1x1xf32> to vector<32x32xf32>
    %390 = arith.addf %388, %389 : vector<32x32xf32>
    %cst_246 = arith.constant 0.000000e+00 : f32
    %391 = vector.broadcast %cst_246 : f32 to vector<32x32xf32>
    %392 = arith.maximumf %390, %391 : vector<32x32xf32>
    %393 = vector.broadcast %382 : vector<1x1xf32> to vector<32x32xf32>
    %394 = arith.mulf %223, %393 : vector<32x32xf32>
    %395 = vector.broadcast %386 : vector<1x1xf32> to vector<32x32xf32>
    %396 = arith.addf %394, %395 : vector<32x32xf32>
    %cst_247 = arith.constant 0.000000e+00 : f32
    %397 = vector.broadcast %cst_247 : f32 to vector<32x32xf32>
    %398 = arith.maximumf %396, %397 : vector<32x32xf32>
    %399 = vector.shape_cast %220 : vector<32x32xf32> to vector<1x32x32xf32>
    %cst_248 = arith.constant dense<0.000000e+00> : vector<1xf32>
    %400 = vector.multi_reduction <add>, %399, %cst_248 [1, 2] : vector<1x32x32xf32> to vector<1xf32>
    %401 = vector.shape_cast %400 : vector<1xf32> to vector<1x1x1xf32>
    %402 = vector.extract %401[0, 0, 0] : f32 from vector<1x1x1xf32>
    %403 = vector.broadcast %402 : f32 to vector<1x1xf32>
    %cst_249 = arith.constant 0.000000e+00 : f32
    %404 = vector.broadcast %cst_249 : f32 to vector<1x1xf32>
    %405 = arith.addf %404, %403 : vector<1x1xf32>
    %406 = vector.shape_cast %224 : vector<32x32xf32> to vector<1x32x32xf32>
    %cst_250 = arith.constant dense<0.000000e+00> : vector<1xf32>
    %407 = vector.multi_reduction <add>, %406, %cst_250 [1, 2] : vector<1x32x32xf32> to vector<1xf32>
    %408 = vector.shape_cast %407 : vector<1xf32> to vector<1x1x1xf32>
    %409 = vector.extract %408[0, 0, 0] : f32 from vector<1x1x1xf32>
    %410 = vector.broadcast %409 : f32 to vector<1x1xf32>
    %411 = arith.addf %405, %410 : vector<1x1xf32>
    %cst_251 = arith.constant 4.8828125E-4 : f32
    %412 = vector.broadcast %cst_251 : f32 to vector<1x1xf32>
    %413 = arith.mulf %411, %412 : vector<1x1xf32>
    %414 = vector.broadcast %413 : vector<1x1xf32> to vector<32x32xf32>
    %415 = arith.subf %220, %414 : vector<32x32xf32>
    %416 = arith.mulf %415, %415 : vector<32x32xf32>
    %417 = vector.shape_cast %416 : vector<32x32xf32> to vector<1x32x32xf32>
    %cst_252 = arith.constant dense<0.000000e+00> : vector<1xf32>
    %418 = vector.multi_reduction <add>, %417, %cst_252 [1, 2] : vector<1x32x32xf32> to vector<1xf32>
    %419 = vector.shape_cast %418 : vector<1xf32> to vector<1x1x1xf32>
    %420 = vector.extract %419[0, 0, 0] : f32 from vector<1x1x1xf32>
    %421 = vector.broadcast %420 : f32 to vector<1x1xf32>
    %cst_253 = arith.constant 0.000000e+00 : f32
    %422 = vector.broadcast %cst_253 : f32 to vector<1x1xf32>
    %423 = arith.addf %422, %421 : vector<1x1xf32>
    %424 = vector.broadcast %413 : vector<1x1xf32> to vector<32x32xf32>
    %425 = arith.subf %224, %424 : vector<32x32xf32>
    %426 = arith.mulf %425, %425 : vector<32x32xf32>
    %427 = vector.shape_cast %426 : vector<32x32xf32> to vector<1x32x32xf32>
    %cst_254 = arith.constant dense<0.000000e+00> : vector<1xf32>
    %428 = vector.multi_reduction <add>, %427, %cst_254 [1, 2] : vector<1x32x32xf32> to vector<1xf32>
    %429 = vector.shape_cast %428 : vector<1xf32> to vector<1x1x1xf32>
    %430 = vector.extract %429[0, 0, 0] : f32 from vector<1x1x1xf32>
    %431 = vector.broadcast %430 : f32 to vector<1x1xf32>
    %432 = arith.addf %423, %431 : vector<1x1xf32>
    %cst_255 = arith.constant 4.8828125E-4 : f32
    %433 = vector.broadcast %cst_255 : f32 to vector<1x1xf32>
    %434 = arith.mulf %432, %433 : vector<1x1xf32>
    %c3_256 = arith.constant 3 : index
    %435 = memref.load %arg6[%c3_256] : memref<4xf32, #tpu.memory_space<smem>>
    %cst_257 = arith.constant 9.99999974E-6 : f32
    %436 = vector.broadcast %cst_257 : f32 to vector<1x1xf32>
    %437 = arith.addf %434, %436 : vector<1x1xf32>
    %438 = math.rsqrt %437 : vector<1x1xf32>
    %439 = vector.broadcast %435 : f32 to vector<1x1xf32>
    %440 = arith.mulf %439, %438 : vector<1x1xf32>
    %c3_258 = arith.constant 3 : index
    %441 = memref.load %arg7[%c3_258] : memref<4xf32, #tpu.memory_space<smem>>
    %442 = arith.mulf %413, %440 : vector<1x1xf32>
    %443 = vector.broadcast %441 : f32 to vector<1x1xf32>
    %444 = arith.subf %443, %442 : vector<1x1xf32>
    %445 = vector.broadcast %440 : vector<1x1xf32> to vector<32x32xf32>
    %446 = arith.mulf %220, %445 : vector<32x32xf32>
    %447 = vector.broadcast %444 : vector<1x1xf32> to vector<32x32xf32>
    %448 = arith.addf %446, %447 : vector<32x32xf32>
    %cst_259 = arith.constant 0.000000e+00 : f32
    %449 = vector.broadcast %cst_259 : f32 to vector<32x32xf32>
    %450 = arith.maximumf %448, %449 : vector<32x32xf32>
    %451 = vector.broadcast %440 : vector<1x1xf32> to vector<32x32xf32>
    %452 = arith.mulf %224, %451 : vector<32x32xf32>
    %453 = vector.broadcast %444 : vector<1x1xf32> to vector<32x32xf32>
    %454 = arith.addf %452, %453 : vector<32x32xf32>
    %cst_260 = arith.constant 0.000000e+00 : f32
    %455 = vector.broadcast %cst_260 : f32 to vector<32x32xf32>
    %456 = arith.maximumf %454, %455 : vector<32x32xf32>
    %c0_261 = arith.constant 0 : index
    %c0_262 = arith.constant 0 : index
    %457 = memref.load %arg8[%c0_261, %c0_262] : memref<8x4xf32, #tpu.memory_space<smem>>
    %458 = vector.broadcast %457 : f32 to vector<32x32xf32>
    %459 = arith.mulf %276, %458 : vector<32x32xf32>
    %c0_263 = arith.constant 0 : index
    %c1_264 = arith.constant 1 : index
    %460 = memref.load %arg8[%c0_263, %c1_264] : memref<8x4xf32, #tpu.memory_space<smem>>
    %461 = vector.broadcast %460 : f32 to vector<32x32xf32>
    %462 = arith.mulf %334, %461 : vector<32x32xf32>
    %463 = arith.addf %459, %462 : vector<32x32xf32>
    %c0_265 = arith.constant 0 : index
    %c2_266 = arith.constant 2 : index
    %464 = memref.load %arg8[%c0_265, %c2_266] : memref<8x4xf32, #tpu.memory_space<smem>>
    %465 = vector.broadcast %464 : f32 to vector<32x32xf32>
    %466 = arith.mulf %392, %465 : vector<32x32xf32>
    %467 = arith.addf %463, %466 : vector<32x32xf32>
    %c0_267 = arith.constant 0 : index
    %c3_268 = arith.constant 3 : index
    %468 = memref.load %arg8[%c0_267, %c3_268] : memref<8x4xf32, #tpu.memory_space<smem>>
    %469 = vector.broadcast %468 : f32 to vector<32x32xf32>
    %470 = arith.mulf %450, %469 : vector<32x32xf32>
    %471 = arith.addf %467, %470 : vector<32x32xf32>
    %c0_269 = arith.constant 0 : index
    %472 = memref.load %arg9[%c0_269] : memref<8xf32, #tpu.memory_space<smem>>
    %473 = vector.broadcast %472 : f32 to vector<32x32xf32>
    %474 = arith.addf %471, %473 : vector<32x32xf32>
    %cst_270 = arith.constant 0.000000e+00 : f32
    %475 = vector.broadcast %cst_270 : f32 to vector<32x32xf32>
    %476 = arith.subf %475, %474 : vector<32x32xf32>
    %477 = math.exp %476 : vector<32x32xf32>
    %cst_271 = arith.constant 1.000000e+00 : f32
    %478 = vector.broadcast %cst_271 : f32 to vector<32x32xf32>
    %479 = arith.addf %478, %477 : vector<32x32xf32>
    %cst_272 = arith.constant 1.000000e+00 : f32
    %480 = vector.broadcast %cst_272 : f32 to vector<32x32xf32>
    %481 = arith.divf %480, %479 : vector<32x32xf32>
    %c0_273 = arith.constant 0 : index
    %c0_274 = arith.constant 0 : index
    %c0_275 = arith.constant 0 : index
    %c0_276 = arith.constant 0 : index
    %482 = vector.load %arg10[%c0_273, %c0_274, %c0_275, %c0_276] : memref<2x8x32x32xf32, #tpu.memory_space<vmem>>, vector<1x1x32x32xf32>
    %483 = vector.shape_cast %482 : vector<1x1x32x32xf32> to vector<32x32xf32>
    %484 = vector.shape_cast %481 : vector<32x32xf32> to vector<1x1x32x32xf32>
    tpu.vector_store %arg10[%c0_273, %c0_274, %c0_275, %c0_276], %484 {strides = array<i32>} : memref<2x8x32x32xf32, #tpu.memory_space<vmem>>, vector<1x1x32x32xf32>,
    %c1_277 = arith.constant 1 : index
    %c0_278 = arith.constant 0 : index
    %485 = memref.load %arg8[%c1_277, %c0_278] : memref<8x4xf32, #tpu.memory_space<smem>>
    %486 = vector.broadcast %485 : f32 to vector<32x32xf32>
    %487 = arith.mulf %276, %486 : vector<32x32xf32>
    %c1_279 = arith.constant 1 : index
    %c1_280 = arith.constant 1 : index
    %488 = memref.load %arg8[%c1_279, %c1_280] : memref<8x4xf32, #tpu.memory_space<smem>>
    %489 = vector.broadcast %488 : f32 to vector<32x32xf32>
    %490 = arith.mulf %334, %489 : vector<32x32xf32>
    %491 = arith.addf %487, %490 : vector<32x32xf32>
    %c1_281 = arith.constant 1 : index
    %c2_282 = arith.constant 2 : index
    %492 = memref.load %arg8[%c1_281, %c2_282] : memref<8x4xf32, #tpu.memory_space<smem>>
    %493 = vector.broadcast %492 : f32 to vector<32x32xf32>
    %494 = arith.mulf %392, %493 : vector<32x32xf32>
    %495 = arith.addf %491, %494 : vector<32x32xf32>
    %c1_283 = arith.constant 1 : index
    %c3_284 = arith.constant 3 : index
    %496 = memref.load %arg8[%c1_283, %c3_284] : memref<8x4xf32, #tpu.memory_space<smem>>
    %497 = vector.broadcast %496 : f32 to vector<32x32xf32>
    %498 = arith.mulf %450, %497 : vector<32x32xf32>
    %499 = arith.addf %495, %498 : vector<32x32xf32>
    %c1_285 = arith.constant 1 : index
    %500 = memref.load %arg9[%c1_285] : memref<8xf32, #tpu.memory_space<smem>>
    %501 = vector.broadcast %500 : f32 to vector<32x32xf32>
    %502 = arith.addf %499, %501 : vector<32x32xf32>
    %cst_286 = arith.constant 0.000000e+00 : f32
    %503 = vector.broadcast %cst_286 : f32 to vector<32x32xf32>
    %504 = arith.subf %503, %502 : vector<32x32xf32>
    %505 = math.exp %504 : vector<32x32xf32>
    %cst_287 = arith.constant 1.000000e+00 : f32
    %506 = vector.broadcast %cst_287 : f32 to vector<32x32xf32>
    %507 = arith.addf %506, %505 : vector<32x32xf32>
    %cst_288 = arith.constant 1.000000e+00 : f32
    %508 = vector.broadcast %cst_288 : f32 to vector<32x32xf32>
    %509 = arith.divf %508, %507 : vector<32x32xf32>
    %c0_289 = arith.constant 0 : index
    %c1_290 = arith.constant 1 : index
    %c0_291 = arith.constant 0 : index
    %c0_292 = arith.constant 0 : index
    %510 = vector.load %arg10[%c0_289, %c1_290, %c0_291, %c0_292] : memref<2x8x32x32xf32, #tpu.memory_space<vmem>>, vector<1x1x32x32xf32>
    %511 = vector.shape_cast %510 : vector<1x1x32x32xf32> to vector<32x32xf32>
    %512 = vector.shape_cast %509 : vector<32x32xf32> to vector<1x1x32x32xf32>
    tpu.vector_store %arg10[%c0_289, %c1_290, %c0_291, %c0_292], %512 {strides = array<i32>} : memref<2x8x32x32xf32, #tpu.memory_space<vmem>>, vector<1x1x32x32xf32>,
    %c2_293 = arith.constant 2 : index
    %c0_294 = arith.constant 0 : index
    %513 = memref.load %arg8[%c2_293, %c0_294] : memref<8x4xf32, #tpu.memory_space<smem>>
    %514 = vector.broadcast %513 : f32 to vector<32x32xf32>
    %515 = arith.mulf %276, %514 : vector<32x32xf32>
    %c2_295 = arith.constant 2 : index
    %c1_296 = arith.constant 1 : index
    %516 = memref.load %arg8[%c2_295, %c1_296] : memref<8x4xf32, #tpu.memory_space<smem>>
    %517 = vector.broadcast %516 : f32 to vector<32x32xf32>
    %518 = arith.mulf %334, %517 : vector<32x32xf32>
    %519 = arith.addf %515, %518 : vector<32x32xf32>
    %c2_297 = arith.constant 2 : index
    %c2_298 = arith.constant 2 : index
    %520 = memref.load %arg8[%c2_297, %c2_298] : memref<8x4xf32, #tpu.memory_space<smem>>
    %521 = vector.broadcast %520 : f32 to vector<32x32xf32>
    %522 = arith.mulf %392, %521 : vector<32x32xf32>
    %523 = arith.addf %519, %522 : vector<32x32xf32>
    %c2_299 = arith.constant 2 : index
    %c3_300 = arith.constant 3 : index
    %524 = memref.load %arg8[%c2_299, %c3_300] : memref<8x4xf32, #tpu.memory_space<smem>>
    %525 = vector.broadcast %524 : f32 to vector<32x32xf32>
    %526 = arith.mulf %450, %525 : vector<32x32xf32>
    %527 = arith.addf %523, %526 : vector<32x32xf32>
    %c2_301 = arith.constant 2 : index
    %528 = memref.load %arg9[%c2_301] : memref<8xf32, #tpu.memory_space<smem>>
    %529 = vector.broadcast %528 : f32 to vector<32x32xf32>
    %530 = arith.addf %527, %529 : vector<32x32xf32>
    %cst_302 = arith.constant 0.000000e+00 : f32
    %531 = vector.broadcast %cst_302 : f32 to vector<32x32xf32>
    %532 = arith.subf %531, %530 : vector<32x32xf32>
    %533 = math.exp %532 : vector<32x32xf32>
    %cst_303 = arith.constant 1.000000e+00 : f32
    %534 = vector.broadcast %cst_303 : f32 to vector<32x32xf32>
    %535 = arith.addf %534, %533 : vector<32x32xf32>
    %cst_304 = arith.constant 1.000000e+00 : f32
    %536 = vector.broadcast %cst_304 : f32 to vector<32x32xf32>
    %537 = arith.divf %536, %535 : vector<32x32xf32>
    %c0_305 = arith.constant 0 : index
    %c2_306 = arith.constant 2 : index
    %c0_307 = arith.constant 0 : index
    %c0_308 = arith.constant 0 : index
    %538 = vector.load %arg10[%c0_305, %c2_306, %c0_307, %c0_308] : memref<2x8x32x32xf32, #tpu.memory_space<vmem>>, vector<1x1x32x32xf32>
    %539 = vector.shape_cast %538 : vector<1x1x32x32xf32> to vector<32x32xf32>
    %540 = vector.shape_cast %537 : vector<32x32xf32> to vector<1x1x32x32xf32>
    tpu.vector_store %arg10[%c0_305, %c2_306, %c0_307, %c0_308], %540 {strides = array<i32>} : memref<2x8x32x32xf32, #tpu.memory_space<vmem>>, vector<1x1x32x32xf32>,
    %c3_309 = arith.constant 3 : index
    %c0_310 = arith.constant 0 : index
    %541 = memref.load %arg8[%c3_309, %c0_310] : memref<8x4xf32, #tpu.memory_space<smem>>
    %542 = vector.broadcast %541 : f32 to vector<32x32xf32>
    %543 = arith.mulf %276, %542 : vector<32x32xf32>
    %c3_311 = arith.constant 3 : index
    %c1_312 = arith.constant 1 : index
    %544 = memref.load %arg8[%c3_311, %c1_312] : memref<8x4xf32, #tpu.memory_space<smem>>
    %545 = vector.broadcast %544 : f32 to vector<32x32xf32>
    %546 = arith.mulf %334, %545 : vector<32x32xf32>
    %547 = arith.addf %543, %546 : vector<32x32xf32>
    %c3_313 = arith.constant 3 : index
    %c2_314 = arith.constant 2 : index
    %548 = memref.load %arg8[%c3_313, %c2_314] : memref<8x4xf32, #tpu.memory_space<smem>>
    %549 = vector.broadcast %548 : f32 to vector<32x32xf32>
    %550 = arith.mulf %392, %549 : vector<32x32xf32>
    %551 = arith.addf %547, %550 : vector<32x32xf32>
    %c3_315 = arith.constant 3 : index
    %c3_316 = arith.constant 3 : index
    %552 = memref.load %arg8[%c3_315, %c3_316] : memref<8x4xf32, #tpu.memory_space<smem>>
    %553 = vector.broadcast %552 : f32 to vector<32x32xf32>
    %554 = arith.mulf %450, %553 : vector<32x32xf32>
    %555 = arith.addf %551, %554 : vector<32x32xf32>
    %c3_317 = arith.constant 3 : index
    %556 = memref.load %arg9[%c3_317] : memref<8xf32, #tpu.memory_space<smem>>
    %557 = vector.broadcast %556 : f32 to vector<32x32xf32>
    %558 = arith.addf %555, %557 : vector<32x32xf32>
    %cst_318 = arith.constant 0.000000e+00 : f32
    %559 = vector.broadcast %cst_318 : f32 to vector<32x32xf32>
    %560 = arith.subf %559, %558 : vector<32x32xf32>
    %561 = math.exp %560 : vector<32x32xf32>
    %cst_319 = arith.constant 1.000000e+00 : f32
    %562 = vector.broadcast %cst_319 : f32 to vector<32x32xf32>
    %563 = arith.addf %562, %561 : vector<32x32xf32>
    %cst_320 = arith.constant 1.000000e+00 : f32
    %564 = vector.broadcast %cst_320 : f32 to vector<32x32xf32>
    %565 = arith.divf %564, %563 : vector<32x32xf32>
    %c0_321 = arith.constant 0 : index
    %c3_322 = arith.constant 3 : index
    %c0_323 = arith.constant 0 : index
    %c0_324 = arith.constant 0 : index
    %566 = vector.load %arg10[%c0_321, %c3_322, %c0_323, %c0_324] : memref<2x8x32x32xf32, #tpu.memory_space<vmem>>, vector<1x1x32x32xf32>
    %567 = vector.shape_cast %566 : vector<1x1x32x32xf32> to vector<32x32xf32>
    %568 = vector.shape_cast %565 : vector<32x32xf32> to vector<1x1x32x32xf32>
    tpu.vector_store %arg10[%c0_321, %c3_322, %c0_323, %c0_324], %568 {strides = array<i32>} : memref<2x8x32x32xf32, #tpu.memory_space<vmem>>, vector<1x1x32x32xf32>,
    %c4_325 = arith.constant 4 : index
    %c0_326 = arith.constant 0 : index
    %569 = memref.load %arg8[%c4_325, %c0_326] : memref<8x4xf32, #tpu.memory_space<smem>>
    %570 = vector.broadcast %569 : f32 to vector<32x32xf32>
    %571 = arith.mulf %276, %570 : vector<32x32xf32>
    %c4_327 = arith.constant 4 : index
    %c1_328 = arith.constant 1 : index
    %572 = memref.load %arg8[%c4_327, %c1_328] : memref<8x4xf32, #tpu.memory_space<smem>>
    %573 = vector.broadcast %572 : f32 to vector<32x32xf32>
    %574 = arith.mulf %334, %573 : vector<32x32xf32>
    %575 = arith.addf %571, %574 : vector<32x32xf32>
    %c4_329 = arith.constant 4 : index
    %c2_330 = arith.constant 2 : index
    %576 = memref.load %arg8[%c4_329, %c2_330] : memref<8x4xf32, #tpu.memory_space<smem>>
    %577 = vector.broadcast %576 : f32 to vector<32x32xf32>
    %578 = arith.mulf %392, %577 : vector<32x32xf32>
    %579 = arith.addf %575, %578 : vector<32x32xf32>
    %c4_331 = arith.constant 4 : index
    %c3_332 = arith.constant 3 : index
    %580 = memref.load %arg8[%c4_331, %c3_332] : memref<8x4xf32, #tpu.memory_space<smem>>
    %581 = vector.broadcast %580 : f32 to vector<32x32xf32>
    %582 = arith.mulf %450, %581 : vector<32x32xf32>
    %583 = arith.addf %579, %582 : vector<32x32xf32>
    %c4_333 = arith.constant 4 : index
    %584 = memref.load %arg9[%c4_333] : memref<8xf32, #tpu.memory_space<smem>>
    %585 = vector.broadcast %584 : f32 to vector<32x32xf32>
    %586 = arith.addf %583, %585 : vector<32x32xf32>
    %cst_334 = arith.constant 0.000000e+00 : f32
    %587 = vector.broadcast %cst_334 : f32 to vector<32x32xf32>
    %588 = arith.subf %587, %586 : vector<32x32xf32>
    %589 = math.exp %588 : vector<32x32xf32>
    %cst_335 = arith.constant 1.000000e+00 : f32
    %590 = vector.broadcast %cst_335 : f32 to vector<32x32xf32>
    %591 = arith.addf %590, %589 : vector<32x32xf32>
    %cst_336 = arith.constant 1.000000e+00 : f32
    %592 = vector.broadcast %cst_336 : f32 to vector<32x32xf32>
    %593 = arith.divf %592, %591 : vector<32x32xf32>
    %c0_337 = arith.constant 0 : index
    %c4_338 = arith.constant 4 : index
    %c0_339 = arith.constant 0 : index
    %c0_340 = arith.constant 0 : index
    %594 = vector.load %arg10[%c0_337, %c4_338, %c0_339, %c0_340] : memref<2x8x32x32xf32, #tpu.memory_space<vmem>>, vector<1x1x32x32xf32>
    %595 = vector.shape_cast %594 : vector<1x1x32x32xf32> to vector<32x32xf32>
    %596 = vector.shape_cast %593 : vector<32x32xf32> to vector<1x1x32x32xf32>
    tpu.vector_store %arg10[%c0_337, %c4_338, %c0_339, %c0_340], %596 {strides = array<i32>} : memref<2x8x32x32xf32, #tpu.memory_space<vmem>>, vector<1x1x32x32xf32>,
    %c5_341 = arith.constant 5 : index
    %c0_342 = arith.constant 0 : index
    %597 = memref.load %arg8[%c5_341, %c0_342] : memref<8x4xf32, #tpu.memory_space<smem>>
    %598 = vector.broadcast %597 : f32 to vector<32x32xf32>
    %599 = arith.mulf %276, %598 : vector<32x32xf32>
    %c5_343 = arith.constant 5 : index
    %c1_344 = arith.constant 1 : index
    %600 = memref.load %arg8[%c5_343, %c1_344] : memref<8x4xf32, #tpu.memory_space<smem>>
    %601 = vector.broadcast %600 : f32 to vector<32x32xf32>
    %602 = arith.mulf %334, %601 : vector<32x32xf32>
    %603 = arith.addf %599, %602 : vector<32x32xf32>
    %c5_345 = arith.constant 5 : index
    %c2_346 = arith.constant 2 : index
    %604 = memref.load %arg8[%c5_345, %c2_346] : memref<8x4xf32, #tpu.memory_space<smem>>
    %605 = vector.broadcast %604 : f32 to vector<32x32xf32>
    %606 = arith.mulf %392, %605 : vector<32x32xf32>
    %607 = arith.addf %603, %606 : vector<32x32xf32>
    %c5_347 = arith.constant 5 : index
    %c3_348 = arith.constant 3 : index
    %608 = memref.load %arg8[%c5_347, %c3_348] : memref<8x4xf32, #tpu.memory_space<smem>>
    %609 = vector.broadcast %608 : f32 to vector<32x32xf32>
    %610 = arith.mulf %450, %609 : vector<32x32xf32>
    %611 = arith.addf %607, %610 : vector<32x32xf32>
    %c5_349 = arith.constant 5 : index
    %612 = memref.load %arg9[%c5_349] : memref<8xf32, #tpu.memory_space<smem>>
    %613 = vector.broadcast %612 : f32 to vector<32x32xf32>
    %614 = arith.addf %611, %613 : vector<32x32xf32>
    %cst_350 = arith.constant 0.000000e+00 : f32
    %615 = vector.broadcast %cst_350 : f32 to vector<32x32xf32>
    %616 = arith.subf %615, %614 : vector<32x32xf32>
    %617 = math.exp %616 : vector<32x32xf32>
    %cst_351 = arith.constant 1.000000e+00 : f32
    %618 = vector.broadcast %cst_351 : f32 to vector<32x32xf32>
    %619 = arith.addf %618, %617 : vector<32x32xf32>
    %cst_352 = arith.constant 1.000000e+00 : f32
    %620 = vector.broadcast %cst_352 : f32 to vector<32x32xf32>
    %621 = arith.divf %620, %619 : vector<32x32xf32>
    %c0_353 = arith.constant 0 : index
    %c5_354 = arith.constant 5 : index
    %c0_355 = arith.constant 0 : index
    %c0_356 = arith.constant 0 : index
    %622 = vector.load %arg10[%c0_353, %c5_354, %c0_355, %c0_356] : memref<2x8x32x32xf32, #tpu.memory_space<vmem>>, vector<1x1x32x32xf32>
    %623 = vector.shape_cast %622 : vector<1x1x32x32xf32> to vector<32x32xf32>
    %624 = vector.shape_cast %621 : vector<32x32xf32> to vector<1x1x32x32xf32>
    tpu.vector_store %arg10[%c0_353, %c5_354, %c0_355, %c0_356], %624 {strides = array<i32>} : memref<2x8x32x32xf32, #tpu.memory_space<vmem>>, vector<1x1x32x32xf32>,
    %c6_357 = arith.constant 6 : index
    %c0_358 = arith.constant 0 : index
    %625 = memref.load %arg8[%c6_357, %c0_358] : memref<8x4xf32, #tpu.memory_space<smem>>
    %626 = vector.broadcast %625 : f32 to vector<32x32xf32>
    %627 = arith.mulf %276, %626 : vector<32x32xf32>
    %c6_359 = arith.constant 6 : index
    %c1_360 = arith.constant 1 : index
    %628 = memref.load %arg8[%c6_359, %c1_360] : memref<8x4xf32, #tpu.memory_space<smem>>
    %629 = vector.broadcast %628 : f32 to vector<32x32xf32>
    %630 = arith.mulf %334, %629 : vector<32x32xf32>
    %631 = arith.addf %627, %630 : vector<32x32xf32>
    %c6_361 = arith.constant 6 : index
    %c2_362 = arith.constant 2 : index
    %632 = memref.load %arg8[%c6_361, %c2_362] : memref<8x4xf32, #tpu.memory_space<smem>>
    %633 = vector.broadcast %632 : f32 to vector<32x32xf32>
    %634 = arith.mulf %392, %633 : vector<32x32xf32>
    %635 = arith.addf %631, %634 : vector<32x32xf32>
    %c6_363 = arith.constant 6 : index
    %c3_364 = arith.constant 3 : index
    %636 = memref.load %arg8[%c6_363, %c3_364] : memref<8x4xf32, #tpu.memory_space<smem>>
    %637 = vector.broadcast %636 : f32 to vector<32x32xf32>
    %638 = arith.mulf %450, %637 : vector<32x32xf32>
    %639 = arith.addf %635, %638 : vector<32x32xf32>
    %c6_365 = arith.constant 6 : index
    %640 = memref.load %arg9[%c6_365] : memref<8xf32, #tpu.memory_space<smem>>
    %641 = vector.broadcast %640 : f32 to vector<32x32xf32>
    %642 = arith.addf %639, %641 : vector<32x32xf32>
    %cst_366 = arith.constant 0.000000e+00 : f32
    %643 = vector.broadcast %cst_366 : f32 to vector<32x32xf32>
    %644 = arith.subf %643, %642 : vector<32x32xf32>
    %645 = math.exp %644 : vector<32x32xf32>
    %cst_367 = arith.constant 1.000000e+00 : f32
    %646 = vector.broadcast %cst_367 : f32 to vector<32x32xf32>
    %647 = arith.addf %646, %645 : vector<32x32xf32>
    %cst_368 = arith.constant 1.000000e+00 : f32
    %648 = vector.broadcast %cst_368 : f32 to vector<32x32xf32>
    %649 = arith.divf %648, %647 : vector<32x32xf32>
    %c0_369 = arith.constant 0 : index
    %c6_370 = arith.constant 6 : index
    %c0_371 = arith.constant 0 : index
    %c0_372 = arith.constant 0 : index
    %650 = vector.load %arg10[%c0_369, %c6_370, %c0_371, %c0_372] : memref<2x8x32x32xf32, #tpu.memory_space<vmem>>, vector<1x1x32x32xf32>
    %651 = vector.shape_cast %650 : vector<1x1x32x32xf32> to vector<32x32xf32>
    %652 = vector.shape_cast %649 : vector<32x32xf32> to vector<1x1x32x32xf32>
    tpu.vector_store %arg10[%c0_369, %c6_370, %c0_371, %c0_372], %652 {strides = array<i32>} : memref<2x8x32x32xf32, #tpu.memory_space<vmem>>, vector<1x1x32x32xf32>,
    %c7_373 = arith.constant 7 : index
    %c0_374 = arith.constant 0 : index
    %653 = memref.load %arg8[%c7_373, %c0_374] : memref<8x4xf32, #tpu.memory_space<smem>>
    %654 = vector.broadcast %653 : f32 to vector<32x32xf32>
    %655 = arith.mulf %276, %654 : vector<32x32xf32>
    %c7_375 = arith.constant 7 : index
    %c1_376 = arith.constant 1 : index
    %656 = memref.load %arg8[%c7_375, %c1_376] : memref<8x4xf32, #tpu.memory_space<smem>>
    %657 = vector.broadcast %656 : f32 to vector<32x32xf32>
    %658 = arith.mulf %334, %657 : vector<32x32xf32>
    %659 = arith.addf %655, %658 : vector<32x32xf32>
    %c7_377 = arith.constant 7 : index
    %c2_378 = arith.constant 2 : index
    %660 = memref.load %arg8[%c7_377, %c2_378] : memref<8x4xf32, #tpu.memory_space<smem>>
    %661 = vector.broadcast %660 : f32 to vector<32x32xf32>
    %662 = arith.mulf %392, %661 : vector<32x32xf32>
    %663 = arith.addf %659, %662 : vector<32x32xf32>
    %c7_379 = arith.constant 7 : index
    %c3_380 = arith.constant 3 : index
    %664 = memref.load %arg8[%c7_379, %c3_380] : memref<8x4xf32, #tpu.memory_space<smem>>
    %665 = vector.broadcast %664 : f32 to vector<32x32xf32>
    %666 = arith.mulf %450, %665 : vector<32x32xf32>
    %667 = arith.addf %663, %666 : vector<32x32xf32>
    %c7_381 = arith.constant 7 : index
    %668 = memref.load %arg9[%c7_381] : memref<8xf32, #tpu.memory_space<smem>>
    %669 = vector.broadcast %668 : f32 to vector<32x32xf32>
    %670 = arith.addf %667, %669 : vector<32x32xf32>
    %cst_382 = arith.constant 0.000000e+00 : f32
    %671 = vector.broadcast %cst_382 : f32 to vector<32x32xf32>
    %672 = arith.subf %671, %670 : vector<32x32xf32>
    %673 = math.exp %672 : vector<32x32xf32>
    %cst_383 = arith.constant 1.000000e+00 : f32
    %674 = vector.broadcast %cst_383 : f32 to vector<32x32xf32>
    %675 = arith.addf %674, %673 : vector<32x32xf32>
    %cst_384 = arith.constant 1.000000e+00 : f32
    %676 = vector.broadcast %cst_384 : f32 to vector<32x32xf32>
    %677 = arith.divf %676, %675 : vector<32x32xf32>
    %c0_385 = arith.constant 0 : index
    %c7_386 = arith.constant 7 : index
    %c0_387 = arith.constant 0 : index
    %c0_388 = arith.constant 0 : index
    %678 = vector.load %arg10[%c0_385, %c7_386, %c0_387, %c0_388] : memref<2x8x32x32xf32, #tpu.memory_space<vmem>>, vector<1x1x32x32xf32>
    %679 = vector.shape_cast %678 : vector<1x1x32x32xf32> to vector<32x32xf32>
    %680 = vector.shape_cast %677 : vector<32x32xf32> to vector<1x1x32x32xf32>
    tpu.vector_store %arg10[%c0_385, %c7_386, %c0_387, %c0_388], %680 {strides = array<i32>} : memref<2x8x32x32xf32, #tpu.memory_space<vmem>>, vector<1x1x32x32xf32>,
    %c0_389 = arith.constant 0 : index
    %c0_390 = arith.constant 0 : index
    %681 = memref.load %arg8[%c0_389, %c0_390] : memref<8x4xf32, #tpu.memory_space<smem>>
    %682 = vector.broadcast %681 : f32 to vector<32x32xf32>
    %683 = arith.mulf %282, %682 : vector<32x32xf32>
    %c0_391 = arith.constant 0 : index
    %c1_392 = arith.constant 1 : index
    %684 = memref.load %arg8[%c0_391, %c1_392] : memref<8x4xf32, #tpu.memory_space<smem>>
    %685 = vector.broadcast %684 : f32 to vector<32x32xf32>
    %686 = arith.mulf %340, %685 : vector<32x32xf32>
    %687 = arith.addf %683, %686 : vector<32x32xf32>
    %c0_393 = arith.constant 0 : index
    %c2_394 = arith.constant 2 : index
    %688 = memref.load %arg8[%c0_393, %c2_394] : memref<8x4xf32, #tpu.memory_space<smem>>
    %689 = vector.broadcast %688 : f32 to vector<32x32xf32>
    %690 = arith.mulf %398, %689 : vector<32x32xf32>
    %691 = arith.addf %687, %690 : vector<32x32xf32>
    %c0_395 = arith.constant 0 : index
    %c3_396 = arith.constant 3 : index
    %692 = memref.load %arg8[%c0_395, %c3_396] : memref<8x4xf32, #tpu.memory_space<smem>>
    %693 = vector.broadcast %692 : f32 to vector<32x32xf32>
    %694 = arith.mulf %456, %693 : vector<32x32xf32>
    %695 = arith.addf %691, %694 : vector<32x32xf32>
    %c0_397 = arith.constant 0 : index
    %696 = memref.load %arg9[%c0_397] : memref<8xf32, #tpu.memory_space<smem>>
    %697 = vector.broadcast %696 : f32 to vector<32x32xf32>
    %698 = arith.addf %695, %697 : vector<32x32xf32>
    %cst_398 = arith.constant 0.000000e+00 : f32
    %699 = vector.broadcast %cst_398 : f32 to vector<32x32xf32>
    %700 = arith.subf %699, %698 : vector<32x32xf32>
    %701 = math.exp %700 : vector<32x32xf32>
    %cst_399 = arith.constant 1.000000e+00 : f32
    %702 = vector.broadcast %cst_399 : f32 to vector<32x32xf32>
    %703 = arith.addf %702, %701 : vector<32x32xf32>
    %cst_400 = arith.constant 1.000000e+00 : f32
    %704 = vector.broadcast %cst_400 : f32 to vector<32x32xf32>
    %705 = arith.divf %704, %703 : vector<32x32xf32>
    %c1_401 = arith.constant 1 : index
    %c0_402 = arith.constant 0 : index
    %c0_403 = arith.constant 0 : index
    %c0_404 = arith.constant 0 : index
    %706 = vector.load %arg10[%c1_401, %c0_402, %c0_403, %c0_404] : memref<2x8x32x32xf32, #tpu.memory_space<vmem>>, vector<1x1x32x32xf32>
    %707 = vector.shape_cast %706 : vector<1x1x32x32xf32> to vector<32x32xf32>
    %708 = vector.shape_cast %705 : vector<32x32xf32> to vector<1x1x32x32xf32>
    tpu.vector_store %arg10[%c1_401, %c0_402, %c0_403, %c0_404], %708 {strides = array<i32>} : memref<2x8x32x32xf32, #tpu.memory_space<vmem>>, vector<1x1x32x32xf32>,
    %c1_405 = arith.constant 1 : index
    %c0_406 = arith.constant 0 : index
    %709 = memref.load %arg8[%c1_405, %c0_406] : memref<8x4xf32, #tpu.memory_space<smem>>
    %710 = vector.broadcast %709 : f32 to vector<32x32xf32>
    %711 = arith.mulf %282, %710 : vector<32x32xf32>
    %c1_407 = arith.constant 1 : index
    %c1_408 = arith.constant 1 : index
    %712 = memref.load %arg8[%c1_407, %c1_408] : memref<8x4xf32, #tpu.memory_space<smem>>
    %713 = vector.broadcast %712 : f32 to vector<32x32xf32>
    %714 = arith.mulf %340, %713 : vector<32x32xf32>
    %715 = arith.addf %711, %714 : vector<32x32xf32>
    %c1_409 = arith.constant 1 : index
    %c2_410 = arith.constant 2 : index
    %716 = memref.load %arg8[%c1_409, %c2_410] : memref<8x4xf32, #tpu.memory_space<smem>>
    %717 = vector.broadcast %716 : f32 to vector<32x32xf32>
    %718 = arith.mulf %398, %717 : vector<32x32xf32>
    %719 = arith.addf %715, %718 : vector<32x32xf32>
    %c1_411 = arith.constant 1 : index
    %c3_412 = arith.constant 3 : index
    %720 = memref.load %arg8[%c1_411, %c3_412] : memref<8x4xf32, #tpu.memory_space<smem>>
    %721 = vector.broadcast %720 : f32 to vector<32x32xf32>
    %722 = arith.mulf %456, %721 : vector<32x32xf32>
    %723 = arith.addf %719, %722 : vector<32x32xf32>
    %c1_413 = arith.constant 1 : index
    %724 = memref.load %arg9[%c1_413] : memref<8xf32, #tpu.memory_space<smem>>
    %725 = vector.broadcast %724 : f32 to vector<32x32xf32>
    %726 = arith.addf %723, %725 : vector<32x32xf32>
    %cst_414 = arith.constant 0.000000e+00 : f32
    %727 = vector.broadcast %cst_414 : f32 to vector<32x32xf32>
    %728 = arith.subf %727, %726 : vector<32x32xf32>
    %729 = math.exp %728 : vector<32x32xf32>
    %cst_415 = arith.constant 1.000000e+00 : f32
    %730 = vector.broadcast %cst_415 : f32 to vector<32x32xf32>
    %731 = arith.addf %730, %729 : vector<32x32xf32>
    %cst_416 = arith.constant 1.000000e+00 : f32
    %732 = vector.broadcast %cst_416 : f32 to vector<32x32xf32>
    %733 = arith.divf %732, %731 : vector<32x32xf32>
    %c1_417 = arith.constant 1 : index
    %c1_418 = arith.constant 1 : index
    %c0_419 = arith.constant 0 : index
    %c0_420 = arith.constant 0 : index
    %734 = vector.load %arg10[%c1_417, %c1_418, %c0_419, %c0_420] : memref<2x8x32x32xf32, #tpu.memory_space<vmem>>, vector<1x1x32x32xf32>
    %735 = vector.shape_cast %734 : vector<1x1x32x32xf32> to vector<32x32xf32>
    %736 = vector.shape_cast %733 : vector<32x32xf32> to vector<1x1x32x32xf32>
    tpu.vector_store %arg10[%c1_417, %c1_418, %c0_419, %c0_420], %736 {strides = array<i32>} : memref<2x8x32x32xf32, #tpu.memory_space<vmem>>, vector<1x1x32x32xf32>,
    %c2_421 = arith.constant 2 : index
    %c0_422 = arith.constant 0 : index
    %737 = memref.load %arg8[%c2_421, %c0_422] : memref<8x4xf32, #tpu.memory_space<smem>>
    %738 = vector.broadcast %737 : f32 to vector<32x32xf32>
    %739 = arith.mulf %282, %738 : vector<32x32xf32>
    %c2_423 = arith.constant 2 : index
    %c1_424 = arith.constant 1 : index
    %740 = memref.load %arg8[%c2_423, %c1_424] : memref<8x4xf32, #tpu.memory_space<smem>>
    %741 = vector.broadcast %740 : f32 to vector<32x32xf32>
    %742 = arith.mulf %340, %741 : vector<32x32xf32>
    %743 = arith.addf %739, %742 : vector<32x32xf32>
    %c2_425 = arith.constant 2 : index
    %c2_426 = arith.constant 2 : index
    %744 = memref.load %arg8[%c2_425, %c2_426] : memref<8x4xf32, #tpu.memory_space<smem>>
    %745 = vector.broadcast %744 : f32 to vector<32x32xf32>
    %746 = arith.mulf %398, %745 : vector<32x32xf32>
    %747 = arith.addf %743, %746 : vector<32x32xf32>
    %c2_427 = arith.constant 2 : index
    %c3_428 = arith.constant 3 : index
    %748 = memref.load %arg8[%c2_427, %c3_428] : memref<8x4xf32, #tpu.memory_space<smem>>
    %749 = vector.broadcast %748 : f32 to vector<32x32xf32>
    %750 = arith.mulf %456, %749 : vector<32x32xf32>
    %751 = arith.addf %747, %750 : vector<32x32xf32>
    %c2_429 = arith.constant 2 : index
    %752 = memref.load %arg9[%c2_429] : memref<8xf32, #tpu.memory_space<smem>>
    %753 = vector.broadcast %752 : f32 to vector<32x32xf32>
    %754 = arith.addf %751, %753 : vector<32x32xf32>
    %cst_430 = arith.constant 0.000000e+00 : f32
    %755 = vector.broadcast %cst_430 : f32 to vector<32x32xf32>
    %756 = arith.subf %755, %754 : vector<32x32xf32>
    %757 = math.exp %756 : vector<32x32xf32>
    %cst_431 = arith.constant 1.000000e+00 : f32
    %758 = vector.broadcast %cst_431 : f32 to vector<32x32xf32>
    %759 = arith.addf %758, %757 : vector<32x32xf32>
    %cst_432 = arith.constant 1.000000e+00 : f32
    %760 = vector.broadcast %cst_432 : f32 to vector<32x32xf32>
    %761 = arith.divf %760, %759 : vector<32x32xf32>
    %c1_433 = arith.constant 1 : index
    %c2_434 = arith.constant 2 : index
    %c0_435 = arith.constant 0 : index
    %c0_436 = arith.constant 0 : index
    %762 = vector.load %arg10[%c1_433, %c2_434, %c0_435, %c0_436] : memref<2x8x32x32xf32, #tpu.memory_space<vmem>>, vector<1x1x32x32xf32>
    %763 = vector.shape_cast %762 : vector<1x1x32x32xf32> to vector<32x32xf32>
    %764 = vector.shape_cast %761 : vector<32x32xf32> to vector<1x1x32x32xf32>
    tpu.vector_store %arg10[%c1_433, %c2_434, %c0_435, %c0_436], %764 {strides = array<i32>} : memref<2x8x32x32xf32, #tpu.memory_space<vmem>>, vector<1x1x32x32xf32>,
    %c3_437 = arith.constant 3 : index
    %c0_438 = arith.constant 0 : index
    %765 = memref.load %arg8[%c3_437, %c0_438] : memref<8x4xf32, #tpu.memory_space<smem>>
    %766 = vector.broadcast %765 : f32 to vector<32x32xf32>
    %767 = arith.mulf %282, %766 : vector<32x32xf32>
    %c3_439 = arith.constant 3 : index
    %c1_440 = arith.constant 1 : index
    %768 = memref.load %arg8[%c3_439, %c1_440] : memref<8x4xf32, #tpu.memory_space<smem>>
    %769 = vector.broadcast %768 : f32 to vector<32x32xf32>
    %770 = arith.mulf %340, %769 : vector<32x32xf32>
    %771 = arith.addf %767, %770 : vector<32x32xf32>
    %c3_441 = arith.constant 3 : index
    %c2_442 = arith.constant 2 : index
    %772 = memref.load %arg8[%c3_441, %c2_442] : memref<8x4xf32, #tpu.memory_space<smem>>
    %773 = vector.broadcast %772 : f32 to vector<32x32xf32>
    %774 = arith.mulf %398, %773 : vector<32x32xf32>
    %775 = arith.addf %771, %774 : vector<32x32xf32>
    %c3_443 = arith.constant 3 : index
    %c3_444 = arith.constant 3 : index
    %776 = memref.load %arg8[%c3_443, %c3_444] : memref<8x4xf32, #tpu.memory_space<smem>>
    %777 = vector.broadcast %776 : f32 to vector<32x32xf32>
    %778 = arith.mulf %456, %777 : vector<32x32xf32>
    %779 = arith.addf %775, %778 : vector<32x32xf32>
    %c3_445 = arith.constant 3 : index
    %780 = memref.load %arg9[%c3_445] : memref<8xf32, #tpu.memory_space<smem>>
    %781 = vector.broadcast %780 : f32 to vector<32x32xf32>
    %782 = arith.addf %779, %781 : vector<32x32xf32>
    %cst_446 = arith.constant 0.000000e+00 : f32
    %783 = vector.broadcast %cst_446 : f32 to vector<32x32xf32>
    %784 = arith.subf %783, %782 : vector<32x32xf32>
    %785 = math.exp %784 : vector<32x32xf32>
    %cst_447 = arith.constant 1.000000e+00 : f32
    %786 = vector.broadcast %cst_447 : f32 to vector<32x32xf32>
    %787 = arith.addf %786, %785 : vector<32x32xf32>
    %cst_448 = arith.constant 1.000000e+00 : f32
    %788 = vector.broadcast %cst_448 : f32 to vector<32x32xf32>
    %789 = arith.divf %788, %787 : vector<32x32xf32>
    %c1_449 = arith.constant 1 : index
    %c3_450 = arith.constant 3 : index
    %c0_451 = arith.constant 0 : index
    %c0_452 = arith.constant 0 : index
    %790 = vector.load %arg10[%c1_449, %c3_450, %c0_451, %c0_452] : memref<2x8x32x32xf32, #tpu.memory_space<vmem>>, vector<1x1x32x32xf32>
    %791 = vector.shape_cast %790 : vector<1x1x32x32xf32> to vector<32x32xf32>
    %792 = vector.shape_cast %789 : vector<32x32xf32> to vector<1x1x32x32xf32>
    tpu.vector_store %arg10[%c1_449, %c3_450, %c0_451, %c0_452], %792 {strides = array<i32>} : memref<2x8x32x32xf32, #tpu.memory_space<vmem>>, vector<1x1x32x32xf32>,
    %c4_453 = arith.constant 4 : index
    %c0_454 = arith.constant 0 : index
    %793 = memref.load %arg8[%c4_453, %c0_454] : memref<8x4xf32, #tpu.memory_space<smem>>
    %794 = vector.broadcast %793 : f32 to vector<32x32xf32>
    %795 = arith.mulf %282, %794 : vector<32x32xf32>
    %c4_455 = arith.constant 4 : index
    %c1_456 = arith.constant 1 : index
    %796 = memref.load %arg8[%c4_455, %c1_456] : memref<8x4xf32, #tpu.memory_space<smem>>
    %797 = vector.broadcast %796 : f32 to vector<32x32xf32>
    %798 = arith.mulf %340, %797 : vector<32x32xf32>
    %799 = arith.addf %795, %798 : vector<32x32xf32>
    %c4_457 = arith.constant 4 : index
    %c2_458 = arith.constant 2 : index
    %800 = memref.load %arg8[%c4_457, %c2_458] : memref<8x4xf32, #tpu.memory_space<smem>>
    %801 = vector.broadcast %800 : f32 to vector<32x32xf32>
    %802 = arith.mulf %398, %801 : vector<32x32xf32>
    %803 = arith.addf %799, %802 : vector<32x32xf32>
    %c4_459 = arith.constant 4 : index
    %c3_460 = arith.constant 3 : index
    %804 = memref.load %arg8[%c4_459, %c3_460] : memref<8x4xf32, #tpu.memory_space<smem>>
    %805 = vector.broadcast %804 : f32 to vector<32x32xf32>
    %806 = arith.mulf %456, %805 : vector<32x32xf32>
    %807 = arith.addf %803, %806 : vector<32x32xf32>
    %c4_461 = arith.constant 4 : index
    %808 = memref.load %arg9[%c4_461] : memref<8xf32, #tpu.memory_space<smem>>
    %809 = vector.broadcast %808 : f32 to vector<32x32xf32>
    %810 = arith.addf %807, %809 : vector<32x32xf32>
    %cst_462 = arith.constant 0.000000e+00 : f32
    %811 = vector.broadcast %cst_462 : f32 to vector<32x32xf32>
    %812 = arith.subf %811, %810 : vector<32x32xf32>
    %813 = math.exp %812 : vector<32x32xf32>
    %cst_463 = arith.constant 1.000000e+00 : f32
    %814 = vector.broadcast %cst_463 : f32 to vector<32x32xf32>
    %815 = arith.addf %814, %813 : vector<32x32xf32>
    %cst_464 = arith.constant 1.000000e+00 : f32
    %816 = vector.broadcast %cst_464 : f32 to vector<32x32xf32>
    %817 = arith.divf %816, %815 : vector<32x32xf32>
    %c1_465 = arith.constant 1 : index
    %c4_466 = arith.constant 4 : index
    %c0_467 = arith.constant 0 : index
    %c0_468 = arith.constant 0 : index
    %818 = vector.load %arg10[%c1_465, %c4_466, %c0_467, %c0_468] : memref<2x8x32x32xf32, #tpu.memory_space<vmem>>, vector<1x1x32x32xf32>
    %819 = vector.shape_cast %818 : vector<1x1x32x32xf32> to vector<32x32xf32>
    %820 = vector.shape_cast %817 : vector<32x32xf32> to vector<1x1x32x32xf32>
    tpu.vector_store %arg10[%c1_465, %c4_466, %c0_467, %c0_468], %820 {strides = array<i32>} : memref<2x8x32x32xf32, #tpu.memory_space<vmem>>, vector<1x1x32x32xf32>,
    %c5_469 = arith.constant 5 : index
    %c0_470 = arith.constant 0 : index
    %821 = memref.load %arg8[%c5_469, %c0_470] : memref<8x4xf32, #tpu.memory_space<smem>>
    %822 = vector.broadcast %821 : f32 to vector<32x32xf32>
    %823 = arith.mulf %282, %822 : vector<32x32xf32>
    %c5_471 = arith.constant 5 : index
    %c1_472 = arith.constant 1 : index
    %824 = memref.load %arg8[%c5_471, %c1_472] : memref<8x4xf32, #tpu.memory_space<smem>>
    %825 = vector.broadcast %824 : f32 to vector<32x32xf32>
    %826 = arith.mulf %340, %825 : vector<32x32xf32>
    %827 = arith.addf %823, %826 : vector<32x32xf32>
    %c5_473 = arith.constant 5 : index
    %c2_474 = arith.constant 2 : index
    %828 = memref.load %arg8[%c5_473, %c2_474] : memref<8x4xf32, #tpu.memory_space<smem>>
    %829 = vector.broadcast %828 : f32 to vector<32x32xf32>
    %830 = arith.mulf %398, %829 : vector<32x32xf32>
    %831 = arith.addf %827, %830 : vector<32x32xf32>
    %c5_475 = arith.constant 5 : index
    %c3_476 = arith.constant 3 : index
    %832 = memref.load %arg8[%c5_475, %c3_476] : memref<8x4xf32, #tpu.memory_space<smem>>
    %833 = vector.broadcast %832 : f32 to vector<32x32xf32>
    %834 = arith.mulf %456, %833 : vector<32x32xf32>
    %835 = arith.addf %831, %834 : vector<32x32xf32>
    %c5_477 = arith.constant 5 : index
    %836 = memref.load %arg9[%c5_477] : memref<8xf32, #tpu.memory_space<smem>>
    %837 = vector.broadcast %836 : f32 to vector<32x32xf32>
    %838 = arith.addf %835, %837 : vector<32x32xf32>
    %cst_478 = arith.constant 0.000000e+00 : f32
    %839 = vector.broadcast %cst_478 : f32 to vector<32x32xf32>
    %840 = arith.subf %839, %838 : vector<32x32xf32>
    %841 = math.exp %840 : vector<32x32xf32>
    %cst_479 = arith.constant 1.000000e+00 : f32
    %842 = vector.broadcast %cst_479 : f32 to vector<32x32xf32>
    %843 = arith.addf %842, %841 : vector<32x32xf32>
    %cst_480 = arith.constant 1.000000e+00 : f32
    %844 = vector.broadcast %cst_480 : f32 to vector<32x32xf32>
    %845 = arith.divf %844, %843 : vector<32x32xf32>
    %c1_481 = arith.constant 1 : index
    %c5_482 = arith.constant 5 : index
    %c0_483 = arith.constant 0 : index
    %c0_484 = arith.constant 0 : index
    %846 = vector.load %arg10[%c1_481, %c5_482, %c0_483, %c0_484] : memref<2x8x32x32xf32, #tpu.memory_space<vmem>>, vector<1x1x32x32xf32>
    %847 = vector.shape_cast %846 : vector<1x1x32x32xf32> to vector<32x32xf32>
    %848 = vector.shape_cast %845 : vector<32x32xf32> to vector<1x1x32x32xf32>
    tpu.vector_store %arg10[%c1_481, %c5_482, %c0_483, %c0_484], %848 {strides = array<i32>} : memref<2x8x32x32xf32, #tpu.memory_space<vmem>>, vector<1x1x32x32xf32>,
    %c6_485 = arith.constant 6 : index
    %c0_486 = arith.constant 0 : index
    %849 = memref.load %arg8[%c6_485, %c0_486] : memref<8x4xf32, #tpu.memory_space<smem>>
    %850 = vector.broadcast %849 : f32 to vector<32x32xf32>
    %851 = arith.mulf %282, %850 : vector<32x32xf32>
    %c6_487 = arith.constant 6 : index
    %c1_488 = arith.constant 1 : index
    %852 = memref.load %arg8[%c6_487, %c1_488] : memref<8x4xf32, #tpu.memory_space<smem>>
    %853 = vector.broadcast %852 : f32 to vector<32x32xf32>
    %854 = arith.mulf %340, %853 : vector<32x32xf32>
    %855 = arith.addf %851, %854 : vector<32x32xf32>
    %c6_489 = arith.constant 6 : index
    %c2_490 = arith.constant 2 : index
    %856 = memref.load %arg8[%c6_489, %c2_490] : memref<8x4xf32, #tpu.memory_space<smem>>
    %857 = vector.broadcast %856 : f32 to vector<32x32xf32>
    %858 = arith.mulf %398, %857 : vector<32x32xf32>
    %859 = arith.addf %855, %858 : vector<32x32xf32>
    %c6_491 = arith.constant 6 : index
    %c3_492 = arith.constant 3 : index
    %860 = memref.load %arg8[%c6_491, %c3_492] : memref<8x4xf32, #tpu.memory_space<smem>>
    %861 = vector.broadcast %860 : f32 to vector<32x32xf32>
    %862 = arith.mulf %456, %861 : vector<32x32xf32>
    %863 = arith.addf %859, %862 : vector<32x32xf32>
    %c6_493 = arith.constant 6 : index
    %864 = memref.load %arg9[%c6_493] : memref<8xf32, #tpu.memory_space<smem>>
    %865 = vector.broadcast %864 : f32 to vector<32x32xf32>
    %866 = arith.addf %863, %865 : vector<32x32xf32>
    %cst_494 = arith.constant 0.000000e+00 : f32
    %867 = vector.broadcast %cst_494 : f32 to vector<32x32xf32>
    %868 = arith.subf %867, %866 : vector<32x32xf32>
    %869 = math.exp %868 : vector<32x32xf32>
    %cst_495 = arith.constant 1.000000e+00 : f32
    %870 = vector.broadcast %cst_495 : f32 to vector<32x32xf32>
    %871 = arith.addf %870, %869 : vector<32x32xf32>
    %cst_496 = arith.constant 1.000000e+00 : f32
    %872 = vector.broadcast %cst_496 : f32 to vector<32x32xf32>
    %873 = arith.divf %872, %871 : vector<32x32xf32>
    %c1_497 = arith.constant 1 : index
    %c6_498 = arith.constant 6 : index
    %c0_499 = arith.constant 0 : index
    %c0_500 = arith.constant 0 : index
    %874 = vector.load %arg10[%c1_497, %c6_498, %c0_499, %c0_500] : memref<2x8x32x32xf32, #tpu.memory_space<vmem>>, vector<1x1x32x32xf32>
    %875 = vector.shape_cast %874 : vector<1x1x32x32xf32> to vector<32x32xf32>
    %876 = vector.shape_cast %873 : vector<32x32xf32> to vector<1x1x32x32xf32>
    tpu.vector_store %arg10[%c1_497, %c6_498, %c0_499, %c0_500], %876 {strides = array<i32>} : memref<2x8x32x32xf32, #tpu.memory_space<vmem>>, vector<1x1x32x32xf32>,
    %c7_501 = arith.constant 7 : index
    %c0_502 = arith.constant 0 : index
    %877 = memref.load %arg8[%c7_501, %c0_502] : memref<8x4xf32, #tpu.memory_space<smem>>
    %878 = vector.broadcast %877 : f32 to vector<32x32xf32>
    %879 = arith.mulf %282, %878 : vector<32x32xf32>
    %c7_503 = arith.constant 7 : index
    %c1_504 = arith.constant 1 : index
    %880 = memref.load %arg8[%c7_503, %c1_504] : memref<8x4xf32, #tpu.memory_space<smem>>
    %881 = vector.broadcast %880 : f32 to vector<32x32xf32>
    %882 = arith.mulf %340, %881 : vector<32x32xf32>
    %883 = arith.addf %879, %882 : vector<32x32xf32>
    %c7_505 = arith.constant 7 : index
    %c2_506 = arith.constant 2 : index
    %884 = memref.load %arg8[%c7_505, %c2_506] : memref<8x4xf32, #tpu.memory_space<smem>>
    %885 = vector.broadcast %884 : f32 to vector<32x32xf32>
    %886 = arith.mulf %398, %885 : vector<32x32xf32>
    %887 = arith.addf %883, %886 : vector<32x32xf32>
    %c7_507 = arith.constant 7 : index
    %c3_508 = arith.constant 3 : index
    %888 = memref.load %arg8[%c7_507, %c3_508] : memref<8x4xf32, #tpu.memory_space<smem>>
    %889 = vector.broadcast %888 : f32 to vector<32x32xf32>
    %890 = arith.mulf %456, %889 : vector<32x32xf32>
    %891 = arith.addf %887, %890 : vector<32x32xf32>
    %c7_509 = arith.constant 7 : index
    %892 = memref.load %arg9[%c7_509] : memref<8xf32, #tpu.memory_space<smem>>
    %893 = vector.broadcast %892 : f32 to vector<32x32xf32>
    %894 = arith.addf %891, %893 : vector<32x32xf32>
    %cst_510 = arith.constant 0.000000e+00 : f32
    %895 = vector.broadcast %cst_510 : f32 to vector<32x32xf32>
    %896 = arith.subf %895, %894 : vector<32x32xf32>
    %897 = math.exp %896 : vector<32x32xf32>
    %cst_511 = arith.constant 1.000000e+00 : f32
    %898 = vector.broadcast %cst_511 : f32 to vector<32x32xf32>
    %899 = arith.addf %898, %897 : vector<32x32xf32>
    %cst_512 = arith.constant 1.000000e+00 : f32
    %900 = vector.broadcast %cst_512 : f32 to vector<32x32xf32>
    %901 = arith.divf %900, %899 : vector<32x32xf32>
    %c1_513 = arith.constant 1 : index
    %c7_514 = arith.constant 7 : index
    %c0_515 = arith.constant 0 : index
    %c0_516 = arith.constant 0 : index
    %902 = vector.load %arg10[%c1_513, %c7_514, %c0_515, %c0_516] : memref<2x8x32x32xf32, #tpu.memory_space<vmem>>, vector<1x1x32x32xf32>
    %903 = vector.shape_cast %902 : vector<1x1x32x32xf32> to vector<32x32xf32>
    %904 = vector.shape_cast %901 : vector<32x32xf32> to vector<1x1x32x32xf32>
    tpu.vector_store %arg10[%c1_513, %c7_514, %c0_515, %c0_516], %904 {strides = array<i32>} : memref<2x8x32x32xf32, #tpu.memory_space<vmem>>, vector<1x1x32x32xf32>,
    return
  }
}

</mosaic_0001>

<llo_original>
// kernel: dhfe_forward.1
$region0: #{dhfe_forward.1}
  #allocation0 [shape = 'u32[]', space=smem, size = 0x4, offset = 0x4, fixed_abs, tag = 'smem constant byte address 0x4 - core index']
  #allocation1 [shape = 'u32[72,128]{1,0:T(1,128)}', space=vmem, size = 0x9000, scoped, tag = 'internal scratch']
  #allocation2 [shape = 'f32[32,64]{1,0:T(8,128)}', space=vmem, size = 0x4000, scoped, tag = 'scratch operand']
  #allocation3 [shape = 'f32[68,136]{1,0:T(8,128)}', space=vmem, size = 0x12000, scoped, tag = 'scratch operand']
  #allocation4 [shape = 'f32[68,136]{1,0:T(8,128)}', space=vmem, size = 0x12000, scoped, tag = 'scratch operand']
  #allocation5 [shape = 'f32[66,134]{1,0:T(8,128)}', space=vmem, size = 0x12000, scoped, tag = 'scratch operand']
  %s0 = inlined_call_operand.vmem [shape: f32[2,4,16,16], index: 0, kind: input, shape index: {}]
  %s1 = inlined_call_operand.vmem [shape: f32[68,32], index: 1, kind: input, shape index: {}]
  %s2 = inlined_call_operand.vmem [shape: f32[64,136], index: 2, kind: input, shape index: {}]
  %s3 = inlined_call_operand.vmem [shape: f32[18,134], index: 3, kind: input, shape index: {}]
  %s4 = inlined_call_operand.vmem [shape: f32[18,134], index: 4, kind: input, shape index: {}]
  %s5 = inlined_call_operand.vmem [shape: f32[66,134], index: 5, kind: input, shape index: {}]
  %s6 = inlined_call_operand.vmem [shape: f32[4], index: 6, kind: input, shape index: {}]
  %s7 = inlined_call_operand.vmem [shape: f32[4], index: 7, kind: input, shape index: {}]
  %s8 = inlined_call_operand.vmem [shape: f32[8,4], index: 8, kind: input, shape index: {}]
  %s9 = inlined_call_operand.vmem [shape: f32[8], index: 9, kind: input, shape index: {}]
  %s10 = inlined_call_operand.hbm [shape: f32[2,8,32,32], index: 10, kind: output, shape index: {}]
  %s11 = sld [smem:[#allocation0]]
  $region66: #{dhfe_forward.1} parent=0
    _
  %s13 = ssub.s32 1, %s11
  %s14 = scalar_select 0, %s13, %s11
  $region1: #{dhfe_forward.1} parent=0
    #allocation6 [shape = 'u8[512]{0}', space=smem, size = 0x200, scoped, tag = 'input window, operand 6, single buffered']
    #allocation7 [shape = 's32[1]{0}', space=sflag, size = 0x4, scoped, tag = 'scoped memory for dhfe_forward.1']
    #allocation8 [shape = 's32[1]{0}', space=sflag, size = 0x4, scoped, tag = 'scoped memory for dhfe_forward.1']
    #allocation9 [shape = 'u8[512]{0}', space=smem, size = 0x200, scoped, tag = 'input window, operand 7, single buffered']
    #allocation10 [shape = 's32[1]{0}', space=sflag, size = 0x4, scoped, tag = 'scoped memory for dhfe_forward.1']
    #allocation11 [shape = 'u8[4096]{0}', space=smem, size = 0x1000, scoped, tag = 'input window, operand 8, single buffered']
    #allocation12 [shape = 'u8[512]{0}', space=smem, size = 0x200, scoped, tag = 'input window, operand 9, single buffered']
    #allocation13 [shape = 's32[1]{0}', space=sflag, size = 0x4, scoped, tag = 'scoped memory for dhfe_forward.1']
    #allocation14 [shape = 'u8[262144]{0}', space=vmem, size = 0x40000, scoped, tag = 'output window, operand 0, single buffered']
    %15 = vsyncpa [#allocation8], 0
    %16 = vsyncpa [#allocation10], 0
    %17 = vsyncpa [#allocation13], 0
    %18 = vsyncpa [#allocation7], 0
    // Predicated region
    $region2: #{dhfe_forward.1} parent=1 // pred_check
      _
    $region3: #{dhfe_forward.1} parent=1 // pred_check_branch
      %20 = sbr.rel (0) target = $region5
    $region4: #{dhfe_forward.1} parent=1 // pred_region
      _
    $region5: #{dhfe_forward.1} parent=1 // pred_fallthru
      _
    // Predicated region
    $region6: #{dhfe_forward.1} parent=1 // pred_check
      _
    $region7: #{dhfe_forward.1} parent=1 // pred_check_branch
      %22 = sbr.rel (0) target = $region9
    $region8: #{dhfe_forward.1} parent=1 // pred_region
      _
    $region9: #{dhfe_forward.1} parent=1 // pred_fallthru
      _
    // Predicated region
    $region10: #{dhfe_forward.1} parent=1 // pred_check
      _
    $region11: #{dhfe_forward.1} parent=1 // pred_check_branch
      %24 = sbr.rel (0) target = $region13
    $region12: #{dhfe_forward.1} parent=1 // pred_region
      _
    $region13: #{dhfe_forward.1} parent=1 // pred_fallthru
      _
    // Predicated region
    $region14: #{dhfe_forward.1} parent=1 // pred_check
      _
    $region15: #{dhfe_forward.1} parent=1 // pred_check_branch
      %26 = sbr.rel (0) target = $region17
    $region16: #{dhfe_forward.1} parent=1 // pred_region
      _
    $region17: #{dhfe_forward.1} parent=1 // pred_fallthru
      _
    // Predicated region
    $region18: #{dhfe_forward.1} parent=1 // pred_check
      _
    $region19: #{dhfe_forward.1} parent=1 // pred_check_branch
      %28 = sbr.rel (0) target = $region21
    $region20: #{dhfe_forward.1} parent=1 // pred_region
      _
    $region21: #{dhfe_forward.1} parent=1 // pred_fallthru
      _
    // Predicated region
    $region22: #{dhfe_forward.1} parent=1 // pred_check
      _
    $region23: #{dhfe_forward.1} parent=1 // pred_check_branch
      %30 = sbr.rel (0) target = $region25
    $region24: #{dhfe_forward.1} parent=1 // pred_region
      _
    $region25: #{dhfe_forward.1} parent=1 // pred_fallthru
      _
    // Predicated region
    $region26: #{dhfe_forward.1} parent=1 // pred_check
      _
    $region27: #{dhfe_forward.1} parent=1 // pred_check_branch
      %32 = sbr.rel (0) target = $region29
    $region28: #{dhfe_forward.1} parent=1 // pred_region
      %34 = vsyncadd [#allocation8], 0
      %s36 = sshll.u32 %s6, 4
      %s37 = int_to_ptr.vmem [resolvable:$true] %s36
      %39 = dma.vmem_to_smem %s37, 16, [#allocation6], [#allocation8]
    $region29: #{dhfe_forward.1} parent=1 // pred_fallthru
      _
    // Predicated region
    $region30: #{dhfe_forward.1} parent=1 // pred_check
      _
    $region31: #{dhfe_forward.1} parent=1 // pred_check_branch
      %41 = sbr.rel (0) target = $region33
    $region32: #{dhfe_forward.1} parent=1 // pred_region
      %43 = vsyncadd [#allocation10], 0
      %s45 = sshll.u32 %s7, 4
      %s46 = int_to_ptr.vmem [resolvable:$true] %s45
      %48 = dma.vmem_to_smem %s46, 16, [#allocation9], [#allocation10]
    $region33: #{dhfe_forward.1} parent=1 // pred_fallthru
      _
    // Predicated region
    $region34: #{dhfe_forward.1} parent=1 // pred_check
      _
    $region35: #{dhfe_forward.1} parent=1 // pred_check_branch
      %50 = sbr.rel (0) target = $region37
    $region36: #{dhfe_forward.1} parent=1 // pred_region
      %52 = vsyncadd [#allocation10], 0
      %s54 = sshll.u32 %s8, 4
      %s55 = int_to_ptr.vmem [resolvable:$true] %s54
      %57 = dma.vmem_to_smem %s55, 128, [#allocation11], [#allocation10]
    $region37: #{dhfe_forward.1} parent=1 // pred_fallthru
      _
    // Predicated region
    $region38: #{dhfe_forward.1} parent=1 // pred_check
      _
    $region39: #{dhfe_forward.1} parent=1 // pred_check_branch
      %59 = sbr.rel (0) target = $region41
    $region40: #{dhfe_forward.1} parent=1 // pred_region
      %61 = vsyncadd [#allocation13], 0
      %s63 = sshll.u32 %s9, 4
      %s64 = int_to_ptr.vmem [resolvable:$true] %s63
      %66 = dma.vmem_to_smem %s64, 16, [#allocation12], [#allocation13]
    $region41: #{dhfe_forward.1} parent=1 // pred_fallthru
      _
    // Predicated region
    $region42: #{dhfe_forward.1} parent=1 // pred_check
      _
    $region43: #{dhfe_forward.1} parent=1 // pred_check_branch
      %68 = sbr.rel (0) target = $region45
    $region44: #{dhfe_forward.1} parent=1 // pred_region
      %70 = dma.done [#allocation8], 16
    $region45: #{dhfe_forward.1} parent=1 // pred_fallthru
      _
    // Predicated region
    $region46: #{dhfe_forward.1} parent=1 // pred_check
      _
    $region47: #{dhfe_forward.1} parent=1 // pred_check_branch
      %72 = sbr.rel (0) target = $region49
    $region48: #{dhfe_forward.1} parent=1 // pred_region
      %74 = dma.done [#allocation10], 16
    $region49: #{dhfe_forward.1} parent=1 // pred_fallthru
      _
    // Predicated region
    $region50: #{dhfe_forward.1} parent=1 // pred_check
      _
    $region51: #{dhfe_forward.1} parent=1 // pred_check_branch
      %76 = sbr.rel (0) target = $region53
    $region52: #{dhfe_forward.1} parent=1 // pred_region
      %78 = dma.done [#allocation10], 128
    $region53: #{dhfe_forward.1} parent=1 // pred_fallthru
      _
    // Predicated region
    $region54: #{dhfe_forward.1} parent=1 // pred_check
      _
    $region55: #{dhfe_forward.1} parent=1 // pred_check_branch
      %80 = sbr.rel (0) target = $region57
    $region56: #{dhfe_forward.1} parent=1 // pred_region
      %82 = dma.done [#allocation13], 16
    $region57: #{dhfe_forward.1} parent=1 // pred_fallthru
      _
    %83 = sfence
    %v84 = vld [vmem:[%s0] sm:$0xff]
    %v85 = vld [vmem:[%s0 + $0x8] sm:$0xff]
    %vm86 = vcmask 130048
    %87 = vst.msk [vmem:[#allocation2] sm:$0xff] %vm86, %v84
    %88 = vst.msk [vmem:[#allocation2 + $0x8] sm:$0xff] %vm86, %v85
    %s89 = scalar_lea.vmem %s0, 16
    %v90 = vld [vmem:[%s89] sm:$0xff]
    %v91 = vld [vmem:[%s89 + $0x8] sm:$0xff]
    %94 = vrot.lane.b32.xlu0 %v90, 16
    %v95 = vpop.permute.xlu0 %94
    %96 = vrot.lane.b32.xlu0 %v91, 16
    %v97 = vpop.permute.xlu0 %96
    %vm100 = vcmask 261248
    %101 = vst.msk [vmem:[#allocation2] sm:$0xff] %vm100, %v95
    %102 = vst.msk [vmem:[#allocation2 + $0x8] sm:$0xff] %vm100, %v97
    %s103 = scalar_lea.vmem %s0, 32
    %v104 = vld [vmem:[%s103] sm:$0xff]
    %v105 = vld [vmem:[%s103 + $0x8] sm:$0xff]
    %108 = vrot.lane.b32.xlu0 %v104, 32
    %v109 = vpop.permute.xlu0 %108
    %110 = vrot.lane.b32.xlu0 %v105, 32
    %v111 = vpop.permute.xlu0 %110
    %vm114 = vcmask 392448
    %115 = vst.msk [vmem:[#allocation2] sm:$0xff] %vm114, %v109
    %116 = vst.msk [vmem:[#allocation2 + $0x8] sm:$0xff] %vm114, %v111
    %s117 = scalar_lea.vmem %s0, 48
    %v118 = vld [vmem:[%s117] sm:$0xff]
    %v119 = vld [vmem:[%s117 + $0x8] sm:$0xff]
    %122 = vrot.lane.b32.xlu0 %v118, 48
    %v123 = vpop.permute.xlu0 %122
    %124 = vrot.lane.b32.xlu0 %v119, 48
    %v125 = vpop.permute.xlu0 %124
    %vm128 = vcmask 523648
    %129 = vst.msk [vmem:[#allocation2] sm:$0xff] %vm128, %v123
    %130 = vst.msk [vmem:[#allocation2 + $0x8] sm:$0xff] %vm128, %v125
    %s131 = scalar_lea.vmem %s0, 64
    %v132 = vld [vmem:[%s131] sm:$0xff]
    %v133 = vld [vmem:[%s131 + $0x8] sm:$0xff]
    %134 = vst.msk [vmem:[#allocation2 + $0x10] sm:$0xff] %vm86, %v132
    %135 = vst.msk [vmem:[#allocation2 + $0x18] sm:$0xff] %vm86, %v133
    %s136 = scalar_lea.vmem %s0, 80
    %v137 = vld [vmem:[%s136] sm:$0xff]
    %v138 = vld [vmem:[%s136 + $0x8] sm:$0xff]
    %141 = vrot.lane.b32.xlu0 %v137, 16
    %v142 = vpop.permute.xlu0 %141
    %143 = vrot.lane.b32.xlu0 %v138, 16
    %v144 = vpop.permute.xlu0 %143
    %147 = vst.msk [vmem:[#allocation2 + $0x10] sm:$0xff] %vm100, %v142
    %148 = vst.msk [vmem:[#allocation2 + $0x18] sm:$0xff] %vm100, %v144
    %s149 = scalar_lea.vmem %s0, 96
    %v150 = vld [vmem:[%s149] sm:$0xff]
    %v151 = vld [vmem:[%s149 + $0x8] sm:$0xff]
    %154 = vrot.lane.b32.xlu0 %v150, 32
    %v155 = vpop.permute.xlu0 %154
    %156 = vrot.lane.b32.xlu0 %v151, 32
    %v157 = vpop.permute.xlu0 %156
    %160 = vst.msk [vmem:[#allocation2 + $0x10] sm:$0xff] %vm114, %v155
    %161 = vst.msk [vmem:[#allocation2 + $0x18] sm:$0xff] %vm114, %v157
    %s162 = scalar_lea.vmem %s0, 112
    %v163 = vld [vmem:[%s162] sm:$0xff]
    %v164 = vld [vmem:[%s162 + $0x8] sm:$0xff]
    %167 = vrot.lane.b32.xlu0 %v163, 48
    %v168 = vpop.permute.xlu0 %167
    %169 = vrot.lane.b32.xlu0 %v164, 48
    %v170 = vpop.permute.xlu0 %169
    %173 = vst.msk [vmem:[#allocation2 + $0x10] sm:$0xff] %vm128, %v168
    %174 = vst.msk [vmem:[#allocation2 + $0x18] sm:$0xff] %vm128, %v170
    %v175 = vld [vmem:[#allocation2] sm:$0xff]
    %v176 = vld [vmem:[#allocation2 + $0x8] sm:$0xff]
    %v177 = vld [vmem:[#allocation2 + $0x10] sm:$0xff]
    %v178 = vld [vmem:[#allocation2 + $0x18] sm:$0xff]
    %v179 = vld [vmem:[%s2] sm:$0xff]
    %v180 = vld [vmem:[%s2 + $0x8] sm:$0xff]
    %v181 = vld [vmem:[%s2 + $0x10] sm:$0xff]
    %v182 = vld [vmem:[%s2 + $0x18] sm:$0xff]
    %v183 = vld [vmem:[%s2 + $0x20] sm:$0xff]
    %v184 = vld [vmem:[%s2 + $0x28] sm:$0xff]
    %v185 = vld [vmem:[%s2 + $0x30] sm:$0xff]
    %v186 = vld [vmem:[%s2 + $0x38] sm:$0xff]
    %v187 = vld [vmem:[%s2 + $0x40] sm:$0xff]
    %v188 = vld [vmem:[%s2 + $0x48] sm:$0xff]
    %v189 = vld [vmem:[%s2 + $0x50] sm:$0xff]
    %v190 = vld [vmem:[%s2 + $0x58] sm:$0xff]
    %v191 = vld [vmem:[%s2 + $0x60] sm:$0xff]
    %v192 = vld [vmem:[%s2 + $0x68] sm:$0xff]
    %v193 = vld [vmem:[%s2 + $0x70] sm:$0xff]
    %v194 = vld [vmem:[%s2 + $0x78] sm:$0xff]
    %vm195 = vcmask 523264
    %v197 = vsel %vm195, %v175, 0
    %v200 = vsel %vm195, %v176, 0
    %v203 = vsel %vm195, %v177, 0
    %v206 = vsel %vm195, %v178, 0
    %208 = vmatpush.msra.mxu0 0.0
    %209 = vmatpush.msra.mxu0 0.0
    %210 = vmatpush.msra.mxu0 0.0
    %211 = vmatpush.msra.mxu0 0.0
    %212 = vmatpush.msra.mxu0 0.0
    %213 = vmatpush.msra.mxu0 0.0
    %214 = vmatpush.msra.mxu0 0.0
    %215 = vmatpush.msra.mxu0 0.0
    %v216 = vand.u32 %v193, 4294901760
    %217 = vmatpush.msra.mxu0 %v216
    %v218 = vand.u32 %v191, 4294901760
    %219 = vmatpush.msra.mxu0 %v218
    %v220 = vand.u32 %v189, 4294901760
    %221 = vmatpush.msra.mxu0 %v220
    %v222 = vand.u32 %v187, 4294901760
    %223 = vmatpush.msra.mxu0 %v222
    %v224 = vand.u32 %v185, 4294901760
    %225 = vmatpush.msra.mxu0 %v224
    %v226 = vand.u32 %v183, 4294901760
    %227 = vmatpush.msra.mxu0 %v226
    %v228 = vand.u32 %v181, 4294901760
    %229 = vmatpush.msra.mxu0 %v228
    %v230 = vand.u32 %v179, 4294901760
    %231 = vmatpush.msra.mxu0 %v230
    %v232 = vand.u32 %v197, 4294901760
    %v233 = vsub.f32 %v197, %v232
    %v234 = vand.u32 %v233, 4294901760
    %v235 = vsub.f32 %v233, %v234
    %v236 = vand.u32 %v235, 4294901760
    %237 = vmatmul.f32.gmra.mxu0 %v236
    %v238 = vpop.f32.mrf.mxu0
    %v239 = vadd.f32 0.0, %v238
    %v240 = vand.u32 %v200, 4294901760
    %v241 = vsub.f32 %v200, %v240
    %v242 = vand.u32 %v241, 4294901760
    %v243 = vsub.f32 %v241, %v242
    %v244 = vand.u32 %v243, 4294901760
    %245 = vmatmul.f32.gmra.mxu0 %v244
    %v246 = vpop.f32.mrf.mxu0
    %v247 = vadd.f32 0.0, %v246
    %v248 = vand.u32 %v203, 4294901760
    %v249 = vsub.f32 %v203, %v248
    %v250 = vand.u32 %v249, 4294901760
    %v251 = vsub.f32 %v249, %v250
    %v252 = vand.u32 %v251, 4294901760
    %253 = vmatmul.f32.gmra.mxu0 %v252
    %v254 = vpop.f32.mrf.mxu0
    %v255 = vadd.f32 0.0, %v254
    %v256 = vand.u32 %v206, 4294901760
    %v257 = vsub.f32 %v206, %v256
    %v258 = vand.u32 %v257, 4294901760
    %v259 = vsub.f32 %v257, %v258
    %v260 = vand.u32 %v259, 4294901760
    %261 = vmatmul.f32.gmra.mxu0 %v260
    %v262 = vpop.f32.mrf.mxu0
    %v263 = vadd.f32 0.0, %v262
    %264 = vdwg.mxu0
    %265 = vmatpush.msra.mxu0 0.0
    %266 = vmatpush.msra.mxu0 0.0
    %267 = vmatpush.msra.mxu0 0.0
    %268 = vmatpush.msra.mxu0 0.0
    %269 = vmatpush.msra.mxu0 0.0
    %270 = vmatpush.msra.mxu0 0.0
    %271 = vmatpush.msra.mxu0 0.0
    %272 = vmatpush.msra.mxu0 0.0
    %v273 = vand.u32 %v193, 4294901760
    %v274 = vsub.f32 %v193, %v273
    %v275 = vand.u32 %v274, 4294901760
    %v276 = vsub.f32 %v274, %v275
    %v277 = vand.u32 %v276, 4294901760
    %278 = vmatpush.msra.mxu0 %v277
    %v279 = vand.u32 %v191, 4294901760
    %v280 = vsub.f32 %v191, %v279
    %v281 = vand.u32 %v280, 4294901760
    %v282 = vsub.f32 %v280, %v281
    %v283 = vand.u32 %v282, 4294901760
    %284 = vmatpush.msra.mxu0 %v283
    %v285 = vand.u32 %v189, 4294901760
    %v286 = vsub.f32 %v189, %v285
    %v287 = vand.u32 %v286, 4294901760
    %v288 = vsub.f32 %v286, %v287
    %v289 = vand.u32 %v288, 4294901760
    %290 = vmatpush.msra.mxu0 %v289
    %v291 = vand.u32 %v187, 4294901760
    %v292 = vsub.f32 %v187, %v291
    %v293 = vand.u32 %v292, 4294901760
    %v294 = vsub.f32 %v292, %v293
    %v295 = vand.u32 %v294, 4294901760
    %296 = vmatpush.msra.mxu0 %v295
    %v297 = vand.u32 %v185, 4294901760
    %v298 = vsub.f32 %v185, %v297
    %v299 = vand.u32 %v298, 4294901760
    %v300 = vsub.f32 %v298, %v299
    %v301 = vand.u32 %v300, 4294901760
    %302 = vmatpush.msra.mxu0 %v301
    %v303 = vand.u32 %v183, 4294901760
    %v304 = vsub.f32 %v183, %v303
    %v305 = vand.u32 %v304, 4294901760
    %v306 = vsub.f32 %v304, %v305
    %v307 = vand.u32 %v306, 4294901760
    %308 = vmatpush.msra.mxu0 %v307
    %v309 = vand.u32 %v181, 4294901760
    %v310 = vsub.f32 %v181, %v309
    %v311 = vand.u32 %v310, 4294901760
    %v312 = vsub.f32 %v310, %v311
    %v313 = vand.u32 %v312, 4294901760
    %314 = vmatpush.msra.mxu0 %v313
    %v315 = vand.u32 %v179, 4294901760
    %v316 = vsub.f32 %v179, %v315
    %v317 = vand.u32 %v316, 4294901760
    %v318 = vsub.f32 %v316, %v317
    %v319 = vand.u32 %v318, 4294901760
    %320 = vmatpush.msra.mxu0 %v319
    %v321 = vand.u32 %v197, 4294901760
    %322 = vmatmul.f32.gmra.mxu0 %v321
    %v323 = vpop.f32.mrf.mxu0
    %v324 = vadd.f32 %v239, %v323
    %v325 = vand.u32 %v200, 4294901760
    %326 = vmatmul.f32.gmra.mxu0 %v325
    %v327 = vpop.f32.mrf.mxu0
    %v328 = vadd.f32 %v247, %v327
    %v329 = vand.u32 %v203, 4294901760
    %330 = vmatmul.f32.gmra.mxu0 %v329
    %v331 = vpop.f32.mrf.mxu0
    %v332 = vadd.f32 %v255, %v331
    %v333 = vand.u32 %v206, 4294901760
    %334 = vmatmul.f32.gmra.mxu0 %v333
    %v335 = vpop.f32.mrf.mxu0
    %v336 = vadd.f32 %v263, %v335
    %337 = vdwg.mxu0
    %338 = vmatpush.msra.mxu0 0.0
    %339 = vmatpush.msra.mxu0 0.0
    %340 = vmatpush.msra.mxu0 0.0
    %341 = vmatpush.msra.mxu0 0.0
    %342 = vmatpush.msra.mxu0 0.0
    %343 = vmatpush.msra.mxu0 0.0
    %344 = vmatpush.msra.mxu0 0.0
    %345 = vmatpush.msra.mxu0 0.0
    %v346 = vand.u32 %v193, 4294901760
    %v347 = vsub.f32 %v193, %v346
    %348 = vmatpush.msra.mxu0 %v347
    %v349 = vand.u32 %v191, 4294901760
    %v350 = vsub.f32 %v191, %v349
    %351 = vmatpush.msra.mxu0 %v350
    %v352 = vand.u32 %v189, 4294901760
    %v353 = vsub.f32 %v189, %v352
    %354 = vmatpush.msra.mxu0 %v353
    %v355 = vand.u32 %v187, 4294901760
    %v356 = vsub.f32 %v187, %v355
    %357 = vmatpush.msra.mxu0 %v356
    %v358 = vand.u32 %v185, 4294901760
    %v359 = vsub.f32 %v185, %v358
    %360 = vmatpush.msra.mxu0 %v359
    %v361 = vand.u32 %v183, 4294901760
    %v362 = vsub.f32 %v183, %v361
    %363 = vmatpush.msra.mxu0 %v362
    %v364 = vand.u32 %v181, 4294901760
    %v365 = vsub.f32 %v181, %v364
    %366 = vmatpush.msra.mxu0 %v365
    %v367 = vand.u32 %v179, 4294901760
    %v368 = vsub.f32 %v179, %v367
    %369 = vmatpush.msra.mxu0 %v368
    %v370 = vand.u32 %v197, 4294901760
    %v371 = vsub.f32 %v197, %v370
    %372 = vmatmul.f32.gmra.mxu0 %v371
    %v373 = vpop.f32.mrf.mxu0
    %v374 = vadd.f32 %v324, %v373
    %v375 = vand.u32 %v200, 4294901760
    %v376 = vsub.f32 %v200, %v375
    %377 = vmatmul.f32.gmra.mxu0 %v376
    %v378 = vpop.f32.mrf.mxu0
    %v379 = vadd.f32 %v328, %v378
    %v380 = vand.u32 %v203, 4294901760
    %v381 = vsub.f32 %v203, %v380
    %382 = vmatmul.f32.gmra.mxu0 %v381
    %v383 = vpop.f32.mrf.mxu0
    %v384 = vadd.f32 %v332, %v383
    %v385 = vand.u32 %v206, 4294901760
    %v386 = vsub.f32 %v206, %v385
    %387 = vmatmul.f32.gmra.mxu0 %v386
    %v388 = vpop.f32.mrf.mxu0
    %v389 = vadd.f32 %v336, %v388
    %390 = vdwg.mxu0
    %391 = vmatpush.msra.mxu0 0.0
    %392 = vmatpush.msra.mxu0 0.0
    %393 = vmatpush.msra.mxu0 0.0
    %394 = vmatpush.msra.mxu0 0.0
    %395 = vmatpush.msra.mxu0 0.0
    %396 = vmatpush.msra.mxu0 0.0
    %397 = vmatpush.msra.mxu0 0.0
    %398 = vmatpush.msra.mxu0 0.0
    %v399 = vand.u32 %v193, 4294901760
    %400 = vmatpush.msra.mxu0 %v399
    %v401 = vand.u32 %v191, 4294901760
    %402 = vmatpush.msra.mxu0 %v401
    %v403 = vand.u32 %v189, 4294901760
    %404 = vmatpush.msra.mxu0 %v403
    %v405 = vand.u32 %v187, 4294901760
    %406 = vmatpush.msra.mxu0 %v405
    %v407 = vand.u32 %v185, 4294901760
    %408 = vmatpush.msra.mxu0 %v407
    %v409 = vand.u32 %v183, 4294901760
    %410 = vmatpush.msra.mxu0 %v409
    %v411 = vand.u32 %v181, 4294901760
    %412 = vmatpush.msra.mxu0 %v411
    %v413 = vand.u32 %v179, 4294901760
    %414 = vmatpush.msra.mxu0 %v413
    %v415 = vand.u32 %v197, 4294901760
    %v416 = vsub.f32 %v197, %v415
    %v417 = vand.u32 %v416, 4294901760
    %418 = vmatmul.f32.gmra.mxu0 %v417
    %v419 = vpop.f32.mrf.mxu0
    %v420 = vadd.f32 %v374, %v419
    %v421 = vand.u32 %v200, 4294901760
    %v422 = vsub.f32 %v200, %v421
    %v423 = vand.u32 %v422, 4294901760
    %424 = vmatmul.f32.gmra.mxu0 %v423
    %v425 = vpop.f32.mrf.mxu0
    %v426 = vadd.f32 %v379, %v425
    %v427 = vand.u32 %v203, 4294901760
    %v428 = vsub.f32 %v203, %v427
    %v429 = vand.u32 %v428, 4294901760
    %430 = vmatmul.f32.gmra.mxu0 %v429
    %v431 = vpop.f32.mrf.mxu0
    %v432 = vadd.f32 %v384, %v431
    %v433 = vand.u32 %v206, 4294901760
    %v434 = vsub.f32 %v206, %v433
    %v435 = vand.u32 %v434, 4294901760
    %436 = vmatmul.f32.gmra.mxu0 %v435
    %v437 = vpop.f32.mrf.mxu0
    %v438 = vadd.f32 %v389, %v437
    %439 = vdwg.mxu0
    %440 = vmatpush.msra.mxu0 0.0
    %441 = vmatpush.msra.mxu0 0.0
    %442 = vmatpush.msra.mxu0 0.0
    %443 = vmatpush.msra.mxu0 0.0
    %444 = vmatpush.msra.mxu0 0.0
    %445 = vmatpush.msra.mxu0 0.0
    %446 = vmatpush.msra.mxu0 0.0
    %447 = vmatpush.msra.mxu0 0.0
    %v448 = vand.u32 %v193, 4294901760
    %v449 = vsub.f32 %v193, %v448
    %v450 = vand.u32 %v449, 4294901760
    %451 = vmatpush.msra.mxu0 %v450
    %v452 = vand.u32 %v191, 4294901760
    %v453 = vsub.f32 %v191, %v452
    %v454 = vand.u32 %v453, 4294901760
    %455 = vmatpush.msra.mxu0 %v454
    %v456 = vand.u32 %v189, 4294901760
    %v457 = vsub.f32 %v189, %v456
    %v458 = vand.u32 %v457, 4294901760
    %459 = vmatpush.msra.mxu0 %v458
    %v460 = vand.u32 %v187, 4294901760
    %v461 = vsub.f32 %v187, %v460
    %v462 = vand.u32 %v461, 4294901760
    %463 = vmatpush.msra.mxu0 %v462
    %v464 = vand.u32 %v185, 4294901760
    %v465 = vsub.f32 %v185, %v464
    %v466 = vand.u32 %v465, 4294901760
    %467 = vmatpush.msra.mxu0 %v466
    %v468 = vand.u32 %v183, 4294901760
    %v469 = vsub.f32 %v183, %v468
    %v470 = vand.u32 %v469, 4294901760
    %471 = vmatpush.msra.mxu0 %v470
    %v472 = vand.u32 %v181, 4294901760
    %v473 = vsub.f32 %v181, %v472
    %v474 = vand.u32 %v473, 4294901760
    %475 = vmatpush.msra.mxu0 %v474
    %v476 = vand.u32 %v179, 4294901760
    %v477 = vsub.f32 %v179, %v476
    %v478 = vand.u32 %v477, 4294901760
    %479 = vmatpush.msra.mxu0 %v478
    %v480 = vand.u32 %v197, 4294901760
    %481 = vmatmul.f32.gmra.mxu0 %v480
    %v482 = vpop.f32.mrf.mxu0
    %v483 = vadd.f32 %v420, %v482
    %v484 = vand.u32 %v200, 4294901760
    %485 = vmatmul.f32.gmra.mxu0 %v484
    %v486 = vpop.f32.mrf.mxu0
    %v487 = vadd.f32 %v426, %v486
    %v488 = vand.u32 %v203, 4294901760
    %489 = vmatmul.f32.gmra.mxu0 %v488
    %v490 = vpop.f32.mrf.mxu0
    %v491 = vadd.f32 %v432, %v490
    %v492 = vand.u32 %v206, 4294901760
    %493 = vmatmul.f32.gmra.mxu0 %v492
    %v494 = vpop.f32.mrf.mxu0
    %v495 = vadd.f32 %v438, %v494
    %496 = vdwg.mxu0
    %497 = vmatpush.msra.mxu0 0.0
    %498 = vmatpush.msra.mxu0 0.0
    %499 = vmatpush.msra.mxu0 0.0
    %500 = vmatpush.msra.mxu0 0.0
    %501 = vmatpush.msra.mxu0 0.0
    %502 = vmatpush.msra.mxu0 0.0
    %503 = vmatpush.msra.mxu0 0.0
    %504 = vmatpush.msra.mxu0 0.0
    %v505 = vand.u32 %v193, 4294901760
    %506 = vmatpush.msra.mxu0 %v505
    %v507 = vand.u32 %v191, 4294901760
    %508 = vmatpush.msra.mxu0 %v507
    %v509 = vand.u32 %v189, 4294901760
    %510 = vmatpush.msra.mxu0 %v509
    %v511 = vand.u32 %v187, 4294901760
    %512 = vmatpush.msra.mxu0 %v511
    %v513 = vand.u32 %v185, 4294901760
    %514 = vmatpush.msra.mxu0 %v513
    %v515 = vand.u32 %v183, 4294901760
    %516 = vmatpush.msra.mxu0 %v515
    %v517 = vand.u32 %v181, 4294901760
    %518 = vmatpush.msra.mxu0 %v517
    %v519 = vand.u32 %v179, 4294901760
    %520 = vmatpush.msra.mxu0 %v519
    %v521 = vand.u32 %v197, 4294901760
    %522 = vmatmul.f32.gmra.mxu0 %v521
    %v523 = vpop.f32.mrf.mxu0
    %v524 = vadd.f32 %v483, %v523
    %v525 = vand.u32 %v200, 4294901760
    %526 = vmatmul.f32.gmra.mxu0 %v525
    %v527 = vpop.f32.mrf.mxu0
    %v528 = vadd.f32 %v487, %v527
    %v529 = vand.u32 %v203, 4294901760
    %530 = vmatmul.f32.gmra.mxu0 %v529
    %v531 = vpop.f32.mrf.mxu0
    %v532 = vadd.f32 %v491, %v531
    %v533 = vand.u32 %v206, 4294901760
    %534 = vmatmul.f32.gmra.mxu0 %v533
    %v535 = vpop.f32.mrf.mxu0
    %v536 = vadd.f32 %v495, %v535
    %537 = vdwg.mxu0
    %538 = vmatpush.msra.mxu0 0.0
    %539 = vmatpush.msra.mxu0 0.0
    %540 = vmatpush.msra.mxu0 0.0
    %541 = vmatpush.msra.mxu0 0.0
    %542 = vmatpush.msra.mxu0 0.0
    %543 = vmatpush.msra.mxu0 0.0
    %544 = vmatpush.msra.mxu0 0.0
    %545 = vmatpush.msra.mxu0 0.0
    %v546 = vand.u32 %v194, 4294901760
    %547 = vmatpush.msra.mxu0 %v546
    %v548 = vand.u32 %v192, 4294901760
    %549 = vmatpush.msra.mxu0 %v548
    %v550 = vand.u32 %v190, 4294901760
    %551 = vmatpush.msra.mxu0 %v550
    %v552 = vand.u32 %v188, 4294901760
    %553 = vmatpush.msra.mxu0 %v552
    %v554 = vand.u32 %v186, 4294901760
    %555 = vmatpush.msra.mxu0 %v554
    %v556 = vand.u32 %v184, 4294901760
    %557 = vmatpush.msra.mxu0 %v556
    %v558 = vand.u32 %v182, 4294901760
    %559 = vmatpush.msra.mxu0 %v558
    %v560 = vand.u32 %v180, 4294901760
    %561 = vmatpush.msra.mxu0 %v560
    %v562 = vand.u32 %v197, 4294901760
    %v563 = vsub.f32 %v197, %v562
    %v564 = vand.u32 %v563, 4294901760
    %v565 = vsub.f32 %v563, %v564
    %v566 = vand.u32 %v565, 4294901760
    %567 = vmatmul.f32.gmra.mxu0 %v566
    %v568 = vpop.f32.mrf.mxu0
    %v569 = vadd.f32 0.0, %v568
    %v570 = vand.u32 %v200, 4294901760
    %v571 = vsub.f32 %v200, %v570
    %v572 = vand.u32 %v571, 4294901760
    %v573 = vsub.f32 %v571, %v572
    %v574 = vand.u32 %v573, 4294901760
    %575 = vmatmul.f32.gmra.mxu0 %v574
    %v576 = vpop.f32.mrf.mxu0
    %v577 = vadd.f32 0.0, %v576
    %v578 = vand.u32 %v203, 4294901760
    %v579 = vsub.f32 %v203, %v578
    %v580 = vand.u32 %v579, 4294901760
    %v581 = vsub.f32 %v579, %v580
    %v582 = vand.u32 %v581, 4294901760
    %583 = vmatmul.f32.gmra.mxu0 %v582
    %v584 = vpop.f32.mrf.mxu0
    %v585 = vadd.f32 0.0, %v584
    %v586 = vand.u32 %v206, 4294901760
    %v587 = vsub.f32 %v206, %v586
    %v588 = vand.u32 %v587, 4294901760
    %v589 = vsub.f32 %v587, %v588
    %v590 = vand.u32 %v589, 4294901760
    %591 = vmatmul.f32.gmra.mxu0 %v590
    %v592 = vpop.f32.mrf.mxu0
    %v593 = vadd.f32 0.0, %v592
    %594 = vdwg.mxu0
    %595 = vmatpush.msra.mxu0 0.0
    %596 = vmatpush.msra.mxu0 0.0
    %597 = vmatpush.msra.mxu0 0.0
    %598 = vmatpush.msra.mxu0 0.0
    %599 = vmatpush.msra.mxu0 0.0
    %600 = vmatpush.msra.mxu0 0.0
    %601 = vmatpush.msra.mxu0 0.0
    %602 = vmatpush.msra.mxu0 0.0
    %v603 = vand.u32 %v194, 4294901760
    %v604 = vsub.f32 %v194, %v603
    %v605 = vand.u32 %v604, 4294901760
    %v606 = vsub.f32 %v604, %v605
    %v607 = vand.u32 %v606, 4294901760
    %608 = vmatpush.msra.mxu0 %v607
    %v609 = vand.u32 %v192, 4294901760
    %v610 = vsub.f32 %v192, %v609
    %v611 = vand.u32 %v610, 4294901760
    %v612 = vsub.f32 %v610, %v611
    %v613 = vand.u32 %v612, 4294901760
    %614 = vmatpush.msra.mxu0 %v613
    %v615 = vand.u32 %v190, 4294901760
    %v616 = vsub.f32 %v190, %v615
    %v617 = vand.u32 %v616, 4294901760
    %v618 = vsub.f32 %v616, %v617
    %v619 = vand.u32 %v618, 4294901760
    %620 = vmatpush.msra.mxu0 %v619
    %v621 = vand.u32 %v188, 4294901760
    %v622 = vsub.f32 %v188, %v621
    %v623 = vand.u32 %v622, 4294901760
    %v624 = vsub.f32 %v622, %v623
    %v625 = vand.u32 %v624, 4294901760
    %626 = vmatpush.msra.mxu0 %v625
    %v627 = vand.u32 %v186, 4294901760
    %v628 = vsub.f32 %v186, %v627
    %v629 = vand.u32 %v628, 4294901760
    %v630 = vsub.f32 %v628, %v629
    %v631 = vand.u32 %v630, 4294901760
    %632 = vmatpush.msra.mxu0 %v631
    %v633 = vand.u32 %v184, 4294901760
    %v634 = vsub.f32 %v184, %v633
    %v635 = vand.u32 %v634, 4294901760
    %v636 = vsub.f32 %v634, %v635
    %v637 = vand.u32 %v636, 4294901760
    %638 = vmatpush.msra.mxu0 %v637
    %v639 = vand.u32 %v182, 4294901760
    %v640 = vsub.f32 %v182, %v639
    %v641 = vand.u32 %v640, 4294901760
    %v642 = vsub.f32 %v640, %v641
    %v643 = vand.u32 %v642, 4294901760
    %644 = vmatpush.msra.mxu0 %v643
    %v645 = vand.u32 %v180, 4294901760
    %v646 = vsub.f32 %v180, %v645
    %v647 = vand.u32 %v646, 4294901760
    %v648 = vsub.f32 %v646, %v647
    %v649 = vand.u32 %v648, 4294901760
    %650 = vmatpush.msra.mxu0 %v649
    %v651 = vand.u32 %v197, 4294901760
    %652 = vmatmul.f32.gmra.mxu0 %v651
    %v653 = vpop.f32.mrf.mxu0
    %v654 = vadd.f32 %v569, %v653
    %v655 = vand.u32 %v200, 4294901760
    %656 = vmatmul.f32.gmra.mxu0 %v655
    %v657 = vpop.f32.mrf.mxu0
    %v658 = vadd.f32 %v577, %v657
    %v659 = vand.u32 %v203, 4294901760
    %660 = vmatmul.f32.gmra.mxu0 %v659
    %v661 = vpop.f32.mrf.mxu0
    %v662 = vadd.f32 %v585, %v661
    %v663 = vand.u32 %v206, 4294901760
    %664 = vmatmul.f32.gmra.mxu0 %v663
    %v665 = vpop.f32.mrf.mxu0
    %v666 = vadd.f32 %v593, %v665
    %667 = vdwg.mxu0
    %668 = vmatpush.msra.mxu0 0.0
    %669 = vmatpush.msra.mxu0 0.0
    %670 = vmatpush.msra.mxu0 0.0
    %671 = vmatpush.msra.mxu0 0.0
    %672 = vmatpush.msra.mxu0 0.0
    %673 = vmatpush.msra.mxu0 0.0
    %674 = vmatpush.msra.mxu0 0.0
    %675 = vmatpush.msra.mxu0 0.0
    %v676 = vand.u32 %v194, 4294901760
    %v677 = vsub.f32 %v194, %v676
    %678 = vmatpush.msra.mxu0 %v677
    %v679 = vand.u32 %v192, 4294901760
    %v680 = vsub.f32 %v192, %v679
    %681 = vmatpush.msra.mxu0 %v680
    %v682 = vand.u32 %v190, 4294901760
    %v683 = vsub.f32 %v190, %v682
    %684 = vmatpush.msra.mxu0 %v683
    %v685 = vand.u32 %v188, 4294901760
    %v686 = vsub.f32 %v188, %v685
    %687 = vmatpush.msra.mxu0 %v686
    %v688 = vand.u32 %v186, 4294901760
    %v689 = vsub.f32 %v186, %v688
    %690 = vmatpush.msra.mxu0 %v689
    %v691 = vand.u32 %v184, 4294901760
    %v692 = vsub.f32 %v184, %v691
    %693 = vmatpush.msra.mxu0 %v692
    %v694 = vand.u32 %v182, 4294901760
    %v695 = vsub.f32 %v182, %v694
    %696 = vmatpush.msra.mxu0 %v695
    %v697 = vand.u32 %v180, 4294901760
    %v698 = vsub.f32 %v180, %v697
    %699 = vmatpush.msra.mxu0 %v698
    %v700 = vand.u32 %v197, 4294901760
    %v701 = vsub.f32 %v197, %v700
    %702 = vmatmul.f32.gmra.mxu0 %v701
    %v703 = vpop.f32.mrf.mxu0
    %v704 = vadd.f32 %v654, %v703
    %v705 = vand.u32 %v200, 4294901760
    %v706 = vsub.f32 %v200, %v705
    %707 = vmatmul.f32.gmra.mxu0 %v706
    %v708 = vpop.f32.mrf.mxu0
    %v709 = vadd.f32 %v658, %v708
    %v710 = vand.u32 %v203, 4294901760
    %v711 = vsub.f32 %v203, %v710
    %712 = vmatmul.f32.gmra.mxu0 %v711
    %v713 = vpop.f32.mrf.mxu0
    %v714 = vadd.f32 %v662, %v713
    %v715 = vand.u32 %v206, 4294901760
    %v716 = vsub.f32 %v206, %v715
    %717 = vmatmul.f32.gmra.mxu0 %v716
    %v718 = vpop.f32.mrf.mxu0
    %v719 = vadd.f32 %v666, %v718
    %720 = vdwg.mxu0
    %721 = vmatpush.msra.mxu0 0.0
    %722 = vmatpush.msra.mxu0 0.0
    %723 = vmatpush.msra.mxu0 0.0
    %724 = vmatpush.msra.mxu0 0.0
    %725 = vmatpush.msra.mxu0 0.0
    %726 = vmatpush.msra.mxu0 0.0
    %727 = vmatpush.msra.mxu0 0.0
    %728 = vmatpush.msra.mxu0 0.0
    %v729 = vand.u32 %v194, 4294901760
    %730 = vmatpush.msra.mxu0 %v729
    %v731 = vand.u32 %v192, 4294901760
    %732 = vmatpush.msra.mxu0 %v731
    %v733 = vand.u32 %v190, 4294901760
    %734 = vmatpush.msra.mxu0 %v733
    %v735 = vand.u32 %v188, 4294901760
    %736 = vmatpush.msra.mxu0 %v735
    %v737 = vand.u32 %v186, 4294901760
    %738 = vmatpush.msra.mxu0 %v737
    %v739 = vand.u32 %v184, 4294901760
    %740 = vmatpush.msra.mxu0 %v739
    %v741 = vand.u32 %v182, 4294901760
    %742 = vmatpush.msra.mxu0 %v741
    %v743 = vand.u32 %v180, 4294901760
    %744 = vmatpush.msra.mxu0 %v743
    %v745 = vand.u32 %v197, 4294901760
    %v746 = vsub.f32 %v197, %v745
    %v747 = vand.u32 %v746, 4294901760
    %748 = vmatmul.f32.gmra.mxu0 %v747
    %v749 = vpop.f32.mrf.mxu0
    %v750 = vadd.f32 %v704, %v749
    %v751 = vand.u32 %v200, 4294901760
    %v752 = vsub.f32 %v200, %v751
    %v753 = vand.u32 %v752, 4294901760
    %754 = vmatmul.f32.gmra.mxu0 %v753
    %v755 = vpop.f32.mrf.mxu0
    %v756 = vadd.f32 %v709, %v755
    %v757 = vand.u32 %v203, 4294901760
    %v758 = vsub.f32 %v203, %v757
    %v759 = vand.u32 %v758, 4294901760
    %760 = vmatmul.f32.gmra.mxu0 %v759
    %v761 = vpop.f32.mrf.mxu0
    %v762 = vadd.f32 %v714, %v761
    %v763 = vand.u32 %v206, 4294901760
    %v764 = vsub.f32 %v206, %v763
    %v765 = vand.u32 %v764, 4294901760
    %766 = vmatmul.f32.gmra.mxu0 %v765
    %v767 = vpop.f32.mrf.mxu0
    %v768 = vadd.f32 %v719, %v767
    %769 = vdwg.mxu0
    %770 = vmatpush.msra.mxu0 0.0
    %771 = vmatpush.msra.mxu0 0.0
    %772 = vmatpush.msra.mxu0 0.0
    %773 = vmatpush.msra.mxu0 0.0
    %774 = vmatpush.msra.mxu0 0.0
    %775 = vmatpush.msra.mxu0 0.0
    %776 = vmatpush.msra.mxu0 0.0
    %777 = vmatpush.msra.mxu0 0.0
    %v778 = vand.u32 %v194, 4294901760
    %v779 = vsub.f32 %v194, %v778
    %v780 = vand.u32 %v779, 4294901760
    %781 = vmatpush.msra.mxu0 %v780
    %v782 = vand.u32 %v192, 4294901760
    %v783 = vsub.f32 %v192, %v782
    %v784 = vand.u32 %v783, 4294901760
    %785 = vmatpush.msra.mxu0 %v784
    %v786 = vand.u32 %v190, 4294901760
    %v787 = vsub.f32 %v190, %v786
    %v788 = vand.u32 %v787, 4294901760
    %789 = vmatpush.msra.mxu0 %v788
    %v790 = vand.u32 %v188, 4294901760
    %v791 = vsub.f32 %v188, %v790
    %v792 = vand.u32 %v791, 4294901760
    %793 = vmatpush.msra.mxu0 %v792
    %v794 = vand.u32 %v186, 4294901760
    %v795 = vsub.f32 %v186, %v794
    %v796 = vand.u32 %v795, 4294901760
    %797 = vmatpush.msra.mxu0 %v796
    %v798 = vand.u32 %v184, 4294901760
    %v799 = vsub.f32 %v184, %v798
    %v800 = vand.u32 %v799, 4294901760
    %801 = vmatpush.msra.mxu0 %v800
    %v802 = vand.u32 %v182, 4294901760
    %v803 = vsub.f32 %v182, %v802
    %v804 = vand.u32 %v803, 4294901760
    %805 = vmatpush.msra.mxu0 %v804
    %v806 = vand.u32 %v180, 4294901760
    %v807 = vsub.f32 %v180, %v806
    %v808 = vand.u32 %v807, 4294901760
    %809 = vmatpush.msra.mxu0 %v808
    %v810 = vand.u32 %v197, 4294901760
    %811 = vmatmul.f32.gmra.mxu0 %v810
    %v812 = vpop.f32.mrf.mxu0
    %v813 = vadd.f32 %v750, %v812
    %v814 = vand.u32 %v200, 4294901760
    %815 = vmatmul.f32.gmra.mxu0 %v814
    %v816 = vpop.f32.mrf.mxu0
    %v817 = vadd.f32 %v756, %v816
    %v818 = vand.u32 %v203, 4294901760
    %819 = vmatmul.f32.gmra.mxu0 %v818
    %v820 = vpop.f32.mrf.mxu0
    %v821 = vadd.f32 %v762, %v820
    %v822 = vand.u32 %v206, 4294901760
    %823 = vmatmul.f32.gmra.mxu0 %v822
    %v824 = vpop.f32.mrf.mxu0
    %v825 = vadd.f32 %v768, %v824
    %826 = vdwg.mxu0
    %827 = vmatpush.msra.mxu0 0.0
    %828 = vmatpush.msra.mxu0 0.0
    %829 = vmatpush.msra.mxu0 0.0
    %830 = vmatpush.msra.mxu0 0.0
    %831 = vmatpush.msra.mxu0 0.0
    %832 = vmatpush.msra.mxu0 0.0
    %833 = vmatpush.msra.mxu0 0.0
    %834 = vmatpush.msra.mxu0 0.0
    %v835 = vand.u32 %v194, 4294901760
    %836 = vmatpush.msra.mxu0 %v835
    %v837 = vand.u32 %v192, 4294901760
    %838 = vmatpush.msra.mxu0 %v837
    %v839 = vand.u32 %v190, 4294901760
    %840 = vmatpush.msra.mxu0 %v839
    %v841 = vand.u32 %v188, 4294901760
    %842 = vmatpush.msra.mxu0 %v841
    %v843 = vand.u32 %v186, 4294901760
    %844 = vmatpush.msra.mxu0 %v843
    %v845 = vand.u32 %v184, 4294901760
    %846 = vmatpush.msra.mxu0 %v845
    %v847 = vand.u32 %v182, 4294901760
    %848 = vmatpush.msra.mxu0 %v847
    %v849 = vand.u32 %v180, 4294901760
    %850 = vmatpush.msra.mxu0 %v849
    %v851 = vand.u32 %v197, 4294901760
    %852 = vmatmul.f32.gmra.mxu0 %v851
    %v853 = vpop.f32.mrf.mxu0
    %v854 = vadd.f32 %v813, %v853
    %v855 = vand.u32 %v200, 4294901760
    %856 = vmatmul.f32.gmra.mxu0 %v855
    %v857 = vpop.f32.mrf.mxu0
    %v858 = vadd.f32 %v817, %v857
    %v859 = vand.u32 %v203, 4294901760
    %860 = vmatmul.f32.gmra.mxu0 %v859
    %v861 = vpop.f32.mrf.mxu0
    %v862 = vadd.f32 %v821, %v861
    %v863 = vand.u32 %v206, 4294901760
    %864 = vmatmul.f32.gmra.mxu0 %v863
    %v865 = vpop.f32.mrf.mxu0
    %v866 = vadd.f32 %v825, %v865
    %867 = vdwg.mxu0
    %v868 = vld [vmem:[%s1] sm:$0xff]
    %v869 = vld [vmem:[%s1 + $0x8] sm:$0xff]
    %v870 = vld [vmem:[%s1 + $0x10] sm:$0xff]
    %v871 = vld [vmem:[%s1 + $0x18] sm:$0xff]
    %v872 = vld [vmem:[%s1 + $0x20] sm:$0xff]
    %v873 = vld [vmem:[%s1 + $0x28] sm:$0xff]
    %v874 = vld [vmem:[%s1 + $0x30] sm:$0xff]
    %v875 = vld [vmem:[%s1 + $0x38] sm:$0xff]
    %v876 = vld [vmem:[%s1 + $0x40] sm:$0xf]
    %vm877 = vcmask 261120
    %v879 = vsel %vm877, %v868, 0
    %v882 = vsel %vm877, %v869, 0
    %v885 = vsel %vm877, %v870, 0
    %v888 = vsel %vm877, %v871, 0
    %v891 = vsel %vm877, %v872, 0
    %v894 = vsel %vm877, %v873, 0
    %v897 = vsel %vm877, %v874, 0
    %v900 = vsel %vm877, %v875, 0
    %v903 = vsel %vm877, %v876, 0
    %905 = vmatpush.msra.mxu0 0.0
    %906 = vmatpush.msra.mxu0 0.0
    %907 = vmatpush.msra.mxu0 0.0
    %908 = vmatpush.msra.mxu0 0.0
    %909 = vmatpush.msra.mxu0 0.0
    %910 = vmatpush.msra.mxu0 0.0
    %911 = vmatpush.msra.mxu0 0.0
    %912 = vmatpush.msra.mxu0 0.0
    %913 = vmatpush.msra.mxu0 0.0
    %914 = vmatpush.msra.mxu0 0.0
    %915 = vmatpush.msra.mxu0 0.0
    %916 = vmatpush.msra.mxu0 0.0
    %v917 = vand.u32 %v536, 4294901760
    %918 = vmatpush.msra.mxu0 %v917
    %v919 = vand.u32 %v532, 4294901760
    %920 = vmatpush.msra.mxu0 %v919
    %v921 = vand.u32 %v528, 4294901760
    %922 = vmatpush.msra.mxu0 %v921
    %v923 = vand.u32 %v524, 4294901760
    %924 = vmatpush.msra.mxu0 %v923
    %v925 = vand.u32 %v879, 4294901760
    %v926 = vsub.f32 %v879, %v925
    %v927 = vand.u32 %v926, 4294901760
    %v928 = vsub.f32 %v926, %v927
    %v929 = vand.u32 %v928, 4294901760
    %930 = vmatmul.f32.gmra.mxu0 %v929
    %v931 = vpop.f32.mrf.mxu0
    %v932 = vadd.f32 0.0, %v931
    %v933 = vand.u32 %v882, 4294901760
    %v934 = vsub.f32 %v882, %v933
    %v935 = vand.u32 %v934, 4294901760
    %v936 = vsub.f32 %v934, %v935
    %v937 = vand.u32 %v936, 4294901760
    %938 = vmatmul.f32.gmra.mxu0 %v937
    %v939 = vpop.f32.mrf.mxu0
    %v940 = vadd.f32 0.0, %v939
    %v941 = vand.u32 %v885, 4294901760
    %v942 = vsub.f32 %v885, %v941
    %v943 = vand.u32 %v942, 4294901760
    %v944 = vsub.f32 %v942, %v943
    %v945 = vand.u32 %v944, 4294901760
    %946 = vmatmul.f32.gmra.mxu0 %v945
    %v947 = vpop.f32.mrf.mxu0
    %v948 = vadd.f32 0.0, %v947
    %v949 = vand.u32 %v888, 4294901760
    %v950 = vsub.f32 %v888, %v949
    %v951 = vand.u32 %v950, 4294901760
    %v952 = vsub.f32 %v950, %v951
    %v953 = vand.u32 %v952, 4294901760
    %954 = vmatmul.f32.gmra.mxu0 %v953
    %v955 = vpop.f32.mrf.mxu0
    %v956 = vadd.f32 0.0, %v955
    %v957 = vand.u32 %v891, 4294901760
    %v958 = vsub.f32 %v891, %v957
    %v959 = vand.u32 %v958, 4294901760
    %v960 = vsub.f32 %v958, %v959
    %v961 = vand.u32 %v960, 4294901760
    %962 = vmatmul.f32.gmra.mxu0 %v961
    %v963 = vpop.f32.mrf.mxu0
    %v964 = vadd.f32 0.0, %v963
    %v965 = vand.u32 %v894, 4294901760
    %v966 = vsub.f32 %v894, %v965
    %v967 = vand.u32 %v966, 4294901760
    %v968 = vsub.f32 %v966, %v967
    %v969 = vand.u32 %v968, 4294901760
    %970 = vmatmul.f32.gmra.mxu0 %v969
    %v971 = vpop.f32.mrf.mxu0
    %v972 = vadd.f32 0.0, %v971
    %v973 = vand.u32 %v897, 4294901760
    %v974 = vsub.f32 %v897, %v973
    %v975 = vand.u32 %v974, 4294901760
    %v976 = vsub.f32 %v974, %v975
    %v977 = vand.u32 %v976, 4294901760
    %978 = vmatmul.f32.gmra.mxu0 %v977
    %v979 = vpop.f32.mrf.mxu0
    %v980 = vadd.f32 0.0, %v979
    %v981 = vand.u32 %v900, 4294901760
    %v982 = vsub.f32 %v900, %v981
    %v983 = vand.u32 %v982, 4294901760
    %v984 = vsub.f32 %v982, %v983
    %v985 = vand.u32 %v984, 4294901760
    %986 = vmatmul.f32.gmra.mxu0 %v985
    %v987 = vpop.f32.mrf.mxu0
    %v988 = vadd.f32 0.0, %v987
    %v989 = vand.u32 %v903, 4294901760
    %v990 = vsub.f32 %v903, %v989
    %v991 = vand.u32 %v990, 4294901760
    %v992 = vsub.f32 %v990, %v991
    %v993 = vand.u32 %v992, 4294901760
    %994 = vmatmul.f32.gmra.mxu0 %v993
    %v995 = vpop.f32.mrf.mxu0
    %v996 = vadd.f32 0.0, %v995
    %997 = vdwg.mxu0
    %998 = vmatpush.msra.mxu0 0.0
    %999 = vmatpush.msra.mxu0 0.0
    %1000 = vmatpush.msra.mxu0 0.0
    %1001 = vmatpush.msra.mxu0 0.0
    %1002 = vmatpush.msra.mxu0 0.0
    %1003 = vmatpush.msra.mxu0 0.0
    %1004 = vmatpush.msra.mxu0 0.0
    %1005 = vmatpush.msra.mxu0 0.0
    %1006 = vmatpush.msra.mxu0 0.0
    %1007 = vmatpush.msra.mxu0 0.0
    %1008 = vmatpush.msra.mxu0 0.0
    %1009 = vmatpush.msra.mxu0 0.0
    %v1010 = vand.u32 %v536, 4294901760
    %v1011 = vsub.f32 %v536, %v1010
    %v1012 = vand.u32 %v1011, 4294901760
    %v1013 = vsub.f32 %v1011, %v1012
    %v1014 = vand.u32 %v1013, 4294901760
    %1015 = vmatpush.msra.mxu0 %v1014
    %v1016 = vand.u32 %v532, 4294901760
    %v1017 = vsub.f32 %v532, %v1016
    %v1018 = vand.u32 %v1017, 4294901760
    %v1019 = vsub.f32 %v1017, %v1018
    %v1020 = vand.u32 %v1019, 4294901760
    %1021 = vmatpush.msra.mxu0 %v1020
    %v1022 = vand.u32 %v528, 4294901760
    %v1023 = vsub.f32 %v528, %v1022
    %v1024 = vand.u32 %v1023, 4294901760
    %v1025 = vsub.f32 %v1023, %v1024
    %v1026 = vand.u32 %v1025, 4294901760
    %1027 = vmatpush.msra.mxu0 %v1026
    %v1028 = vand.u32 %v524, 4294901760
    %v1029 = vsub.f32 %v524, %v1028
    %v1030 = vand.u32 %v1029, 4294901760
    %v1031 = vsub.f32 %v1029, %v1030
    %v1032 = vand.u32 %v1031, 4294901760
    %1033 = vmatpush.msra.mxu0 %v1032
    %v1034 = vand.u32 %v879, 4294901760
    %1035 = vmatmul.f32.gmra.mxu0 %v1034
    %v1036 = vpop.f32.mrf.mxu0
    %v1037 = vadd.f32 %v932, %v1036
    %v1038 = vand.u32 %v882, 4294901760
    %1039 = vmatmul.f32.gmra.mxu0 %v1038
    %v1040 = vpop.f32.mrf.mxu0
    %v1041 = vadd.f32 %v940, %v1040
    %v1042 = vand.u32 %v885, 4294901760
    %1043 = vmatmul.f32.gmra.mxu0 %v1042
    %v1044 = vpop.f32.mrf.mxu0
    %v1045 = vadd.f32 %v948, %v1044
    %v1046 = vand.u32 %v888, 4294901760
    %1047 = vmatmul.f32.gmra.mxu0 %v1046
    %v1048 = vpop.f32.mrf.mxu0
    %v1049 = vadd.f32 %v956, %v1048
    %v1050 = vand.u32 %v891, 4294901760
    %1051 = vmatmul.f32.gmra.mxu0 %v1050
    %v1052 = vpop.f32.mrf.mxu0
    %v1053 = vadd.f32 %v964, %v1052
    %v1054 = vand.u32 %v894, 4294901760
    %1055 = vmatmul.f32.gmra.mxu0 %v1054
    %v1056 = vpop.f32.mrf.mxu0
    %v1057 = vadd.f32 %v972, %v1056
    %v1058 = vand.u32 %v897, 4294901760
    %1059 = vmatmul.f32.gmra.mxu0 %v1058
    %v1060 = vpop.f32.mrf.mxu0
    %v1061 = vadd.f32 %v980, %v1060
    %v1062 = vand.u32 %v900, 4294901760
    %1063 = vmatmul.f32.gmra.mxu0 %v1062
    %v1064 = vpop.f32.mrf.mxu0
    %v1065 = vadd.f32 %v988, %v1064
    %v1066 = vand.u32 %v903, 4294901760
    %1067 = vmatmul.f32.gmra.mxu0 %v1066
    %v1068 = vpop.f32.mrf.mxu0
    %v1069 = vadd.f32 %v996, %v1068
    %1070 = vdwg.mxu0
    %1071 = vmatpush.msra.mxu0 0.0
    %1072 = vmatpush.msra.mxu0 0.0
    %1073 = vmatpush.msra.mxu0 0.0
    %1074 = vmatpush.msra.mxu0 0.0
    %1075 = vmatpush.msra.mxu0 0.0
    %1076 = vmatpush.msra.mxu0 0.0
    %1077 = vmatpush.msra.mxu0 0.0
    %1078 = vmatpush.msra.mxu0 0.0
    %1079 = vmatpush.msra.mxu0 0.0
    %1080 = vmatpush.msra.mxu0 0.0
    %1081 = vmatpush.msra.mxu0 0.0
    %1082 = vmatpush.msra.mxu0 0.0
    %v1083 = vand.u32 %v536, 4294901760
    %v1084 = vsub.f32 %v536, %v1083
    %1085 = vmatpush.msra.mxu0 %v1084
    %v1086 = vand.u32 %v532, 4294901760
    %v1087 = vsub.f32 %v532, %v1086
    %1088 = vmatpush.msra.mxu0 %v1087
    %v1089 = vand.u32 %v528, 4294901760
    %v1090 = vsub.f32 %v528, %v1089
    %1091 = vmatpush.msra.mxu0 %v1090
    %v1092 = vand.u32 %v524, 4294901760
    %v1093 = vsub.f32 %v524, %v1092
    %1094 = vmatpush.msra.mxu0 %v1093
    %v1095 = vand.u32 %v879, 4294901760
    %v1096 = vsub.f32 %v879, %v1095
    %1097 = vmatmul.f32.gmra.mxu0 %v1096
    %v1098 = vpop.f32.mrf.mxu0
    %v1099 = vadd.f32 %v1037, %v1098
    %v1100 = vand.u32 %v882, 4294901760
    %v1101 = vsub.f32 %v882, %v1100
    %1102 = vmatmul.f32.gmra.mxu0 %v1101
    %v1103 = vpop.f32.mrf.mxu0
    %v1104 = vadd.f32 %v1041, %v1103
    %v1105 = vand.u32 %v885, 4294901760
    %v1106 = vsub.f32 %v885, %v1105
    %1107 = vmatmul.f32.gmra.mxu0 %v1106
    %v1108 = vpop.f32.mrf.mxu0
    %v1109 = vadd.f32 %v1045, %v1108
    %v1110 = vand.u32 %v888, 4294901760
    %v1111 = vsub.f32 %v888, %v1110
    %1112 = vmatmul.f32.gmra.mxu0 %v1111
    %v1113 = vpop.f32.mrf.mxu0
    %v1114 = vadd.f32 %v1049, %v1113
    %v1115 = vand.u32 %v891, 4294901760
    %v1116 = vsub.f32 %v891, %v1115
    %1117 = vmatmul.f32.gmra.mxu0 %v1116
    %v1118 = vpop.f32.mrf.mxu0
    %v1119 = vadd.f32 %v1053, %v1118
    %v1120 = vand.u32 %v894, 4294901760
    %v1121 = vsub.f32 %v894, %v1120
    %1122 = vmatmul.f32.gmra.mxu0 %v1121
    %v1123 = vpop.f32.mrf.mxu0
    %v1124 = vadd.f32 %v1057, %v1123
    %v1125 = vand.u32 %v897, 4294901760
    %v1126 = vsub.f32 %v897, %v1125
    %1127 = vmatmul.f32.gmra.mxu0 %v1126
    %v1128 = vpop.f32.mrf.mxu0
    %v1129 = vadd.f32 %v1061, %v1128
    %v1130 = vand.u32 %v900, 4294901760
    %v1131 = vsub.f32 %v900, %v1130
    %1132 = vmatmul.f32.gmra.mxu0 %v1131
    %v1133 = vpop.f32.mrf.mxu0
    %v1134 = vadd.f32 %v1065, %v1133
    %v1135 = vand.u32 %v903, 4294901760
    %v1136 = vsub.f32 %v903, %v1135
    %1137 = vmatmul.f32.gmra.mxu0 %v1136
    %v1138 = vpop.f32.mrf.mxu0
    %v1139 = vadd.f32 %v1069, %v1138
    %1140 = vdwg.mxu0
    %1141 = vmatpush.msra.mxu0 0.0
    %1142 = vmatpush.msra.mxu0 0.0
    %1143 = vmatpush.msra.mxu0 0.0
    %1144 = vmatpush.msra.mxu0 0.0
    %1145 = vmatpush.msra.mxu0 0.0
    %1146 = vmatpush.msra.mxu0 0.0
    %1147 = vmatpush.msra.mxu0 0.0
    %1148 = vmatpush.msra.mxu0 0.0
    %1149 = vmatpush.msra.mxu0 0.0
    %1150 = vmatpush.msra.mxu0 0.0
    %1151 = vmatpush.msra.mxu0 0.0
    %1152 = vmatpush.msra.mxu0 0.0
    %v1153 = vand.u32 %v536, 4294901760
    %1154 = vmatpush.msra.mxu0 %v1153
    %v1155 = vand.u32 %v532, 4294901760
    %1156 = vmatpush.msra.mxu0 %v1155
    %v1157 = vand.u32 %v528, 4294901760
    %1158 = vmatpush.msra.mxu0 %v1157
    %v1159 = vand.u32 %v524, 4294901760
    %1160 = vmatpush.msra.mxu0 %v1159
    %v1161 = vand.u32 %v879, 4294901760
    %v1162 = vsub.f32 %v879, %v1161
    %v1163 = vand.u32 %v1162, 4294901760
    %1164 = vmatmul.f32.gmra.mxu0 %v1163
    %v1165 = vpop.f32.mrf.mxu0
    %v1166 = vadd.f32 %v1099, %v1165
    %v1167 = vand.u32 %v882, 4294901760
    %v1168 = vsub.f32 %v882, %v1167
    %v1169 = vand.u32 %v1168, 4294901760
    %1170 = vmatmul.f32.gmra.mxu0 %v1169
    %v1171 = vpop.f32.mrf.mxu0
    %v1172 = vadd.f32 %v1104, %v1171
    %v1173 = vand.u32 %v885, 4294901760
    %v1174 = vsub.f32 %v885, %v1173
    %v1175 = vand.u32 %v1174, 4294901760
    %1176 = vmatmul.f32.gmra.mxu0 %v1175
    %v1177 = vpop.f32.mrf.mxu0
    %v1178 = vadd.f32 %v1109, %v1177
    %v1179 = vand.u32 %v888, 4294901760
    %v1180 = vsub.f32 %v888, %v1179
    %v1181 = vand.u32 %v1180, 4294901760
    %1182 = vmatmul.f32.gmra.mxu0 %v1181
    %v1183 = vpop.f32.mrf.mxu0
    %v1184 = vadd.f32 %v1114, %v1183
    %v1185 = vand.u32 %v891, 4294901760
    %v1186 = vsub.f32 %v891, %v1185
    %v1187 = vand.u32 %v1186, 4294901760
    %1188 = vmatmul.f32.gmra.mxu0 %v1187
    %v1189 = vpop.f32.mrf.mxu0
    %v1190 = vadd.f32 %v1119, %v1189
    %v1191 = vand.u32 %v894, 4294901760
    %v1192 = vsub.f32 %v894, %v1191
    %v1193 = vand.u32 %v1192, 4294901760
    %1194 = vmatmul.f32.gmra.mxu0 %v1193
    %v1195 = vpop.f32.mrf.mxu0
    %v1196 = vadd.f32 %v1124, %v1195
    %v1197 = vand.u32 %v897, 4294901760
    %v1198 = vsub.f32 %v897, %v1197
    %v1199 = vand.u32 %v1198, 4294901760
    %1200 = vmatmul.f32.gmra.mxu0 %v1199
    %v1201 = vpop.f32.mrf.mxu0
    %v1202 = vadd.f32 %v1129, %v1201
    %v1203 = vand.u32 %v900, 4294901760
    %v1204 = vsub.f32 %v900, %v1203
    %v1205 = vand.u32 %v1204, 4294901760
    %1206 = vmatmul.f32.gmra.mxu0 %v1205
    %v1207 = vpop.f32.mrf.mxu0
    %v1208 = vadd.f32 %v1134, %v1207
    %v1209 = vand.u32 %v903, 4294901760
    %v1210 = vsub.f32 %v903, %v1209
    %v1211 = vand.u32 %v1210, 4294901760
    %1212 = vmatmul.f32.gmra.mxu0 %v1211
    %v1213 = vpop.f32.mrf.mxu0
    %v1214 = vadd.f32 %v1139, %v1213
    %1215 = vdwg.mxu0
    %1216 = vmatpush.msra.mxu0 0.0
    %1217 = vmatpush.msra.mxu0 0.0
    %1218 = vmatpush.msra.mxu0 0.0
    %1219 = vmatpush.msra.mxu0 0.0
    %1220 = vmatpush.msra.mxu0 0.0
    %1221 = vmatpush.msra.mxu0 0.0
    %1222 = vmatpush.msra.mxu0 0.0
    %1223 = vmatpush.msra.mxu0 0.0
    %1224 = vmatpush.msra.mxu0 0.0
    %1225 = vmatpush.msra.mxu0 0.0
    %1226 = vmatpush.msra.mxu0 0.0
    %1227 = vmatpush.msra.mxu0 0.0
    %v1228 = vand.u32 %v536, 4294901760
    %v1229 = vsub.f32 %v536, %v1228
    %v1230 = vand.u32 %v1229, 4294901760
    %1231 = vmatpush.msra.mxu0 %v1230
    %v1232 = vand.u32 %v532, 4294901760
    %v1233 = vsub.f32 %v532, %v1232
    %v1234 = vand.u32 %v1233, 4294901760
    %1235 = vmatpush.msra.mxu0 %v1234
    %v1236 = vand.u32 %v528, 4294901760
    %v1237 = vsub.f32 %v528, %v1236
    %v1238 = vand.u32 %v1237, 4294901760
    %1239 = vmatpush.msra.mxu0 %v1238
    %v1240 = vand.u32 %v524, 4294901760
    %v1241 = vsub.f32 %v524, %v1240
    %v1242 = vand.u32 %v1241, 4294901760
    %1243 = vmatpush.msra.mxu0 %v1242
    %v1244 = vand.u32 %v879, 4294901760
    %1245 = vmatmul.f32.gmra.mxu0 %v1244
    %v1246 = vpop.f32.mrf.mxu0
    %v1247 = vadd.f32 %v1166, %v1246
    %v1248 = vand.u32 %v882, 4294901760
    %1249 = vmatmul.f32.gmra.mxu0 %v1248
    %v1250 = vpop.f32.mrf.mxu0
    %v1251 = vadd.f32 %v1172, %v1250
    %v1252 = vand.u32 %v885, 4294901760
    %1253 = vmatmul.f32.gmra.mxu0 %v1252
    %v1254 = vpop.f32.mrf.mxu0
    %v1255 = vadd.f32 %v1178, %v1254
    %v1256 = vand.u32 %v888, 4294901760
    %1257 = vmatmul.f32.gmra.mxu0 %v1256
    %v1258 = vpop.f32.mrf.mxu0
    %v1259 = vadd.f32 %v1184, %v1258
    %v1260 = vand.u32 %v891, 4294901760
    %1261 = vmatmul.f32.gmra.mxu0 %v1260
    %v1262 = vpop.f32.mrf.mxu0
    %v1263 = vadd.f32 %v1190, %v1262
    %v1264 = vand.u32 %v894, 4294901760
    %1265 = vmatmul.f32.gmra.mxu0 %v1264
    %v1266 = vpop.f32.mrf.mxu0
    %v1267 = vadd.f32 %v1196, %v1266
    %v1268 = vand.u32 %v897, 4294901760
    %1269 = vmatmul.f32.gmra.mxu0 %v1268
    %v1270 = vpop.f32.mrf.mxu0
    %v1271 = vadd.f32 %v1202, %v1270
    %v1272 = vand.u32 %v900, 4294901760
    %1273 = vmatmul.f32.gmra.mxu0 %v1272
    %v1274 = vpop.f32.mrf.mxu0
    %v1275 = vadd.f32 %v1208, %v1274
    %v1276 = vand.u32 %v903, 4294901760
    %1277 = vmatmul.f32.gmra.mxu0 %v1276
    %v1278 = vpop.f32.mrf.mxu0
    %v1279 = vadd.f32 %v1214, %v1278
    %1280 = vdwg.mxu0
    %1281 = vmatpush.msra.mxu0 0.0
    %1282 = vmatpush.msra.mxu0 0.0
    %1283 = vmatpush.msra.mxu0 0.0
    %1284 = vmatpush.msra.mxu0 0.0
    %1285 = vmatpush.msra.mxu0 0.0
    %1286 = vmatpush.msra.mxu0 0.0
    %1287 = vmatpush.msra.mxu0 0.0
    %1288 = vmatpush.msra.mxu0 0.0
    %1289 = vmatpush.msra.mxu0 0.0
    %1290 = vmatpush.msra.mxu0 0.0
    %1291 = vmatpush.msra.mxu0 0.0
    %1292 = vmatpush.msra.mxu0 0.0
    %v1293 = vand.u32 %v536, 4294901760
    %1294 = vmatpush.msra.mxu0 %v1293
    %v1295 = vand.u32 %v532, 4294901760
    %1296 = vmatpush.msra.mxu0 %v1295
    %v1297 = vand.u32 %v528, 4294901760
    %1298 = vmatpush.msra.mxu0 %v1297
    %v1299 = vand.u32 %v524, 4294901760
    %1300 = vmatpush.msra.mxu0 %v1299
    %v1301 = vand.u32 %v879, 4294901760
    %1302 = vmatmul.f32.gmra.mxu0 %v1301
    %v1303 = vpop.f32.mrf.mxu0
    %v1304 = vadd.f32 %v1247, %v1303
    %v1305 = vand.u32 %v882, 4294901760
    %1306 = vmatmul.f32.gmra.mxu0 %v1305
    %v1307 = vpop.f32.mrf.mxu0
    %v1308 = vadd.f32 %v1251, %v1307
    %v1309 = vand.u32 %v885, 4294901760
    %1310 = vmatmul.f32.gmra.mxu0 %v1309
    %v1311 = vpop.f32.mrf.mxu0
    %v1312 = vadd.f32 %v1255, %v1311
    %v1313 = vand.u32 %v888, 4294901760
    %1314 = vmatmul.f32.gmra.mxu0 %v1313
    %v1315 = vpop.f32.mrf.mxu0
    %v1316 = vadd.f32 %v1259, %v1315
    %v1317 = vand.u32 %v891, 4294901760
    %1318 = vmatmul.f32.gmra.mxu0 %v1317
    %v1319 = vpop.f32.mrf.mxu0
    %v1320 = vadd.f32 %v1263, %v1319
    %v1321 = vand.u32 %v894, 4294901760
    %1322 = vmatmul.f32.gmra.mxu0 %v1321
    %v1323 = vpop.f32.mrf.mxu0
    %v1324 = vadd.f32 %v1267, %v1323
    %v1325 = vand.u32 %v897, 4294901760
    %1326 = vmatmul.f32.gmra.mxu0 %v1325
    %v1327 = vpop.f32.mrf.mxu0
    %v1328 = vadd.f32 %v1271, %v1327
    %v1329 = vand.u32 %v900, 4294901760
    %1330 = vmatmul.f32.gmra.mxu0 %v1329
    %v1331 = vpop.f32.mrf.mxu0
    %v1332 = vadd.f32 %v1275, %v1331
    %v1333 = vand.u32 %v903, 4294901760
    %1334 = vmatmul.f32.gmra.mxu0 %v1333
    %v1335 = vpop.f32.mrf.mxu0
    %v1336 = vadd.f32 %v1279, %v1335
    %1337 = vdwg.mxu0
    %1338 = vmatpush.msra.mxu0 0.0
    %1339 = vmatpush.msra.mxu0 0.0
    %1340 = vmatpush.msra.mxu0 0.0
    %1341 = vmatpush.msra.mxu0 0.0
    %1342 = vmatpush.msra.mxu0 0.0
    %1343 = vmatpush.msra.mxu0 0.0
    %1344 = vmatpush.msra.mxu0 0.0
    %1345 = vmatpush.msra.mxu0 0.0
    %1346 = vmatpush.msra.mxu0 0.0
    %1347 = vmatpush.msra.mxu0 0.0
    %1348 = vmatpush.msra.mxu0 0.0
    %1349 = vmatpush.msra.mxu0 0.0
    %v1350 = vand.u32 %v866, 4294901760
    %1351 = vmatpush.msra.mxu0 %v1350
    %v1352 = vand.u32 %v862, 4294901760
    %1353 = vmatpush.msra.mxu0 %v1352
    %v1354 = vand.u32 %v858, 4294901760
    %1355 = vmatpush.msra.mxu0 %v1354
    %v1356 = vand.u32 %v854, 4294901760
    %1357 = vmatpush.msra.mxu0 %v1356
    %v1358 = vand.u32 %v879, 4294901760
    %v1359 = vsub.f32 %v879, %v1358
    %v1360 = vand.u32 %v1359, 4294901760
    %v1361 = vsub.f32 %v1359, %v1360
    %v1362 = vand.u32 %v1361, 4294901760
    %1363 = vmatmul.f32.gmra.mxu0 %v1362
    %v1364 = vpop.f32.mrf.mxu0
    %v1365 = vadd.f32 0.0, %v1364
    %v1366 = vand.u32 %v882, 4294901760
    %v1367 = vsub.f32 %v882, %v1366
    %v1368 = vand.u32 %v1367, 4294901760
    %v1369 = vsub.f32 %v1367, %v1368
    %v1370 = vand.u32 %v1369, 4294901760
    %1371 = vmatmul.f32.gmra.mxu0 %v1370
    %v1372 = vpop.f32.mrf.mxu0
    %v1373 = vadd.f32 0.0, %v1372
    %v1374 = vand.u32 %v885, 4294901760
    %v1375 = vsub.f32 %v885, %v1374
    %v1376 = vand.u32 %v1375, 4294901760
    %v1377 = vsub.f32 %v1375, %v1376
    %v1378 = vand.u32 %v1377, 4294901760
    %1379 = vmatmul.f32.gmra.mxu0 %v1378
    %v1380 = vpop.f32.mrf.mxu0
    %v1381 = vadd.f32 0.0, %v1380
    %v1382 = vand.u32 %v888, 4294901760
    %v1383 = vsub.f32 %v888, %v1382
    %v1384 = vand.u32 %v1383, 4294901760
    %v1385 = vsub.f32 %v1383, %v1384
    %v1386 = vand.u32 %v1385, 4294901760
    %1387 = vmatmul.f32.gmra.mxu0 %v1386
    %v1388 = vpop.f32.mrf.mxu0
    %v1389 = vadd.f32 0.0, %v1388
    %v1390 = vand.u32 %v891, 4294901760
    %v1391 = vsub.f32 %v891, %v1390
    %v1392 = vand.u32 %v1391, 4294901760
    %v1393 = vsub.f32 %v1391, %v1392
    %v1394 = vand.u32 %v1393, 4294901760
    %1395 = vmatmul.f32.gmra.mxu0 %v1394
    %v1396 = vpop.f32.mrf.mxu0
    %v1397 = vadd.f32 0.0, %v1396
    %v1398 = vand.u32 %v894, 4294901760
    %v1399 = vsub.f32 %v894, %v1398
    %v1400 = vand.u32 %v1399, 4294901760
    %v1401 = vsub.f32 %v1399, %v1400
    %v1402 = vand.u32 %v1401, 4294901760
    %1403 = vmatmul.f32.gmra.mxu0 %v1402
    %v1404 = vpop.f32.mrf.mxu0
    %v1405 = vadd.f32 0.0, %v1404
    %v1406 = vand.u32 %v897, 4294901760
    %v1407 = vsub.f32 %v897, %v1406
    %v1408 = vand.u32 %v1407, 4294901760
    %v1409 = vsub.f32 %v1407, %v1408
    %v1410 = vand.u32 %v1409, 4294901760
    %1411 = vmatmul.f32.gmra.mxu0 %v1410
    %v1412 = vpop.f32.mrf.mxu0
    %v1413 = vadd.f32 0.0, %v1412
    %v1414 = vand.u32 %v900, 4294901760
    %v1415 = vsub.f32 %v900, %v1414
    %v1416 = vand.u32 %v1415, 4294901760
    %v1417 = vsub.f32 %v1415, %v1416
    %v1418 = vand.u32 %v1417, 4294901760
    %1419 = vmatmul.f32.gmra.mxu0 %v1418
    %v1420 = vpop.f32.mrf.mxu0
    %v1421 = vadd.f32 0.0, %v1420
    %v1422 = vand.u32 %v903, 4294901760
    %v1423 = vsub.f32 %v903, %v1422
    %v1424 = vand.u32 %v1423, 4294901760
    %v1425 = vsub.f32 %v1423, %v1424
    %v1426 = vand.u32 %v1425, 4294901760
    %1427 = vmatmul.f32.gmra.mxu0 %v1426
    %v1428 = vpop.f32.mrf.mxu0
    %v1429 = vadd.f32 0.0, %v1428
    %1430 = vdwg.mxu0
    %1431 = vmatpush.msra.mxu0 0.0
    %1432 = vmatpush.msra.mxu0 0.0
    %1433 = vmatpush.msra.mxu0 0.0
    %1434 = vmatpush.msra.mxu0 0.0
    %1435 = vmatpush.msra.mxu0 0.0
    %1436 = vmatpush.msra.mxu0 0.0
    %1437 = vmatpush.msra.mxu0 0.0
    %1438 = vmatpush.msra.mxu0 0.0
    %1439 = vmatpush.msra.mxu0 0.0
    %1440 = vmatpush.msra.mxu0 0.0
    %1441 = vmatpush.msra.mxu0 0.0
    %1442 = vmatpush.msra.mxu0 0.0
    %v1443 = vand.u32 %v866, 4294901760
    %v1444 = vsub.f32 %v866, %v1443
    %v1445 = vand.u32 %v1444, 4294901760
    %v1446 = vsub.f32 %v1444, %v1445
    %v1447 = vand.u32 %v1446, 4294901760
    %1448 = vmatpush.msra.mxu0 %v1447
    %v1449 = vand.u32 %v862, 4294901760
    %v1450 = vsub.f32 %v862, %v1449
    %v1451 = vand.u32 %v1450, 4294901760
    %v1452 = vsub.f32 %v1450, %v1451
    %v1453 = vand.u32 %v1452, 4294901760
    %1454 = vmatpush.msra.mxu0 %v1453
    %v1455 = vand.u32 %v858, 4294901760
    %v1456 = vsub.f32 %v858, %v1455
    %v1457 = vand.u32 %v1456, 4294901760
    %v1458 = vsub.f32 %v1456, %v1457
    %v1459 = vand.u32 %v1458, 4294901760
    %1460 = vmatpush.msra.mxu0 %v1459
    %v1461 = vand.u32 %v854, 4294901760
    %v1462 = vsub.f32 %v854, %v1461
    %v1463 = vand.u32 %v1462, 4294901760
    %v1464 = vsub.f32 %v1462, %v1463
    %v1465 = vand.u32 %v1464, 4294901760
    %1466 = vmatpush.msra.mxu0 %v1465
    %v1467 = vand.u32 %v879, 4294901760
    %1468 = vmatmul.f32.gmra.mxu0 %v1467
    %v1469 = vpop.f32.mrf.mxu0
    %v1470 = vadd.f32 %v1365, %v1469
    %v1471 = vand.u32 %v882, 4294901760
    %1472 = vmatmul.f32.gmra.mxu0 %v1471
    %v1473 = vpop.f32.mrf.mxu0
    %v1474 = vadd.f32 %v1373, %v1473
    %v1475 = vand.u32 %v885, 4294901760
    %1476 = vmatmul.f32.gmra.mxu0 %v1475
    %v1477 = vpop.f32.mrf.mxu0
    %v1478 = vadd.f32 %v1381, %v1477
    %v1479 = vand.u32 %v888, 4294901760
    %1480 = vmatmul.f32.gmra.mxu0 %v1479
    %v1481 = vpop.f32.mrf.mxu0
    %v1482 = vadd.f32 %v1389, %v1481
    %v1483 = vand.u32 %v891, 4294901760
    %1484 = vmatmul.f32.gmra.mxu0 %v1483
    %v1485 = vpop.f32.mrf.mxu0
    %v1486 = vadd.f32 %v1397, %v1485
    %v1487 = vand.u32 %v894, 4294901760
    %1488 = vmatmul.f32.gmra.mxu0 %v1487
    %v1489 = vpop.f32.mrf.mxu0
    %v1490 = vadd.f32 %v1405, %v1489
    %v1491 = vand.u32 %v897, 4294901760
    %1492 = vmatmul.f32.gmra.mxu0 %v1491
    %v1493 = vpop.f32.mrf.mxu0
    %v1494 = vadd.f32 %v1413, %v1493
    %v1495 = vand.u32 %v900, 4294901760
    %1496 = vmatmul.f32.gmra.mxu0 %v1495
    %v1497 = vpop.f32.mrf.mxu0
    %v1498 = vadd.f32 %v1421, %v1497
    %v1499 = vand.u32 %v903, 4294901760
    %1500 = vmatmul.f32.gmra.mxu0 %v1499
    %v1501 = vpop.f32.mrf.mxu0
    %v1502 = vadd.f32 %v1429, %v1501
    %1503 = vdwg.mxu0
    %1504 = vmatpush.msra.mxu0 0.0
    %1505 = vmatpush.msra.mxu0 0.0
    %1506 = vmatpush.msra.mxu0 0.0
    %1507 = vmatpush.msra.mxu0 0.0
    %1508 = vmatpush.msra.mxu0 0.0
    %1509 = vmatpush.msra.mxu0 0.0
    %1510 = vmatpush.msra.mxu0 0.0
    %1511 = vmatpush.msra.mxu0 0.0
    %1512 = vmatpush.msra.mxu0 0.0
    %1513 = vmatpush.msra.mxu0 0.0
    %1514 = vmatpush.msra.mxu0 0.0
    %1515 = vmatpush.msra.mxu0 0.0
    %v1516 = vand.u32 %v866, 4294901760
    %v1517 = vsub.f32 %v866, %v1516
    %1518 = vmatpush.msra.mxu0 %v1517
    %v1519 = vand.u32 %v862, 4294901760
    %v1520 = vsub.f32 %v862, %v1519
    %1521 = vmatpush.msra.mxu0 %v1520
    %v1522 = vand.u32 %v858, 4294901760
    %v1523 = vsub.f32 %v858, %v1522
    %1524 = vmatpush.msra.mxu0 %v1523
    %v1525 = vand.u32 %v854, 4294901760
    %v1526 = vsub.f32 %v854, %v1525
    %1527 = vmatpush.msra.mxu0 %v1526
    %v1528 = vand.u32 %v879, 4294901760
    %v1529 = vsub.f32 %v879, %v1528
    %1530 = vmatmul.f32.gmra.mxu0 %v1529
    %v1531 = vpop.f32.mrf.mxu0
    %v1532 = vadd.f32 %v1470, %v1531
    %v1533 = vand.u32 %v882, 4294901760
    %v1534 = vsub.f32 %v882, %v1533
    %1535 = vmatmul.f32.gmra.mxu0 %v1534
    %v1536 = vpop.f32.mrf.mxu0
    %v1537 = vadd.f32 %v1474, %v1536
    %v1538 = vand.u32 %v885, 4294901760
    %v1539 = vsub.f32 %v885, %v1538
    %1540 = vmatmul.f32.gmra.mxu0 %v1539
    %v1541 = vpop.f32.mrf.mxu0
    %v1542 = vadd.f32 %v1478, %v1541
    %v1543 = vand.u32 %v888, 4294901760
    %v1544 = vsub.f32 %v888, %v1543
    %1545 = vmatmul.f32.gmra.mxu0 %v1544
    %v1546 = vpop.f32.mrf.mxu0
    %v1547 = vadd.f32 %v1482, %v1546
    %v1548 = vand.u32 %v891, 4294901760
    %v1549 = vsub.f32 %v891, %v1548
    %1550 = vmatmul.f32.gmra.mxu0 %v1549
    %v1551 = vpop.f32.mrf.mxu0
    %v1552 = vadd.f32 %v1486, %v1551
    %v1553 = vand.u32 %v894, 4294901760
    %v1554 = vsub.f32 %v894, %v1553
    %1555 = vmatmul.f32.gmra.mxu0 %v1554
    %v1556 = vpop.f32.mrf.mxu0
    %v1557 = vadd.f32 %v1490, %v1556
    %v1558 = vand.u32 %v897, 4294901760
    %v1559 = vsub.f32 %v897, %v1558
    %1560 = vmatmul.f32.gmra.mxu0 %v1559
    %v1561 = vpop.f32.mrf.mxu0
    %v1562 = vadd.f32 %v1494, %v1561
    %v1563 = vand.u32 %v900, 4294901760
    %v1564 = vsub.f32 %v900, %v1563
    %1565 = vmatmul.f32.gmra.mxu0 %v1564
    %v1566 = vpop.f32.mrf.mxu0
    %v1567 = vadd.f32 %v1498, %v1566
    %v1568 = vand.u32 %v903, 4294901760
    %v1569 = vsub.f32 %v903, %v1568
    %1570 = vmatmul.f32.gmra.mxu0 %v1569
    %v1571 = vpop.f32.mrf.mxu0
    %v1572 = vadd.f32 %v1502, %v1571
    %1573 = vdwg.mxu0
    %1574 = vmatpush.msra.mxu0 0.0
    %1575 = vmatpush.msra.mxu0 0.0
    %1576 = vmatpush.msra.mxu0 0.0
    %1577 = vmatpush.msra.mxu0 0.0
    %1578 = vmatpush.msra.mxu0 0.0
    %1579 = vmatpush.msra.mxu0 0.0
    %1580 = vmatpush.msra.mxu0 0.0
    %1581 = vmatpush.msra.mxu0 0.0
    %1582 = vmatpush.msra.mxu0 0.0
    %1583 = vmatpush.msra.mxu0 0.0
    %1584 = vmatpush.msra.mxu0 0.0
    %1585 = vmatpush.msra.mxu0 0.0
    %v1586 = vand.u32 %v866, 4294901760
    %1587 = vmatpush.msra.mxu0 %v1586
    %v1588 = vand.u32 %v862, 4294901760
    %1589 = vmatpush.msra.mxu0 %v1588
    %v1590 = vand.u32 %v858, 4294901760
    %1591 = vmatpush.msra.mxu0 %v1590
    %v1592 = vand.u32 %v854, 4294901760
    %1593 = vmatpush.msra.mxu0 %v1592
    %v1594 = vand.u32 %v879, 4294901760
    %v1595 = vsub.f32 %v879, %v1594
    %v1596 = vand.u32 %v1595, 4294901760
    %1597 = vmatmul.f32.gmra.mxu0 %v1596
    %v1598 = vpop.f32.mrf.mxu0
    %v1599 = vadd.f32 %v1532, %v1598
    %v1600 = vand.u32 %v882, 4294901760
    %v1601 = vsub.f32 %v882, %v1600
    %v1602 = vand.u32 %v1601, 4294901760
    %1603 = vmatmul.f32.gmra.mxu0 %v1602
    %v1604 = vpop.f32.mrf.mxu0
    %v1605 = vadd.f32 %v1537, %v1604
    %v1606 = vand.u32 %v885, 4294901760
    %v1607 = vsub.f32 %v885, %v1606
    %v1608 = vand.u32 %v1607, 4294901760
    %1609 = vmatmul.f32.gmra.mxu0 %v1608
    %v1610 = vpop.f32.mrf.mxu0
    %v1611 = vadd.f32 %v1542, %v1610
    %v1612 = vand.u32 %v888, 4294901760
    %v1613 = vsub.f32 %v888, %v1612
    %v1614 = vand.u32 %v1613, 4294901760
    %1615 = vmatmul.f32.gmra.mxu0 %v1614
    %v1616 = vpop.f32.mrf.mxu0
    %v1617 = vadd.f32 %v1547, %v1616
    %v1618 = vand.u32 %v891, 4294901760
    %v1619 = vsub.f32 %v891, %v1618
    %v1620 = vand.u32 %v1619, 4294901760
    %1621 = vmatmul.f32.gmra.mxu0 %v1620
    %v1622 = vpop.f32.mrf.mxu0
    %v1623 = vadd.f32 %v1552, %v1622
    %v1624 = vand.u32 %v894, 4294901760
    %v1625 = vsub.f32 %v894, %v1624
    %v1626 = vand.u32 %v1625, 4294901760
    %1627 = vmatmul.f32.gmra.mxu0 %v1626
    %v1628 = vpop.f32.mrf.mxu0
    %v1629 = vadd.f32 %v1557, %v1628
    %v1630 = vand.u32 %v897, 4294901760
    %v1631 = vsub.f32 %v897, %v1630
    %v1632 = vand.u32 %v1631, 4294901760
    %1633 = vmatmul.f32.gmra.mxu0 %v1632
    %v1634 = vpop.f32.mrf.mxu0
    %v1635 = vadd.f32 %v1562, %v1634
    %v1636 = vand.u32 %v900, 4294901760
    %v1637 = vsub.f32 %v900, %v1636
    %v1638 = vand.u32 %v1637, 4294901760
    %1639 = vmatmul.f32.gmra.mxu0 %v1638
    %v1640 = vpop.f32.mrf.mxu0
    %v1641 = vadd.f32 %v1567, %v1640
    %v1642 = vand.u32 %v903, 4294901760
    %v1643 = vsub.f32 %v903, %v1642
    %v1644 = vand.u32 %v1643, 4294901760
    %1645 = vmatmul.f32.gmra.mxu0 %v1644
    %v1646 = vpop.f32.mrf.mxu0
    %v1647 = vadd.f32 %v1572, %v1646
    %1648 = vdwg.mxu0
    %1649 = vmatpush.msra.mxu0 0.0
    %1650 = vmatpush.msra.mxu0 0.0
    %1651 = vmatpush.msra.mxu0 0.0
    %1652 = vmatpush.msra.mxu0 0.0
    %1653 = vmatpush.msra.mxu0 0.0
    %1654 = vmatpush.msra.mxu0 0.0
    %1655 = vmatpush.msra.mxu0 0.0
    %1656 = vmatpush.msra.mxu0 0.0
    %1657 = vmatpush.msra.mxu0 0.0
    %1658 = vmatpush.msra.mxu0 0.0
    %1659 = vmatpush.msra.mxu0 0.0
    %1660 = vmatpush.msra.mxu0 0.0
    %v1661 = vand.u32 %v866, 4294901760
    %v1662 = vsub.f32 %v866, %v1661
    %v1663 = vand.u32 %v1662, 4294901760
    %1664 = vmatpush.msra.mxu0 %v1663
    %v1665 = vand.u32 %v862, 4294901760
    %v1666 = vsub.f32 %v862, %v1665
    %v1667 = vand.u32 %v1666, 4294901760
    %1668 = vmatpush.msra.mxu0 %v1667
    %v1669 = vand.u32 %v858, 4294901760
    %v1670 = vsub.f32 %v858, %v1669
    %v1671 = vand.u32 %v1670, 4294901760
    %1672 = vmatpush.msra.mxu0 %v1671
    %v1673 = vand.u32 %v854, 4294901760
    %v1674 = vsub.f32 %v854, %v1673
    %v1675 = vand.u32 %v1674, 4294901760
    %1676 = vmatpush.msra.mxu0 %v1675
    %v1677 = vand.u32 %v879, 4294901760
    %1678 = vmatmul.f32.gmra.mxu0 %v1677
    %v1679 = vpop.f32.mrf.mxu0
    %v1680 = vadd.f32 %v1599, %v1679
    %v1681 = vand.u32 %v882, 4294901760
    %1682 = vmatmul.f32.gmra.mxu0 %v1681
    %v1683 = vpop.f32.mrf.mxu0
    %v1684 = vadd.f32 %v1605, %v1683
    %v1685 = vand.u32 %v885, 4294901760
    %1686 = vmatmul.f32.gmra.mxu0 %v1685
    %v1687 = vpop.f32.mrf.mxu0
    %v1688 = vadd.f32 %v1611, %v1687
    %v1689 = vand.u32 %v888, 4294901760
    %1690 = vmatmul.f32.gmra.mxu0 %v1689
    %v1691 = vpop.f32.mrf.mxu0
    %v1692 = vadd.f32 %v1617, %v1691
    %v1693 = vand.u32 %v891, 4294901760
    %1694 = vmatmul.f32.gmra.mxu0 %v1693
    %v1695 = vpop.f32.mrf.mxu0
    %v1696 = vadd.f32 %v1623, %v1695
    %v1697 = vand.u32 %v894, 4294901760
    %1698 = vmatmul.f32.gmra.mxu0 %v1697
    %v1699 = vpop.f32.mrf.mxu0
    %v1700 = vadd.f32 %v1629, %v1699
    %v1701 = vand.u32 %v897, 4294901760
    %1702 = vmatmul.f32.gmra.mxu0 %v1701
    %v1703 = vpop.f32.mrf.mxu0
    %v1704 = vadd.f32 %v1635, %v1703
    %v1705 = vand.u32 %v900, 4294901760
    %1706 = vmatmul.f32.gmra.mxu0 %v1705
    %v1707 = vpop.f32.mrf.mxu0
    %v1708 = vadd.f32 %v1641, %v1707
    %v1709 = vand.u32 %v903, 4294901760
    %1710 = vmatmul.f32.gmra.mxu0 %v1709
    %v1711 = vpop.f32.mrf.mxu0
    %v1712 = vadd.f32 %v1647, %v1711
    %1713 = vdwg.mxu0
    %1714 = vmatpush.msra.mxu0 0.0
    %1715 = vmatpush.msra.mxu0 0.0
    %1716 = vmatpush.msra.mxu0 0.0
    %1717 = vmatpush.msra.mxu0 0.0
    %1718 = vmatpush.msra.mxu0 0.0
    %1719 = vmatpush.msra.mxu0 0.0
    %1720 = vmatpush.msra.mxu0 0.0
    %1721 = vmatpush.msra.mxu0 0.0
    %1722 = vmatpush.msra.mxu0 0.0
    %1723 = vmatpush.msra.mxu0 0.0
    %1724 = vmatpush.msra.mxu0 0.0
    %1725 = vmatpush.msra.mxu0 0.0
    %v1726 = vand.u32 %v866, 4294901760
    %1727 = vmatpush.msra.mxu0 %v1726
    %v1728 = vand.u32 %v862, 4294901760
    %1729 = vmatpush.msra.mxu0 %v1728
    %v1730 = vand.u32 %v858, 4294901760
    %1731 = vmatpush.msra.mxu0 %v1730
    %v1732 = vand.u32 %v854, 4294901760
    %1733 = vmatpush.msra.mxu0 %v1732
    %v1734 = vand.u32 %v879, 4294901760
    %1735 = vmatmul.f32.gmra.mxu0 %v1734
    %v1736 = vpop.f32.mrf.mxu0
    %v1737 = vadd.f32 %v1680, %v1736
    %v1738 = vand.u32 %v882, 4294901760
    %1739 = vmatmul.f32.gmra.mxu0 %v1738
    %v1740 = vpop.f32.mrf.mxu0
    %v1741 = vadd.f32 %v1684, %v1740
    %v1742 = vand.u32 %v885, 4294901760
    %1743 = vmatmul.f32.gmra.mxu0 %v1742
    %v1744 = vpop.f32.mrf.mxu0
    %v1745 = vadd.f32 %v1688, %v1744
    %v1746 = vand.u32 %v888, 4294901760
    %1747 = vmatmul.f32.gmra.mxu0 %v1746
    %v1748 = vpop.f32.mrf.mxu0
    %v1749 = vadd.f32 %v1692, %v1748
    %v1750 = vand.u32 %v891, 4294901760
    %1751 = vmatmul.f32.gmra.mxu0 %v1750
    %v1752 = vpop.f32.mrf.mxu0
    %v1753 = vadd.f32 %v1696, %v1752
    %v1754 = vand.u32 %v894, 4294901760
    %1755 = vmatmul.f32.gmra.mxu0 %v1754
    %v1756 = vpop.f32.mrf.mxu0
    %v1757 = vadd.f32 %v1700, %v1756
    %v1758 = vand.u32 %v897, 4294901760
    %1759 = vmatmul.f32.gmra.mxu0 %v1758
    %v1760 = vpop.f32.mrf.mxu0
    %v1761 = vadd.f32 %v1704, %v1760
    %v1762 = vand.u32 %v900, 4294901760
    %1763 = vmatmul.f32.gmra.mxu0 %v1762
    %v1764 = vpop.f32.mrf.mxu0
    %v1765 = vadd.f32 %v1708, %v1764
    %v1766 = vand.u32 %v903, 4294901760
    %1767 = vmatmul.f32.gmra.mxu0 %v1766
    %v1768 = vpop.f32.mrf.mxu0
    %v1769 = vadd.f32 %v1712, %v1768
    %1770 = vdwg.mxu0
    %1771 = vst [vmem:[#allocation3] sm:$0xff] %v1304
    %vm1772 = vcmask 64512
    %1773 = vst.msk [vmem:[#allocation3 + $0x8] sm:$0xff] %vm1772, %v1737
    %1774 = vst [vmem:[#allocation3 + $0x10] sm:$0xff] %v1308
    %1775 = vst.msk [vmem:[#allocation3 + $0x18] sm:$0xff] %vm1772, %v1741
    %1776 = vst [vmem:[#allocation3 + $0x20] sm:$0xff] %v1312
    %1777 = vst.msk [vmem:[#allocation3 + $0x28] sm:$0xff] %vm1772, %v1745
    %1778 = vst [vmem:[#allocation3 + $0x30] sm:$0xff] %v1316
    %1779 = vst.msk [vmem:[#allocation3 + $0x38] sm:$0xff] %vm1772, %v1749
    %1780 = vst [vmem:[#allocation3 + $0x40] sm:$0xff] %v1320
    %1781 = vst.msk [vmem:[#allocation3 + $0x48] sm:$0xff] %vm1772, %v1753
    %1782 = vst [vmem:[#allocation3 + $0x50] sm:$0xff] %v1324
    %1783 = vst.msk [vmem:[#allocation3 + $0x58] sm:$0xff] %vm1772, %v1757
    %1784 = vst [vmem:[#allocation3 + $0x60] sm:$0xff] %v1328
    %1785 = vst.msk [vmem:[#allocation3 + $0x68] sm:$0xff] %vm1772, %v1761
    %1786 = vst [vmem:[#allocation3 + $0x70] sm:$0xff] %v1332
    %1787 = vst.msk [vmem:[#allocation3 + $0x78] sm:$0xff] %vm1772, %v1765
    %1788 = vst [vmem:[#allocation3 + $0x80] sm:$0xf] %v1336
    %vm1789 = vcmask 60416
    %1790 = vst.msk [vmem:[#allocation3 + $0x88] sm:$0xf] %vm1789, %v1769
    %1791 = vst [vmem:[#allocation4] sm:$0xff] 0.0
    %1792 = vst.msk [vmem:[#allocation4 + $0x8] sm:$0xff] %vm1772, 0.0
    %1793 = vst [vmem:[#allocation4 + $0x10] sm:$0xff] 0.0
    %1794 = vst.msk [vmem:[#allocation4 + $0x18] sm:$0xff] %vm1772, 0.0
    %1795 = vst [vmem:[#allocation4 + $0x20] sm:$0xff] 0.0
    %1796 = vst.msk [vmem:[#allocation4 + $0x28] sm:$0xff] %vm1772, 0.0
    %1797 = vst [vmem:[#allocation4 + $0x30] sm:$0xff] 0.0
    %1798 = vst.msk [vmem:[#allocation4 + $0x38] sm:$0xff] %vm1772, 0.0
    %1799 = vst [vmem:[#allocation4 + $0x40] sm:$0xff] 0.0
    %1800 = vst.msk [vmem:[#allocation4 + $0x48] sm:$0xff] %vm1772, 0.0
    %1801 = vst [vmem:[#allocation4 + $0x50] sm:$0xff] 0.0
    %1802 = vst.msk [vmem:[#allocation4 + $0x58] sm:$0xff] %vm1772, 0.0
    %1803 = vst [vmem:[#allocation4 + $0x60] sm:$0xff] 0.0
    %1804 = vst.msk [vmem:[#allocation4 + $0x68] sm:$0xff] %vm1772, 0.0
    %1805 = vst [vmem:[#allocation4 + $0x70] sm:$0xff] 0.0
    %1806 = vst.msk [vmem:[#allocation4 + $0x78] sm:$0xff] %vm1772, 0.0
    %1807 = vst [vmem:[#allocation4 + $0x80] sm:$0xf] 0.0
    %1808 = vst.msk [vmem:[#allocation4 + $0x88] sm:$0xf] %vm1789, 0.0
    %v1809 = vld [vmem:[%s5] sm:$0xff]
    %v1810 = vld [vmem:[%s5 + $0x8] sm:$0xff]
    %v1811 = vld [vmem:[%s5 + $0x10] sm:$0xff]
    %v1812 = vld [vmem:[%s5 + $0x18] sm:$0xff]
    %v1813 = vld [vmem:[%s5 + $0x20] sm:$0xff]
    %v1814 = vld [vmem:[%s5 + $0x28] sm:$0xff]
    %v1815 = vld [vmem:[%s5 + $0x30] sm:$0xff]
    %v1816 = vld [vmem:[%s5 + $0x38] sm:$0xff]
    %v1817 = vld [vmem:[%s5 + $0x40] sm:$0xff]
    %v1818 = vld [vmem:[%s5 + $0x48] sm:$0xff]
    %v1819 = vld [vmem:[%s5 + $0x50] sm:$0xff]
    %v1820 = vld [vmem:[%s5 + $0x58] sm:$0xff]
    %v1821 = vld [vmem:[%s5 + $0x60] sm:$0xff]
    %v1822 = vld [vmem:[%s5 + $0x68] sm:$0xff]
    %v1823 = vld [vmem:[%s5 + $0x70] sm:$0xff]
    %v1824 = vld [vmem:[%s5 + $0x78] sm:$0xff]
    %v1825 = vld [vmem:[%s5 + $0x80] sm:$0x3]
    %v1826 = vld [vmem:[%s5 + $0x88] sm:$0x3]
    %v1827 = vld [vmem:[%s3] ss:$8 sm:$0x3]
    %v1828 = vld [vmem:[#allocation3] sm:$0xff]
    %v1829 = vld [vmem:[#allocation3 + $0x8] sm:$0xff]
    %v1830 = vld [vmem:[#allocation3 + $0x10] sm:$0xff]
    %v1831 = vld [vmem:[#allocation3 + $0x18] sm:$0xff]
    %v1832 = vld [vmem:[#allocation3 + $0x20] sm:$0xff]
    %v1833 = vld [vmem:[#allocation3 + $0x28] sm:$0xff]
    %v1834 = vld [vmem:[#allocation3 + $0x30] sm:$0xff]
    %v1835 = vld [vmem:[#allocation3 + $0x38] sm:$0xff]
    %v1836 = vld [vmem:[#allocation3 + $0x40] sm:$0xff]
    %v1837 = vld [vmem:[#allocation3 + $0x48] sm:$0xff]
    %v1838 = vld [vmem:[#allocation3 + $0x50] sm:$0xff]
    %v1839 = vld [vmem:[#allocation3 + $0x58] sm:$0xff]
    %v1840 = vld [vmem:[#allocation3 + $0x60] sm:$0xff]
    %v1841 = vld [vmem:[#allocation3 + $0x68] sm:$0xff]
    %v1842 = vld [vmem:[#allocation3 + $0x70] sm:$0xff]
    %v1843 = vld [vmem:[#allocation3 + $0x78] sm:$0xff]
    %v1844 = vld [vmem:[#allocation3 + $0x80] sm:$0x3]
    %v1845 = vld [vmem:[#allocation3 + $0x88] sm:$0x3]
    %v1847 = vperm.slane %v1827, 0
    %v1848 = vperm.slane %v1827, 1
    %v1851 = vmul.f32 %v1828, %v1847
    %v1852 = vmul.f32 %v1829, %v1848
    %v1853 = vmul.f32 %v1830, %v1847
    %v1854 = vmul.f32 %v1831, %v1848
    %v1855 = vmul.f32 %v1832, %v1847
    %v1856 = vmul.f32 %v1833, %v1848
    %v1857 = vmul.f32 %v1834, %v1847
    %v1858 = vmul.f32 %v1835, %v1848
    %v1859 = vmul.f32 %v1836, %v1847
    %v1860 = vmul.f32 %v1837, %v1848
    %v1861 = vmul.f32 %v1838, %v1847
    %v1862 = vmul.f32 %v1839, %v1848
    %v1863 = vmul.f32 %v1840, %v1847
    %v1864 = vmul.f32 %v1841, %v1848
    %v1865 = vmul.f32 %v1842, %v1847
    %v1866 = vmul.f32 %v1843, %v1848
    %v1867 = vmul.f32 %v1844, %v1847
    %v1868 = vmul.f32 %v1845, %v1848
    %s1869 = scalar_lea.vmem %s3, 1
    %v1870 = vld [vmem:[%s1869] ss:$8 sm:$0x3]
    %v1872 = vperm.slane %v1870, 0
    %v1873 = vperm.slane %v1870, 1
    %1874 = vrot.lane.b32.xlu0 %v1872, 1
    %v1875 = vpop.permute.xlu0 %1874
    %1876 = vrot.lane.b32.xlu0 %v1873, 1
    %v1877 = vpop.permute.xlu0 %1876
    %vm1878 = vcmask 7168
    %v1879 = vsel %vm1878, %v1875, %v1877
    %v1882 = vmul.f32 %v1828, %v1875
    %v1883 = vmul.f32 %v1829, %v1879
    %v1884 = vmul.f32 %v1830, %v1875
    %v1885 = vmul.f32 %v1831, %v1879
    %v1886 = vmul.f32 %v1832, %v1875
    %v1887 = vmul.f32 %v1833, %v1879
    %v1888 = vmul.f32 %v1834, %v1875
    %v1889 = vmul.f32 %v1835, %v1879
    %v1890 = vmul.f32 %v1836, %v1875
    %v1891 = vmul.f32 %v1837, %v1879
    %v1892 = vmul.f32 %v1838, %v1875
    %v1893 = vmul.f32 %v1839, %v1879
    %v1894 = vmul.f32 %v1840, %v1875
    %v1895 = vmul.f32 %v1841, %v1879
    %v1896 = vmul.f32 %v1842, %v1875
    %v1897 = vmul.f32 %v1843, %v1879
    %v1898 = vmul.f32 %v1844, %v1875
    %v1899 = vmul.f32 %v1845, %v1879
    %1918 = vrot.lane.b32.xlu0 %v1882, 127
    %v1919 = vpop.permute.xlu0 %1918
    %1920 = vrot.lane.b32.xlu0 %v1883, 127
    %v1921 = vpop.permute.xlu0 %1920
    %1922 = vrot.lane.b32.xlu0 %v1884, 127
    %v1923 = vpop.permute.xlu0 %1922
    %1924 = vrot.lane.b32.xlu0 %v1885, 127
    %v1925 = vpop.permute.xlu0 %1924
    %1926 = vrot.lane.b32.xlu0 %v1886, 127
    %v1927 = vpop.permute.xlu0 %1926
    %1928 = vrot.lane.b32.xlu0 %v1887, 127
    %v1929 = vpop.permute.xlu0 %1928
    %1930 = vrot.lane.b32.xlu0 %v1888, 127
    %v1931 = vpop.permute.xlu0 %1930
    %1932 = vrot.lane.b32.xlu0 %v1889, 127
    %v1933 = vpop.permute.xlu0 %1932
    %1934 = vrot.lane.b32.xlu0 %v1890, 127
    %v1935 = vpop.permute.xlu0 %1934
    %1936 = vrot.lane.b32.xlu0 %v1891, 127
    %v1937 = vpop.permute.xlu0 %1936
    %1938 = vrot.lane.b32.xlu0 %v1892, 127
    %v1939 = vpop.permute.xlu0 %1938
    %1940 = vrot.lane.b32.xlu0 %v1893, 127
    %v1941 = vpop.permute.xlu0 %1940
    %1942 = vrot.lane.b32.xlu0 %v1894, 127
    %v1943 = vpop.permute.xlu0 %1942
    %1944 = vrot.lane.b32.xlu0 %v1895, 127
    %v1945 = vpop.permute.xlu0 %1944
    %1946 = vrot.lane.b32.xlu0 %v1896, 127
    %v1947 = vpop.permute.xlu0 %1946
    %1948 = vrot.lane.b32.xlu0 %v1897, 127
    %v1949 = vpop.permute.xlu0 %1948
    %1950 = vrot.lane.b32.xlu0 %v1898, 127
    %v1951 = vpop.permute.xlu0 %1950
    %1952 = vrot.lane.b32.xlu0 %v1899, 127
    %v1953 = vpop.permute.xlu0 %1952
    %vm1954 = vcmask 1039360
    %v1955 = vsel %vm1954, %v1919, %v1921
    %v1956 = vsel %vm1954, %v1923, %v1925
    %v1957 = vsel %vm1954, %v1927, %v1929
    %v1958 = vsel %vm1954, %v1931, %v1933
    %v1959 = vsel %vm1954, %v1935, %v1937
    %v1960 = vsel %vm1954, %v1939, %v1941
    %v1961 = vsel %vm1954, %v1943, %v1945
    %v1962 = vsel %vm1954, %v1947, %v1949
    %v1963 = vsel %vm1954, %v1951, %v1953
    %v1982 = vadd.f32 %v1851, %v1955
    %v1983 = vadd.f32 %v1852, %v1921
    %v1984 = vadd.f32 %v1853, %v1956
    %v1985 = vadd.f32 %v1854, %v1925
    %v1986 = vadd.f32 %v1855, %v1957
    %v1987 = vadd.f32 %v1856, %v1929
    %v1988 = vadd.f32 %v1857, %v1958
    %v1989 = vadd.f32 %v1858, %v1933
    %v1990 = vadd.f32 %v1859, %v1959
    %v1991 = vadd.f32 %v1860, %v1937
    %v1992 = vadd.f32 %v1861, %v1960
    %v1993 = vadd.f32 %v1862, %v1941
    %v1994 = vadd.f32 %v1863, %v1961
    %v1995 = vadd.f32 %v1864, %v1945
    %v1996 = vadd.f32 %v1865, %v1962
    %v1997 = vadd.f32 %v1866, %v1949
    %v1998 = vadd.f32 %v1867, %v1963
    %v1999 = vadd.f32 %v1868, %v1953
    %s2000 = scalar_lea.vmem %s3, 2
    %v2001 = vld [vmem:[%s2000] ss:$8 sm:$0x3]
    %v2003 = vperm.slane %v2001, 0
    %v2004 = vperm.slane %v2001, 1
    %2005 = vrot.lane.b32.xlu0 %v2003, 2
    %v2006 = vpop.permute.xlu0 %2005
    %2007 = vrot.lane.b32.xlu0 %v2004, 2
    %v2008 = vpop.permute.xlu0 %2007
    %vm2009 = vcmask 15360
    %v2010 = vsel %vm2009, %v2006, %v2008
    %v2013 = vmul.f32 %v1828, %v2006
    %v2014 = vmul.f32 %v1829, %v2010
    %v2015 = vmul.f32 %v1830, %v2006
    %v2016 = vmul.f32 %v1831, %v2010
    %v2017 = vmul.f32 %v1832, %v2006
    %v2018 = vmul.f32 %v1833, %v2010
    %v2019 = vmul.f32 %v1834, %v2006
    %v2020 = vmul.f32 %v1835, %v2010
    %v2021 = vmul.f32 %v1836, %v2006
    %v2022 = vmul.f32 %v1837, %v2010
    %v2023 = vmul.f32 %v1838, %v2006
    %v2024 = vmul.f32 %v1839, %v2010
    %v2025 = vmul.f32 %v1840, %v2006
    %v2026 = vmul.f32 %v1841, %v2010
    %v2027 = vmul.f32 %v1842, %v2006
    %v2028 = vmul.f32 %v1843, %v2010
    %v2029 = vmul.f32 %v1844, %v2006
    %v2030 = vmul.f32 %v1845, %v2010
    %2049 = vrot.lane.b32.xlu0 %v2013, 126
    %v2050 = vpop.permute.xlu0 %2049
    %2051 = vrot.lane.b32.xlu0 %v2014, 126
    %v2052 = vpop.permute.xlu0 %2051
    %2053 = vrot.lane.b32.xlu0 %v2015, 126
    %v2054 = vpop.permute.xlu0 %2053
    %2055 = vrot.lane.b32.xlu0 %v2016, 126
    %v2056 = vpop.permute.xlu0 %2055
    %2057 = vrot.lane.b32.xlu0 %v2017, 126
    %v2058 = vpop.permute.xlu0 %2057
    %2059 = vrot.lane.b32.xlu0 %v2018, 126
    %v2060 = vpop.permute.xlu0 %2059
    %2061 = vrot.lane.b32.xlu0 %v2019, 126
    %v2062 = vpop.permute.xlu0 %2061
    %2063 = vrot.lane.b32.xlu0 %v2020, 126
    %v2064 = vpop.permute.xlu0 %2063
    %2065 = vrot.lane.b32.xlu0 %v2021, 126
    %v2066 = vpop.permute.xlu0 %2065
    %2067 = vrot.lane.b32.xlu0 %v2022, 126
    %v2068 = vpop.permute.xlu0 %2067
    %2069 = vrot.lane.b32.xlu0 %v2023, 126
    %v2070 = vpop.permute.xlu0 %2069
    %2071 = vrot.lane.b32.xlu0 %v2024, 126
    %v2072 = vpop.permute.xlu0 %2071
    %2073 = vrot.lane.b32.xlu0 %v2025, 126
    %v2074 = vpop.permute.xlu0 %2073
    %2075 = vrot.lane.b32.xlu0 %v2026, 126
    %v2076 = vpop.permute.xlu0 %2075
    %2077 = vrot.lane.b32.xlu0 %v2027, 126
    %v2078 = vpop.permute.xlu0 %2077
    %2079 = vrot.lane.b32.xlu0 %v2028, 126
    %v2080 = vpop.permute.xlu0 %2079
    %2081 = vrot.lane.b32.xlu0 %v2029, 126
    %v2082 = vpop.permute.xlu0 %2081
    %2083 = vrot.lane.b32.xlu0 %v2030, 126
    %v2084 = vpop.permute.xlu0 %2083
    %vm2085 = vcmask 1031168
    %v2086 = vsel %vm2085, %v2050, %v2052
    %v2087 = vsel %vm2085, %v2054, %v2056
    %v2088 = vsel %vm2085, %v2058, %v2060
    %v2089 = vsel %vm2085, %v2062, %v2064
    %v2090 = vsel %vm2085, %v2066, %v2068
    %v2091 = vsel %vm2085, %v2070, %v2072
    %v2092 = vsel %vm2085, %v2074, %v2076
    %v2093 = vsel %vm2085, %v2078, %v2080
    %v2094 = vsel %vm2085, %v2082, %v2084
    %v2113 = vadd.f32 %v1982, %v2086
    %v2114 = vadd.f32 %v1983, %v2052
    %v2115 = vadd.f32 %v1984, %v2087
    %v2116 = vadd.f32 %v1985, %v2056
    %v2117 = vadd.f32 %v1986, %v2088
    %v2118 = vadd.f32 %v1987, %v2060
    %v2119 = vadd.f32 %v1988, %v2089
    %v2120 = vadd.f32 %v1989, %v2064
    %v2121 = vadd.f32 %v1990, %v2090
    %v2122 = vadd.f32 %v1991, %v2068
    %v2123 = vadd.f32 %v1992, %v2091
    %v2124 = vadd.f32 %v1993, %v2072
    %v2125 = vadd.f32 %v1994, %v2092
    %v2126 = vadd.f32 %v1995, %v2076
    %v2127 = vadd.f32 %v1996, %v2093
    %v2128 = vadd.f32 %v1997, %v2080
    %v2129 = vadd.f32 %v1998, %v2094
    %v2130 = vadd.f32 %v1999, %v2084
    %s2131 = scalar_lea.vmem %s3, 3
    %v2132 = vld [vmem:[%s2131] ss:$8 sm:$0x3]
    %v2133 = vld [vmem:[#allocation3] sm:$0xfe]
    %v2134 = vld [vmem:[#allocation3 + $0x8] sm:$0xfe]
    %v2135 = vld [vmem:[#allocation3 + $0x80] sm:$0x7]
    %v2136 = vld [vmem:[#allocation3 + $0x88] sm:$0x7]
    %v2138 = vperm.slane %v2132, 0
    %v2139 = vperm.slane %v2132, 1
    %v2142 = vmul.f32 %v2133, %v2138
    %v2143 = vmul.f32 %v2134, %v2139
    %v2144 = vmul.f32 %v1830, %v2138
    %v2145 = vmul.f32 %v1831, %v2139
    %v2146 = vmul.f32 %v1832, %v2138
    %v2147 = vmul.f32 %v1833, %v2139
    %v2148 = vmul.f32 %v1834, %v2138
    %v2149 = vmul.f32 %v1835, %v2139
    %v2150 = vmul.f32 %v1836, %v2138
    %v2151 = vmul.f32 %v1837, %v2139
    %v2152 = vmul.f32 %v1838, %v2138
    %v2153 = vmul.f32 %v1839, %v2139
    %v2154 = vmul.f32 %v1840, %v2138
    %v2155 = vmul.f32 %v1841, %v2139
    %v2156 = vmul.f32 %v1842, %v2138
    %v2157 = vmul.f32 %v1843, %v2139
    %v2158 = vmul.f32 %v2135, %v2138
    %v2159 = vmul.f32 %v2136, %v2139
    %vm2178 = vcmask 1046528
    %v2179 = vrot.slane %v2142, 1
    %v2180 = vrot.slane %v2144, 1
    %v2181 = vsel %vm2178, %v2179, %v2180
    %v2182 = vrot.slane %v2143, 1
    %v2183 = vrot.slane %v2145, 1
    %v2184 = vsel %vm2178, %v2182, %v2183
    %v2185 = vrot.slane %v2146, 1
    %v2186 = vsel %vm2178, %v2180, %v2185
    %v2187 = vrot.slane %v2147, 1
    %v2188 = vsel %vm2178, %v2183, %v2187
    %v2189 = vrot.slane %v2148, 1
    %v2190 = vsel %vm2178, %v2185, %v2189
    %v2191 = vrot.slane %v2149, 1
    %v2192 = vsel %vm2178, %v2187, %v2191
    %v2193 = vrot.slane %v2150, 1
    %v2194 = vsel %vm2178, %v2189, %v2193
    %v2195 = vrot.slane %v2151, 1
    %v2196 = vsel %vm2178, %v2191, %v2195
    %v2197 = vrot.slane %v2152, 1
    %v2198 = vsel %vm2178, %v2193, %v2197
    %v2199 = vrot.slane %v2153, 1
    %v2200 = vsel %vm2178, %v2195, %v2199
    %v2201 = vrot.slane %v2154, 1
    %v2202 = vsel %vm2178, %v2197, %v2201
    %v2203 = vrot.slane %v2155, 1
    %v2204 = vsel %vm2178, %v2199, %v2203
    %v2205 = vrot.slane %v2156, 1
    %v2206 = vsel %vm2178, %v2201, %v2205
    %v2207 = vrot.slane %v2157, 1
    %v2208 = vsel %vm2178, %v2203, %v2207
    %v2209 = vrot.slane %v2158, 1
    %v2210 = vsel %vm2178, %v2205, %v2209
    %v2211 = vrot.slane %v2159, 1
    %v2212 = vsel %vm2178, %v2207, %v2211
    %v2231 = vadd.f32 %v2113, %v2181
    %v2232 = vadd.f32 %v2114, %v2184
    %v2233 = vadd.f32 %v2115, %v2186
    %v2234 = vadd.f32 %v2116, %v2188
    %v2235 = vadd.f32 %v2117, %v2190
    %v2236 = vadd.f32 %v2118, %v2192
    %v2237 = vadd.f32 %v2119, %v2194
    %v2238 = vadd.f32 %v2120, %v2196
    %v2239 = vadd.f32 %v2121, %v2198
    %v2240 = vadd.f32 %v2122, %v2200
    %v2241 = vadd.f32 %v2123, %v2202
    %v2242 = vadd.f32 %v2124, %v2204
    %v2243 = vadd.f32 %v2125, %v2206
    %v2244 = vadd.f32 %v2126, %v2208
    %v2245 = vadd.f32 %v2127, %v2210
    %v2246 = vadd.f32 %v2128, %v2212
    %v2247 = vadd.f32 %v2129, %v2209
    %v2248 = vadd.f32 %v2130, %v2211
    %s2249 = scalar_lea.vmem %s3, 4
    %v2250 = vld [vmem:[%s2249] ss:$8 sm:$0x3]
    %v2252 = vperm.slane %v2250, 0
    %v2253 = vperm.slane %v2250, 1
    %2254 = vrot.lane.b32.xlu0 %v2252, 1
    %v2255 = vpop.permute.xlu0 %2254
    %2256 = vrot.lane.b32.xlu0 %v2253, 1
    %v2257 = vpop.permute.xlu0 %2256
    %v2258 = vsel %vm1878, %v2255, %v2257
    %v2261 = vmul.f32 %v2133, %v2255
    %v2262 = vmul.f32 %v2134, %v2258
    %v2263 = vmul.f32 %v1830, %v2255
    %v2264 = vmul.f32 %v1831, %v2258
    %v2265 = vmul.f32 %v1832, %v2255
    %v2266 = vmul.f32 %v1833, %v2258
    %v2267 = vmul.f32 %v1834, %v2255
    %v2268 = vmul.f32 %v1835, %v2258
    %v2269 = vmul.f32 %v1836, %v2255
    %v2270 = vmul.f32 %v1837, %v2258
    %v2271 = vmul.f32 %v1838, %v2255
    %v2272 = vmul.f32 %v1839, %v2258
    %v2273 = vmul.f32 %v1840, %v2255
    %v2274 = vmul.f32 %v1841, %v2258
    %v2275 = vmul.f32 %v1842, %v2255
    %v2276 = vmul.f32 %v1843, %v2258
    %v2277 = vmul.f32 %v2135, %v2255
    %v2278 = vmul.f32 %v2136, %v2258
    %v2297 = vrot.slane %v2261, 1
    %v2298 = vrot.slane %v2263, 1
    %v2299 = vsel %vm2178, %v2297, %v2298
    %v2300 = vrot.slane %v2262, 1
    %v2301 = vrot.slane %v2264, 1
    %v2302 = vsel %vm2178, %v2300, %v2301
    %v2303 = vrot.slane %v2265, 1
    %v2304 = vsel %vm2178, %v2298, %v2303
    %v2305 = vrot.slane %v2266, 1
    %v2306 = vsel %vm2178, %v2301, %v2305
    %v2307 = vrot.slane %v2267, 1
    %v2308 = vsel %vm2178, %v2303, %v2307
    %v2309 = vrot.slane %v2268, 1
    %v2310 = vsel %vm2178, %v2305, %v2309
    %v2311 = vrot.slane %v2269, 1
    %v2312 = vsel %vm2178, %v2307, %v2311
    %v2313 = vrot.slane %v2270, 1
    %v2314 = vsel %vm2178, %v2309, %v2313
    %v2315 = vrot.slane %v2271, 1
    %v2316 = vsel %vm2178, %v2311, %v2315
    %v2317 = vrot.slane %v2272, 1
    %v2318 = vsel %vm2178, %v2313, %v2317
    %v2319 = vrot.slane %v2273, 1
    %v2320 = vsel %vm2178, %v2315, %v2319
    %v2321 = vrot.slane %v2274, 1
    %v2322 = vsel %vm2178, %v2317, %v2321
    %v2323 = vrot.slane %v2275, 1
    %v2324 = vsel %vm2178, %v2319, %v2323
    %v2325 = vrot.slane %v2276, 1
    %v2326 = vsel %vm2178, %v2321, %v2325
    %v2327 = vrot.slane %v2277, 1
    %v2328 = vsel %vm2178, %v2323, %v2327
    %v2329 = vrot.slane %v2278, 1
    %v2330 = vsel %vm2178, %v2325, %v2329
    %2331 = vrot.lane.b32.xlu0 %v2299, 127
    %v2332 = vpop.permute.xlu0 %2331
    %2333 = vrot.lane.b32.xlu0 %v2302, 127
    %v2334 = vpop.permute.xlu0 %2333
    %2335 = vrot.lane.b32.xlu0 %v2304, 127
    %v2336 = vpop.permute.xlu0 %2335
    %2337 = vrot.lane.b32.xlu0 %v2306, 127
    %v2338 = vpop.permute.xlu0 %2337
    %2339 = vrot.lane.b32.xlu0 %v2308, 127
    %v2340 = vpop.permute.xlu0 %2339
    %2341 = vrot.lane.b32.xlu0 %v2310, 127
    %v2342 = vpop.permute.xlu0 %2341
    %2343 = vrot.lane.b32.xlu0 %v2312, 127
    %v2344 = vpop.permute.xlu0 %2343
    %2345 = vrot.lane.b32.xlu0 %v2314, 127
    %v2346 = vpop.permute.xlu0 %2345
    %2347 = vrot.lane.b32.xlu0 %v2316, 127
    %v2348 = vpop.permute.xlu0 %2347
    %2349 = vrot.lane.b32.xlu0 %v2318, 127
    %v2350 = vpop.permute.xlu0 %2349
    %2351 = vrot.lane.b32.xlu0 %v2320, 127
    %v2352 = vpop.permute.xlu0 %2351
    %2353 = vrot.lane.b32.xlu0 %v2322, 127
    %v2354 = vpop.permute.xlu0 %2353
    %2355 = vrot.lane.b32.xlu0 %v2324, 127
    %v2356 = vpop.permute.xlu0 %2355
    %2357 = vrot.lane.b32.xlu0 %v2326, 127
    %v2358 = vpop.permute.xlu0 %2357
    %2359 = vrot.lane.b32.xlu0 %v2328, 127
    %v2360 = vpop.permute.xlu0 %2359
    %2361 = vrot.lane.b32.xlu0 %v2330, 127
    %v2362 = vpop.permute.xlu0 %2361
    %2363 = vrot.lane.b32.xlu0 %v2327, 127
    %v2364 = vpop.permute.xlu0 %2363
    %2365 = vrot.lane.b32.xlu0 %v2329, 127
    %v2366 = vpop.permute.xlu0 %2365
    %v2367 = vsel %vm1954, %v2332, %v2334
    %v2368 = vsel %vm1954, %v2336, %v2338
    %v2369 = vsel %vm1954, %v2340, %v2342
    %v2370 = vsel %vm1954, %v2344, %v2346
    %v2371 = vsel %vm1954, %v2348, %v2350
    %v2372 = vsel %vm1954, %v2352, %v2354
    %v2373 = vsel %vm1954, %v2356, %v2358
    %v2374 = vsel %vm1954, %v2360, %v2362
    %v2375 = vsel %vm1954, %v2364, %v2366
    %v2394 = vadd.f32 %v2231, %v2367
    %v2395 = vadd.f32 %v2232, %v2334
    %v2396 = vadd.f32 %v2233, %v2368
    %v2397 = vadd.f32 %v2234, %v2338
    %v2398 = vadd.f32 %v2235, %v2369
    %v2399 = vadd.f32 %v2236, %v2342
    %v2400 = vadd.f32 %v2237, %v2370
    %v2401 = vadd.f32 %v2238, %v2346
    %v2402 = vadd.f32 %v2239, %v2371
    %v2403 = vadd.f32 %v2240, %v2350
    %v2404 = vadd.f32 %v2241, %v2372
    %v2405 = vadd.f32 %v2242, %v2354
    %v2406 = vadd.f32 %v2243, %v2373
    %v2407 = vadd.f32 %v2244, %v2358
    %v2408 = vadd.f32 %v2245, %v2374
    %v2409 = vadd.f32 %v2246, %v2362
    %v2410 = vadd.f32 %v2247, %v2375
    %v2411 = vadd.f32 %v2248, %v2366
    %s2412 = scalar_lea.vmem %s3, 5
    %v2413 = vld [vmem:[%s2412] ss:$8 sm:$0x3]
    %v2415 = vperm.slane %v2413, 0
    %v2416 = vperm.slane %v2413, 1
    %2417 = vrot.lane.b32.xlu0 %v2415, 2
    %v2418 = vpop.permute.xlu0 %2417
    %2419 = vrot.lane.b32.xlu0 %v2416, 2
    %v2420 = vpop.permute.xlu0 %2419
    %v2421 = vsel %vm2009, %v2418, %v2420
    %v2424 = vmul.f32 %v2133, %v2418
    %v2425 = vmul.f32 %v2134, %v2421
    %v2426 = vmul.f32 %v1830, %v2418
    %v2427 = vmul.f32 %v1831, %v2421
    %v2428 = vmul.f32 %v1832, %v2418
    %v2429 = vmul.f32 %v1833, %v2421
    %v2430 = vmul.f32 %v1834, %v2418
    %v2431 = vmul.f32 %v1835, %v2421
    %v2432 = vmul.f32 %v1836, %v2418
    %v2433 = vmul.f32 %v1837, %v2421
    %v2434 = vmul.f32 %v1838, %v2418
    %v2435 = vmul.f32 %v1839, %v2421
    %v2436 = vmul.f32 %v1840, %v2418
    %v2437 = vmul.f32 %v1841, %v2421
    %v2438 = vmul.f32 %v1842, %v2418
    %v2439 = vmul.f32 %v1843, %v2421
    %v2440 = vmul.f32 %v2135, %v2418
    %v2441 = vmul.f32 %v2136, %v2421
    %v2460 = vrot.slane %v2424, 1
    %v2461 = vrot.slane %v2426, 1
    %v2462 = vsel %vm2178, %v2460, %v2461
    %v2463 = vrot.slane %v2425, 1
    %v2464 = vrot.slane %v2427, 1
    %v2465 = vsel %vm2178, %v2463, %v2464
    %v2466 = vrot.slane %v2428, 1
    %v2467 = vsel %vm2178, %v2461, %v2466
    %v2468 = vrot.slane %v2429, 1
    %v2469 = vsel %vm2178, %v2464, %v2468
    %v2470 = vrot.slane %v2430, 1
    %v2471 = vsel %vm2178, %v2466, %v2470
    %v2472 = vrot.slane %v2431, 1
    %v2473 = vsel %vm2178, %v2468, %v2472
    %v2474 = vrot.slane %v2432, 1
    %v2475 = vsel %vm2178, %v2470, %v2474
    %v2476 = vrot.slane %v2433, 1
    %v2477 = vsel %vm2178, %v2472, %v2476
    %v2478 = vrot.slane %v2434, 1
    %v2479 = vsel %vm2178, %v2474, %v2478
    %v2480 = vrot.slane %v2435, 1
    %v2481 = vsel %vm2178, %v2476, %v2480
    %v2482 = vrot.slane %v2436, 1
    %v2483 = vsel %vm2178, %v2478, %v2482
    %v2484 = vrot.slane %v2437, 1
    %v2485 = vsel %vm2178, %v2480, %v2484
    %v2486 = vrot.slane %v2438, 1
    %v2487 = vsel %vm2178, %v2482, %v2486
    %v2488 = vrot.slane %v2439, 1
    %v2489 = vsel %vm2178, %v2484, %v2488
    %v2490 = vrot.slane %v2440, 1
    %v2491 = vsel %vm2178, %v2486, %v2490
    %v2492 = vrot.slane %v2441, 1
    %v2493 = vsel %vm2178, %v2488, %v2492
    %2494 = vrot.lane.b32.xlu0 %v2462, 126
    %v2495 = vpop.permute.xlu0 %2494
    %2496 = vrot.lane.b32.xlu0 %v2465, 126
    %v2497 = vpop.permute.xlu0 %2496
    %2498 = vrot.lane.b32.xlu0 %v2467, 126
    %v2499 = vpop.permute.xlu0 %2498
    %2500 = vrot.lane.b32.xlu0 %v2469, 126
    %v2501 = vpop.permute.xlu0 %2500
    %2502 = vrot.lane.b32.xlu0 %v2471, 126
    %v2503 = vpop.permute.xlu0 %2502
    %2504 = vrot.lane.b32.xlu0 %v2473, 126
    %v2505 = vpop.permute.xlu0 %2504
    %2506 = vrot.lane.b32.xlu0 %v2475, 126
    %v2507 = vpop.permute.xlu0 %2506
    %2508 = vrot.lane.b32.xlu0 %v2477, 126
    %v2509 = vpop.permute.xlu0 %2508
    %2510 = vrot.lane.b32.xlu0 %v2479, 126
    %v2511 = vpop.permute.xlu0 %2510
    %2512 = vrot.lane.b32.xlu0 %v2481, 126
    %v2513 = vpop.permute.xlu0 %2512
    %2514 = vrot.lane.b32.xlu0 %v2483, 126
    %v2515 = vpop.permute.xlu0 %2514
    %2516 = vrot.lane.b32.xlu0 %v2485, 126
    %v2517 = vpop.permute.xlu0 %2516
    %2518 = vrot.lane.b32.xlu0 %v2487, 126
    %v2519 = vpop.permute.xlu0 %2518
    %2520 = vrot.lane.b32.xlu0 %v2489, 126
    %v2521 = vpop.permute.xlu0 %2520
    %2522 = vrot.lane.b32.xlu0 %v2491, 126
    %v2523 = vpop.permute.xlu0 %2522
    %2524 = vrot.lane.b32.xlu0 %v2493, 126
    %v2525 = vpop.permute.xlu0 %2524
    %2526 = vrot.lane.b32.xlu0 %v2490, 126
    %v2527 = vpop.permute.xlu0 %2526
    %2528 = vrot.lane.b32.xlu0 %v2492, 126
    %v2529 = vpop.permute.xlu0 %2528
    %v2530 = vsel %vm2085, %v2495, %v2497
    %v2531 = vsel %vm2085, %v2499, %v2501
    %v2532 = vsel %vm2085, %v2503, %v2505
    %v2533 = vsel %vm2085, %v2507, %v2509
    %v2534 = vsel %vm2085, %v2511, %v2513
    %v2535 = vsel %vm2085, %v2515, %v2517
    %v2536 = vsel %vm2085, %v2519, %v2521
    %v2537 = vsel %vm2085, %v2523, %v2525
    %v2538 = vsel %vm2085, %v2527, %v2529
    %v2557 = vadd.f32 %v2394, %v2530
    %v2558 = vadd.f32 %v2395, %v2497
    %v2559 = vadd.f32 %v2396, %v2531
    %v2560 = vadd.f32 %v2397, %v2501
    %v2561 = vadd.f32 %v2398, %v2532
    %v2562 = vadd.f32 %v2399, %v2505
    %v2563 = vadd.f32 %v2400, %v2533
    %v2564 = vadd.f32 %v2401, %v2509
    %v2565 = vadd.f32 %v2402, %v2534
    %v2566 = vadd.f32 %v2403, %v2513
    %v2567 = vadd.f32 %v2404, %v2535
    %v2568 = vadd.f32 %v2405, %v2517
    %v2569 = vadd.f32 %v2406, %v2536
    %v2570 = vadd.f32 %v2407, %v2521
    %v2571 = vadd.f32 %v2408, %v2537
    %v2572 = vadd.f32 %v2409, %v2525
    %v2573 = vadd.f32 %v2410, %v2538
    %v2574 = vadd.f32 %v2411, %v2529
    %s2575 = scalar_lea.vmem %s3, 6
    %v2576 = vld [vmem:[%s2575] ss:$8 sm:$0x3]
    %v2577 = vld [vmem:[#allocation3] sm:$0xfc]
    %v2578 = vld [vmem:[#allocation3 + $0x8] sm:$0xfc]
    %v2579 = vld [vmem:[#allocation3 + $0x80] sm:$0xf]
    %v2580 = vld [vmem:[#allocation3 + $0x88] sm:$0xf]
    %v2582 = vperm.slane %v2576, 0
    %v2583 = vperm.slane %v2576, 1
    %v2586 = vmul.f32 %v2577, %v2582
    %v2587 = vmul.f32 %v2578, %v2583
    %v2588 = vmul.f32 %v1830, %v2582
    %v2589 = vmul.f32 %v1831, %v2583
    %v2590 = vmul.f32 %v1832, %v2582
    %v2591 = vmul.f32 %v1833, %v2583
    %v2592 = vmul.f32 %v1834, %v2582
    %v2593 = vmul.f32 %v1835, %v2583
    %v2594 = vmul.f32 %v1836, %v2582
    %v2595 = vmul.f32 %v1837, %v2583
    %v2596 = vmul.f32 %v1838, %v2582
    %v2597 = vmul.f32 %v1839, %v2583
    %v2598 = vmul.f32 %v1840, %v2582
    %v2599 = vmul.f32 %v1841, %v2583
    %v2600 = vmul.f32 %v1842, %v2582
    %v2601 = vmul.f32 %v1843, %v2583
    %v2602 = vmul.f32 %v2579, %v2582
    %v2603 = vmul.f32 %v2580, %v2583
    %vm2622 = vcmask 1045504
    %v2623 = vrot.slane %v2586, 2
    %v2624 = vrot.slane %v2588, 2
    %v2625 = vsel %vm2622, %v2623, %v2624
    %v2626 = vrot.slane %v2587, 2
    %v2627 = vrot.slane %v2589, 2
    %v2628 = vsel %vm2622, %v2626, %v2627
    %v2629 = vrot.slane %v2590, 2
    %v2630 = vsel %vm2622, %v2624, %v2629
    %v2631 = vrot.slane %v2591, 2
    %v2632 = vsel %vm2622, %v2627, %v2631
    %v2633 = vrot.slane %v2592, 2
    %v2634 = vsel %vm2622, %v2629, %v2633
    %v2635 = vrot.slane %v2593, 2
    %v2636 = vsel %vm2622, %v2631, %v2635
    %v2637 = vrot.slane %v2594, 2
    %v2638 = vsel %vm2622, %v2633, %v2637
    %v2639 = vrot.slane %v2595, 2
    %v2640 = vsel %vm2622, %v2635, %v2639
    %v2641 = vrot.slane %v2596, 2
    %v2642 = vsel %vm2622, %v2637, %v2641
    %v2643 = vrot.slane %v2597, 2
    %v2644 = vsel %vm2622, %v2639, %v2643
    %v2645 = vrot.slane %v2598, 2
    %v2646 = vsel %vm2622, %v2641, %v2645
    %v2647 = vrot.slane %v2599, 2
    %v2648 = vsel %vm2622, %v2643, %v2647
    %v2649 = vrot.slane %v2600, 2
    %v2650 = vsel %vm2622, %v2645, %v2649
    %v2651 = vrot.slane %v2601, 2
    %v2652 = vsel %vm2622, %v2647, %v2651
    %v2653 = vrot.slane %v2602, 2
    %v2654 = vsel %vm2622, %v2649, %v2653
    %v2655 = vrot.slane %v2603, 2
    %v2656 = vsel %vm2622, %v2651, %v2655
    %v2675 = vadd.f32 %v2557, %v2625
    %v2676 = vadd.f32 %v2558, %v2628
    %v2677 = vadd.f32 %v2559, %v2630
    %v2678 = vadd.f32 %v2560, %v2632
    %v2679 = vadd.f32 %v2561, %v2634
    %v2680 = vadd.f32 %v2562, %v2636
    %v2681 = vadd.f32 %v2563, %v2638
    %v2682 = vadd.f32 %v2564, %v2640
    %v2683 = vadd.f32 %v2565, %v2642
    %v2684 = vadd.f32 %v2566, %v2644
    %v2685 = vadd.f32 %v2567, %v2646
    %v2686 = vadd.f32 %v2568, %v2648
    %v2687 = vadd.f32 %v2569, %v2650
    %v2688 = vadd.f32 %v2570, %v2652
    %v2689 = vadd.f32 %v2571, %v2654
    %v2690 = vadd.f32 %v2572, %v2656
    %v2691 = vadd.f32 %v2573, %v2653
    %v2692 = vadd.f32 %v2574, %v2655
    %s2693 = scalar_lea.vmem %s3, 7
    %v2694 = vld [vmem:[%s2693] ss:$8 sm:$0x3]
    %v2696 = vperm.slane %v2694, 0
    %v2697 = vperm.slane %v2694, 1
    %2698 = vrot.lane.b32.xlu0 %v2696, 1
    %v2699 = vpop.permute.xlu0 %2698
    %2700 = vrot.lane.b32.xlu0 %v2697, 1
    %v2701 = vpop.permute.xlu0 %2700
    %v2702 = vsel %vm1878, %v2699, %v2701
    %v2705 = vmul.f32 %v2577, %v2699
    %v2706 = vmul.f32 %v2578, %v2702
    %v2707 = vmul.f32 %v1830, %v2699
    %v2708 = vmul.f32 %v1831, %v2702
    %v2709 = vmul.f32 %v1832, %v2699
    %v2710 = vmul.f32 %v1833, %v2702
    %v2711 = vmul.f32 %v1834, %v2699
    %v2712 = vmul.f32 %v1835, %v2702
    %v2713 = vmul.f32 %v1836, %v2699
    %v2714 = vmul.f32 %v1837, %v2702
    %v2715 = vmul.f32 %v1838, %v2699
    %v2716 = vmul.f32 %v1839, %v2702
    %v2717 = vmul.f32 %v1840, %v2699
    %v2718 = vmul.f32 %v1841, %v2702
    %v2719 = vmul.f32 %v1842, %v2699
    %v2720 = vmul.f32 %v1843, %v2702
    %v2721 = vmul.f32 %v2579, %v2699
    %v2722 = vmul.f32 %v2580, %v2702
    %v2741 = vrot.slane %v2705, 2
    %v2742 = vrot.slane %v2707, 2
    %v2743 = vsel %vm2622, %v2741, %v2742
    %v2744 = vrot.slane %v2706, 2
    %v2745 = vrot.slane %v2708, 2
    %v2746 = vsel %vm2622, %v2744, %v2745
    %v2747 = vrot.slane %v2709, 2
    %v2748 = vsel %vm2622, %v2742, %v2747
    %v2749 = vrot.slane %v2710, 2
    %v2750 = vsel %vm2622, %v2745, %v2749
    %v2751 = vrot.slane %v2711, 2
    %v2752 = vsel %vm2622, %v2747, %v2751
    %v2753 = vrot.slane %v2712, 2
    %v2754 = vsel %vm2622, %v2749, %v2753
    %v2755 = vrot.slane %v2713, 2
    %v2756 = vsel %vm2622, %v2751, %v2755
    %v2757 = vrot.slane %v2714, 2
    %v2758 = vsel %vm2622, %v2753, %v2757
    %v2759 = vrot.slane %v2715, 2
    %v2760 = vsel %vm2622, %v2755, %v2759
    %v2761 = vrot.slane %v2716, 2
    %v2762 = vsel %vm2622, %v2757, %v2761
    %v2763 = vrot.slane %v2717, 2
    %v2764 = vsel %vm2622, %v2759, %v2763
    %v2765 = vrot.slane %v2718, 2
    %v2766 = vsel %vm2622, %v2761, %v2765
    %v2767 = vrot.slane %v2719, 2
    %v2768 = vsel %vm2622, %v2763, %v2767
    %v2769 = vrot.slane %v2720, 2
    %v2770 = vsel %vm2622, %v2765, %v2769
    %v2771 = vrot.slane %v2721, 2
    %v2772 = vsel %vm2622, %v2767, %v2771
    %v2773 = vrot.slane %v2722, 2
    %v2774 = vsel %vm2622, %v2769, %v2773
    %2775 = vrot.lane.b32.xlu0 %v2743, 127
    %v2776 = vpop.permute.xlu0 %2775
    %2777 = vrot.lane.b32.xlu0 %v2746, 127
    %v2778 = vpop.permute.xlu0 %2777
    %2779 = vrot.lane.b32.xlu0 %v2748, 127
    %v2780 = vpop.permute.xlu0 %2779
    %2781 = vrot.lane.b32.xlu0 %v2750, 127
    %v2782 = vpop.permute.xlu0 %2781
    %2783 = vrot.lane.b32.xlu0 %v2752, 127
    %v2784 = vpop.permute.xlu0 %2783
    %2785 = vrot.lane.b32.xlu0 %v2754, 127
    %v2786 = vpop.permute.xlu0 %2785
    %2787 = vrot.lane.b32.xlu0 %v2756, 127
    %v2788 = vpop.permute.xlu0 %2787
    %2789 = vrot.lane.b32.xlu0 %v2758, 127
    %v2790 = vpop.permute.xlu0 %2789
    %2791 = vrot.lane.b32.xlu0 %v2760, 127
    %v2792 = vpop.permute.xlu0 %2791
    %2793 = vrot.lane.b32.xlu0 %v2762, 127
    %v2794 = vpop.permute.xlu0 %2793
    %2795 = vrot.lane.b32.xlu0 %v2764, 127
    %v2796 = vpop.permute.xlu0 %2795
    %2797 = vrot.lane.b32.xlu0 %v2766, 127
    %v2798 = vpop.permute.xlu0 %2797
    %2799 = vrot.lane.b32.xlu0 %v2768, 127
    %v2800 = vpop.permute.xlu0 %2799
    %2801 = vrot.lane.b32.xlu0 %v2770, 127
    %v2802 = vpop.permute.xlu0 %2801
    %2803 = vrot.lane.b32.xlu0 %v2772, 127
    %v2804 = vpop.permute.xlu0 %2803
    %2805 = vrot.lane.b32.xlu0 %v2774, 127
    %v2806 = vpop.permute.xlu0 %2805
    %2807 = vrot.lane.b32.xlu0 %v2771, 127
    %v2808 = vpop.permute.xlu0 %2807
    %2809 = vrot.lane.b32.xlu0 %v2773, 127
    %v2810 = vpop.permute.xlu0 %2809
    %v2811 = vsel %vm1954, %v2776, %v2778
    %v2812 = vsel %vm1954, %v2780, %v2782
    %v2813 = vsel %vm1954, %v2784, %v2786
    %v2814 = vsel %vm1954, %v2788, %v2790
    %v2815 = vsel %vm1954, %v2792, %v2794
    %v2816 = vsel %vm1954, %v2796, %v2798
    %v2817 = vsel %vm1954, %v2800, %v2802
    %v2818 = vsel %vm1954, %v2804, %v2806
    %v2819 = vsel %vm1954, %v2808, %v2810
    %v2838 = vadd.f32 %v2675, %v2811
    %v2839 = vadd.f32 %v2676, %v2778
    %v2840 = vadd.f32 %v2677, %v2812
    %v2841 = vadd.f32 %v2678, %v2782
    %v2842 = vadd.f32 %v2679, %v2813
    %v2843 = vadd.f32 %v2680, %v2786
    %v2844 = vadd.f32 %v2681, %v2814
    %v2845 = vadd.f32 %v2682, %v2790
    %v2846 = vadd.f32 %v2683, %v2815
    %v2847 = vadd.f32 %v2684, %v2794
    %v2848 = vadd.f32 %v2685, %v2816
    %v2849 = vadd.f32 %v2686, %v2798
    %v2850 = vadd.f32 %v2687, %v2817
    %v2851 = vadd.f32 %v2688, %v2802
    %v2852 = vadd.f32 %v2689, %v2818
    %v2853 = vadd.f32 %v2690, %v2806
    %v2854 = vadd.f32 %v2691, %v2819
    %v2855 = vadd.f32 %v2692, %v2810
    %s2856 = scalar_lea.vmem %s3, 16
    %v2857 = vld [vmem:[%s2856] ss:$8 sm:$0x3]
    %v2859 = vperm.slane %v2857, 0
    %v2860 = vperm.slane %v2857, 1
    %2861 = vrot.lane.b32.xlu0 %v2859, 2
    %v2862 = vpop.permute.xlu0 %2861
    %2863 = vrot.lane.b32.xlu0 %v2860, 2
    %v2864 = vpop.permute.xlu0 %2863
    %v2865 = vsel %vm2009, %v2862, %v2864
    %v2868 = vmul.f32 %v2577, %v2862
    %v2869 = vmul.f32 %v2578, %v2865
    %v2870 = vmul.f32 %v1830, %v2862
    %v2871 = vmul.f32 %v1831, %v2865
    %v2872 = vmul.f32 %v1832, %v2862
    %v2873 = vmul.f32 %v1833, %v2865
    %v2874 = vmul.f32 %v1834, %v2862
    %v2875 = vmul.f32 %v1835, %v2865
    %v2876 = vmul.f32 %v1836, %v2862
    %v2877 = vmul.f32 %v1837, %v2865
    %v2878 = vmul.f32 %v1838, %v2862
    %v2879 = vmul.f32 %v1839, %v2865
    %v2880 = vmul.f32 %v1840, %v2862
    %v2881 = vmul.f32 %v1841, %v2865
    %v2882 = vmul.f32 %v1842, %v2862
    %v2883 = vmul.f32 %v1843, %v2865
    %v2884 = vmul.f32 %v2579, %v2862
    %v2885 = vmul.f32 %v2580, %v2865
    %v2904 = vrot.slane %v2868, 2
    %v2905 = vrot.slane %v2870, 2
    %v2906 = vsel %vm2622, %v2904, %v2905
    %v2907 = vrot.slane %v2869, 2
    %v2908 = vrot.slane %v2871, 2
    %v2909 = vsel %vm2622, %v2907, %v2908
    %v2910 = vrot.slane %v2872, 2
    %v2911 = vsel %vm2622, %v2905, %v2910
    %v2912 = vrot.slane %v2873, 2
    %v2913 = vsel %vm2622, %v2908, %v2912
    %v2914 = vrot.slane %v2874, 2
    %v2915 = vsel %vm2622, %v2910, %v2914
    %v2916 = vrot.slane %v2875, 2
    %v2917 = vsel %vm2622, %v2912, %v2916
    %v2918 = vrot.slane %v2876, 2
    %v2919 = vsel %vm2622, %v2914, %v2918
    %v2920 = vrot.slane %v2877, 2
    %v2921 = vsel %vm2622, %v2916, %v2920
    %v2922 = vrot.slane %v2878, 2
    %v2923 = vsel %vm2622, %v2918, %v2922
    %v2924 = vrot.slane %v2879, 2
    %v2925 = vsel %vm2622, %v2920, %v2924
    %v2926 = vrot.slane %v2880, 2
    %v2927 = vsel %vm2622, %v2922, %v2926
    %v2928 = vrot.slane %v2881, 2
    %v2929 = vsel %vm2622, %v2924, %v2928
    %v2930 = vrot.slane %v2882, 2
    %v2931 = vsel %vm2622, %v2926, %v2930
    %v2932 = vrot.slane %v2883, 2
    %v2933 = vsel %vm2622, %v2928, %v2932
    %v2934 = vrot.slane %v2884, 2
    %v2935 = vsel %vm2622, %v2930, %v2934
    %v2936 = vrot.slane %v2885, 2
    %v2937 = vsel %vm2622, %v2932, %v2936
    %2938 = vrot.lane.b32.xlu0 %v2906, 126
    %v2939 = vpop.permute.xlu0 %2938
    %2940 = vrot.lane.b32.xlu0 %v2909, 126
    %v2941 = vpop.permute.xlu0 %2940
    %2942 = vrot.lane.b32.xlu0 %v2911, 126
    %v2943 = vpop.permute.xlu0 %2942
    %2944 = vrot.lane.b32.xlu0 %v2913, 126
    %v2945 = vpop.permute.xlu0 %2944
    %2946 = vrot.lane.b32.xlu0 %v2915, 126
    %v2947 = vpop.permute.xlu0 %2946
    %2948 = vrot.lane.b32.xlu0 %v2917, 126
    %v2949 = vpop.permute.xlu0 %2948
    %2950 = vrot.lane.b32.xlu0 %v2919, 126
    %v2951 = vpop.permute.xlu0 %2950
    %2952 = vrot.lane.b32.xlu0 %v2921, 126
    %v2953 = vpop.permute.xlu0 %2952
    %2954 = vrot.lane.b32.xlu0 %v2923, 126
    %v2955 = vpop.permute.xlu0 %2954
    %2956 = vrot.lane.b32.xlu0 %v2925, 126
    %v2957 = vpop.permute.xlu0 %2956
    %2958 = vrot.lane.b32.xlu0 %v2927, 126
    %v2959 = vpop.permute.xlu0 %2958
    %2960 = vrot.lane.b32.xlu0 %v2929, 126
    %v2961 = vpop.permute.xlu0 %2960
    %2962 = vrot.lane.b32.xlu0 %v2931, 126
    %v2963 = vpop.permute.xlu0 %2962
    %2964 = vrot.lane.b32.xlu0 %v2933, 126
    %v2965 = vpop.permute.xlu0 %2964
    %2966 = vrot.lane.b32.xlu0 %v2935, 126
    %v2967 = vpop.permute.xlu0 %2966
    %2968 = vrot.lane.b32.xlu0 %v2937, 126
    %v2969 = vpop.permute.xlu0 %2968
    %2970 = vrot.lane.b32.xlu0 %v2934, 126
    %v2971 = vpop.permute.xlu0 %2970
    %2972 = vrot.lane.b32.xlu0 %v2936, 126
    %v2973 = vpop.permute.xlu0 %2972
    %v2974 = vsel %vm2085, %v2939, %v2941
    %v2975 = vsel %vm2085, %v2943, %v2945
    %v2976 = vsel %vm2085, %v2947, %v2949
    %v2977 = vsel %vm2085, %v2951, %v2953
    %v2978 = vsel %vm2085, %v2955, %v2957
    %v2979 = vsel %vm2085, %v2959, %v2961
    %v2980 = vsel %vm2085, %v2963, %v2965
    %v2981 = vsel %vm2085, %v2967, %v2969
    %v2982 = vsel %vm2085, %v2971, %v2973
    %v3001 = vadd.f32 %v2838, %v2974
    %v3002 = vadd.f32 %v2839, %v2941
    %v3003 = vadd.f32 %v2840, %v2975
    %v3004 = vadd.f32 %v2841, %v2945
    %v3005 = vadd.f32 %v2842, %v2976
    %v3006 = vadd.f32 %v2843, %v2949
    %v3007 = vadd.f32 %v2844, %v2977
    %v3008 = vadd.f32 %v2845, %v2953
    %v3009 = vadd.f32 %v2846, %v2978
    %v3010 = vadd.f32 %v2847, %v2957
    %v3011 = vadd.f32 %v2848, %v2979
    %v3012 = vadd.f32 %v2849, %v2961
    %v3013 = vadd.f32 %v2850, %v2980
    %v3014 = vadd.f32 %v2851, %v2965
    %v3015 = vadd.f32 %v2852, %v2981
    %v3016 = vadd.f32 %v2853, %v2969
    %v3017 = vadd.f32 %v2854, %v2982
    %v3018 = vadd.f32 %v2855, %v2973
    %v3019 = vmul.f32 %v3001, %v1809
    %v3020 = vmul.f32 %v3002, %v1810
    %v3021 = vmul.f32 %v3003, %v1811
    %v3022 = vmul.f32 %v3004, %v1812
    %v3023 = vmul.f32 %v3005, %v1813
    %v3024 = vmul.f32 %v3006, %v1814
    %v3025 = vmul.f32 %v3007, %v1815
    %v3026 = vmul.f32 %v3008, %v1816
    %v3027 = vmul.f32 %v3009, %v1817
    %v3028 = vmul.f32 %v3010, %v1818
    %v3029 = vmul.f32 %v3011, %v1819
    %v3030 = vmul.f32 %v3012, %v1820
    %v3031 = vmul.f32 %v3013, %v1821
    %v3032 = vmul.f32 %v3014, %v1822
    %v3033 = vmul.f32 %v3015, %v1823
    %v3034 = vmul.f32 %v3016, %v1824
    %v3035 = vmul.f32 %v3017, %v1825
    %v3036 = vmul.f32 %v3018, %v1826
    %vm3055 = vcmask 1040384
    %v3056 = vrot.slane %v3019, 7
    %v3057 = vrot.slane %v3020, 7
    %v3058 = vrot.slane %v3021, 7
    %v3059 = vsel %vm3055, %v3056, %v3058
    %v3060 = vrot.slane %v3022, 7
    %v3061 = vsel %vm3055, %v3057, %v3060
    %v3062 = vrot.slane %v3023, 7
    %v3063 = vsel %vm3055, %v3058, %v3062
    %v3064 = vrot.slane %v3024, 7
    %v3065 = vsel %vm3055, %v3060, %v3064
    %v3066 = vrot.slane %v3025, 7
    %v3067 = vsel %vm3055, %v3062, %v3066
    %v3068 = vrot.slane %v3026, 7
    %v3069 = vsel %vm3055, %v3064, %v3068
    %v3070 = vrot.slane %v3027, 7
    %v3071 = vsel %vm3055, %v3066, %v3070
    %v3072 = vrot.slane %v3028, 7
    %v3073 = vsel %vm3055, %v3068, %v3072
    %v3074 = vrot.slane %v3029, 7
    %v3075 = vsel %vm3055, %v3070, %v3074
    %v3076 = vrot.slane %v3030, 7
    %v3077 = vsel %vm3055, %v3072, %v3076
    %v3078 = vrot.slane %v3031, 7
    %v3079 = vsel %vm3055, %v3074, %v3078
    %v3080 = vrot.slane %v3032, 7
    %v3081 = vsel %vm3055, %v3076, %v3080
    %v3082 = vrot.slane %v3033, 7
    %v3083 = vsel %vm3055, %v3078, %v3082
    %v3084 = vrot.slane %v3034, 7
    %v3085 = vsel %vm3055, %v3080, %v3084
    %v3086 = vrot.slane %v3035, 7
    %v3087 = vsel %vm3055, %v3082, %v3086
    %v3088 = vrot.slane %v3036, 7
    %v3089 = vsel %vm3055, %v3084, %v3088
    %3090 = vrot.lane.b32.xlu0 %v3056, 1
    %v3091 = vpop.permute.xlu0 %3090
    %3092 = vrot.lane.b32.xlu0 %v3057, 1
    %v3093 = vpop.permute.xlu0 %3092
    %3094 = vrot.lane.b32.xlu0 %v3059, 1
    %v3095 = vpop.permute.xlu0 %3094
    %3096 = vrot.lane.b32.xlu0 %v3061, 1
    %v3097 = vpop.permute.xlu0 %3096
    %3098 = vrot.lane.b32.xlu0 %v3063, 1
    %v3099 = vpop.permute.xlu0 %3098
    %3100 = vrot.lane.b32.xlu0 %v3065, 1
    %v3101 = vpop.permute.xlu0 %3100
    %3102 = vrot.lane.b32.xlu0 %v3067, 1
    %v3103 = vpop.permute.xlu0 %3102
    %3104 = vrot.lane.b32.xlu0 %v3069, 1
    %v3105 = vpop.permute.xlu0 %3104
    %3106 = vrot.lane.b32.xlu0 %v3071, 1
    %v3107 = vpop.permute.xlu0 %3106
    %3108 = vrot.lane.b32.xlu0 %v3073, 1
    %v3109 = vpop.permute.xlu0 %3108
    %3110 = vrot.lane.b32.xlu0 %v3075, 1
    %v3111 = vpop.permute.xlu0 %3110
    %3112 = vrot.lane.b32.xlu0 %v3077, 1
    %v3113 = vpop.permute.xlu0 %3112
    %3114 = vrot.lane.b32.xlu0 %v3079, 1
    %v3115 = vpop.permute.xlu0 %3114
    %3116 = vrot.lane.b32.xlu0 %v3081, 1
    %v3117 = vpop.permute.xlu0 %3116
    %3118 = vrot.lane.b32.xlu0 %v3083, 1
    %v3119 = vpop.permute.xlu0 %3118
    %3120 = vrot.lane.b32.xlu0 %v3085, 1
    %v3121 = vpop.permute.xlu0 %3120
    %3122 = vrot.lane.b32.xlu0 %v3087, 1
    %v3123 = vpop.permute.xlu0 %3122
    %3124 = vrot.lane.b32.xlu0 %v3089, 1
    %v3125 = vpop.permute.xlu0 %3124
    %v3126 = vsel %vm1878, %v3091, %v3093
    %v3127 = vsel %vm1878, %v3095, %v3097
    %v3128 = vsel %vm1878, %v3099, %v3101
    %v3129 = vsel %vm1878, %v3103, %v3105
    %v3130 = vsel %vm1878, %v3107, %v3109
    %v3131 = vsel %vm1878, %v3111, %v3113
    %v3132 = vsel %vm1878, %v3115, %v3117
    %v3133 = vsel %vm1878, %v3119, %v3121
    %v3134 = vsel %vm1878, %v3123, %v3125
    %vm3153 = vcmask 1047561
    %3154 = vst.msk [vmem:[#allocation4] sm:$0xfe] %vm3153, %v3091
    %vm3155 = vcmask 56321
    %3156 = vst.msk [vmem:[#allocation4 + $0x8] sm:$0xfe] %vm3155, %v3126
    %vm3157 = vcmask 1047560
    %3158 = vst.msk [vmem:[#allocation4 + $0x10] sm:$0xff] %vm3157, %v3095
    %vm3159 = vcmask 56320
    %3160 = vst.msk [vmem:[#allocation4 + $0x18] sm:$0xff] %vm3159, %v3127
    %3161 = vst.msk [vmem:[#allocation4 + $0x20] sm:$0xff] %vm3157, %v3099
    %3162 = vst.msk [vmem:[#allocation4 + $0x28] sm:$0xff] %vm3159, %v3128
    %3163 = vst.msk [vmem:[#allocation4 + $0x30] sm:$0xff] %vm3157, %v3103
    %3164 = vst.msk [vmem:[#allocation4 + $0x38] sm:$0xff] %vm3159, %v3129
    %3165 = vst.msk [vmem:[#allocation4 + $0x40] sm:$0xff] %vm3157, %v3107
    %3166 = vst.msk [vmem:[#allocation4 + $0x48] sm:$0xff] %vm3159, %v3130
    %3167 = vst.msk [vmem:[#allocation4 + $0x50] sm:$0xff] %vm3157, %v3111
    %3168 = vst.msk [vmem:[#allocation4 + $0x58] sm:$0xff] %vm3159, %v3131
    %3169 = vst.msk [vmem:[#allocation4 + $0x60] sm:$0xff] %vm3157, %v3115
    %3170 = vst.msk [vmem:[#allocation4 + $0x68] sm:$0xff] %vm3159, %v3132
    %3171 = vst.msk [vmem:[#allocation4 + $0x70] sm:$0xff] %vm3157, %v3119
    %3172 = vst.msk [vmem:[#allocation4 + $0x78] sm:$0xff] %vm3159, %v3133
    %vm3173 = vcmask 1042440
    %3174 = vst.msk [vmem:[#allocation4 + $0x80] sm:$0x7] %vm3173, %v3123
    %vm3175 = vcmask 51200
    %3176 = vst.msk [vmem:[#allocation4 + $0x88] sm:$0x7] %vm3175, %v3134
    %v3177 = vld [vmem:[%s4] ss:$8 sm:$0x3]
    %v3178 = vld [vmem:[#allocation4] sm:$0xff]
    %v3179 = vld [vmem:[#allocation4 + $0x8] sm:$0xff]
    %v3180 = vld [vmem:[#allocation4 + $0x10] sm:$0xff]
    %v3181 = vld [vmem:[#allocation4 + $0x18] sm:$0xff]
    %v3182 = vld [vmem:[#allocation4 + $0x20] sm:$0xff]
    %v3183 = vld [vmem:[#allocation4 + $0x28] sm:$0xff]
    %v3184 = vld [vmem:[#allocation4 + $0x30] sm:$0xff]
    %v3185 = vld [vmem:[#allocation4 + $0x38] sm:$0xff]
    %v3186 = vld [vmem:[#allocation4 + $0x40] sm:$0xff]
    %v3187 = vld [vmem:[#allocation4 + $0x48] sm:$0xff]
    %v3188 = vld [vmem:[#allocation4 + $0x50] sm:$0xff]
    %v3189 = vld [vmem:[#allocation4 + $0x58] sm:$0xff]
    %v3190 = vld [vmem:[#allocation4 + $0x60] sm:$0xff]
    %v3191 = vld [vmem:[#allocation4 + $0x68] sm:$0xff]
    %v3192 = vld [vmem:[#allocation4 + $0x70] sm:$0xff]
    %v3193 = vld [vmem:[#allocation4 + $0x78] sm:$0xff]
    %v3194 = vld [vmem:[#allocation4 + $0x80] sm:$0x3]
    %v3195 = vld [vmem:[#allocation4 + $0x88] sm:$0x3]
    %v3197 = vperm.slane %v3177, 0
    %v3198 = vperm.slane %v3177, 1
    %v3201 = vmul.f32 %v3178, %v3197
    %v3202 = vmul.f32 %v3179, %v3198
    %v3203 = vmul.f32 %v3180, %v3197
    %v3204 = vmul.f32 %v3181, %v3198
    %v3205 = vmul.f32 %v3182, %v3197
    %v3206 = vmul.f32 %v3183, %v3198
    %v3207 = vmul.f32 %v3184, %v3197
    %v3208 = vmul.f32 %v3185, %v3198
    %v3209 = vmul.f32 %v3186, %v3197
    %v3210 = vmul.f32 %v3187, %v3198
    %v3211 = vmul.f32 %v3188, %v3197
    %v3212 = vmul.f32 %v3189, %v3198
    %v3213 = vmul.f32 %v3190, %v3197
    %v3214 = vmul.f32 %v3191, %v3198
    %v3215 = vmul.f32 %v3192, %v3197
    %v3216 = vmul.f32 %v3193, %v3198
    %v3217 = vmul.f32 %v3194, %v3197
    %v3218 = vmul.f32 %v3195, %v3198
    %s3219 = scalar_lea.vmem %s4, 1
    %v3220 = vld [vmem:[%s3219] ss:$8 sm:$0x3]
    %v3222 = vperm.slane %v3220, 0
    %v3223 = vperm.slane %v3220, 1
    %3224 = vrot.lane.b32.xlu0 %v3222, 1
    %v3225 = vpop.permute.xlu0 %3224
    %3226 = vrot.lane.b32.xlu0 %v3223, 1
    %v3227 = vpop.permute.xlu0 %3226
    %v3228 = vsel %vm1878, %v3225, %v3227
    %v3231 = vmul.f32 %v3178, %v3225
    %v3232 = vmul.f32 %v3179, %v3228
    %v3233 = vmul.f32 %v3180, %v3225
    %v3234 = vmul.f32 %v3181, %v3228
    %v3235 = vmul.f32 %v3182, %v3225
    %v3236 = vmul.f32 %v3183, %v3228
    %v3237 = vmul.f32 %v3184, %v3225
    %v3238 = vmul.f32 %v3185, %v3228
    %v3239 = vmul.f32 %v3186, %v3225
    %v3240 = vmul.f32 %v3187, %v3228
    %v3241 = vmul.f32 %v3188, %v3225
    %v3242 = vmul.f32 %v3189, %v3228
    %v3243 = vmul.f32 %v3190, %v3225
    %v3244 = vmul.f32 %v3191, %v3228
    %v3245 = vmul.f32 %v3192, %v3225
    %v3246 = vmul.f32 %v3193, %v3228
    %v3247 = vmul.f32 %v3194, %v3225
    %v3248 = vmul.f32 %v3195, %v3228
    %3267 = vrot.lane.b32.xlu0 %v3231, 127
    %v3268 = vpop.permute.xlu0 %3267
    %3269 = vrot.lane.b32.xlu0 %v3232, 127
    %v3270 = vpop.permute.xlu0 %3269
    %3271 = vrot.lane.b32.xlu0 %v3233, 127
    %v3272 = vpop.permute.xlu0 %3271
    %3273 = vrot.lane.b32.xlu0 %v3234, 127
    %v3274 = vpop.permute.xlu0 %3273
    %3275 = vrot.lane.b32.xlu0 %v3235, 127
    %v3276 = vpop.permute.xlu0 %3275
    %3277 = vrot.lane.b32.xlu0 %v3236, 127
    %v3278 = vpop.permute.xlu0 %3277
    %3279 = vrot.lane.b32.xlu0 %v3237, 127
    %v3280 = vpop.permute.xlu0 %3279
    %3281 = vrot.lane.b32.xlu0 %v3238, 127
    %v3282 = vpop.permute.xlu0 %3281
    %3283 = vrot.lane.b32.xlu0 %v3239, 127
    %v3284 = vpop.permute.xlu0 %3283
    %3285 = vrot.lane.b32.xlu0 %v3240, 127
    %v3286 = vpop.permute.xlu0 %3285
    %3287 = vrot.lane.b32.xlu0 %v3241, 127
    %v3288 = vpop.permute.xlu0 %3287
    %3289 = vrot.lane.b32.xlu0 %v3242, 127
    %v3290 = vpop.permute.xlu0 %3289
    %3291 = vrot.lane.b32.xlu0 %v3243, 127
    %v3292 = vpop.permute.xlu0 %3291
    %3293 = vrot.lane.b32.xlu0 %v3244, 127
    %v3294 = vpop.permute.xlu0 %3293
    %3295 = vrot.lane.b32.xlu0 %v3245, 127
    %v3296 = vpop.permute.xlu0 %3295
    %3297 = vrot.lane.b32.xlu0 %v3246, 127
    %v3298 = vpop.permute.xlu0 %3297
    %3299 = vrot.lane.b32.xlu0 %v3247, 127
    %v3300 = vpop.permute.xlu0 %3299
    %3301 = vrot.lane.b32.xlu0 %v3248, 127
    %v3302 = vpop.permute.xlu0 %3301
    %v3303 = vsel %vm1954, %v3268, %v3270
    %v3304 = vsel %vm1954, %v3272, %v3274
    %v3305 = vsel %vm1954, %v3276, %v3278
    %v3306 = vsel %vm1954, %v3280, %v3282
    %v3307 = vsel %vm1954, %v3284, %v3286
    %v3308 = vsel %vm1954, %v3288, %v3290
    %v3309 = vsel %vm1954, %v3292, %v3294
    %v3310 = vsel %vm1954, %v3296, %v3298
    %v3311 = vsel %vm1954, %v3300, %v3302
    %v3330 = vadd.f32 %v3201, %v3303
    %v3331 = vadd.f32 %v3202, %v3270
    %v3332 = vadd.f32 %v3203, %v3304
    %v3333 = vadd.f32 %v3204, %v3274
    %v3334 = vadd.f32 %v3205, %v3305
    %v3335 = vadd.f32 %v3206, %v3278
    %v3336 = vadd.f32 %v3207, %v3306
    %v3337 = vadd.f32 %v3208, %v3282
    %v3338 = vadd.f32 %v3209, %v3307
    %v3339 = vadd.f32 %v3210, %v3286
    %v3340 = vadd.f32 %v3211, %v3308
    %v3341 = vadd.f32 %v3212, %v3290
    %v3342 = vadd.f32 %v3213, %v3309
    %v3343 = vadd.f32 %v3214, %v3294
    %v3344 = vadd.f32 %v3215, %v3310
    %v3345 = vadd.f32 %v3216, %v3298
    %v3346 = vadd.f32 %v3217, %v3311
    %v3347 = vadd.f32 %v3218, %v3302
    %s3348 = scalar_lea.vmem %s4, 2
    %v3349 = vld [vmem:[%s3348] ss:$8 sm:$0x3]
    %v3351 = vperm.slane %v3349, 0
    %v3352 = vperm.slane %v3349, 1
    %3353 = vrot.lane.b32.xlu0 %v3351, 2
    %v3354 = vpop.permute.xlu0 %3353
    %3355 = vrot.lane.b32.xlu0 %v3352, 2
    %v3356 = vpop.permute.xlu0 %3355
    %v3357 = vsel %vm2009, %v3354, %v3356
    %v3360 = vmul.f32 %v3178, %v3354
    %v3361 = vmul.f32 %v3179, %v3357
    %v3362 = vmul.f32 %v3180, %v3354
    %v3363 = vmul.f32 %v3181, %v3357
    %v3364 = vmul.f32 %v3182, %v3354
    %v3365 = vmul.f32 %v3183, %v3357
    %v3366 = vmul.f32 %v3184, %v3354
    %v3367 = vmul.f32 %v3185, %v3357
    %v3368 = vmul.f32 %v3186, %v3354
    %v3369 = vmul.f32 %v3187, %v3357
    %v3370 = vmul.f32 %v3188, %v3354
    %v3371 = vmul.f32 %v3189, %v3357
    %v3372 = vmul.f32 %v3190, %v3354
    %v3373 = vmul.f32 %v3191, %v3357
    %v3374 = vmul.f32 %v3192, %v3354
    %v3375 = vmul.f32 %v3193, %v3357
    %v3376 = vmul.f32 %v3194, %v3354
    %v3377 = vmul.f32 %v3195, %v3357
    %3396 = vrot.lane.b32.xlu0 %v3360, 126
    %v3397 = vpop.permute.xlu0 %3396
    %3398 = vrot.lane.b32.xlu0 %v3361, 126
    %v3399 = vpop.permute.xlu0 %3398
    %3400 = vrot.lane.b32.xlu0 %v3362, 126
    %v3401 = vpop.permute.xlu0 %3400
    %3402 = vrot.lane.b32.xlu0 %v3363, 126
    %v3403 = vpop.permute.xlu0 %3402
    %3404 = vrot.lane.b32.xlu0 %v3364, 126
    %v3405 = vpop.permute.xlu0 %3404
    %3406 = vrot.lane.b32.xlu0 %v3365, 126
    %v3407 = vpop.permute.xlu0 %3406
    %3408 = vrot.lane.b32.xlu0 %v3366, 126
    %v3409 = vpop.permute.xlu0 %3408
    %3410 = vrot.lane.b32.xlu0 %v3367, 126
    %v3411 = vpop.permute.xlu0 %3410
    %3412 = vrot.lane.b32.xlu0 %v3368, 126
    %v3413 = vpop.permute.xlu0 %3412
    %3414 = vrot.lane.b32.xlu0 %v3369, 126
    %v3415 = vpop.permute.xlu0 %3414
    %3416 = vrot.lane.b32.xlu0 %v3370, 126
    %v3417 = vpop.permute.xlu0 %3416
    %3418 = vrot.lane.b32.xlu0 %v3371, 126
    %v3419 = vpop.permute.xlu0 %3418
    %3420 = vrot.lane.b32.xlu0 %v3372, 126
    %v3421 = vpop.permute.xlu0 %3420
    %3422 = vrot.lane.b32.xlu0 %v3373, 126
    %v3423 = vpop.permute.xlu0 %3422
    %3424 = vrot.lane.b32.xlu0 %v3374, 126
    %v3425 = vpop.permute.xlu0 %3424
    %3426 = vrot.lane.b32.xlu0 %v3375, 126
    %v3427 = vpop.permute.xlu0 %3426
    %3428 = vrot.lane.b32.xlu0 %v3376, 126
    %v3429 = vpop.permute.xlu0 %3428
    %3430 = vrot.lane.b32.xlu0 %v3377, 126
    %v3431 = vpop.permute.xlu0 %3430
    %v3432 = vsel %vm2085, %v3397, %v3399
    %v3433 = vsel %vm2085, %v3401, %v3403
    %v3434 = vsel %vm2085, %v3405, %v3407
    %v3435 = vsel %vm2085, %v3409, %v3411
    %v3436 = vsel %vm2085, %v3413, %v3415
    %v3437 = vsel %vm2085, %v3417, %v3419
    %v3438 = vsel %vm2085, %v3421, %v3423
    %v3439 = vsel %vm2085, %v3425, %v3427
    %v3440 = vsel %vm2085, %v3429, %v3431
    %v3459 = vadd.f32 %v3330, %v3432
    %v3460 = vadd.f32 %v3331, %v3399
    %v3461 = vadd.f32 %v3332, %v3433
    %v3462 = vadd.f32 %v3333, %v3403
    %v3463 = vadd.f32 %v3334, %v3434
    %v3464 = vadd.f32 %v3335, %v3407
    %v3465 = vadd.f32 %v3336, %v3435
    %v3466 = vadd.f32 %v3337, %v3411
    %v3467 = vadd.f32 %v3338, %v3436
    %v3468 = vadd.f32 %v3339, %v3415
    %v3469 = vadd.f32 %v3340, %v3437
    %v3470 = vadd.f32 %v3341, %v3419
    %v3471 = vadd.f32 %v3342, %v3438
    %v3472 = vadd.f32 %v3343, %v3423
    %v3473 = vadd.f32 %v3344, %v3439
    %v3474 = vadd.f32 %v3345, %v3427
    %v3475 = vadd.f32 %v3346, %v3440
    %v3476 = vadd.f32 %v3347, %v3431
    %s3477 = scalar_lea.vmem %s4, 3
    %v3478 = vld [vmem:[%s3477] ss:$8 sm:$0x3]
    %v3479 = vld [vmem:[#allocation4] sm:$0xfe]
    %v3480 = vld [vmem:[#allocation4 + $0x8] sm:$0xfe]
    %v3481 = vld [vmem:[#allocation4 + $0x80] sm:$0x7]
    %v3482 = vld [vmem:[#allocation4 + $0x88] sm:$0x7]
    %v3484 = vperm.slane %v3478, 0
    %v3485 = vperm.slane %v3478, 1
    %v3488 = vmul.f32 %v3479, %v3484
    %v3489 = vmul.f32 %v3480, %v3485
    %v3490 = vmul.f32 %v3180, %v3484
    %v3491 = vmul.f32 %v3181, %v3485
    %v3492 = vmul.f32 %v3182, %v3484
    %v3493 = vmul.f32 %v3183, %v3485
    %v3494 = vmul.f32 %v3184, %v3484
    %v3495 = vmul.f32 %v3185, %v3485
    %v3496 = vmul.f32 %v3186, %v3484
    %v3497 = vmul.f32 %v3187, %v3485
    %v3498 = vmul.f32 %v3188, %v3484
    %v3499 = vmul.f32 %v3189, %v3485
    %v3500 = vmul.f32 %v3190, %v3484
    %v3501 = vmul.f32 %v3191, %v3485
    %v3502 = vmul.f32 %v3192, %v3484
    %v3503 = vmul.f32 %v3193, %v3485
    %v3504 = vmul.f32 %v3481, %v3484
    %v3505 = vmul.f32 %v3482, %v3485
    %v3524 = vrot.slane %v3488, 1
    %v3525 = vrot.slane %v3490, 1
    %v3526 = vsel %vm2178, %v3524, %v3525
    %v3527 = vrot.slane %v3489, 1
    %v3528 = vrot.slane %v3491, 1
    %v3529 = vsel %vm2178, %v3527, %v3528
    %v3530 = vrot.slane %v3492, 1
    %v3531 = vsel %vm2178, %v3525, %v3530
    %v3532 = vrot.slane %v3493, 1
    %v3533 = vsel %vm2178, %v3528, %v3532
    %v3534 = vrot.slane %v3494, 1
    %v3535 = vsel %vm2178, %v3530, %v3534
    %v3536 = vrot.slane %v3495, 1
    %v3537 = vsel %vm2178, %v3532, %v3536
    %v3538 = vrot.slane %v3496, 1
    %v3539 = vsel %vm2178, %v3534, %v3538
    %v3540 = vrot.slane %v3497, 1
    %v3541 = vsel %vm2178, %v3536, %v3540
    %v3542 = vrot.slane %v3498, 1
    %v3543 = vsel %vm2178, %v3538, %v3542
    %v3544 = vrot.slane %v3499, 1
    %v3545 = vsel %vm2178, %v3540, %v3544
    %v3546 = vrot.slane %v3500, 1
    %v3547 = vsel %vm2178, %v3542, %v3546
    %v3548 = vrot.slane %v3501, 1
    %v3549 = vsel %vm2178, %v3544, %v3548
    %v3550 = vrot.slane %v3502, 1
    %v3551 = vsel %vm2178, %v3546, %v3550
    %v3552 = vrot.slane %v3503, 1
    %v3553 = vsel %vm2178, %v3548, %v3552
    %v3554 = vrot.slane %v3504, 1
    %v3555 = vsel %vm2178, %v3550, %v3554
    %v3556 = vrot.slane %v3505, 1
    %v3557 = vsel %vm2178, %v3552, %v3556
    %v3576 = vadd.f32 %v3459, %v3526
    %v3577 = vadd.f32 %v3460, %v3529
    %v3578 = vadd.f32 %v3461, %v3531
    %v3579 = vadd.f32 %v3462, %v3533
    %v3580 = vadd.f32 %v3463, %v3535
    %v3581 = vadd.f32 %v3464, %v3537
    %v3582 = vadd.f32 %v3465, %v3539
    %v3583 = vadd.f32 %v3466, %v3541
    %v3584 = vadd.f32 %v3467, %v3543
    %v3585 = vadd.f32 %v3468, %v3545
    %v3586 = vadd.f32 %v3469, %v3547
    %v3587 = vadd.f32 %v3470, %v3549
    %v3588 = vadd.f32 %v3471, %v3551
    %v3589 = vadd.f32 %v3472, %v3553
    %v3590 = vadd.f32 %v3473, %v3555
    %v3591 = vadd.f32 %v3474, %v3557
    %v3592 = vadd.f32 %v3475, %v3554
    %v3593 = vadd.f32 %v3476, %v3556
    %s3594 = scalar_lea.vmem %s4, 4
    %v3595 = vld [vmem:[%s3594] ss:$8 sm:$0x3]
    %v3597 = vperm.slane %v3595, 0
    %v3598 = vperm.slane %v3595, 1
    %3599 = vrot.lane.b32.xlu0 %v3597, 1
    %v3600 = vpop.permute.xlu0 %3599
    %3601 = vrot.lane.b32.xlu0 %v3598, 1
    %v3602 = vpop.permute.xlu0 %3601
    %v3603 = vsel %vm1878, %v3600, %v3602
    %v3606 = vmul.f32 %v3479, %v3600
    %v3607 = vmul.f32 %v3480, %v3603
    %v3608 = vmul.f32 %v3180, %v3600
    %v3609 = vmul.f32 %v3181, %v3603
    %v3610 = vmul.f32 %v3182, %v3600
    %v3611 = vmul.f32 %v3183, %v3603
    %v3612 = vmul.f32 %v3184, %v3600
    %v3613 = vmul.f32 %v3185, %v3603
    %v3614 = vmul.f32 %v3186, %v3600
    %v3615 = vmul.f32 %v3187, %v3603
    %v3616 = vmul.f32 %v3188, %v3600
    %v3617 = vmul.f32 %v3189, %v3603
    %v3618 = vmul.f32 %v3190, %v3600
    %v3619 = vmul.f32 %v3191, %v3603
    %v3620 = vmul.f32 %v3192, %v3600
    %v3621 = vmul.f32 %v3193, %v3603
    %v3622 = vmul.f32 %v3481, %v3600
    %v3623 = vmul.f32 %v3482, %v3603
    %v3642 = vrot.slane %v3606, 1
    %v3643 = vrot.slane %v3608, 1
    %v3644 = vsel %vm2178, %v3642, %v3643
    %v3645 = vrot.slane %v3607, 1
    %v3646 = vrot.slane %v3609, 1
    %v3647 = vsel %vm2178, %v3645, %v3646
    %v3648 = vrot.slane %v3610, 1
    %v3649 = vsel %vm2178, %v3643, %v3648
    %v3650 = vrot.slane %v3611, 1
    %v3651 = vsel %vm2178, %v3646, %v3650
    %v3652 = vrot.slane %v3612, 1
    %v3653 = vsel %vm2178, %v3648, %v3652
    %v3654 = vrot.slane %v3613, 1
    %v3655 = vsel %vm2178, %v3650, %v3654
    %v3656 = vrot.slane %v3614, 1
    %v3657 = vsel %vm2178, %v3652, %v3656
    %v3658 = vrot.slane %v3615, 1
    %v3659 = vsel %vm2178, %v3654, %v3658
    %v3660 = vrot.slane %v3616, 1
    %v3661 = vsel %vm2178, %v3656, %v3660
    %v3662 = vrot.slane %v3617, 1
    %v3663 = vsel %vm2178, %v3658, %v3662
    %v3664 = vrot.slane %v3618, 1
    %v3665 = vsel %vm2178, %v3660, %v3664
    %v3666 = vrot.slane %v3619, 1
    %v3667 = vsel %vm2178, %v3662, %v3666
    %v3668 = vrot.slane %v3620, 1
    %v3669 = vsel %vm2178, %v3664, %v3668
    %v3670 = vrot.slane %v3621, 1
    %v3671 = vsel %vm2178, %v3666, %v3670
    %v3672 = vrot.slane %v3622, 1
    %v3673 = vsel %vm2178, %v3668, %v3672
    %v3674 = vrot.slane %v3623, 1
    %v3675 = vsel %vm2178, %v3670, %v3674
    %3676 = vrot.lane.b32.xlu0 %v3644, 127
    %v3677 = vpop.permute.xlu0 %3676
    %3678 = vrot.lane.b32.xlu0 %v3647, 127
    %v3679 = vpop.permute.xlu0 %3678
    %3680 = vrot.lane.b32.xlu0 %v3649, 127
    %v3681 = vpop.permute.xlu0 %3680
    %3682 = vrot.lane.b32.xlu0 %v3651, 127
    %v3683 = vpop.permute.xlu0 %3682
    %3684 = vrot.lane.b32.xlu0 %v3653, 127
    %v3685 = vpop.permute.xlu0 %3684
    %3686 = vrot.lane.b32.xlu0 %v3655, 127
    %v3687 = vpop.permute.xlu0 %3686
    %3688 = vrot.lane.b32.xlu0 %v3657, 127
    %v3689 = vpop.permute.xlu0 %3688
    %3690 = vrot.lane.b32.xlu0 %v3659, 127
    %v3691 = vpop.permute.xlu0 %3690
    %3692 = vrot.lane.b32.xlu0 %v3661, 127
    %v3693 = vpop.permute.xlu0 %3692
    %3694 = vrot.lane.b32.xlu0 %v3663, 127
    %v3695 = vpop.permute.xlu0 %3694
    %3696 = vrot.lane.b32.xlu0 %v3665, 127
    %v3697 = vpop.permute.xlu0 %3696
    %3698 = vrot.lane.b32.xlu0 %v3667, 127
    %v3699 = vpop.permute.xlu0 %3698
    %3700 = vrot.lane.b32.xlu0 %v3669, 127
    %v3701 = vpop.permute.xlu0 %3700
    %3702 = vrot.lane.b32.xlu0 %v3671, 127
    %v3703 = vpop.permute.xlu0 %3702
    %3704 = vrot.lane.b32.xlu0 %v3673, 127
    %v3705 = vpop.permute.xlu0 %3704
    %3706 = vrot.lane.b32.xlu0 %v3675, 127
    %v3707 = vpop.permute.xlu0 %3706
    %3708 = vrot.lane.b32.xlu0 %v3672, 127
    %v3709 = vpop.permute.xlu0 %3708
    %3710 = vrot.lane.b32.xlu0 %v3674, 127
    %v3711 = vpop.permute.xlu0 %3710
    %v3712 = vsel %vm1954, %v3677, %v3679
    %v3713 = vsel %vm1954, %v3681, %v3683
    %v3714 = vsel %vm1954, %v3685, %v3687
    %v3715 = vsel %vm1954, %v3689, %v3691
    %v3716 = vsel %vm1954, %v3693, %v3695
    %v3717 = vsel %vm1954, %v3697, %v3699
    %v3718 = vsel %vm1954, %v3701, %v3703
    %v3719 = vsel %vm1954, %v3705, %v3707
    %v3720 = vsel %vm1954, %v3709, %v3711
    %v3739 = vadd.f32 %v3576, %v3712
    %v3740 = vadd.f32 %v3577, %v3679
    %v3741 = vadd.f32 %v3578, %v3713
    %v3742 = vadd.f32 %v3579, %v3683
    %v3743 = vadd.f32 %v3580, %v3714
    %v3744 = vadd.f32 %v3581, %v3687
    %v3745 = vadd.f32 %v3582, %v3715
    %v3746 = vadd.f32 %v3583, %v3691
    %v3747 = vadd.f32 %v3584, %v3716
    %v3748 = vadd.f32 %v3585, %v3695
    %v3749 = vadd.f32 %v3586, %v3717
    %v3750 = vadd.f32 %v3587, %v3699
    %v3751 = vadd.f32 %v3588, %v3718
    %v3752 = vadd.f32 %v3589, %v3703
    %v3753 = vadd.f32 %v3590, %v3719
    %v3754 = vadd.f32 %v3591, %v3707
    %v3755 = vadd.f32 %v3592, %v3720
    %v3756 = vadd.f32 %v3593, %v3711
    %s3757 = scalar_lea.vmem %s4, 5
    %v3758 = vld [vmem:[%s3757] ss:$8 sm:$0x3]
    %v3760 = vperm.slane %v3758, 0
    %v3761 = vperm.slane %v3758, 1
    %3762 = vrot.lane.b32.xlu0 %v3760, 2
    %v3763 = vpop.permute.xlu0 %3762
    %3764 = vrot.lane.b32.xlu0 %v3761, 2
    %v3765 = vpop.permute.xlu0 %3764
    %v3766 = vsel %vm2009, %v3763, %v3765
    %v3769 = vmul.f32 %v3479, %v3763
    %v3770 = vmul.f32 %v3480, %v3766
    %v3771 = vmul.f32 %v3180, %v3763
    %v3772 = vmul.f32 %v3181, %v3766
    %v3773 = vmul.f32 %v3182, %v3763
    %v3774 = vmul.f32 %v3183, %v3766
    %v3775 = vmul.f32 %v3184, %v3763
    %v3776 = vmul.f32 %v3185, %v3766
    %v3777 = vmul.f32 %v3186, %v3763
    %v3778 = vmul.f32 %v3187, %v3766
    %v3779 = vmul.f32 %v3188, %v3763
    %v3780 = vmul.f32 %v3189, %v3766
    %v3781 = vmul.f32 %v3190, %v3763
    %v3782 = vmul.f32 %v3191, %v3766
    %v3783 = vmul.f32 %v3192, %v3763
    %v3784 = vmul.f32 %v3193, %v3766
    %v3785 = vmul.f32 %v3481, %v3763
    %v3786 = vmul.f32 %v3482, %v3766
    %v3805 = vrot.slane %v3769, 1
    %v3806 = vrot.slane %v3771, 1
    %v3807 = vsel %vm2178, %v3805, %v3806
    %v3808 = vrot.slane %v3770, 1
    %v3809 = vrot.slane %v3772, 1
    %v3810 = vsel %vm2178, %v3808, %v3809
    %v3811 = vrot.slane %v3773, 1
    %v3812 = vsel %vm2178, %v3806, %v3811
    %v3813 = vrot.slane %v3774, 1
    %v3814 = vsel %vm2178, %v3809, %v3813
    %v3815 = vrot.slane %v3775, 1
    %v3816 = vsel %vm2178, %v3811, %v3815
    %v3817 = vrot.slane %v3776, 1
    %v3818 = vsel %vm2178, %v3813, %v3817
    %v3819 = vrot.slane %v3777, 1
    %v3820 = vsel %vm2178, %v3815, %v3819
    %v3821 = vrot.slane %v3778, 1
    %v3822 = vsel %vm2178, %v3817, %v3821
    %v3823 = vrot.slane %v3779, 1
    %v3824 = vsel %vm2178, %v3819, %v3823
    %v3825 = vrot.slane %v3780, 1
    %v3826 = vsel %vm2178, %v3821, %v3825
    %v3827 = vrot.slane %v3781, 1
    %v3828 = vsel %vm2178, %v3823, %v3827
    %v3829 = vrot.slane %v3782, 1
    %v3830 = vsel %vm2178, %v3825, %v3829
    %v3831 = vrot.slane %v3783, 1
    %v3832 = vsel %vm2178, %v3827, %v3831
    %v3833 = vrot.slane %v3784, 1
    %v3834 = vsel %vm2178, %v3829, %v3833
    %v3835 = vrot.slane %v3785, 1
    %v3836 = vsel %vm2178, %v3831, %v3835
    %v3837 = vrot.slane %v3786, 1
    %v3838 = vsel %vm2178, %v3833, %v3837
    %3839 = vrot.lane.b32.xlu0 %v3807, 126
    %v3840 = vpop.permute.xlu0 %3839
    %3841 = vrot.lane.b32.xlu0 %v3810, 126
    %v3842 = vpop.permute.xlu0 %3841
    %3843 = vrot.lane.b32.xlu0 %v3812, 126
    %v3844 = vpop.permute.xlu0 %3843
    %3845 = vrot.lane.b32.xlu0 %v3814, 126
    %v3846 = vpop.permute.xlu0 %3845
    %3847 = vrot.lane.b32.xlu0 %v3816, 126
    %v3848 = vpop.permute.xlu0 %3847
    %3849 = vrot.lane.b32.xlu0 %v3818, 126
    %v3850 = vpop.permute.xlu0 %3849
    %3851 = vrot.lane.b32.xlu0 %v3820, 126
    %v3852 = vpop.permute.xlu0 %3851
    %3853 = vrot.lane.b32.xlu0 %v3822, 126
    %v3854 = vpop.permute.xlu0 %3853
    %3855 = vrot.lane.b32.xlu0 %v3824, 126
    %v3856 = vpop.permute.xlu0 %3855
    %3857 = vrot.lane.b32.xlu0 %v3826, 126
    %v3858 = vpop.permute.xlu0 %3857
    %3859 = vrot.lane.b32.xlu0 %v3828, 126
    %v3860 = vpop.permute.xlu0 %3859
    %3861 = vrot.lane.b32.xlu0 %v3830, 126
    %v3862 = vpop.permute.xlu0 %3861
    %3863 = vrot.lane.b32.xlu0 %v3832, 126
    %v3864 = vpop.permute.xlu0 %3863
    %3865 = vrot.lane.b32.xlu0 %v3834, 126
    %v3866 = vpop.permute.xlu0 %3865
    %3867 = vrot.lane.b32.xlu0 %v3836, 126
    %v3868 = vpop.permute.xlu0 %3867
    %3869 = vrot.lane.b32.xlu0 %v3838, 126
    %v3870 = vpop.permute.xlu0 %3869
    %3871 = vrot.lane.b32.xlu0 %v3835, 126
    %v3872 = vpop.permute.xlu0 %3871
    %3873 = vrot.lane.b32.xlu0 %v3837, 126
    %v3874 = vpop.permute.xlu0 %3873
    %v3875 = vsel %vm2085, %v3840, %v3842
    %v3876 = vsel %vm2085, %v3844, %v3846
    %v3877 = vsel %vm2085, %v3848, %v3850
    %v3878 = vsel %vm2085, %v3852, %v3854
    %v3879 = vsel %vm2085, %v3856, %v3858
    %v3880 = vsel %vm2085, %v3860, %v3862
    %v3881 = vsel %vm2085, %v3864, %v3866
    %v3882 = vsel %vm2085, %v3868, %v3870
    %v3883 = vsel %vm2085, %v3872, %v3874
    %v3902 = vadd.f32 %v3739, %v3875
    %v3903 = vadd.f32 %v3740, %v3842
    %v3904 = vadd.f32 %v3741, %v3876
    %v3905 = vadd.f32 %v3742, %v3846
    %v3906 = vadd.f32 %v3743, %v3877
    %v3907 = vadd.f32 %v3744, %v3850
    %v3908 = vadd.f32 %v3745, %v3878
    %v3909 = vadd.f32 %v3746, %v3854
    %v3910 = vadd.f32 %v3747, %v3879
    %v3911 = vadd.f32 %v3748, %v3858
    %v3912 = vadd.f32 %v3749, %v3880
    %v3913 = vadd.f32 %v3750, %v3862
    %v3914 = vadd.f32 %v3751, %v3881
    %v3915 = vadd.f32 %v3752, %v3866
    %v3916 = vadd.f32 %v3753, %v3882
    %v3917 = vadd.f32 %v3754, %v3870
    %v3918 = vadd.f32 %v3755, %v3883
    %v3919 = vadd.f32 %v3756, %v3874
    %s3920 = scalar_lea.vmem %s4, 6
    %v3921 = vld [vmem:[%s3920] ss:$8 sm:$0x3]
    %v3922 = vld [vmem:[#allocation4] sm:$0xfc]
    %v3923 = vld [vmem:[#allocation4 + $0x8] sm:$0xfc]
    %v3924 = vld [vmem:[#allocation4 + $0x80] sm:$0xf]
    %v3925 = vld [vmem:[#allocation4 + $0x88] sm:$0xf]
    %v3927 = vperm.slane %v3921, 0
    %v3928 = vperm.slane %v3921, 1
    %v3931 = vmul.f32 %v3922, %v3927
    %v3932 = vmul.f32 %v3923, %v3928
    %v3933 = vmul.f32 %v3180, %v3927
    %v3934 = vmul.f32 %v3181, %v3928
    %v3935 = vmul.f32 %v3182, %v3927
    %v3936 = vmul.f32 %v3183, %v3928
    %v3937 = vmul.f32 %v3184, %v3927
    %v3938 = vmul.f32 %v3185, %v3928
    %v3939 = vmul.f32 %v3186, %v3927
    %v3940 = vmul.f32 %v3187, %v3928
    %v3941 = vmul.f32 %v3188, %v3927
    %v3942 = vmul.f32 %v3189, %v3928
    %v3943 = vmul.f32 %v3190, %v3927
    %v3944 = vmul.f32 %v3191, %v3928
    %v3945 = vmul.f32 %v3192, %v3927
    %v3946 = vmul.f32 %v3193, %v3928
    %v3947 = vmul.f32 %v3924, %v3927
    %v3948 = vmul.f32 %v3925, %v3928
    %v3967 = vrot.slane %v3931, 2
    %v3968 = vrot.slane %v3933, 2
    %v3969 = vsel %vm2622, %v3967, %v3968
    %v3970 = vrot.slane %v3932, 2
    %v3971 = vrot.slane %v3934, 2
    %v3972 = vsel %vm2622, %v3970, %v3971
    %v3973 = vrot.slane %v3935, 2
    %v3974 = vsel %vm2622, %v3968, %v3973
    %v3975 = vrot.slane %v3936, 2
    %v3976 = vsel %vm2622, %v3971, %v3975
    %v3977 = vrot.slane %v3937, 2
    %v3978 = vsel %vm2622, %v3973, %v3977
    %v3979 = vrot.slane %v3938, 2
    %v3980 = vsel %vm2622, %v3975, %v3979
    %v3981 = vrot.slane %v3939, 2
    %v3982 = vsel %vm2622, %v3977, %v3981
    %v3983 = vrot.slane %v3940, 2
    %v3984 = vsel %vm2622, %v3979, %v3983
    %v3985 = vrot.slane %v3941, 2
    %v3986 = vsel %vm2622, %v3981, %v3985
    %v3987 = vrot.slane %v3942, 2
    %v3988 = vsel %vm2622, %v3983, %v3987
    %v3989 = vrot.slane %v3943, 2
    %v3990 = vsel %vm2622, %v3985, %v3989
    %v3991 = vrot.slane %v3944, 2
    %v3992 = vsel %vm2622, %v3987, %v3991
    %v3993 = vrot.slane %v3945, 2
    %v3994 = vsel %vm2622, %v3989, %v3993
    %v3995 = vrot.slane %v3946, 2
    %v3996 = vsel %vm2622, %v3991, %v3995
    %v3997 = vrot.slane %v3947, 2
    %v3998 = vsel %vm2622, %v3993, %v3997
    %v3999 = vrot.slane %v3948, 2
    %v4000 = vsel %vm2622, %v3995, %v3999
    %v4019 = vadd.f32 %v3902, %v3969
    %v4020 = vadd.f32 %v3903, %v3972
    %v4021 = vadd.f32 %v3904, %v3974
    %v4022 = vadd.f32 %v3905, %v3976
    %v4023 = vadd.f32 %v3906, %v3978
    %v4024 = vadd.f32 %v3907, %v3980
    %v4025 = vadd.f32 %v3908, %v3982
    %v4026 = vadd.f32 %v3909, %v3984
    %v4027 = vadd.f32 %v3910, %v3986
    %v4028 = vadd.f32 %v3911, %v3988
    %v4029 = vadd.f32 %v3912, %v3990
    %v4030 = vadd.f32 %v3913, %v3992
    %v4031 = vadd.f32 %v3914, %v3994
    %v4032 = vadd.f32 %v3915, %v3996
    %v4033 = vadd.f32 %v3916, %v3998
    %v4034 = vadd.f32 %v3917, %v4000
    %v4035 = vadd.f32 %v3918, %v3997
    %v4036 = vadd.f32 %v3919, %v3999
    %s4037 = scalar_lea.vmem %s4, 7
    %v4038 = vld [vmem:[%s4037] ss:$8 sm:$0x3]
    %v4040 = vperm.slane %v4038, 0
    %v4041 = vperm.slane %v4038, 1
    %4042 = vrot.lane.b32.xlu0 %v4040, 1
    %v4043 = vpop.permute.xlu0 %4042
    %4044 = vrot.lane.b32.xlu0 %v4041, 1
    %v4045 = vpop.permute.xlu0 %4044
    %v4046 = vsel %vm1878, %v4043, %v4045
    %v4049 = vmul.f32 %v3922, %v4043
    %v4050 = vmul.f32 %v3923, %v4046
    %v4051 = vmul.f32 %v3180, %v4043
    %v4052 = vmul.f32 %v3181, %v4046
    %v4053 = vmul.f32 %v3182, %v4043
    %v4054 = vmul.f32 %v3183, %v4046
    %v4055 = vmul.f32 %v3184, %v4043
    %v4056 = vmul.f32 %v3185, %v4046
    %v4057 = vmul.f32 %v3186, %v4043
    %v4058 = vmul.f32 %v3187, %v4046
    %v4059 = vmul.f32 %v3188, %v4043
    %v4060 = vmul.f32 %v3189, %v4046
    %v4061 = vmul.f32 %v3190, %v4043
    %v4062 = vmul.f32 %v3191, %v4046
    %v4063 = vmul.f32 %v3192, %v4043
    %v4064 = vmul.f32 %v3193, %v4046
    %v4065 = vmul.f32 %v3924, %v4043
    %v4066 = vmul.f32 %v3925, %v4046
    %v4085 = vrot.slane %v4049, 2
    %v4086 = vrot.slane %v4051, 2
    %v4087 = vsel %vm2622, %v4085, %v4086
    %v4088 = vrot.slane %v4050, 2
    %v4089 = vrot.slane %v4052, 2
    %v4090 = vsel %vm2622, %v4088, %v4089
    %v4091 = vrot.slane %v4053, 2
    %v4092 = vsel %vm2622, %v4086, %v4091
    %v4093 = vrot.slane %v4054, 2
    %v4094 = vsel %vm2622, %v4089, %v4093
    %v4095 = vrot.slane %v4055, 2
    %v4096 = vsel %vm2622, %v4091, %v4095
    %v4097 = vrot.slane %v4056, 2
    %v4098 = vsel %vm2622, %v4093, %v4097
    %v4099 = vrot.slane %v4057, 2
    %v4100 = vsel %vm2622, %v4095, %v4099
    %v4101 = vrot.slane %v4058, 2
    %v4102 = vsel %vm2622, %v4097, %v4101
    %v4103 = vrot.slane %v4059, 2
    %v4104 = vsel %vm2622, %v4099, %v4103
    %v4105 = vrot.slane %v4060, 2
    %v4106 = vsel %vm2622, %v4101, %v4105
    %v4107 = vrot.slane %v4061, 2
    %v4108 = vsel %vm2622, %v4103, %v4107
    %v4109 = vrot.slane %v4062, 2
    %v4110 = vsel %vm2622, %v4105, %v4109
    %v4111 = vrot.slane %v4063, 2
    %v4112 = vsel %vm2622, %v4107, %v4111
    %v4113 = vrot.slane %v4064, 2
    %v4114 = vsel %vm2622, %v4109, %v4113
    %v4115 = vrot.slane %v4065, 2
    %v4116 = vsel %vm2622, %v4111, %v4115
    %v4117 = vrot.slane %v4066, 2
    %v4118 = vsel %vm2622, %v4113, %v4117
    %4119 = vrot.lane.b32.xlu0 %v4087, 127
    %v4120 = vpop.permute.xlu0 %4119
    %4121 = vrot.lane.b32.xlu0 %v4090, 127
    %v4122 = vpop.permute.xlu0 %4121
    %4123 = vrot.lane.b32.xlu0 %v4092, 127
    %v4124 = vpop.permute.xlu0 %4123
    %4125 = vrot.lane.b32.xlu0 %v4094, 127
    %v4126 = vpop.permute.xlu0 %4125
    %4127 = vrot.lane.b32.xlu0 %v4096, 127
    %v4128 = vpop.permute.xlu0 %4127
    %4129 = vrot.lane.b32.xlu0 %v4098, 127
    %v4130 = vpop.permute.xlu0 %4129
    %4131 = vrot.lane.b32.xlu0 %v4100, 127
    %v4132 = vpop.permute.xlu0 %4131
    %4133 = vrot.lane.b32.xlu0 %v4102, 127
    %v4134 = vpop.permute.xlu0 %4133
    %4135 = vrot.lane.b32.xlu0 %v4104, 127
    %v4136 = vpop.permute.xlu0 %4135
    %4137 = vrot.lane.b32.xlu0 %v4106, 127
    %v4138 = vpop.permute.xlu0 %4137
    %4139 = vrot.lane.b32.xlu0 %v4108, 127
    %v4140 = vpop.permute.xlu0 %4139
    %4141 = vrot.lane.b32.xlu0 %v4110, 127
    %v4142 = vpop.permute.xlu0 %4141
    %4143 = vrot.lane.b32.xlu0 %v4112, 127
    %v4144 = vpop.permute.xlu0 %4143
    %4145 = vrot.lane.b32.xlu0 %v4114, 127
    %v4146 = vpop.permute.xlu0 %4145
    %4147 = vrot.lane.b32.xlu0 %v4116, 127
    %v4148 = vpop.permute.xlu0 %4147
    %4149 = vrot.lane.b32.xlu0 %v4118, 127
    %v4150 = vpop.permute.xlu0 %4149
    %4151 = vrot.lane.b32.xlu0 %v4115, 127
    %v4152 = vpop.permute.xlu0 %4151
    %4153 = vrot.lane.b32.xlu0 %v4117, 127
    %v4154 = vpop.permute.xlu0 %4153
    %v4155 = vsel %vm1954, %v4120, %v4122
    %v4156 = vsel %vm1954, %v4124, %v4126
    %v4157 = vsel %vm1954, %v4128, %v4130
    %v4158 = vsel %vm1954, %v4132, %v4134
    %v4159 = vsel %vm1954, %v4136, %v4138
    %v4160 = vsel %vm1954, %v4140, %v4142
    %v4161 = vsel %vm1954, %v4144, %v4146
    %v4162 = vsel %vm1954, %v4148, %v4150
    %v4163 = vsel %vm1954, %v4152, %v4154
    %v4182 = vadd.f32 %v4019, %v4155
    %v4183 = vadd.f32 %v4020, %v4122
    %v4184 = vadd.f32 %v4021, %v4156
    %v4185 = vadd.f32 %v4022, %v4126
    %v4186 = vadd.f32 %v4023, %v4157
    %v4187 = vadd.f32 %v4024, %v4130
    %v4188 = vadd.f32 %v4025, %v4158
    %v4189 = vadd.f32 %v4026, %v4134
    %v4190 = vadd.f32 %v4027, %v4159
    %v4191 = vadd.f32 %v4028, %v4138
    %v4192 = vadd.f32 %v4029, %v4160
    %v4193 = vadd.f32 %v4030, %v4142
    %v4194 = vadd.f32 %v4031, %v4161
    %v4195 = vadd.f32 %v4032, %v4146
    %v4196 = vadd.f32 %v4033, %v4162
    %v4197 = vadd.f32 %v4034, %v4150
    %v4198 = vadd.f32 %v4035, %v4163
    %v4199 = vadd.f32 %v4036, %v4154
    %s4200 = scalar_lea.vmem %s4, 16
    %v4201 = vld [vmem:[%s4200] ss:$8 sm:$0x3]
    %v4203 = vperm.slane %v4201, 0
    %v4204 = vperm.slane %v4201, 1
    %4205 = vrot.lane.b32.xlu0 %v4203, 2
    %v4206 = vpop.permute.xlu0 %4205
    %4207 = vrot.lane.b32.xlu0 %v4204, 2
    %v4208 = vpop.permute.xlu0 %4207
    %v4209 = vsel %vm2009, %v4206, %v4208
    %v4212 = vmul.f32 %v3922, %v4206
    %v4213 = vmul.f32 %v3923, %v4209
    %v4214 = vmul.f32 %v3180, %v4206
    %v4215 = vmul.f32 %v3181, %v4209
    %v4216 = vmul.f32 %v3182, %v4206
    %v4217 = vmul.f32 %v3183, %v4209
    %v4218 = vmul.f32 %v3184, %v4206
    %v4219 = vmul.f32 %v3185, %v4209
    %v4220 = vmul.f32 %v3186, %v4206
    %v4221 = vmul.f32 %v3187, %v4209
    %v4222 = vmul.f32 %v3188, %v4206
    %v4223 = vmul.f32 %v3189, %v4209
    %v4224 = vmul.f32 %v3190, %v4206
    %v4225 = vmul.f32 %v3191, %v4209
    %v4226 = vmul.f32 %v3192, %v4206
    %v4227 = vmul.f32 %v3193, %v4209
    %v4228 = vmul.f32 %v3924, %v4206
    %v4229 = vmul.f32 %v3925, %v4209
    %v4248 = vrot.slane %v4212, 2
    %v4249 = vrot.slane %v4214, 2
    %v4250 = vsel %vm2622, %v4248, %v4249
    %v4251 = vrot.slane %v4213, 2
    %v4252 = vrot.slane %v4215, 2
    %v4253 = vsel %vm2622, %v4251, %v4252
    %v4254 = vrot.slane %v4216, 2
    %v4255 = vsel %vm2622, %v4249, %v4254
    %v4256 = vrot.slane %v4217, 2
    %v4257 = vsel %vm2622, %v4252, %v4256
    %v4258 = vrot.slane %v4218, 2
    %v4259 = vsel %vm2622, %v4254, %v4258
    %v4260 = vrot.slane %v4219, 2
    %v4261 = vsel %vm2622, %v4256, %v4260
    %v4262 = vrot.slane %v4220, 2
    %v4263 = vsel %vm2622, %v4258, %v4262
    %v4264 = vrot.slane %v4221, 2
    %v4265 = vsel %vm2622, %v4260, %v4264
    %v4266 = vrot.slane %v4222, 2
    %v4267 = vsel %vm2622, %v4262, %v4266
    %v4268 = vrot.slane %v4223, 2
    %v4269 = vsel %vm2622, %v4264, %v4268
    %v4270 = vrot.slane %v4224, 2
    %v4271 = vsel %vm2622, %v4266, %v4270
    %v4272 = vrot.slane %v4225, 2
    %v4273 = vsel %vm2622, %v4268, %v4272
    %v4274 = vrot.slane %v4226, 2
    %v4275 = vsel %vm2622, %v4270, %v4274
    %v4276 = vrot.slane %v4227, 2
    %v4277 = vsel %vm2622, %v4272, %v4276
    %v4278 = vrot.slane %v4228, 2
    %v4279 = vsel %vm2622, %v4274, %v4278
    %v4280 = vrot.slane %v4229, 2
    %v4281 = vsel %vm2622, %v4276, %v4280
    %4282 = vrot.lane.b32.xlu0 %v4250, 126
    %v4283 = vpop.permute.xlu0 %4282
    %4284 = vrot.lane.b32.xlu0 %v4253, 126
    %v4285 = vpop.permute.xlu0 %4284
    %4286 = vrot.lane.b32.xlu0 %v4255, 126
    %v4287 = vpop.permute.xlu0 %4286
    %4288 = vrot.lane.b32.xlu0 %v4257, 126
    %v4289 = vpop.permute.xlu0 %4288
    %4290 = vrot.lane.b32.xlu0 %v4259, 126
    %v4291 = vpop.permute.xlu0 %4290
    %4292 = vrot.lane.b32.xlu0 %v4261, 126
    %v4293 = vpop.permute.xlu0 %4292
    %4294 = vrot.lane.b32.xlu0 %v4263, 126
    %v4295 = vpop.permute.xlu0 %4294
    %4296 = vrot.lane.b32.xlu0 %v4265, 126
    %v4297 = vpop.permute.xlu0 %4296
    %4298 = vrot.lane.b32.xlu0 %v4267, 126
    %v4299 = vpop.permute.xlu0 %4298
    %4300 = vrot.lane.b32.xlu0 %v4269, 126
    %v4301 = vpop.permute.xlu0 %4300
    %4302 = vrot.lane.b32.xlu0 %v4271, 126
    %v4303 = vpop.permute.xlu0 %4302
    %4304 = vrot.lane.b32.xlu0 %v4273, 126
    %v4305 = vpop.permute.xlu0 %4304
    %4306 = vrot.lane.b32.xlu0 %v4275, 126
    %v4307 = vpop.permute.xlu0 %4306
    %4308 = vrot.lane.b32.xlu0 %v4277, 126
    %v4309 = vpop.permute.xlu0 %4308
    %4310 = vrot.lane.b32.xlu0 %v4279, 126
    %v4311 = vpop.permute.xlu0 %4310
    %4312 = vrot.lane.b32.xlu0 %v4281, 126
    %v4313 = vpop.permute.xlu0 %4312
    %4314 = vrot.lane.b32.xlu0 %v4278, 126
    %v4315 = vpop.permute.xlu0 %4314
    %4316 = vrot.lane.b32.xlu0 %v4280, 126
    %v4317 = vpop.permute.xlu0 %4316
    %v4318 = vsel %vm2085, %v4283, %v4285
    %v4319 = vsel %vm2085, %v4287, %v4289
    %v4320 = vsel %vm2085, %v4291, %v4293
    %v4321 = vsel %vm2085, %v4295, %v4297
    %v4322 = vsel %vm2085, %v4299, %v4301
    %v4323 = vsel %vm2085, %v4303, %v4305
    %v4324 = vsel %vm2085, %v4307, %v4309
    %v4325 = vsel %vm2085, %v4311, %v4313
    %v4326 = vsel %vm2085, %v4315, %v4317
    %v4345 = vadd.f32 %v4182, %v4318
    %v4346 = vadd.f32 %v4183, %v4285
    %v4347 = vadd.f32 %v4184, %v4319
    %v4348 = vadd.f32 %v4185, %v4289
    %v4349 = vadd.f32 %v4186, %v4320
    %v4350 = vadd.f32 %v4187, %v4293
    %v4351 = vadd.f32 %v4188, %v4321
    %v4352 = vadd.f32 %v4189, %v4297
    %v4353 = vadd.f32 %v4190, %v4322
    %v4354 = vadd.f32 %v4191, %v4301
    %v4355 = vadd.f32 %v4192, %v4323
    %v4356 = vadd.f32 %v4193, %v4305
    %v4357 = vadd.f32 %v4194, %v4324
    %v4358 = vadd.f32 %v4195, %v4309
    %v4359 = vadd.f32 %v4196, %v4325
    %v4360 = vadd.f32 %v4197, %v4313
    %v4361 = vadd.f32 %v4198, %v4326
    %v4362 = vadd.f32 %v4199, %v4317
    %4363 = vst [vmem:[#allocation5] sm:$0xff] %v4345
    %vm4364 = vcmask 48128
    %4365 = vst.msk [vmem:[#allocation5 + $0x8] sm:$0xff] %vm4364, %v4346
    %4366 = vst [vmem:[#allocation5 + $0x10] sm:$0xff] %v4347
    %4367 = vst.msk [vmem:[#allocation5 + $0x18] sm:$0xff] %vm4364, %v4348
    %4368 = vst [vmem:[#allocation5 + $0x20] sm:$0xff] %v4349
    %4369 = vst.msk [vmem:[#allocation5 + $0x28] sm:$0xff] %vm4364, %v4350
    %4370 = vst [vmem:[#allocation5 + $0x30] sm:$0xff] %v4351
    %4371 = vst.msk [vmem:[#allocation5 + $0x38] sm:$0xff] %vm4364, %v4352
    %4372 = vst [vmem:[#allocation5 + $0x40] sm:$0xff] %v4353
    %4373 = vst.msk [vmem:[#allocation5 + $0x48] sm:$0xff] %vm4364, %v4354
    %4374 = vst [vmem:[#allocation5 + $0x50] sm:$0xff] %v4355
    %4375 = vst.msk [vmem:[#allocation5 + $0x58] sm:$0xff] %vm4364, %v4356
    %4376 = vst [vmem:[#allocation5 + $0x60] sm:$0xff] %v4357
    %4377 = vst.msk [vmem:[#allocation5 + $0x68] sm:$0xff] %vm4364, %v4358
    %4378 = vst [vmem:[#allocation5 + $0x70] sm:$0xff] %v4359
    %4379 = vst.msk [vmem:[#allocation5 + $0x78] sm:$0xff] %vm4364, %v4360
    %4380 = vst [vmem:[#allocation5 + $0x80] sm:$0x3] %v4361
    %vm4381 = vcmask 41984
    %4382 = vst.msk [vmem:[#allocation5 + $0x88] sm:$0x3] %vm4381, %v4362
    %s4383 = scalar_lea.vmem %s3, 17
    %v4384 = vld [vmem:[%s4383] ss:$8 sm:$0x3]
    %v4385 = vld [vmem:[#allocation3] sm:$0xff]
    %v4386 = vld [vmem:[#allocation3 + $0x8] sm:$0xff]
    %v4387 = vld [vmem:[#allocation3 + $0x10] sm:$0xff]
    %v4388 = vld [vmem:[#allocation3 + $0x18] sm:$0xff]
    %v4389 = vld [vmem:[#allocation3 + $0x20] sm:$0xff]
    %v4390 = vld [vmem:[#allocation3 + $0x28] sm:$0xff]
    %v4391 = vld [vmem:[#allocation3 + $0x30] sm:$0xff]
    %v4392 = vld [vmem:[#allocation3 + $0x38] sm:$0xff]
    %v4393 = vld [vmem:[#allocation3 + $0x40] sm:$0xff]
    %v4394 = vld [vmem:[#allocation3 + $0x48] sm:$0xff]
    %v4395 = vld [vmem:[#allocation3 + $0x50] sm:$0xff]
    %v4396 = vld [vmem:[#allocation3 + $0x58] sm:$0xff]
    %v4397 = vld [vmem:[#allocation3 + $0x60] sm:$0xff]
    %v4398 = vld [vmem:[#allocation3 + $0x68] sm:$0xff]
    %v4399 = vld [vmem:[#allocation3 + $0x70] sm:$0xff]
    %v4400 = vld [vmem:[#allocation3 + $0x78] sm:$0xff]
    %v4401 = vld [vmem:[#allocation3 + $0x80] sm:$0x3]
    %v4402 = vld [vmem:[#allocation3 + $0x88] sm:$0x3]
    %v4404 = vperm.slane %v4384, 0
    %v4405 = vperm.slane %v4384, 1
    %v4408 = vmul.f32 %v4385, %v4404
    %v4409 = vmul.f32 %v4386, %v4405
    %v4410 = vmul.f32 %v4387, %v4404
    %v4411 = vmul.f32 %v4388, %v4405
    %v4412 = vmul.f32 %v4389, %v4404
    %v4413 = vmul.f32 %v4390, %v4405
    %v4414 = vmul.f32 %v4391, %v4404
    %v4415 = vmul.f32 %v4392, %v4405
    %v4416 = vmul.f32 %v4393, %v4404
    %v4417 = vmul.f32 %v4394, %v4405
    %v4418 = vmul.f32 %v4395, %v4404
    %v4419 = vmul.f32 %v4396, %v4405
    %v4420 = vmul.f32 %v4397, %v4404
    %v4421 = vmul.f32 %v4398, %v4405
    %v4422 = vmul.f32 %v4399, %v4404
    %v4423 = vmul.f32 %v4400, %v4405
    %v4424 = vmul.f32 %v4401, %v4404
    %v4425 = vmul.f32 %v4402, %v4405
    %s4426 = scalar_lea.vmem %s3, 18
    %v4427 = vld [vmem:[%s4426] ss:$8 sm:$0x3]
    %v4429 = vperm.slane %v4427, 0
    %v4430 = vperm.slane %v4427, 1
    %4431 = vrot.lane.b32.xlu0 %v4429, 1
    %v4432 = vpop.permute.xlu0 %4431
    %4433 = vrot.lane.b32.xlu0 %v4430, 1
    %v4434 = vpop.permute.xlu0 %4433
    %v4435 = vsel %vm1878, %v4432, %v4434
    %v4438 = vmul.f32 %v4385, %v4432
    %v4439 = vmul.f32 %v4386, %v4435
    %v4440 = vmul.f32 %v4387, %v4432
    %v4441 = vmul.f32 %v4388, %v4435
    %v4442 = vmul.f32 %v4389, %v4432
    %v4443 = vmul.f32 %v4390, %v4435
    %v4444 = vmul.f32 %v4391, %v4432
    %v4445 = vmul.f32 %v4392, %v4435
    %v4446 = vmul.f32 %v4393, %v4432
    %v4447 = vmul.f32 %v4394, %v4435
    %v4448 = vmul.f32 %v4395, %v4432
    %v4449 = vmul.f32 %v4396, %v4435
    %v4450 = vmul.f32 %v4397, %v4432
    %v4451 = vmul.f32 %v4398, %v4435
    %v4452 = vmul.f32 %v4399, %v4432
    %v4453 = vmul.f32 %v4400, %v4435
    %v4454 = vmul.f32 %v4401, %v4432
    %v4455 = vmul.f32 %v4402, %v4435
    %4474 = vrot.lane.b32.xlu0 %v4438, 127
    %v4475 = vpop.permute.xlu0 %4474
    %4476 = vrot.lane.b32.xlu0 %v4439, 127
    %v4477 = vpop.permute.xlu0 %4476
    %4478 = vrot.lane.b32.xlu0 %v4440, 127
    %v4479 = vpop.permute.xlu0 %4478
    %4480 = vrot.lane.b32.xlu0 %v4441, 127
    %v4481 = vpop.permute.xlu0 %4480
    %4482 = vrot.lane.b32.xlu0 %v4442, 127
    %v4483 = vpop.permute.xlu0 %4482
    %4484 = vrot.lane.b32.xlu0 %v4443, 127
    %v4485 = vpop.permute.xlu0 %4484
    %4486 = vrot.lane.b32.xlu0 %v4444, 127
    %v4487 = vpop.permute.xlu0 %4486
    %4488 = vrot.lane.b32.xlu0 %v4445, 127
    %v4489 = vpop.permute.xlu0 %4488
    %4490 = vrot.lane.b32.xlu0 %v4446, 127
    %v4491 = vpop.permute.xlu0 %4490
    %4492 = vrot.lane.b32.xlu0 %v4447, 127
    %v4493 = vpop.permute.xlu0 %4492
    %4494 = vrot.lane.b32.xlu0 %v4448, 127
    %v4495 = vpop.permute.xlu0 %4494
    %4496 = vrot.lane.b32.xlu0 %v4449, 127
    %v4497 = vpop.permute.xlu0 %4496
    %4498 = vrot.lane.b32.xlu0 %v4450, 127
    %v4499 = vpop.permute.xlu0 %4498
    %4500 = vrot.lane.b32.xlu0 %v4451, 127
    %v4501 = vpop.permute.xlu0 %4500
    %4502 = vrot.lane.b32.xlu0 %v4452, 127
    %v4503 = vpop.permute.xlu0 %4502
    %4504 = vrot.lane.b32.xlu0 %v4453, 127
    %v4505 = vpop.permute.xlu0 %4504
    %4506 = vrot.lane.b32.xlu0 %v4454, 127
    %v4507 = vpop.permute.xlu0 %4506
    %4508 = vrot.lane.b32.xlu0 %v4455, 127
    %v4509 = vpop.permute.xlu0 %4508
    %v4510 = vsel %vm1954, %v4475, %v4477
    %v4511 = vsel %vm1954, %v4479, %v4481
    %v4512 = vsel %vm1954, %v4483, %v4485
    %v4513 = vsel %vm1954, %v4487, %v4489
    %v4514 = vsel %vm1954, %v4491, %v4493
    %v4515 = vsel %vm1954, %v4495, %v4497
    %v4516 = vsel %vm1954, %v4499, %v4501
    %v4517 = vsel %vm1954, %v4503, %v4505
    %v4518 = vsel %vm1954, %v4507, %v4509
    %v4537 = vadd.f32 %v4408, %v4510
    %v4538 = vadd.f32 %v4409, %v4477
    %v4539 = vadd.f32 %v4410, %v4511
    %v4540 = vadd.f32 %v4411, %v4481
    %v4541 = vadd.f32 %v4412, %v4512
    %v4542 = vadd.f32 %v4413, %v4485
    %v4543 = vadd.f32 %v4414, %v4513
    %v4544 = vadd.f32 %v4415, %v4489
    %v4545 = vadd.f32 %v4416, %v4514
    %v4546 = vadd.f32 %v4417, %v4493
    %v4547 = vadd.f32 %v4418, %v4515
    %v4548 = vadd.f32 %v4419, %v4497
    %v4549 = vadd.f32 %v4420, %v4516
    %v4550 = vadd.f32 %v4421, %v4501
    %v4551 = vadd.f32 %v4422, %v4517
    %v4552 = vadd.f32 %v4423, %v4505
    %v4553 = vadd.f32 %v4424, %v4518
    %v4554 = vadd.f32 %v4425, %v4509
    %s4555 = scalar_lea.vmem %s3, 19
    %v4556 = vld [vmem:[%s4555] ss:$8 sm:$0x3]
    %v4558 = vperm.slane %v4556, 0
    %v4559 = vperm.slane %v4556, 1
    %4560 = vrot.lane.b32.xlu0 %v4558, 2
    %v4561 = vpop.permute.xlu0 %4560
    %4562 = vrot.lane.b32.xlu0 %v4559, 2
    %v4563 = vpop.permute.xlu0 %4562
    %v4564 = vsel %vm2009, %v4561, %v4563
    %v4567 = vmul.f32 %v4385, %v4561
    %v4568 = vmul.f32 %v4386, %v4564
    %v4569 = vmul.f32 %v4387, %v4561
    %v4570 = vmul.f32 %v4388, %v4564
    %v4571 = vmul.f32 %v4389, %v4561
    %v4572 = vmul.f32 %v4390, %v4564
    %v4573 = vmul.f32 %v4391, %v4561
    %v4574 = vmul.f32 %v4392, %v4564
    %v4575 = vmul.f32 %v4393, %v4561
    %v4576 = vmul.f32 %v4394, %v4564
    %v4577 = vmul.f32 %v4395, %v4561
    %v4578 = vmul.f32 %v4396, %v4564
    %v4579 = vmul.f32 %v4397, %v4561
    %v4580 = vmul.f32 %v4398, %v4564
    %v4581 = vmul.f32 %v4399, %v4561
    %v4582 = vmul.f32 %v4400, %v4564
    %v4583 = vmul.f32 %v4401, %v4561
    %v4584 = vmul.f32 %v4402, %v4564
    %4603 = vrot.lane.b32.xlu0 %v4567, 126
    %v4604 = vpop.permute.xlu0 %4603
    %4605 = vrot.lane.b32.xlu0 %v4568, 126
    %v4606 = vpop.permute.xlu0 %4605
    %4607 = vrot.lane.b32.xlu0 %v4569, 126
    %v4608 = vpop.permute.xlu0 %4607
    %4609 = vrot.lane.b32.xlu0 %v4570, 126
    %v4610 = vpop.permute.xlu0 %4609
    %4611 = vrot.lane.b32.xlu0 %v4571, 126
    %v4612 = vpop.permute.xlu0 %4611
    %4613 = vrot.lane.b32.xlu0 %v4572, 126
    %v4614 = vpop.permute.xlu0 %4613
    %4615 = vrot.lane.b32.xlu0 %v4573, 126
    %v4616 = vpop.permute.xlu0 %4615
    %4617 = vrot.lane.b32.xlu0 %v4574, 126
    %v4618 = vpop.permute.xlu0 %4617
    %4619 = vrot.lane.b32.xlu0 %v4575, 126
    %v4620 = vpop.permute.xlu0 %4619
    %4621 = vrot.lane.b32.xlu0 %v4576, 126
    %v4622 = vpop.permute.xlu0 %4621
    %4623 = vrot.lane.b32.xlu0 %v4577, 126
    %v4624 = vpop.permute.xlu0 %4623
    %4625 = vrot.lane.b32.xlu0 %v4578, 126
    %v4626 = vpop.permute.xlu0 %4625
    %4627 = vrot.lane.b32.xlu0 %v4579, 126
    %v4628 = vpop.permute.xlu0 %4627
    %4629 = vrot.lane.b32.xlu0 %v4580, 126
    %v4630 = vpop.permute.xlu0 %4629
    %4631 = vrot.lane.b32.xlu0 %v4581, 126
    %v4632 = vpop.permute.xlu0 %4631
    %4633 = vrot.lane.b32.xlu0 %v4582, 126
    %v4634 = vpop.permute.xlu0 %4633
    %4635 = vrot.lane.b32.xlu0 %v4583, 126
    %v4636 = vpop.permute.xlu0 %4635
    %4637 = vrot.lane.b32.xlu0 %v4584, 126
    %v4638 = vpop.permute.xlu0 %4637
    %v4639 = vsel %vm2085, %v4604, %v4606
    %v4640 = vsel %vm2085, %v4608, %v4610
    %v4641 = vsel %vm2085, %v4612, %v4614
    %v4642 = vsel %vm2085, %v4616, %v4618
    %v4643 = vsel %vm2085, %v4620, %v4622
    %v4644 = vsel %vm2085, %v4624, %v4626
    %v4645 = vsel %vm2085, %v4628, %v4630
    %v4646 = vsel %vm2085, %v4632, %v4634
    %v4647 = vsel %vm2085, %v4636, %v4638
    %v4666 = vadd.f32 %v4537, %v4639
    %v4667 = vadd.f32 %v4538, %v4606
    %v4668 = vadd.f32 %v4539, %v4640
    %v4669 = vadd.f32 %v4540, %v4610
    %v4670 = vadd.f32 %v4541, %v4641
    %v4671 = vadd.f32 %v4542, %v4614
    %v4672 = vadd.f32 %v4543, %v4642
    %v4673 = vadd.f32 %v4544, %v4618
    %v4674 = vadd.f32 %v4545, %v4643
    %v4675 = vadd.f32 %v4546, %v4622
    %v4676 = vadd.f32 %v4547, %v4644
    %v4677 = vadd.f32 %v4548, %v4626
    %v4678 = vadd.f32 %v4549, %v4645
    %v4679 = vadd.f32 %v4550, %v4630
    %v4680 = vadd.f32 %v4551, %v4646
    %v4681 = vadd.f32 %v4552, %v4634
    %v4682 = vadd.f32 %v4553, %v4647
    %v4683 = vadd.f32 %v4554, %v4638
    %s4684 = scalar_lea.vmem %s3, 20
    %v4685 = vld [vmem:[%s4684] ss:$8 sm:$0x3]
    %v4686 = vld [vmem:[#allocation3] sm:$0xfe]
    %v4687 = vld [vmem:[#allocation3 + $0x8] sm:$0xfe]
    %v4688 = vld [vmem:[#allocation3 + $0x80] sm:$0x7]
    %v4689 = vld [vmem:[#allocation3 + $0x88] sm:$0x7]
    %v4691 = vperm.slane %v4685, 0
    %v4692 = vperm.slane %v4685, 1
    %v4695 = vmul.f32 %v4686, %v4691
    %v4696 = vmul.f32 %v4687, %v4692
    %v4697 = vmul.f32 %v4387, %v4691
    %v4698 = vmul.f32 %v4388, %v4692
    %v4699 = vmul.f32 %v4389, %v4691
    %v4700 = vmul.f32 %v4390, %v4692
    %v4701 = vmul.f32 %v4391, %v4691
    %v4702 = vmul.f32 %v4392, %v4692
    %v4703 = vmul.f32 %v4393, %v4691
    %v4704 = vmul.f32 %v4394, %v4692
    %v4705 = vmul.f32 %v4395, %v4691
    %v4706 = vmul.f32 %v4396, %v4692
    %v4707 = vmul.f32 %v4397, %v4691
    %v4708 = vmul.f32 %v4398, %v4692
    %v4709 = vmul.f32 %v4399, %v4691
    %v4710 = vmul.f32 %v4400, %v4692
    %v4711 = vmul.f32 %v4688, %v4691
    %v4712 = vmul.f32 %v4689, %v4692
    %v4731 = vrot.slane %v4695, 1
    %v4732 = vrot.slane %v4697, 1
    %v4733 = vsel %vm2178, %v4731, %v4732
    %v4734 = vrot.slane %v4696, 1
    %v4735 = vrot.slane %v4698, 1
    %v4736 = vsel %vm2178, %v4734, %v4735
    %v4737 = vrot.slane %v4699, 1
    %v4738 = vsel %vm2178, %v4732, %v4737
    %v4739 = vrot.slane %v4700, 1
    %v4740 = vsel %vm2178, %v4735, %v4739
    %v4741 = vrot.slane %v4701, 1
    %v4742 = vsel %vm2178, %v4737, %v4741
    %v4743 = vrot.slane %v4702, 1
    %v4744 = vsel %vm2178, %v4739, %v4743
    %v4745 = vrot.slane %v4703, 1
    %v4746 = vsel %vm2178, %v4741, %v4745
    %v4747 = vrot.slane %v4704, 1
    %v4748 = vsel %vm2178, %v4743, %v4747
    %v4749 = vrot.slane %v4705, 1
    %v4750 = vsel %vm2178, %v4745, %v4749
    %v4751 = vrot.slane %v4706, 1
    %v4752 = vsel %vm2178, %v4747, %v4751
    %v4753 = vrot.slane %v4707, 1
    %v4754 = vsel %vm2178, %v4749, %v4753
    %v4755 = vrot.slane %v4708, 1
    %v4756 = vsel %vm2178, %v4751, %v4755
    %v4757 = vrot.slane %v4709, 1
    %v4758 = vsel %vm2178, %v4753, %v4757
    %v4759 = vrot.slane %v4710, 1
    %v4760 = vsel %vm2178, %v4755, %v4759
    %v4761 = vrot.slane %v4711, 1
    %v4762 = vsel %vm2178, %v4757, %v4761
    %v4763 = vrot.slane %v4712, 1
    %v4764 = vsel %vm2178, %v4759, %v4763
    %v4783 = vadd.f32 %v4666, %v4733
    %v4784 = vadd.f32 %v4667, %v4736
    %v4785 = vadd.f32 %v4668, %v4738
    %v4786 = vadd.f32 %v4669, %v4740
    %v4787 = vadd.f32 %v4670, %v4742
    %v4788 = vadd.f32 %v4671, %v4744
    %v4789 = vadd.f32 %v4672, %v4746
    %v4790 = vadd.f32 %v4673, %v4748
    %v4791 = vadd.f32 %v4674, %v4750
    %v4792 = vadd.f32 %v4675, %v4752
    %v4793 = vadd.f32 %v4676, %v4754
    %v4794 = vadd.f32 %v4677, %v4756
    %v4795 = vadd.f32 %v4678, %v4758
    %v4796 = vadd.f32 %v4679, %v4760
    %v4797 = vadd.f32 %v4680, %v4762
    %v4798 = vadd.f32 %v4681, %v4764
    %v4799 = vadd.f32 %v4682, %v4761
    %v4800 = vadd.f32 %v4683, %v4763
    %s4801 = scalar_lea.vmem %s3, 21
    %v4802 = vld [vmem:[%s4801] ss:$8 sm:$0x3]
    %v4804 = vperm.slane %v4802, 0
    %v4805 = vperm.slane %v4802, 1
    %4806 = vrot.lane.b32.xlu0 %v4804, 1
    %v4807 = vpop.permute.xlu0 %4806
    %4808 = vrot.lane.b32.xlu0 %v4805, 1
    %v4809 = vpop.permute.xlu0 %4808
    %v4810 = vsel %vm1878, %v4807, %v4809
    %v4813 = vmul.f32 %v4686, %v4807
    %v4814 = vmul.f32 %v4687, %v4810
    %v4815 = vmul.f32 %v4387, %v4807
    %v4816 = vmul.f32 %v4388, %v4810
    %v4817 = vmul.f32 %v4389, %v4807
    %v4818 = vmul.f32 %v4390, %v4810
    %v4819 = vmul.f32 %v4391, %v4807
    %v4820 = vmul.f32 %v4392, %v4810
    %v4821 = vmul.f32 %v4393, %v4807
    %v4822 = vmul.f32 %v4394, %v4810
    %v4823 = vmul.f32 %v4395, %v4807
    %v4824 = vmul.f32 %v4396, %v4810
    %v4825 = vmul.f32 %v4397, %v4807
    %v4826 = vmul.f32 %v4398, %v4810
    %v4827 = vmul.f32 %v4399, %v4807
    %v4828 = vmul.f32 %v4400, %v4810
    %v4829 = vmul.f32 %v4688, %v4807
    %v4830 = vmul.f32 %v4689, %v4810
    %v4849 = vrot.slane %v4813, 1
    %v4850 = vrot.slane %v4815, 1
    %v4851 = vsel %vm2178, %v4849, %v4850
    %v4852 = vrot.slane %v4814, 1
    %v4853 = vrot.slane %v4816, 1
    %v4854 = vsel %vm2178, %v4852, %v4853
    %v4855 = vrot.slane %v4817, 1
    %v4856 = vsel %vm2178, %v4850, %v4855
    %v4857 = vrot.slane %v4818, 1
    %v4858 = vsel %vm2178, %v4853, %v4857
    %v4859 = vrot.slane %v4819, 1
    %v4860 = vsel %vm2178, %v4855, %v4859
    %v4861 = vrot.slane %v4820, 1
    %v4862 = vsel %vm2178, %v4857, %v4861
    %v4863 = vrot.slane %v4821, 1
    %v4864 = vsel %vm2178, %v4859, %v4863
    %v4865 = vrot.slane %v4822, 1
    %v4866 = vsel %vm2178, %v4861, %v4865
    %v4867 = vrot.slane %v4823, 1
    %v4868 = vsel %vm2178, %v4863, %v4867
    %v4869 = vrot.slane %v4824, 1
    %v4870 = vsel %vm2178, %v4865, %v4869
    %v4871 = vrot.slane %v4825, 1
    %v4872 = vsel %vm2178, %v4867, %v4871
    %v4873 = vrot.slane %v4826, 1
    %v4874 = vsel %vm2178, %v4869, %v4873
    %v4875 = vrot.slane %v4827, 1
    %v4876 = vsel %vm2178, %v4871, %v4875
    %v4877 = vrot.slane %v4828, 1
    %v4878 = vsel %vm2178, %v4873, %v4877
    %v4879 = vrot.slane %v4829, 1
    %v4880 = vsel %vm2178, %v4875, %v4879
    %v4881 = vrot.slane %v4830, 1
    %v4882 = vsel %vm2178, %v4877, %v4881
    %4883 = vrot.lane.b32.xlu0 %v4851, 127
    %v4884 = vpop.permute.xlu0 %4883
    %4885 = vrot.lane.b32.xlu0 %v4854, 127
    %v4886 = vpop.permute.xlu0 %4885
    %4887 = vrot.lane.b32.xlu0 %v4856, 127
    %v4888 = vpop.permute.xlu0 %4887
    %4889 = vrot.lane.b32.xlu0 %v4858, 127
    %v4890 = vpop.permute.xlu0 %4889
    %4891 = vrot.lane.b32.xlu0 %v4860, 127
    %v4892 = vpop.permute.xlu0 %4891
    %4893 = vrot.lane.b32.xlu0 %v4862, 127
    %v4894 = vpop.permute.xlu0 %4893
    %4895 = vrot.lane.b32.xlu0 %v4864, 127
    %v4896 = vpop.permute.xlu0 %4895
    %4897 = vrot.lane.b32.xlu0 %v4866, 127
    %v4898 = vpop.permute.xlu0 %4897
    %4899 = vrot.lane.b32.xlu0 %v4868, 127
    %v4900 = vpop.permute.xlu0 %4899
    %4901 = vrot.lane.b32.xlu0 %v4870, 127
    %v4902 = vpop.permute.xlu0 %4901
    %4903 = vrot.lane.b32.xlu0 %v4872, 127
    %v4904 = vpop.permute.xlu0 %4903
    %4905 = vrot.lane.b32.xlu0 %v4874, 127
    %v4906 = vpop.permute.xlu0 %4905
    %4907 = vrot.lane.b32.xlu0 %v4876, 127
    %v4908 = vpop.permute.xlu0 %4907
    %4909 = vrot.lane.b32.xlu0 %v4878, 127
    %v4910 = vpop.permute.xlu0 %4909
    %4911 = vrot.lane.b32.xlu0 %v4880, 127
    %v4912 = vpop.permute.xlu0 %4911
    %4913 = vrot.lane.b32.xlu0 %v4882, 127
    %v4914 = vpop.permute.xlu0 %4913
    %4915 = vrot.lane.b32.xlu0 %v4879, 127
    %v4916 = vpop.permute.xlu0 %4915
    %4917 = vrot.lane.b32.xlu0 %v4881, 127
    %v4918 = vpop.permute.xlu0 %4917
    %v4919 = vsel %vm1954, %v4884, %v4886
    %v4920 = vsel %vm1954, %v4888, %v4890
    %v4921 = vsel %vm1954, %v4892, %v4894
    %v4922 = vsel %vm1954, %v4896, %v4898
    %v4923 = vsel %vm1954, %v4900, %v4902
    %v4924 = vsel %vm1954, %v4904, %v4906
    %v4925 = vsel %vm1954, %v4908, %v4910
    %v4926 = vsel %vm1954, %v4912, %v4914
    %v4927 = vsel %vm1954, %v4916, %v4918
    %v4946 = vadd.f32 %v4783, %v4919
    %v4947 = vadd.f32 %v4784, %v4886
    %v4948 = vadd.f32 %v4785, %v4920
    %v4949 = vadd.f32 %v4786, %v4890
    %v4950 = vadd.f32 %v4787, %v4921
    %v4951 = vadd.f32 %v4788, %v4894
    %v4952 = vadd.f32 %v4789, %v4922
    %v4953 = vadd.f32 %v4790, %v4898
    %v4954 = vadd.f32 %v4791, %v4923
    %v4955 = vadd.f32 %v4792, %v4902
    %v4956 = vadd.f32 %v4793, %v4924
    %v4957 = vadd.f32 %v4794, %v4906
    %v4958 = vadd.f32 %v4795, %v4925
    %v4959 = vadd.f32 %v4796, %v4910
    %v4960 = vadd.f32 %v4797, %v4926
    %v4961 = vadd.f32 %v4798, %v4914
    %v4962 = vadd.f32 %v4799, %v4927
    %v4963 = vadd.f32 %v4800, %v4918
    %s4964 = scalar_lea.vmem %s3, 22
    %v4965 = vld [vmem:[%s4964] ss:$8 sm:$0x3]
    %v4967 = vperm.slane %v4965, 0
    %v4968 = vperm.slane %v4965, 1
    %4969 = vrot.lane.b32.xlu0 %v4967, 2
    %v4970 = vpop.permute.xlu0 %4969
    %4971 = vrot.lane.b32.xlu0 %v4968, 2
    %v4972 = vpop.permute.xlu0 %4971
    %v4973 = vsel %vm2009, %v4970, %v4972
    %v4976 = vmul.f32 %v4686, %v4970
    %v4977 = vmul.f32 %v4687, %v4973
    %v4978 = vmul.f32 %v4387, %v4970
    %v4979 = vmul.f32 %v4388, %v4973
    %v4980 = vmul.f32 %v4389, %v4970
    %v4981 = vmul.f32 %v4390, %v4973
    %v4982 = vmul.f32 %v4391, %v4970
    %v4983 = vmul.f32 %v4392, %v4973
    %v4984 = vmul.f32 %v4393, %v4970
    %v4985 = vmul.f32 %v4394, %v4973
    %v4986 = vmul.f32 %v4395, %v4970
    %v4987 = vmul.f32 %v4396, %v4973
    %v4988 = vmul.f32 %v4397, %v4970
    %v4989 = vmul.f32 %v4398, %v4973
    %v4990 = vmul.f32 %v4399, %v4970
    %v4991 = vmul.f32 %v4400, %v4973
    %v4992 = vmul.f32 %v4688, %v4970
    %v4993 = vmul.f32 %v4689, %v4973
    %v5012 = vrot.slane %v4976, 1
    %v5013 = vrot.slane %v4978, 1
    %v5014 = vsel %vm2178, %v5012, %v5013
    %v5015 = vrot.slane %v4977, 1
    %v5016 = vrot.slane %v4979, 1
    %v5017 = vsel %vm2178, %v5015, %v5016
    %v5018 = vrot.slane %v4980, 1
    %v5019 = vsel %vm2178, %v5013, %v5018
    %v5020 = vrot.slane %v4981, 1
    %v5021 = vsel %vm2178, %v5016, %v5020
    %v5022 = vrot.slane %v4982, 1
    %v5023 = vsel %vm2178, %v5018, %v5022
    %v5024 = vrot.slane %v4983, 1
    %v5025 = vsel %vm2178, %v5020, %v5024
    %v5026 = vrot.slane %v4984, 1
    %v5027 = vsel %vm2178, %v5022, %v5026
    %v5028 = vrot.slane %v4985, 1
    %v5029 = vsel %vm2178, %v5024, %v5028
    %v5030 = vrot.slane %v4986, 1
    %v5031 = vsel %vm2178, %v5026, %v5030
    %v5032 = vrot.slane %v4987, 1
    %v5033 = vsel %vm2178, %v5028, %v5032
    %v5034 = vrot.slane %v4988, 1
    %v5035 = vsel %vm2178, %v5030, %v5034
    %v5036 = vrot.slane %v4989, 1
    %v5037 = vsel %vm2178, %v5032, %v5036
    %v5038 = vrot.slane %v4990, 1
    %v5039 = vsel %vm2178, %v5034, %v5038
    %v5040 = vrot.slane %v4991, 1
    %v5041 = vsel %vm2178, %v5036, %v5040
    %v5042 = vrot.slane %v4992, 1
    %v5043 = vsel %vm2178, %v5038, %v5042
    %v5044 = vrot.slane %v4993, 1
    %v5045 = vsel %vm2178, %v5040, %v5044
    %5046 = vrot.lane.b32.xlu0 %v5014, 126
    %v5047 = vpop.permute.xlu0 %5046
    %5048 = vrot.lane.b32.xlu0 %v5017, 126
    %v5049 = vpop.permute.xlu0 %5048
    %5050 = vrot.lane.b32.xlu0 %v5019, 126
    %v5051 = vpop.permute.xlu0 %5050
    %5052 = vrot.lane.b32.xlu0 %v5021, 126
    %v5053 = vpop.permute.xlu0 %5052
    %5054 = vrot.lane.b32.xlu0 %v5023, 126
    %v5055 = vpop.permute.xlu0 %5054
    %5056 = vrot.lane.b32.xlu0 %v5025, 126
    %v5057 = vpop.permute.xlu0 %5056
    %5058 = vrot.lane.b32.xlu0 %v5027, 126
    %v5059 = vpop.permute.xlu0 %5058
    %5060 = vrot.lane.b32.xlu0 %v5029, 126
    %v5061 = vpop.permute.xlu0 %5060
    %5062 = vrot.lane.b32.xlu0 %v5031, 126
    %v5063 = vpop.permute.xlu0 %5062
    %5064 = vrot.lane.b32.xlu0 %v5033, 126
    %v5065 = vpop.permute.xlu0 %5064
    %5066 = vrot.lane.b32.xlu0 %v5035, 126
    %v5067 = vpop.permute.xlu0 %5066
    %5068 = vrot.lane.b32.xlu0 %v5037, 126
    %v5069 = vpop.permute.xlu0 %5068
    %5070 = vrot.lane.b32.xlu0 %v5039, 126
    %v5071 = vpop.permute.xlu0 %5070
    %5072 = vrot.lane.b32.xlu0 %v5041, 126
    %v5073 = vpop.permute.xlu0 %5072
    %5074 = vrot.lane.b32.xlu0 %v5043, 126
    %v5075 = vpop.permute.xlu0 %5074
    %5076 = vrot.lane.b32.xlu0 %v5045, 126
    %v5077 = vpop.permute.xlu0 %5076
    %5078 = vrot.lane.b32.xlu0 %v5042, 126
    %v5079 = vpop.permute.xlu0 %5078
    %5080 = vrot.lane.b32.xlu0 %v5044, 126
    %v5081 = vpop.permute.xlu0 %5080
    %v5082 = vsel %vm2085, %v5047, %v5049
    %v5083 = vsel %vm2085, %v5051, %v5053
    %v5084 = vsel %vm2085, %v5055, %v5057
    %v5085 = vsel %vm2085, %v5059, %v5061
    %v5086 = vsel %vm2085, %v5063, %v5065
    %v5087 = vsel %vm2085, %v5067, %v5069
    %v5088 = vsel %vm2085, %v5071, %v5073
    %v5089 = vsel %vm2085, %v5075, %v5077
    %v5090 = vsel %vm2085, %v5079, %v5081
    %v5109 = vadd.f32 %v4946, %v5082
    %v5110 = vadd.f32 %v4947, %v5049
    %v5111 = vadd.f32 %v4948, %v5083
    %v5112 = vadd.f32 %v4949, %v5053
    %v5113 = vadd.f32 %v4950, %v5084
    %v5114 = vadd.f32 %v4951, %v5057
    %v5115 = vadd.f32 %v4952, %v5085
    %v5116 = vadd.f32 %v4953, %v5061
    %v5117 = vadd.f32 %v4954, %v5086
    %v5118 = vadd.f32 %v4955, %v5065
    %v5119 = vadd.f32 %v4956, %v5087
    %v5120 = vadd.f32 %v4957, %v5069
    %v5121 = vadd.f32 %v4958, %v5088
    %v5122 = vadd.f32 %v4959, %v5073
    %v5123 = vadd.f32 %v4960, %v5089
    %v5124 = vadd.f32 %v4961, %v5077
    %v5125 = vadd.f32 %v4962, %v5090
    %v5126 = vadd.f32 %v4963, %v5081
    %s5127 = scalar_lea.vmem %s3, 23
    %v5128 = vld [vmem:[%s5127] ss:$8 sm:$0x3]
    %v5129 = vld [vmem:[#allocation3] sm:$0xfc]
    %v5130 = vld [vmem:[#allocation3 + $0x8] sm:$0xfc]
    %v5131 = vld [vmem:[#allocation3 + $0x80] sm:$0xf]
    %v5132 = vld [vmem:[#allocation3 + $0x88] sm:$0xf]
    %v5134 = vperm.slane %v5128, 0
    %v5135 = vperm.slane %v5128, 1
    %v5138 = vmul.f32 %v5129, %v5134
    %v5139 = vmul.f32 %v5130, %v5135
    %v5140 = vmul.f32 %v4387, %v5134
    %v5141 = vmul.f32 %v4388, %v5135
    %v5142 = vmul.f32 %v4389, %v5134
    %v5143 = vmul.f32 %v4390, %v5135
    %v5144 = vmul.f32 %v4391, %v5134
    %v5145 = vmul.f32 %v4392, %v5135
    %v5146 = vmul.f32 %v4393, %v5134
    %v5147 = vmul.f32 %v4394, %v5135
    %v5148 = vmul.f32 %v4395, %v5134
    %v5149 = vmul.f32 %v4396, %v5135
    %v5150 = vmul.f32 %v4397, %v5134
    %v5151 = vmul.f32 %v4398, %v5135
    %v5152 = vmul.f32 %v4399, %v5134
    %v5153 = vmul.f32 %v4400, %v5135
    %v5154 = vmul.f32 %v5131, %v5134
    %v5155 = vmul.f32 %v5132, %v5135
    %v5174 = vrot.slane %v5138, 2
    %v5175 = vrot.slane %v5140, 2
    %v5176 = vsel %vm2622, %v5174, %v5175
    %v5177 = vrot.slane %v5139, 2
    %v5178 = vrot.slane %v5141, 2
    %v5179 = vsel %vm2622, %v5177, %v5178
    %v5180 = vrot.slane %v5142, 2
    %v5181 = vsel %vm2622, %v5175, %v5180
    %v5182 = vrot.slane %v5143, 2
    %v5183 = vsel %vm2622, %v5178, %v5182
    %v5184 = vrot.slane %v5144, 2
    %v5185 = vsel %vm2622, %v5180, %v5184
    %v5186 = vrot.slane %v5145, 2
    %v5187 = vsel %vm2622, %v5182, %v5186
    %v5188 = vrot.slane %v5146, 2
    %v5189 = vsel %vm2622, %v5184, %v5188
    %v5190 = vrot.slane %v5147, 2
    %v5191 = vsel %vm2622, %v5186, %v5190
    %v5192 = vrot.slane %v5148, 2
    %v5193 = vsel %vm2622, %v5188, %v5192
    %v5194 = vrot.slane %v5149, 2
    %v5195 = vsel %vm2622, %v5190, %v5194
    %v5196 = vrot.slane %v5150, 2
    %v5197 = vsel %vm2622, %v5192, %v5196
    %v5198 = vrot.slane %v5151, 2
    %v5199 = vsel %vm2622, %v5194, %v5198
    %v5200 = vrot.slane %v5152, 2
    %v5201 = vsel %vm2622, %v5196, %v5200
    %v5202 = vrot.slane %v5153, 2
    %v5203 = vsel %vm2622, %v5198, %v5202
    %v5204 = vrot.slane %v5154, 2
    %v5205 = vsel %vm2622, %v5200, %v5204
    %v5206 = vrot.slane %v5155, 2
    %v5207 = vsel %vm2622, %v5202, %v5206
    %v5226 = vadd.f32 %v5109, %v5176
    %v5227 = vadd.f32 %v5110, %v5179
    %v5228 = vadd.f32 %v5111, %v5181
    %v5229 = vadd.f32 %v5112, %v5183
    %v5230 = vadd.f32 %v5113, %v5185
    %v5231 = vadd.f32 %v5114, %v5187
    %v5232 = vadd.f32 %v5115, %v5189
    %v5233 = vadd.f32 %v5116, %v5191
    %v5234 = vadd.f32 %v5117, %v5193
    %v5235 = vadd.f32 %v5118, %v5195
    %v5236 = vadd.f32 %v5119, %v5197
    %v5237 = vadd.f32 %v5120, %v5199
    %v5238 = vadd.f32 %v5121, %v5201
    %v5239 = vadd.f32 %v5122, %v5203
    %v5240 = vadd.f32 %v5123, %v5205
    %v5241 = vadd.f32 %v5124, %v5207
    %v5242 = vadd.f32 %v5125, %v5204
    %v5243 = vadd.f32 %v5126, %v5206
    %s5244 = scalar_lea.vmem %s3, 32
    %v5245 = vld [vmem:[%s5244] ss:$8 sm:$0x3]
    %v5247 = vperm.slane %v5245, 0
    %v5248 = vperm.slane %v5245, 1
    %5249 = vrot.lane.b32.xlu0 %v5247, 1
    %v5250 = vpop.permute.xlu0 %5249
    %5251 = vrot.lane.b32.xlu0 %v5248, 1
    %v5252 = vpop.permute.xlu0 %5251
    %v5253 = vsel %vm1878, %v5250, %v5252
    %v5256 = vmul.f32 %v5129, %v5250
    %v5257 = vmul.f32 %v5130, %v5253
    %v5258 = vmul.f32 %v4387, %v5250
    %v5259 = vmul.f32 %v4388, %v5253
    %v5260 = vmul.f32 %v4389, %v5250
    %v5261 = vmul.f32 %v4390, %v5253
    %v5262 = vmul.f32 %v4391, %v5250
    %v5263 = vmul.f32 %v4392, %v5253
    %v5264 = vmul.f32 %v4393, %v5250
    %v5265 = vmul.f32 %v4394, %v5253
    %v5266 = vmul.f32 %v4395, %v5250
    %v5267 = vmul.f32 %v4396, %v5253
    %v5268 = vmul.f32 %v4397, %v5250
    %v5269 = vmul.f32 %v4398, %v5253
    %v5270 = vmul.f32 %v4399, %v5250
    %v5271 = vmul.f32 %v4400, %v5253
    %v5272 = vmul.f32 %v5131, %v5250
    %v5273 = vmul.f32 %v5132, %v5253
    %v5292 = vrot.slane %v5256, 2
    %v5293 = vrot.slane %v5258, 2
    %v5294 = vsel %vm2622, %v5292, %v5293
    %v5295 = vrot.slane %v5257, 2
    %v5296 = vrot.slane %v5259, 2
    %v5297 = vsel %vm2622, %v5295, %v5296
    %v5298 = vrot.slane %v5260, 2
    %v5299 = vsel %vm2622, %v5293, %v5298
    %v5300 = vrot.slane %v5261, 2
    %v5301 = vsel %vm2622, %v5296, %v5300
    %v5302 = vrot.slane %v5262, 2
    %v5303 = vsel %vm2622, %v5298, %v5302
    %v5304 = vrot.slane %v5263, 2
    %v5305 = vsel %vm2622, %v5300, %v5304
    %v5306 = vrot.slane %v5264, 2
    %v5307 = vsel %vm2622, %v5302, %v5306
    %v5308 = vrot.slane %v5265, 2
    %v5309 = vsel %vm2622, %v5304, %v5308
    %v5310 = vrot.slane %v5266, 2
    %v5311 = vsel %vm2622, %v5306, %v5310
    %v5312 = vrot.slane %v5267, 2
    %v5313 = vsel %vm2622, %v5308, %v5312
    %v5314 = vrot.slane %v5268, 2
    %v5315 = vsel %vm2622, %v5310, %v5314
    %v5316 = vrot.slane %v5269, 2
    %v5317 = vsel %vm2622, %v5312, %v5316
    %v5318 = vrot.slane %v5270, 2
    %v5319 = vsel %vm2622, %v5314, %v5318
    %v5320 = vrot.slane %v5271, 2
    %v5321 = vsel %vm2622, %v5316, %v5320
    %v5322 = vrot.slane %v5272, 2
    %v5323 = vsel %vm2622, %v5318, %v5322
    %v5324 = vrot.slane %v5273, 2
    %v5325 = vsel %vm2622, %v5320, %v5324
    %5326 = vrot.lane.b32.xlu0 %v5294, 127
    %v5327 = vpop.permute.xlu0 %5326
    %5328 = vrot.lane.b32.xlu0 %v5297, 127
    %v5329 = vpop.permute.xlu0 %5328
    %5330 = vrot.lane.b32.xlu0 %v5299, 127
    %v5331 = vpop.permute.xlu0 %5330
    %5332 = vrot.lane.b32.xlu0 %v5301, 127
    %v5333 = vpop.permute.xlu0 %5332
    %5334 = vrot.lane.b32.xlu0 %v5303, 127
    %v5335 = vpop.permute.xlu0 %5334
    %5336 = vrot.lane.b32.xlu0 %v5305, 127
    %v5337 = vpop.permute.xlu0 %5336
    %5338 = vrot.lane.b32.xlu0 %v5307, 127
    %v5339 = vpop.permute.xlu0 %5338
    %5340 = vrot.lane.b32.xlu0 %v5309, 127
    %v5341 = vpop.permute.xlu0 %5340
    %5342 = vrot.lane.b32.xlu0 %v5311, 127
    %v5343 = vpop.permute.xlu0 %5342
    %5344 = vrot.lane.b32.xlu0 %v5313, 127
    %v5345 = vpop.permute.xlu0 %5344
    %5346 = vrot.lane.b32.xlu0 %v5315, 127
    %v5347 = vpop.permute.xlu0 %5346
    %5348 = vrot.lane.b32.xlu0 %v5317, 127
    %v5349 = vpop.permute.xlu0 %5348
    %5350 = vrot.lane.b32.xlu0 %v5319, 127
    %v5351 = vpop.permute.xlu0 %5350
    %5352 = vrot.lane.b32.xlu0 %v5321, 127
    %v5353 = vpop.permute.xlu0 %5352
    %5354 = vrot.lane.b32.xlu0 %v5323, 127
    %v5355 = vpop.permute.xlu0 %5354
    %5356 = vrot.lane.b32.xlu0 %v5325, 127
    %v5357 = vpop.permute.xlu0 %5356
    %5358 = vrot.lane.b32.xlu0 %v5322, 127
    %v5359 = vpop.permute.xlu0 %5358
    %5360 = vrot.lane.b32.xlu0 %v5324, 127
    %v5361 = vpop.permute.xlu0 %5360
    %v5362 = vsel %vm1954, %v5327, %v5329
    %v5363 = vsel %vm1954, %v5331, %v5333
    %v5364 = vsel %vm1954, %v5335, %v5337
    %v5365 = vsel %vm1954, %v5339, %v5341
    %v5366 = vsel %vm1954, %v5343, %v5345
    %v5367 = vsel %vm1954, %v5347, %v5349
    %v5368 = vsel %vm1954, %v5351, %v5353
    %v5369 = vsel %vm1954, %v5355, %v5357
    %v5370 = vsel %vm1954, %v5359, %v5361
    %v5389 = vadd.f32 %v5226, %v5362
    %v5390 = vadd.f32 %v5227, %v5329
    %v5391 = vadd.f32 %v5228, %v5363
    %v5392 = vadd.f32 %v5229, %v5333
    %v5393 = vadd.f32 %v5230, %v5364
    %v5394 = vadd.f32 %v5231, %v5337
    %v5395 = vadd.f32 %v5232, %v5365
    %v5396 = vadd.f32 %v5233, %v5341
    %v5397 = vadd.f32 %v5234, %v5366
    %v5398 = vadd.f32 %v5235, %v5345
    %v5399 = vadd.f32 %v5236, %v5367
    %v5400 = vadd.f32 %v5237, %v5349
    %v5401 = vadd.f32 %v5238, %v5368
    %v5402 = vadd.f32 %v5239, %v5353
    %v5403 = vadd.f32 %v5240, %v5369
    %v5404 = vadd.f32 %v5241, %v5357
    %v5405 = vadd.f32 %v5242, %v5370
    %v5406 = vadd.f32 %v5243, %v5361
    %s5407 = scalar_lea.vmem %s3, 33
    %v5408 = vld [vmem:[%s5407] ss:$8 sm:$0x3]
    %v5410 = vperm.slane %v5408, 0
    %v5411 = vperm.slane %v5408, 1
    %5412 = vrot.lane.b32.xlu0 %v5410, 2
    %v5413 = vpop.permute.xlu0 %5412
    %5414 = vrot.lane.b32.xlu0 %v5411, 2
    %v5415 = vpop.permute.xlu0 %5414
    %v5416 = vsel %vm2009, %v5413, %v5415
    %v5419 = vmul.f32 %v5129, %v5413
    %v5420 = vmul.f32 %v5130, %v5416
    %v5421 = vmul.f32 %v4387, %v5413
    %v5422 = vmul.f32 %v4388, %v5416
    %v5423 = vmul.f32 %v4389, %v5413
    %v5424 = vmul.f32 %v4390, %v5416
    %v5425 = vmul.f32 %v4391, %v5413
    %v5426 = vmul.f32 %v4392, %v5416
    %v5427 = vmul.f32 %v4393, %v5413
    %v5428 = vmul.f32 %v4394, %v5416
    %v5429 = vmul.f32 %v4395, %v5413
    %v5430 = vmul.f32 %v4396, %v5416
    %v5431 = vmul.f32 %v4397, %v5413
    %v5432 = vmul.f32 %v4398, %v5416
    %v5433 = vmul.f32 %v4399, %v5413
    %v5434 = vmul.f32 %v4400, %v5416
    %v5435 = vmul.f32 %v5131, %v5413
    %v5436 = vmul.f32 %v5132, %v5416
    %v5455 = vrot.slane %v5419, 2
    %v5456 = vrot.slane %v5421, 2
    %v5457 = vsel %vm2622, %v5455, %v5456
    %v5458 = vrot.slane %v5420, 2
    %v5459 = vrot.slane %v5422, 2
    %v5460 = vsel %vm2622, %v5458, %v5459
    %v5461 = vrot.slane %v5423, 2
    %v5462 = vsel %vm2622, %v5456, %v5461
    %v5463 = vrot.slane %v5424, 2
    %v5464 = vsel %vm2622, %v5459, %v5463
    %v5465 = vrot.slane %v5425, 2
    %v5466 = vsel %vm2622, %v5461, %v5465
    %v5467 = vrot.slane %v5426, 2
    %v5468 = vsel %vm2622, %v5463, %v5467
    %v5469 = vrot.slane %v5427, 2
    %v5470 = vsel %vm2622, %v5465, %v5469
    %v5471 = vrot.slane %v5428, 2
    %v5472 = vsel %vm2622, %v5467, %v5471
    %v5473 = vrot.slane %v5429, 2
    %v5474 = vsel %vm2622, %v5469, %v5473
    %v5475 = vrot.slane %v5430, 2
    %v5476 = vsel %vm2622, %v5471, %v5475
    %v5477 = vrot.slane %v5431, 2
    %v5478 = vsel %vm2622, %v5473, %v5477
    %v5479 = vrot.slane %v5432, 2
    %v5480 = vsel %vm2622, %v5475, %v5479
    %v5481 = vrot.slane %v5433, 2
    %v5482 = vsel %vm2622, %v5477, %v5481
    %v5483 = vrot.slane %v5434, 2
    %v5484 = vsel %vm2622, %v5479, %v5483
    %v5485 = vrot.slane %v5435, 2
    %v5486 = vsel %vm2622, %v5481, %v5485
    %v5487 = vrot.slane %v5436, 2
    %v5488 = vsel %vm2622, %v5483, %v5487
    %5489 = vrot.lane.b32.xlu0 %v5457, 126
    %v5490 = vpop.permute.xlu0 %5489
    %5491 = vrot.lane.b32.xlu0 %v5460, 126
    %v5492 = vpop.permute.xlu0 %5491
    %5493 = vrot.lane.b32.xlu0 %v5462, 126
    %v5494 = vpop.permute.xlu0 %5493
    %5495 = vrot.lane.b32.xlu0 %v5464, 126
    %v5496 = vpop.permute.xlu0 %5495
    %5497 = vrot.lane.b32.xlu0 %v5466, 126
    %v5498 = vpop.permute.xlu0 %5497
    %5499 = vrot.lane.b32.xlu0 %v5468, 126
    %v5500 = vpop.permute.xlu0 %5499
    %5501 = vrot.lane.b32.xlu0 %v5470, 126
    %v5502 = vpop.permute.xlu0 %5501
    %5503 = vrot.lane.b32.xlu0 %v5472, 126
    %v5504 = vpop.permute.xlu0 %5503
    %5505 = vrot.lane.b32.xlu0 %v5474, 126
    %v5506 = vpop.permute.xlu0 %5505
    %5507 = vrot.lane.b32.xlu0 %v5476, 126
    %v5508 = vpop.permute.xlu0 %5507
    %5509 = vrot.lane.b32.xlu0 %v5478, 126
    %v5510 = vpop.permute.xlu0 %5509
    %5511 = vrot.lane.b32.xlu0 %v5480, 126
    %v5512 = vpop.permute.xlu0 %5511
    %5513 = vrot.lane.b32.xlu0 %v5482, 126
    %v5514 = vpop.permute.xlu0 %5513
    %5515 = vrot.lane.b32.xlu0 %v5484, 126
    %v5516 = vpop.permute.xlu0 %5515
    %5517 = vrot.lane.b32.xlu0 %v5486, 126
    %v5518 = vpop.permute.xlu0 %5517
    %5519 = vrot.lane.b32.xlu0 %v5488, 126
    %v5520 = vpop.permute.xlu0 %5519
    %5521 = vrot.lane.b32.xlu0 %v5485, 126
    %v5522 = vpop.permute.xlu0 %5521
    %5523 = vrot.lane.b32.xlu0 %v5487, 126
    %v5524 = vpop.permute.xlu0 %5523
    %v5525 = vsel %vm2085, %v5490, %v5492
    %v5526 = vsel %vm2085, %v5494, %v5496
    %v5527 = vsel %vm2085, %v5498, %v5500
    %v5528 = vsel %vm2085, %v5502, %v5504
    %v5529 = vsel %vm2085, %v5506, %v5508
    %v5530 = vsel %vm2085, %v5510, %v5512
    %v5531 = vsel %vm2085, %v5514, %v5516
    %v5532 = vsel %vm2085, %v5518, %v5520
    %v5533 = vsel %vm2085, %v5522, %v5524
    %v5552 = vadd.f32 %v5389, %v5525
    %v5553 = vadd.f32 %v5390, %v5492
    %v5554 = vadd.f32 %v5391, %v5526
    %v5555 = vadd.f32 %v5392, %v5496
    %v5556 = vadd.f32 %v5393, %v5527
    %v5557 = vadd.f32 %v5394, %v5500
    %v5558 = vadd.f32 %v5395, %v5528
    %v5559 = vadd.f32 %v5396, %v5504
    %v5560 = vadd.f32 %v5397, %v5529
    %v5561 = vadd.f32 %v5398, %v5508
    %v5562 = vadd.f32 %v5399, %v5530
    %v5563 = vadd.f32 %v5400, %v5512
    %v5564 = vadd.f32 %v5401, %v5531
    %v5565 = vadd.f32 %v5402, %v5516
    %v5566 = vadd.f32 %v5403, %v5532
    %v5567 = vadd.f32 %v5404, %v5520
    %v5568 = vadd.f32 %v5405, %v5533
    %v5569 = vadd.f32 %v5406, %v5524
    %v5570 = vmul.f32 %v5552, %v1809
    %v5571 = vmul.f32 %v5553, %v1810
    %v5572 = vmul.f32 %v5554, %v1811
    %v5573 = vmul.f32 %v5555, %v1812
    %v5574 = vmul.f32 %v5556, %v1813
    %v5575 = vmul.f32 %v5557, %v1814
    %v5576 = vmul.f32 %v5558, %v1815
    %v5577 = vmul.f32 %v5559, %v1816
    %v5578 = vmul.f32 %v5560, %v1817
    %v5579 = vmul.f32 %v5561, %v1818
    %v5580 = vmul.f32 %v5562, %v1819
    %v5581 = vmul.f32 %v5563, %v1820
    %v5582 = vmul.f32 %v5564, %v1821
    %v5583 = vmul.f32 %v5565, %v1822
    %v5584 = vmul.f32 %v5566, %v1823
    %v5585 = vmul.f32 %v5567, %v1824
    %v5586 = vmul.f32 %v5568, %v1825
    %v5587 = vmul.f32 %v5569, %v1826
    %v5606 = vrot.slane %v5570, 7
    %v5607 = vrot.slane %v5571, 7
    %v5608 = vrot.slane %v5572, 7
    %v5609 = vsel %vm3055, %v5606, %v5608
    %v5610 = vrot.slane %v5573, 7
    %v5611 = vsel %vm3055, %v5607, %v5610
    %v5612 = vrot.slane %v5574, 7
    %v5613 = vsel %vm3055, %v5608, %v5612
    %v5614 = vrot.slane %v5575, 7
    %v5615 = vsel %vm3055, %v5610, %v5614
    %v5616 = vrot.slane %v5576, 7
    %v5617 = vsel %vm3055, %v5612, %v5616
    %v5618 = vrot.slane %v5577, 7
    %v5619 = vsel %vm3055, %v5614, %v5618
    %v5620 = vrot.slane %v5578, 7
    %v5621 = vsel %vm3055, %v5616, %v5620
    %v5622 = vrot.slane %v5579, 7
    %v5623 = vsel %vm3055, %v5618, %v5622
    %v5624 = vrot.slane %v5580, 7
    %v5625 = vsel %vm3055, %v5620, %v5624
    %v5626 = vrot.slane %v5581, 7
    %v5627 = vsel %vm3055, %v5622, %v5626
    %v5628 = vrot.slane %v5582, 7
    %v5629 = vsel %vm3055, %v5624, %v5628
    %v5630 = vrot.slane %v5583, 7
    %v5631 = vsel %vm3055, %v5626, %v5630
    %v5632 = vrot.slane %v5584, 7
    %v5633 = vsel %vm3055, %v5628, %v5632
    %v5634 = vrot.slane %v5585, 7
    %v5635 = vsel %vm3055, %v5630, %v5634
    %v5636 = vrot.slane %v5586, 7
    %v5637 = vsel %vm3055, %v5632, %v5636
    %v5638 = vrot.slane %v5587, 7
    %v5639 = vsel %vm3055, %v5634, %v5638
    %5640 = vrot.lane.b32.xlu0 %v5606, 1
    %v5641 = vpop.permute.xlu0 %5640
    %5642 = vrot.lane.b32.xlu0 %v5607, 1
    %v5643 = vpop.permute.xlu0 %5642
    %5644 = vrot.lane.b32.xlu0 %v5609, 1
    %v5645 = vpop.permute.xlu0 %5644
    %5646 = vrot.lane.b32.xlu0 %v5611, 1
    %v5647 = vpop.permute.xlu0 %5646
    %5648 = vrot.lane.b32.xlu0 %v5613, 1
    %v5649 = vpop.permute.xlu0 %5648
    %5650 = vrot.lane.b32.xlu0 %v5615, 1
    %v5651 = vpop.permute.xlu0 %5650
    %5652 = vrot.lane.b32.xlu0 %v5617, 1
    %v5653 = vpop.permute.xlu0 %5652
    %5654 = vrot.lane.b32.xlu0 %v5619, 1
    %v5655 = vpop.permute.xlu0 %5654
    %5656 = vrot.lane.b32.xlu0 %v5621, 1
    %v5657 = vpop.permute.xlu0 %5656
    %5658 = vrot.lane.b32.xlu0 %v5623, 1
    %v5659 = vpop.permute.xlu0 %5658
    %5660 = vrot.lane.b32.xlu0 %v5625, 1
    %v5661 = vpop.permute.xlu0 %5660
    %5662 = vrot.lane.b32.xlu0 %v5627, 1
    %v5663 = vpop.permute.xlu0 %5662
    %5664 = vrot.lane.b32.xlu0 %v5629, 1
    %v5665 = vpop.permute.xlu0 %5664
    %5666 = vrot.lane.b32.xlu0 %v5631, 1
    %v5667 = vpop.permute.xlu0 %5666
    %5668 = vrot.lane.b32.xlu0 %v5633, 1
    %v5669 = vpop.permute.xlu0 %5668
    %5670 = vrot.lane.b32.xlu0 %v5635, 1
    %v5671 = vpop.permute.xlu0 %5670
    %5672 = vrot.lane.b32.xlu0 %v5637, 1
    %v5673 = vpop.permute.xlu0 %5672
    %5674 = vrot.lane.b32.xlu0 %v5639, 1
    %v5675 = vpop.permute.xlu0 %5674
    %v5676 = vsel %vm1878, %v5641, %v5643
    %v5677 = vsel %vm1878, %v5645, %v5647
    %v5678 = vsel %vm1878, %v5649, %v5651
    %v5679 = vsel %vm1878, %v5653, %v5655
    %v5680 = vsel %vm1878, %v5657, %v5659
    %v5681 = vsel %vm1878, %v5661, %v5663
    %v5682 = vsel %vm1878, %v5665, %v5667
    %v5683 = vsel %vm1878, %v5669, %v5671
    %v5684 = vsel %vm1878, %v5673, %v5675
    %5703 = vst.msk [vmem:[#allocation4] sm:$0xfe] %vm3153, %v5641
    %5704 = vst.msk [vmem:[#allocation4 + $0x8] sm:$0xfe] %vm3155, %v5676
    %5705 = vst.msk [vmem:[#allocation4 + $0x10] sm:$0xff] %vm3157, %v5645
    %5706 = vst.msk [vmem:[#allocation4 + $0x18] sm:$0xff] %vm3159, %v5677
    %5707 = vst.msk [vmem:[#allocation4 + $0x20] sm:$0xff] %vm3157, %v5649
    %5708 = vst.msk [vmem:[#allocation4 + $0x28] sm:$0xff] %vm3159, %v5678
    %5709 = vst.msk [vmem:[#allocation4 + $0x30] sm:$0xff] %vm3157, %v5653
    %5710 = vst.msk [vmem:[#allocation4 + $0x38] sm:$0xff] %vm3159, %v5679
    %5711 = vst.msk [vmem:[#allocation4 + $0x40] sm:$0xff] %vm3157, %v5657
    %5712 = vst.msk [vmem:[#allocation4 + $0x48] sm:$0xff] %vm3159, %v5680
    %5713 = vst.msk [vmem:[#allocation4 + $0x50] sm:$0xff] %vm3157, %v5661
    %5714 = vst.msk [vmem:[#allocation4 + $0x58] sm:$0xff] %vm3159, %v5681
    %5715 = vst.msk [vmem:[#allocation4 + $0x60] sm:$0xff] %vm3157, %v5665
    %5716 = vst.msk [vmem:[#allocation4 + $0x68] sm:$0xff] %vm3159, %v5682
    %5717 = vst.msk [vmem:[#allocation4 + $0x70] sm:$0xff] %vm3157, %v5669
    %5718 = vst.msk [vmem:[#allocation4 + $0x78] sm:$0xff] %vm3159, %v5683
    %5719 = vst.msk [vmem:[#allocation4 + $0x80] sm:$0x7] %vm3173, %v5673
    %5720 = vst.msk [vmem:[#allocation4 + $0x88] sm:$0x7] %vm3175, %v5684
    %s5721 = scalar_lea.vmem %s4, 17
    %v5722 = vld [vmem:[%s5721] ss:$8 sm:$0x3]
    %v5723 = vld [vmem:[#allocation4] sm:$0xff]
    %v5724 = vld [vmem:[#allocation4 + $0x8] sm:$0xff]
    %v5725 = vld [vmem:[#allocation4 + $0x10] sm:$0xff]
    %v5726 = vld [vmem:[#allocation4 + $0x18] sm:$0xff]
    %v5727 = vld [vmem:[#allocation4 + $0x20] sm:$0xff]
    %v5728 = vld [vmem:[#allocation4 + $0x28] sm:$0xff]
    %v5729 = vld [vmem:[#allocation4 + $0x30] sm:$0xff]
    %v5730 = vld [vmem:[#allocation4 + $0x38] sm:$0xff]
    %v5731 = vld [vmem:[#allocation4 + $0x40] sm:$0xff]
    %v5732 = vld [vmem:[#allocation4 + $0x48] sm:$0xff]
    %v5733 = vld [vmem:[#allocation4 + $0x50] sm:$0xff]
    %v5734 = vld [vmem:[#allocation4 + $0x58] sm:$0xff]
    %v5735 = vld [vmem:[#allocation4 + $0x60] sm:$0xff]
    %v5736 = vld [vmem:[#allocation4 + $0x68] sm:$0xff]
    %v5737 = vld [vmem:[#allocation4 + $0x70] sm:$0xff]
    %v5738 = vld [vmem:[#allocation4 + $0x78] sm:$0xff]
    %v5739 = vld [vmem:[#allocation4 + $0x80] sm:$0x3]
    %v5740 = vld [vmem:[#allocation4 + $0x88] sm:$0x3]
    %v5742 = vperm.slane %v5722, 0
    %v5743 = vperm.slane %v5722, 1
    %v5746 = vmul.f32 %v5723, %v5742
    %v5747 = vmul.f32 %v5724, %v5743
    %v5748 = vmul.f32 %v5725, %v5742
    %v5749 = vmul.f32 %v5726, %v5743
    %v5750 = vmul.f32 %v5727, %v5742
    %v5751 = vmul.f32 %v5728, %v5743
    %v5752 = vmul.f32 %v5729, %v5742
    %v5753 = vmul.f32 %v5730, %v5743
    %v5754 = vmul.f32 %v5731, %v5742
    %v5755 = vmul.f32 %v5732, %v5743
    %v5756 = vmul.f32 %v5733, %v5742
    %v5757 = vmul.f32 %v5734, %v5743
    %v5758 = vmul.f32 %v5735, %v5742
    %v5759 = vmul.f32 %v5736, %v5743
    %v5760 = vmul.f32 %v5737, %v5742
    %v5761 = vmul.f32 %v5738, %v5743
    %v5762 = vmul.f32 %v5739, %v5742
    %v5763 = vmul.f32 %v5740, %v5743
    %s5764 = scalar_lea.vmem %s4, 18
    %v5765 = vld [vmem:[%s5764] ss:$8 sm:$0x3]
    %v5767 = vperm.slane %v5765, 0
    %v5768 = vperm.slane %v5765, 1
    %5769 = vrot.lane.b32.xlu0 %v5767, 1
    %v5770 = vpop.permute.xlu0 %5769
    %5771 = vrot.lane.b32.xlu0 %v5768, 1
    %v5772 = vpop.permute.xlu0 %5771
    %v5773 = vsel %vm1878, %v5770, %v5772
    %v5776 = vmul.f32 %v5723, %v5770
    %v5777 = vmul.f32 %v5724, %v5773
    %v5778 = vmul.f32 %v5725, %v5770
    %v5779 = vmul.f32 %v5726, %v5773
    %v5780 = vmul.f32 %v5727, %v5770
    %v5781 = vmul.f32 %v5728, %v5773
    %v5782 = vmul.f32 %v5729, %v5770
    %v5783 = vmul.f32 %v5730, %v5773
    %v5784 = vmul.f32 %v5731, %v5770
    %v5785 = vmul.f32 %v5732, %v5773
    %v5786 = vmul.f32 %v5733, %v5770
    %v5787 = vmul.f32 %v5734, %v5773
    %v5788 = vmul.f32 %v5735, %v5770
    %v5789 = vmul.f32 %v5736, %v5773
    %v5790 = vmul.f32 %v5737, %v5770
    %v5791 = vmul.f32 %v5738, %v5773
    %v5792 = vmul.f32 %v5739, %v5770
    %v5793 = vmul.f32 %v5740, %v5773
    %5812 = vrot.lane.b32.xlu0 %v5776, 127
    %v5813 = vpop.permute.xlu0 %5812
    %5814 = vrot.lane.b32.xlu0 %v5777, 127
    %v5815 = vpop.permute.xlu0 %5814
    %5816 = vrot.lane.b32.xlu0 %v5778, 127
    %v5817 = vpop.permute.xlu0 %5816
    %5818 = vrot.lane.b32.xlu0 %v5779, 127
    %v5819 = vpop.permute.xlu0 %5818
    %5820 = vrot.lane.b32.xlu0 %v5780, 127
    %v5821 = vpop.permute.xlu0 %5820
    %5822 = vrot.lane.b32.xlu0 %v5781, 127
    %v5823 = vpop.permute.xlu0 %5822
    %5824 = vrot.lane.b32.xlu0 %v5782, 127
    %v5825 = vpop.permute.xlu0 %5824
    %5826 = vrot.lane.b32.xlu0 %v5783, 127
    %v5827 = vpop.permute.xlu0 %5826
    %5828 = vrot.lane.b32.xlu0 %v5784, 127
    %v5829 = vpop.permute.xlu0 %5828
    %5830 = vrot.lane.b32.xlu0 %v5785, 127
    %v5831 = vpop.permute.xlu0 %5830
    %5832 = vrot.lane.b32.xlu0 %v5786, 127
    %v5833 = vpop.permute.xlu0 %5832
    %5834 = vrot.lane.b32.xlu0 %v5787, 127
    %v5835 = vpop.permute.xlu0 %5834
    %5836 = vrot.lane.b32.xlu0 %v5788, 127
    %v5837 = vpop.permute.xlu0 %5836
    %5838 = vrot.lane.b32.xlu0 %v5789, 127
    %v5839 = vpop.permute.xlu0 %5838
    %5840 = vrot.lane.b32.xlu0 %v5790, 127
    %v5841 = vpop.permute.xlu0 %5840
    %5842 = vrot.lane.b32.xlu0 %v5791, 127
    %v5843 = vpop.permute.xlu0 %5842
    %5844 = vrot.lane.b32.xlu0 %v5792, 127
    %v5845 = vpop.permute.xlu0 %5844
    %5846 = vrot.lane.b32.xlu0 %v5793, 127
    %v5847 = vpop.permute.xlu0 %5846
    %v5848 = vsel %vm1954, %v5813, %v5815
    %v5849 = vsel %vm1954, %v5817, %v5819
    %v5850 = vsel %vm1954, %v5821, %v5823
    %v5851 = vsel %vm1954, %v5825, %v5827
    %v5852 = vsel %vm1954, %v5829, %v5831
    %v5853 = vsel %vm1954, %v5833, %v5835
    %v5854 = vsel %vm1954, %v5837, %v5839
    %v5855 = vsel %vm1954, %v5841, %v5843
    %v5856 = vsel %vm1954, %v5845, %v5847
    %v5875 = vadd.f32 %v5746, %v5848
    %v5876 = vadd.f32 %v5747, %v5815
    %v5877 = vadd.f32 %v5748, %v5849
    %v5878 = vadd.f32 %v5749, %v5819
    %v5879 = vadd.f32 %v5750, %v5850
    %v5880 = vadd.f32 %v5751, %v5823
    %v5881 = vadd.f32 %v5752, %v5851
    %v5882 = vadd.f32 %v5753, %v5827
    %v5883 = vadd.f32 %v5754, %v5852
    %v5884 = vadd.f32 %v5755, %v5831
    %v5885 = vadd.f32 %v5756, %v5853
    %v5886 = vadd.f32 %v5757, %v5835
    %v5887 = vadd.f32 %v5758, %v5854
    %v5888 = vadd.f32 %v5759, %v5839
    %v5889 = vadd.f32 %v5760, %v5855
    %v5890 = vadd.f32 %v5761, %v5843
    %v5891 = vadd.f32 %v5762, %v5856
    %v5892 = vadd.f32 %v5763, %v5847
    %s5893 = scalar_lea.vmem %s4, 19
    %v5894 = vld [vmem:[%s5893] ss:$8 sm:$0x3]
    %v5896 = vperm.slane %v5894, 0
    %v5897 = vperm.slane %v5894, 1
    %5898 = vrot.lane.b32.xlu0 %v5896, 2
    %v5899 = vpop.permute.xlu0 %5898
    %5900 = vrot.lane.b32.xlu0 %v5897, 2
    %v5901 = vpop.permute.xlu0 %5900
    %v5902 = vsel %vm2009, %v5899, %v5901
    %v5905 = vmul.f32 %v5723, %v5899
    %v5906 = vmul.f32 %v5724, %v5902
    %v5907 = vmul.f32 %v5725, %v5899
    %v5908 = vmul.f32 %v5726, %v5902
    %v5909 = vmul.f32 %v5727, %v5899
    %v5910 = vmul.f32 %v5728, %v5902
    %v5911 = vmul.f32 %v5729, %v5899
    %v5912 = vmul.f32 %v5730, %v5902
    %v5913 = vmul.f32 %v5731, %v5899
    %v5914 = vmul.f32 %v5732, %v5902
    %v5915 = vmul.f32 %v5733, %v5899
    %v5916 = vmul.f32 %v5734, %v5902
    %v5917 = vmul.f32 %v5735, %v5899
    %v5918 = vmul.f32 %v5736, %v5902
    %v5919 = vmul.f32 %v5737, %v5899
    %v5920 = vmul.f32 %v5738, %v5902
    %v5921 = vmul.f32 %v5739, %v5899
    %v5922 = vmul.f32 %v5740, %v5902
    %5941 = vrot.lane.b32.xlu0 %v5905, 126
    %v5942 = vpop.permute.xlu0 %5941
    %5943 = vrot.lane.b32.xlu0 %v5906, 126
    %v5944 = vpop.permute.xlu0 %5943
    %5945 = vrot.lane.b32.xlu0 %v5907, 126
    %v5946 = vpop.permute.xlu0 %5945
    %5947 = vrot.lane.b32.xlu0 %v5908, 126
    %v5948 = vpop.permute.xlu0 %5947
    %5949 = vrot.lane.b32.xlu0 %v5909, 126
    %v5950 = vpop.permute.xlu0 %5949
    %5951 = vrot.lane.b32.xlu0 %v5910, 126
    %v5952 = vpop.permute.xlu0 %5951
    %5953 = vrot.lane.b32.xlu0 %v5911, 126
    %v5954 = vpop.permute.xlu0 %5953
    %5955 = vrot.lane.b32.xlu0 %v5912, 126
    %v5956 = vpop.permute.xlu0 %5955
    %5957 = vrot.lane.b32.xlu0 %v5913, 126
    %v5958 = vpop.permute.xlu0 %5957
    %5959 = vrot.lane.b32.xlu0 %v5914, 126
    %v5960 = vpop.permute.xlu0 %5959
    %5961 = vrot.lane.b32.xlu0 %v5915, 126
    %v5962 = vpop.permute.xlu0 %5961
    %5963 = vrot.lane.b32.xlu0 %v5916, 126
    %v5964 = vpop.permute.xlu0 %5963
    %5965 = vrot.lane.b32.xlu0 %v5917, 126
    %v5966 = vpop.permute.xlu0 %5965
    %5967 = vrot.lane.b32.xlu0 %v5918, 126
    %v5968 = vpop.permute.xlu0 %5967
    %5969 = vrot.lane.b32.xlu0 %v5919, 126
    %v5970 = vpop.permute.xlu0 %5969
    %5971 = vrot.lane.b32.xlu0 %v5920, 126
    %v5972 = vpop.permute.xlu0 %5971
    %5973 = vrot.lane.b32.xlu0 %v5921, 126
    %v5974 = vpop.permute.xlu0 %5973
    %5975 = vrot.lane.b32.xlu0 %v5922, 126
    %v5976 = vpop.permute.xlu0 %5975
    %v5977 = vsel %vm2085, %v5942, %v5944
    %v5978 = vsel %vm2085, %v5946, %v5948
    %v5979 = vsel %vm2085, %v5950, %v5952
    %v5980 = vsel %vm2085, %v5954, %v5956
    %v5981 = vsel %vm2085, %v5958, %v5960
    %v5982 = vsel %vm2085, %v5962, %v5964
    %v5983 = vsel %vm2085, %v5966, %v5968
    %v5984 = vsel %vm2085, %v5970, %v5972
    %v5985 = vsel %vm2085, %v5974, %v5976
    %v6004 = vadd.f32 %v5875, %v5977
    %v6005 = vadd.f32 %v5876, %v5944
    %v6006 = vadd.f32 %v5877, %v5978
    %v6007 = vadd.f32 %v5878, %v5948
    %v6008 = vadd.f32 %v5879, %v5979
    %v6009 = vadd.f32 %v5880, %v5952
    %v6010 = vadd.f32 %v5881, %v5980
    %v6011 = vadd.f32 %v5882, %v5956
    %v6012 = vadd.f32 %v5883, %v5981
    %v6013 = vadd.f32 %v5884, %v5960
    %v6014 = vadd.f32 %v5885, %v5982
    %v6015 = vadd.f32 %v5886, %v5964
    %v6016 = vadd.f32 %v5887, %v5983
    %v6017 = vadd.f32 %v5888, %v5968
    %v6018 = vadd.f32 %v5889, %v5984
    %v6019 = vadd.f32 %v5890, %v5972
    %v6020 = vadd.f32 %v5891, %v5985
    %v6021 = vadd.f32 %v5892, %v5976
    %s6022 = scalar_lea.vmem %s4, 20
    %v6023 = vld [vmem:[%s6022] ss:$8 sm:$0x3]
    %v6024 = vld [vmem:[#allocation4] sm:$0xfe]
    %v6025 = vld [vmem:[#allocation4 + $0x8] sm:$0xfe]
    %v6026 = vld [vmem:[#allocation4 + $0x80] sm:$0x7]
    %v6027 = vld [vmem:[#allocation4 + $0x88] sm:$0x7]
    %v6029 = vperm.slane %v6023, 0
    %v6030 = vperm.slane %v6023, 1
    %v6033 = vmul.f32 %v6024, %v6029
    %v6034 = vmul.f32 %v6025, %v6030
    %v6035 = vmul.f32 %v5725, %v6029
    %v6036 = vmul.f32 %v5726, %v6030
    %v6037 = vmul.f32 %v5727, %v6029
    %v6038 = vmul.f32 %v5728, %v6030
    %v6039 = vmul.f32 %v5729, %v6029
    %v6040 = vmul.f32 %v5730, %v6030
    %v6041 = vmul.f32 %v5731, %v6029
    %v6042 = vmul.f32 %v5732, %v6030
    %v6043 = vmul.f32 %v5733, %v6029
    %v6044 = vmul.f32 %v5734, %v6030
    %v6045 = vmul.f32 %v5735, %v6029
    %v6046 = vmul.f32 %v5736, %v6030
    %v6047 = vmul.f32 %v5737, %v6029
    %v6048 = vmul.f32 %v5738, %v6030
    %v6049 = vmul.f32 %v6026, %v6029
    %v6050 = vmul.f32 %v6027, %v6030
    %v6069 = vrot.slane %v6033, 1
    %v6070 = vrot.slane %v6035, 1
    %v6071 = vsel %vm2178, %v6069, %v6070
    %v6072 = vrot.slane %v6034, 1
    %v6073 = vrot.slane %v6036, 1
    %v6074 = vsel %vm2178, %v6072, %v6073
    %v6075 = vrot.slane %v6037, 1
    %v6076 = vsel %vm2178, %v6070, %v6075
    %v6077 = vrot.slane %v6038, 1
    %v6078 = vsel %vm2178, %v6073, %v6077
    %v6079 = vrot.slane %v6039, 1
    %v6080 = vsel %vm2178, %v6075, %v6079
    %v6081 = vrot.slane %v6040, 1
    %v6082 = vsel %vm2178, %v6077, %v6081
    %v6083 = vrot.slane %v6041, 1
    %v6084 = vsel %vm2178, %v6079, %v6083
    %v6085 = vrot.slane %v6042, 1
    %v6086 = vsel %vm2178, %v6081, %v6085
    %v6087 = vrot.slane %v6043, 1
    %v6088 = vsel %vm2178, %v6083, %v6087
    %v6089 = vrot.slane %v6044, 1
    %v6090 = vsel %vm2178, %v6085, %v6089
    %v6091 = vrot.slane %v6045, 1
    %v6092 = vsel %vm2178, %v6087, %v6091
    %v6093 = vrot.slane %v6046, 1
    %v6094 = vsel %vm2178, %v6089, %v6093
    %v6095 = vrot.slane %v6047, 1
    %v6096 = vsel %vm2178, %v6091, %v6095
    %v6097 = vrot.slane %v6048, 1
    %v6098 = vsel %vm2178, %v6093, %v6097
    %v6099 = vrot.slane %v6049, 1
    %v6100 = vsel %vm2178, %v6095, %v6099
    %v6101 = vrot.slane %v6050, 1
    %v6102 = vsel %vm2178, %v6097, %v6101
    %v6121 = vadd.f32 %v6004, %v6071
    %v6122 = vadd.f32 %v6005, %v6074
    %v6123 = vadd.f32 %v6006, %v6076
    %v6124 = vadd.f32 %v6007, %v6078
    %v6125 = vadd.f32 %v6008, %v6080
    %v6126 = vadd.f32 %v6009, %v6082
    %v6127 = vadd.f32 %v6010, %v6084
    %v6128 = vadd.f32 %v6011, %v6086
    %v6129 = vadd.f32 %v6012, %v6088
    %v6130 = vadd.f32 %v6013, %v6090
    %v6131 = vadd.f32 %v6014, %v6092
    %v6132 = vadd.f32 %v6015, %v6094
    %v6133 = vadd.f32 %v6016, %v6096
    %v6134 = vadd.f32 %v6017, %v6098
    %v6135 = vadd.f32 %v6018, %v6100
    %v6136 = vadd.f32 %v6019, %v6102
    %v6137 = vadd.f32 %v6020, %v6099
    %v6138 = vadd.f32 %v6021, %v6101
    %s6139 = scalar_lea.vmem %s4, 21
    %v6140 = vld [vmem:[%s6139] ss:$8 sm:$0x3]
    %v6142 = vperm.slane %v6140, 0
    %v6143 = vperm.slane %v6140, 1
    %6144 = vrot.lane.b32.xlu0 %v6142, 1
    %v6145 = vpop.permute.xlu0 %6144
    %6146 = vrot.lane.b32.xlu0 %v6143, 1
    %v6147 = vpop.permute.xlu0 %6146
    %v6148 = vsel %vm1878, %v6145, %v6147
    %v6151 = vmul.f32 %v6024, %v6145
    %v6152 = vmul.f32 %v6025, %v6148
    %v6153 = vmul.f32 %v5725, %v6145
    %v6154 = vmul.f32 %v5726, %v6148
    %v6155 = vmul.f32 %v5727, %v6145
    %v6156 = vmul.f32 %v5728, %v6148
    %v6157 = vmul.f32 %v5729, %v6145
    %v6158 = vmul.f32 %v5730, %v6148
    %v6159 = vmul.f32 %v5731, %v6145
    %v6160 = vmul.f32 %v5732, %v6148
    %v6161 = vmul.f32 %v5733, %v6145
    %v6162 = vmul.f32 %v5734, %v6148
    %v6163 = vmul.f32 %v5735, %v6145
    %v6164 = vmul.f32 %v5736, %v6148
    %v6165 = vmul.f32 %v5737, %v6145
    %v6166 = vmul.f32 %v5738, %v6148
    %v6167 = vmul.f32 %v6026, %v6145
    %v6168 = vmul.f32 %v6027, %v6148
    %v6187 = vrot.slane %v6151, 1
    %v6188 = vrot.slane %v6153, 1
    %v6189 = vsel %vm2178, %v6187, %v6188
    %v6190 = vrot.slane %v6152, 1
    %v6191 = vrot.slane %v6154, 1
    %v6192 = vsel %vm2178, %v6190, %v6191
    %v6193 = vrot.slane %v6155, 1
    %v6194 = vsel %vm2178, %v6188, %v6193
    %v6195 = vrot.slane %v6156, 1
    %v6196 = vsel %vm2178, %v6191, %v6195
    %v6197 = vrot.slane %v6157, 1
    %v6198 = vsel %vm2178, %v6193, %v6197
    %v6199 = vrot.slane %v6158, 1
    %v6200 = vsel %vm2178, %v6195, %v6199
    %v6201 = vrot.slane %v6159, 1
    %v6202 = vsel %vm2178, %v6197, %v6201
    %v6203 = vrot.slane %v6160, 1
    %v6204 = vsel %vm2178, %v6199, %v6203
    %v6205 = vrot.slane %v6161, 1
    %v6206 = vsel %vm2178, %v6201, %v6205
    %v6207 = vrot.slane %v6162, 1
    %v6208 = vsel %vm2178, %v6203, %v6207
    %v6209 = vrot.slane %v6163, 1
    %v6210 = vsel %vm2178, %v6205, %v6209
    %v6211 = vrot.slane %v6164, 1
    %v6212 = vsel %vm2178, %v6207, %v6211
    %v6213 = vrot.slane %v6165, 1
    %v6214 = vsel %vm2178, %v6209, %v6213
    %v6215 = vrot.slane %v6166, 1
    %v6216 = vsel %vm2178, %v6211, %v6215
    %v6217 = vrot.slane %v6167, 1
    %v6218 = vsel %vm2178, %v6213, %v6217
    %v6219 = vrot.slane %v6168, 1
    %v6220 = vsel %vm2178, %v6215, %v6219
    %6221 = vrot.lane.b32.xlu0 %v6189, 127
    %v6222 = vpop.permute.xlu0 %6221
    %6223 = vrot.lane.b32.xlu0 %v6192, 127
    %v6224 = vpop.permute.xlu0 %6223
    %6225 = vrot.lane.b32.xlu0 %v6194, 127
    %v6226 = vpop.permute.xlu0 %6225
    %6227 = vrot.lane.b32.xlu0 %v6196, 127
    %v6228 = vpop.permute.xlu0 %6227
    %6229 = vrot.lane.b32.xlu0 %v6198, 127
    %v6230 = vpop.permute.xlu0 %6229
    %6231 = vrot.lane.b32.xlu0 %v6200, 127
    %v6232 = vpop.permute.xlu0 %6231
    %6233 = vrot.lane.b32.xlu0 %v6202, 127
    %v6234 = vpop.permute.xlu0 %6233
    %6235 = vrot.lane.b32.xlu0 %v6204, 127
    %v6236 = vpop.permute.xlu0 %6235
    %6237 = vrot.lane.b32.xlu0 %v6206, 127
    %v6238 = vpop.permute.xlu0 %6237
    %6239 = vrot.lane.b32.xlu0 %v6208, 127
    %v6240 = vpop.permute.xlu0 %6239
    %6241 = vrot.lane.b32.xlu0 %v6210, 127
    %v6242 = vpop.permute.xlu0 %6241
    %6243 = vrot.lane.b32.xlu0 %v6212, 127
    %v6244 = vpop.permute.xlu0 %6243
    %6245 = vrot.lane.b32.xlu0 %v6214, 127
    %v6246 = vpop.permute.xlu0 %6245
    %6247 = vrot.lane.b32.xlu0 %v6216, 127
    %v6248 = vpop.permute.xlu0 %6247
    %6249 = vrot.lane.b32.xlu0 %v6218, 127
    %v6250 = vpop.permute.xlu0 %6249
    %6251 = vrot.lane.b32.xlu0 %v6220, 127
    %v6252 = vpop.permute.xlu0 %6251
    %6253 = vrot.lane.b32.xlu0 %v6217, 127
    %v6254 = vpop.permute.xlu0 %6253
    %6255 = vrot.lane.b32.xlu0 %v6219, 127
    %v6256 = vpop.permute.xlu0 %6255
    %v6257 = vsel %vm1954, %v6222, %v6224
    %v6258 = vsel %vm1954, %v6226, %v6228
    %v6259 = vsel %vm1954, %v6230, %v6232
    %v6260 = vsel %vm1954, %v6234, %v6236
    %v6261 = vsel %vm1954, %v6238, %v6240
    %v6262 = vsel %vm1954, %v6242, %v6244
    %v6263 = vsel %vm1954, %v6246, %v6248
    %v6264 = vsel %vm1954, %v6250, %v6252
    %v6265 = vsel %vm1954, %v6254, %v6256
    %v6284 = vadd.f32 %v6121, %v6257
    %v6285 = vadd.f32 %v6122, %v6224
    %v6286 = vadd.f32 %v6123, %v6258
    %v6287 = vadd.f32 %v6124, %v6228
    %v6288 = vadd.f32 %v6125, %v6259
    %v6289 = vadd.f32 %v6126, %v6232
    %v6290 = vadd.f32 %v6127, %v6260
    %v6291 = vadd.f32 %v6128, %v6236
    %v6292 = vadd.f32 %v6129, %v6261
    %v6293 = vadd.f32 %v6130, %v6240
    %v6294 = vadd.f32 %v6131, %v6262
    %v6295 = vadd.f32 %v6132, %v6244
    %v6296 = vadd.f32 %v6133, %v6263
    %v6297 = vadd.f32 %v6134, %v6248
    %v6298 = vadd.f32 %v6135, %v6264
    %v6299 = vadd.f32 %v6136, %v6252
    %v6300 = vadd.f32 %v6137, %v6265
    %v6301 = vadd.f32 %v6138, %v6256
    %s6302 = scalar_lea.vmem %s4, 22
    %v6303 = vld [vmem:[%s6302] ss:$8 sm:$0x3]
    %v6305 = vperm.slane %v6303, 0
    %v6306 = vperm.slane %v6303, 1
    %6307 = vrot.lane.b32.xlu0 %v6305, 2
    %v6308 = vpop.permute.xlu0 %6307
    %6309 = vrot.lane.b32.xlu0 %v6306, 2
    %v6310 = vpop.permute.xlu0 %6309
    %v6311 = vsel %vm2009, %v6308, %v6310
    %v6314 = vmul.f32 %v6024, %v6308
    %v6315 = vmul.f32 %v6025, %v6311
    %v6316 = vmul.f32 %v5725, %v6308
    %v6317 = vmul.f32 %v5726, %v6311
    %v6318 = vmul.f32 %v5727, %v6308
    %v6319 = vmul.f32 %v5728, %v6311
    %v6320 = vmul.f32 %v5729, %v6308
    %v6321 = vmul.f32 %v5730, %v6311
    %v6322 = vmul.f32 %v5731, %v6308
    %v6323 = vmul.f32 %v5732, %v6311
    %v6324 = vmul.f32 %v5733, %v6308
    %v6325 = vmul.f32 %v5734, %v6311
    %v6326 = vmul.f32 %v5735, %v6308
    %v6327 = vmul.f32 %v5736, %v6311
    %v6328 = vmul.f32 %v5737, %v6308
    %v6329 = vmul.f32 %v5738, %v6311
    %v6330 = vmul.f32 %v6026, %v6308
    %v6331 = vmul.f32 %v6027, %v6311
    %v6350 = vrot.slane %v6314, 1
    %v6351 = vrot.slane %v6316, 1
    %v6352 = vsel %vm2178, %v6350, %v6351
    %v6353 = vrot.slane %v6315, 1
    %v6354 = vrot.slane %v6317, 1
    %v6355 = vsel %vm2178, %v6353, %v6354
    %v6356 = vrot.slane %v6318, 1
    %v6357 = vsel %vm2178, %v6351, %v6356
    %v6358 = vrot.slane %v6319, 1
    %v6359 = vsel %vm2178, %v6354, %v6358
    %v6360 = vrot.slane %v6320, 1
    %v6361 = vsel %vm2178, %v6356, %v6360
    %v6362 = vrot.slane %v6321, 1
    %v6363 = vsel %vm2178, %v6358, %v6362
    %v6364 = vrot.slane %v6322, 1
    %v6365 = vsel %vm2178, %v6360, %v6364
    %v6366 = vrot.slane %v6323, 1
    %v6367 = vsel %vm2178, %v6362, %v6366
    %v6368 = vrot.slane %v6324, 1
    %v6369 = vsel %vm2178, %v6364, %v6368
    %v6370 = vrot.slane %v6325, 1
    %v6371 = vsel %vm2178, %v6366, %v6370
    %v6372 = vrot.slane %v6326, 1
    %v6373 = vsel %vm2178, %v6368, %v6372
    %v6374 = vrot.slane %v6327, 1
    %v6375 = vsel %vm2178, %v6370, %v6374
    %v6376 = vrot.slane %v6328, 1
    %v6377 = vsel %vm2178, %v6372, %v6376
    %v6378 = vrot.slane %v6329, 1
    %v6379 = vsel %vm2178, %v6374, %v6378
    %v6380 = vrot.slane %v6330, 1
    %v6381 = vsel %vm2178, %v6376, %v6380
    %v6382 = vrot.slane %v6331, 1
    %v6383 = vsel %vm2178, %v6378, %v6382
    %6384 = vrot.lane.b32.xlu0 %v6352, 126
    %v6385 = vpop.permute.xlu0 %6384
    %6386 = vrot.lane.b32.xlu0 %v6355, 126
    %v6387 = vpop.permute.xlu0 %6386
    %6388 = vrot.lane.b32.xlu0 %v6357, 126
    %v6389 = vpop.permute.xlu0 %6388
    %6390 = vrot.lane.b32.xlu0 %v6359, 126
    %v6391 = vpop.permute.xlu0 %6390
    %6392 = vrot.lane.b32.xlu0 %v6361, 126
    %v6393 = vpop.permute.xlu0 %6392
    %6394 = vrot.lane.b32.xlu0 %v6363, 126
    %v6395 = vpop.permute.xlu0 %6394
    %6396 = vrot.lane.b32.xlu0 %v6365, 126
    %v6397 = vpop.permute.xlu0 %6396
    %6398 = vrot.lane.b32.xlu0 %v6367, 126
    %v6399 = vpop.permute.xlu0 %6398
    %6400 = vrot.lane.b32.xlu0 %v6369, 126
    %v6401 = vpop.permute.xlu0 %6400
    %6402 = vrot.lane.b32.xlu0 %v6371, 126
    %v6403 = vpop.permute.xlu0 %6402
    %6404 = vrot.lane.b32.xlu0 %v6373, 126
    %v6405 = vpop.permute.xlu0 %6404
    %6406 = vrot.lane.b32.xlu0 %v6375, 126
    %v6407 = vpop.permute.xlu0 %6406
    %6408 = vrot.lane.b32.xlu0 %v6377, 126
    %v6409 = vpop.permute.xlu0 %6408
    %6410 = vrot.lane.b32.xlu0 %v6379, 126
    %v6411 = vpop.permute.xlu0 %6410
    %6412 = vrot.lane.b32.xlu0 %v6381, 126
    %v6413 = vpop.permute.xlu0 %6412
    %6414 = vrot.lane.b32.xlu0 %v6383, 126
    %v6415 = vpop.permute.xlu0 %6414
    %6416 = vrot.lane.b32.xlu0 %v6380, 126
    %v6417 = vpop.permute.xlu0 %6416
    %6418 = vrot.lane.b32.xlu0 %v6382, 126
    %v6419 = vpop.permute.xlu0 %6418
    %v6420 = vsel %vm2085, %v6385, %v6387
    %v6421 = vsel %vm2085, %v6389, %v6391
    %v6422 = vsel %vm2085, %v6393, %v6395
    %v6423 = vsel %vm2085, %v6397, %v6399
    %v6424 = vsel %vm2085, %v6401, %v6403
    %v6425 = vsel %vm2085, %v6405, %v6407
    %v6426 = vsel %vm2085, %v6409, %v6411
    %v6427 = vsel %vm2085, %v6413, %v6415
    %v6428 = vsel %vm2085, %v6417, %v6419
    %v6447 = vadd.f32 %v6284, %v6420
    %v6448 = vadd.f32 %v6285, %v6387
    %v6449 = vadd.f32 %v6286, %v6421
    %v6450 = vadd.f32 %v6287, %v6391
    %v6451 = vadd.f32 %v6288, %v6422
    %v6452 = vadd.f32 %v6289, %v6395
    %v6453 = vadd.f32 %v6290, %v6423
    %v6454 = vadd.f32 %v6291, %v6399
    %v6455 = vadd.f32 %v6292, %v6424
    %v6456 = vadd.f32 %v6293, %v6403
    %v6457 = vadd.f32 %v6294, %v6425
    %v6458 = vadd.f32 %v6295, %v6407
    %v6459 = vadd.f32 %v6296, %v6426
    %v6460 = vadd.f32 %v6297, %v6411
    %v6461 = vadd.f32 %v6298, %v6427
    %v6462 = vadd.f32 %v6299, %v6415
    %v6463 = vadd.f32 %v6300, %v6428
    %v6464 = vadd.f32 %v6301, %v6419
    %s6465 = scalar_lea.vmem %s4, 23
    %v6466 = vld [vmem:[%s6465] ss:$8 sm:$0x3]
    %v6467 = vld [vmem:[#allocation4] sm:$0xfc]
    %v6468 = vld [vmem:[#allocation4 + $0x8] sm:$0xfc]
    %v6469 = vld [vmem:[#allocation4 + $0x80] sm:$0xf]
    %v6470 = vld [vmem:[#allocation4 + $0x88] sm:$0xf]
    %v6472 = vperm.slane %v6466, 0
    %v6473 = vperm.slane %v6466, 1
    %v6476 = vmul.f32 %v6467, %v6472
    %v6477 = vmul.f32 %v6468, %v6473
    %v6478 = vmul.f32 %v5725, %v6472
    %v6479 = vmul.f32 %v5726, %v6473
    %v6480 = vmul.f32 %v5727, %v6472
    %v6481 = vmul.f32 %v5728, %v6473
    %v6482 = vmul.f32 %v5729, %v6472
    %v6483 = vmul.f32 %v5730, %v6473
    %v6484 = vmul.f32 %v5731, %v6472
    %v6485 = vmul.f32 %v5732, %v6473
    %v6486 = vmul.f32 %v5733, %v6472
    %v6487 = vmul.f32 %v5734, %v6473
    %v6488 = vmul.f32 %v5735, %v6472
    %v6489 = vmul.f32 %v5736, %v6473
    %v6490 = vmul.f32 %v5737, %v6472
    %v6491 = vmul.f32 %v5738, %v6473
    %v6492 = vmul.f32 %v6469, %v6472
    %v6493 = vmul.f32 %v6470, %v6473
    %v6512 = vrot.slane %v6476, 2
    %v6513 = vrot.slane %v6478, 2
    %v6514 = vsel %vm2622, %v6512, %v6513
    %v6515 = vrot.slane %v6477, 2
    %v6516 = vrot.slane %v6479, 2
    %v6517 = vsel %vm2622, %v6515, %v6516
    %v6518 = vrot.slane %v6480, 2
    %v6519 = vsel %vm2622, %v6513, %v6518
    %v6520 = vrot.slane %v6481, 2
    %v6521 = vsel %vm2622, %v6516, %v6520
    %v6522 = vrot.slane %v6482, 2
    %v6523 = vsel %vm2622, %v6518, %v6522
    %v6524 = vrot.slane %v6483, 2
    %v6525 = vsel %vm2622, %v6520, %v6524
    %v6526 = vrot.slane %v6484, 2
    %v6527 = vsel %vm2622, %v6522, %v6526
    %v6528 = vrot.slane %v6485, 2
    %v6529 = vsel %vm2622, %v6524, %v6528
    %v6530 = vrot.slane %v6486, 2
    %v6531 = vsel %vm2622, %v6526, %v6530
    %v6532 = vrot.slane %v6487, 2
    %v6533 = vsel %vm2622, %v6528, %v6532
    %v6534 = vrot.slane %v6488, 2
    %v6535 = vsel %vm2622, %v6530, %v6534
    %v6536 = vrot.slane %v6489, 2
    %v6537 = vsel %vm2622, %v6532, %v6536
    %v6538 = vrot.slane %v6490, 2
    %v6539 = vsel %vm2622, %v6534, %v6538
    %v6540 = vrot.slane %v6491, 2
    %v6541 = vsel %vm2622, %v6536, %v6540
    %v6542 = vrot.slane %v6492, 2
    %v6543 = vsel %vm2622, %v6538, %v6542
    %v6544 = vrot.slane %v6493, 2
    %v6545 = vsel %vm2622, %v6540, %v6544
    %v6564 = vadd.f32 %v6447, %v6514
    %v6565 = vadd.f32 %v6448, %v6517
    %v6566 = vadd.f32 %v6449, %v6519
    %v6567 = vadd.f32 %v6450, %v6521
    %v6568 = vadd.f32 %v6451, %v6523
    %v6569 = vadd.f32 %v6452, %v6525
    %v6570 = vadd.f32 %v6453, %v6527
    %v6571 = vadd.f32 %v6454, %v6529
    %v6572 = vadd.f32 %v6455, %v6531
    %v6573 = vadd.f32 %v6456, %v6533
    %v6574 = vadd.f32 %v6457, %v6535
    %v6575 = vadd.f32 %v6458, %v6537
    %v6576 = vadd.f32 %v6459, %v6539
    %v6577 = vadd.f32 %v6460, %v6541
    %v6578 = vadd.f32 %v6461, %v6543
    %v6579 = vadd.f32 %v6462, %v6545
    %v6580 = vadd.f32 %v6463, %v6542
    %v6581 = vadd.f32 %v6464, %v6544
    %s6582 = scalar_lea.vmem %s4, 32
    %v6583 = vld [vmem:[%s6582] ss:$8 sm:$0x3]
    %v6585 = vperm.slane %v6583, 0
    %v6586 = vperm.slane %v6583, 1
    %6587 = vrot.lane.b32.xlu0 %v6585, 1
    %v6588 = vpop.permute.xlu0 %6587
    %6589 = vrot.lane.b32.xlu0 %v6586, 1
    %v6590 = vpop.permute.xlu0 %6589
    %v6591 = vsel %vm1878, %v6588, %v6590
    %v6594 = vmul.f32 %v6467, %v6588
    %v6595 = vmul.f32 %v6468, %v6591
    %v6596 = vmul.f32 %v5725, %v6588
    %v6597 = vmul.f32 %v5726, %v6591
    %v6598 = vmul.f32 %v5727, %v6588
    %v6599 = vmul.f32 %v5728, %v6591
    %v6600 = vmul.f32 %v5729, %v6588
    %v6601 = vmul.f32 %v5730, %v6591
    %v6602 = vmul.f32 %v5731, %v6588
    %v6603 = vmul.f32 %v5732, %v6591
    %v6604 = vmul.f32 %v5733, %v6588
    %v6605 = vmul.f32 %v5734, %v6591
    %v6606 = vmul.f32 %v5735, %v6588
    %v6607 = vmul.f32 %v5736, %v6591
    %v6608 = vmul.f32 %v5737, %v6588
    %v6609 = vmul.f32 %v5738, %v6591
    %v6610 = vmul.f32 %v6469, %v6588
    %v6611 = vmul.f32 %v6470, %v6591
    %v6630 = vrot.slane %v6594, 2
    %v6631 = vrot.slane %v6596, 2
    %v6632 = vsel %vm2622, %v6630, %v6631
    %v6633 = vrot.slane %v6595, 2
    %v6634 = vrot.slane %v6597, 2
    %v6635 = vsel %vm2622, %v6633, %v6634
    %v6636 = vrot.slane %v6598, 2
    %v6637 = vsel %vm2622, %v6631, %v6636
    %v6638 = vrot.slane %v6599, 2
    %v6639 = vsel %vm2622, %v6634, %v6638
    %v6640 = vrot.slane %v6600, 2
    %v6641 = vsel %vm2622, %v6636, %v6640
    %v6642 = vrot.slane %v6601, 2
    %v6643 = vsel %vm2622, %v6638, %v6642
    %v6644 = vrot.slane %v6602, 2
    %v6645 = vsel %vm2622, %v6640, %v6644
    %v6646 = vrot.slane %v6603, 2
    %v6647 = vsel %vm2622, %v6642, %v6646
    %v6648 = vrot.slane %v6604, 2
    %v6649 = vsel %vm2622, %v6644, %v6648
    %v6650 = vrot.slane %v6605, 2
    %v6651 = vsel %vm2622, %v6646, %v6650
    %v6652 = vrot.slane %v6606, 2
    %v6653 = vsel %vm2622, %v6648, %v6652
    %v6654 = vrot.slane %v6607, 2
    %v6655 = vsel %vm2622, %v6650, %v6654
    %v6656 = vrot.slane %v6608, 2
    %v6657 = vsel %vm2622, %v6652, %v6656
    %v6658 = vrot.slane %v6609, 2
    %v6659 = vsel %vm2622, %v6654, %v6658
    %v6660 = vrot.slane %v6610, 2
    %v6661 = vsel %vm2622, %v6656, %v6660
    %v6662 = vrot.slane %v6611, 2
    %v6663 = vsel %vm2622, %v6658, %v6662
    %6664 = vrot.lane.b32.xlu0 %v6632, 127
    %v6665 = vpop.permute.xlu0 %6664
    %6666 = vrot.lane.b32.xlu0 %v6635, 127
    %v6667 = vpop.permute.xlu0 %6666
    %6668 = vrot.lane.b32.xlu0 %v6637, 127
    %v6669 = vpop.permute.xlu0 %6668
    %6670 = vrot.lane.b32.xlu0 %v6639, 127
    %v6671 = vpop.permute.xlu0 %6670
    %6672 = vrot.lane.b32.xlu0 %v6641, 127
    %v6673 = vpop.permute.xlu0 %6672
    %6674 = vrot.lane.b32.xlu0 %v6643, 127
    %v6675 = vpop.permute.xlu0 %6674
    %6676 = vrot.lane.b32.xlu0 %v6645, 127
    %v6677 = vpop.permute.xlu0 %6676
    %6678 = vrot.lane.b32.xlu0 %v6647, 127
    %v6679 = vpop.permute.xlu0 %6678
    %6680 = vrot.lane.b32.xlu0 %v6649, 127
    %v6681 = vpop.permute.xlu0 %6680
    %6682 = vrot.lane.b32.xlu0 %v6651, 127
    %v6683 = vpop.permute.xlu0 %6682
    %6684 = vrot.lane.b32.xlu0 %v6653, 127
    %v6685 = vpop.permute.xlu0 %6684
    %6686 = vrot.lane.b32.xlu0 %v6655, 127
    %v6687 = vpop.permute.xlu0 %6686
    %6688 = vrot.lane.b32.xlu0 %v6657, 127
    %v6689 = vpop.permute.xlu0 %6688
    %6690 = vrot.lane.b32.xlu0 %v6659, 127
    %v6691 = vpop.permute.xlu0 %6690
    %6692 = vrot.lane.b32.xlu0 %v6661, 127
    %v6693 = vpop.permute.xlu0 %6692
    %6694 = vrot.lane.b32.xlu0 %v6663, 127
    %v6695 = vpop.permute.xlu0 %6694
    %6696 = vrot.lane.b32.xlu0 %v6660, 127
    %v6697 = vpop.permute.xlu0 %6696
    %6698 = vrot.lane.b32.xlu0 %v6662, 127
    %v6699 = vpop.permute.xlu0 %6698
    %v6700 = vsel %vm1954, %v6665, %v6667
    %v6701 = vsel %vm1954, %v6669, %v6671
    %v6702 = vsel %vm1954, %v6673, %v6675
    %v6703 = vsel %vm1954, %v6677, %v6679
    %v6704 = vsel %vm1954, %v6681, %v6683
    %v6705 = vsel %vm1954, %v6685, %v6687
    %v6706 = vsel %vm1954, %v6689, %v6691
    %v6707 = vsel %vm1954, %v6693, %v6695
    %v6708 = vsel %vm1954, %v6697, %v6699
    %v6727 = vadd.f32 %v6564, %v6700
    %v6728 = vadd.f32 %v6565, %v6667
    %v6729 = vadd.f32 %v6566, %v6701
    %v6730 = vadd.f32 %v6567, %v6671
    %v6731 = vadd.f32 %v6568, %v6702
    %v6732 = vadd.f32 %v6569, %v6675
    %v6733 = vadd.f32 %v6570, %v6703
    %v6734 = vadd.f32 %v6571, %v6679
    %v6735 = vadd.f32 %v6572, %v6704
    %v6736 = vadd.f32 %v6573, %v6683
    %v6737 = vadd.f32 %v6574, %v6705
    %v6738 = vadd.f32 %v6575, %v6687
    %v6739 = vadd.f32 %v6576, %v6706
    %v6740 = vadd.f32 %v6577, %v6691
    %v6741 = vadd.f32 %v6578, %v6707
    %v6742 = vadd.f32 %v6579, %v6695
    %v6743 = vadd.f32 %v6580, %v6708
    %v6744 = vadd.f32 %v6581, %v6699
    %s6745 = scalar_lea.vmem %s4, 33
    %v6746 = vld [vmem:[%s6745] ss:$8 sm:$0x3]
    %v6748 = vperm.slane %v6746, 0
    %v6749 = vperm.slane %v6746, 1
    %6750 = vrot.lane.b32.xlu0 %v6748, 2
    %v6751 = vpop.permute.xlu0 %6750
    %6752 = vrot.lane.b32.xlu0 %v6749, 2
    %v6753 = vpop.permute.xlu0 %6752
    %v6754 = vsel %vm2009, %v6751, %v6753
    %v6757 = vmul.f32 %v6467, %v6751
    %v6758 = vmul.f32 %v6468, %v6754
    %v6759 = vmul.f32 %v5725, %v6751
    %v6760 = vmul.f32 %v5726, %v6754
    %v6761 = vmul.f32 %v5727, %v6751
    %v6762 = vmul.f32 %v5728, %v6754
    %v6763 = vmul.f32 %v5729, %v6751
    %v6764 = vmul.f32 %v5730, %v6754
    %v6765 = vmul.f32 %v5731, %v6751
    %v6766 = vmul.f32 %v5732, %v6754
    %v6767 = vmul.f32 %v5733, %v6751
    %v6768 = vmul.f32 %v5734, %v6754
    %v6769 = vmul.f32 %v5735, %v6751
    %v6770 = vmul.f32 %v5736, %v6754
    %v6771 = vmul.f32 %v5737, %v6751
    %v6772 = vmul.f32 %v5738, %v6754
    %v6773 = vmul.f32 %v6469, %v6751
    %v6774 = vmul.f32 %v6470, %v6754
    %v6793 = vrot.slane %v6757, 2
    %v6794 = vrot.slane %v6759, 2
    %v6795 = vsel %vm2622, %v6793, %v6794
    %v6796 = vrot.slane %v6758, 2
    %v6797 = vrot.slane %v6760, 2
    %v6798 = vsel %vm2622, %v6796, %v6797
    %v6799 = vrot.slane %v6761, 2
    %v6800 = vsel %vm2622, %v6794, %v6799
    %v6801 = vrot.slane %v6762, 2
    %v6802 = vsel %vm2622, %v6797, %v6801
    %v6803 = vrot.slane %v6763, 2
    %v6804 = vsel %vm2622, %v6799, %v6803
    %v6805 = vrot.slane %v6764, 2
    %v6806 = vsel %vm2622, %v6801, %v6805
    %v6807 = vrot.slane %v6765, 2
    %v6808 = vsel %vm2622, %v6803, %v6807
    %v6809 = vrot.slane %v6766, 2
    %v6810 = vsel %vm2622, %v6805, %v6809
    %v6811 = vrot.slane %v6767, 2
    %v6812 = vsel %vm2622, %v6807, %v6811
    %v6813 = vrot.slane %v6768, 2
    %v6814 = vsel %vm2622, %v6809, %v6813
    %v6815 = vrot.slane %v6769, 2
    %v6816 = vsel %vm2622, %v6811, %v6815
    %v6817 = vrot.slane %v6770, 2
    %v6818 = vsel %vm2622, %v6813, %v6817
    %v6819 = vrot.slane %v6771, 2
    %v6820 = vsel %vm2622, %v6815, %v6819
    %v6821 = vrot.slane %v6772, 2
    %v6822 = vsel %vm2622, %v6817, %v6821
    %v6823 = vrot.slane %v6773, 2
    %v6824 = vsel %vm2622, %v6819, %v6823
    %v6825 = vrot.slane %v6774, 2
    %v6826 = vsel %vm2622, %v6821, %v6825
    %6827 = vrot.lane.b32.xlu0 %v6795, 126
    %v6828 = vpop.permute.xlu0 %6827
    %6829 = vrot.lane.b32.xlu0 %v6798, 126
    %v6830 = vpop.permute.xlu0 %6829
    %6831 = vrot.lane.b32.xlu0 %v6800, 126
    %v6832 = vpop.permute.xlu0 %6831
    %6833 = vrot.lane.b32.xlu0 %v6802, 126
    %v6834 = vpop.permute.xlu0 %6833
    %6835 = vrot.lane.b32.xlu0 %v6804, 126
    %v6836 = vpop.permute.xlu0 %6835
    %6837 = vrot.lane.b32.xlu0 %v6806, 126
    %v6838 = vpop.permute.xlu0 %6837
    %6839 = vrot.lane.b32.xlu0 %v6808, 126
    %v6840 = vpop.permute.xlu0 %6839
    %6841 = vrot.lane.b32.xlu0 %v6810, 126
    %v6842 = vpop.permute.xlu0 %6841
    %6843 = vrot.lane.b32.xlu0 %v6812, 126
    %v6844 = vpop.permute.xlu0 %6843
    %6845 = vrot.lane.b32.xlu0 %v6814, 126
    %v6846 = vpop.permute.xlu0 %6845
    %6847 = vrot.lane.b32.xlu0 %v6816, 126
    %v6848 = vpop.permute.xlu0 %6847
    %6849 = vrot.lane.b32.xlu0 %v6818, 126
    %v6850 = vpop.permute.xlu0 %6849
    %6851 = vrot.lane.b32.xlu0 %v6820, 126
    %v6852 = vpop.permute.xlu0 %6851
    %6853 = vrot.lane.b32.xlu0 %v6822, 126
    %v6854 = vpop.permute.xlu0 %6853
    %6855 = vrot.lane.b32.xlu0 %v6824, 126
    %v6856 = vpop.permute.xlu0 %6855
    %6857 = vrot.lane.b32.xlu0 %v6826, 126
    %v6858 = vpop.permute.xlu0 %6857
    %6859 = vrot.lane.b32.xlu0 %v6823, 126
    %v6860 = vpop.permute.xlu0 %6859
    %6861 = vrot.lane.b32.xlu0 %v6825, 126
    %v6862 = vpop.permute.xlu0 %6861
    %v6863 = vsel %vm2085, %v6828, %v6830
    %v6864 = vsel %vm2085, %v6832, %v6834
    %v6865 = vsel %vm2085, %v6836, %v6838
    %v6866 = vsel %vm2085, %v6840, %v6842
    %v6867 = vsel %vm2085, %v6844, %v6846
    %v6868 = vsel %vm2085, %v6848, %v6850
    %v6869 = vsel %vm2085, %v6852, %v6854
    %v6870 = vsel %vm2085, %v6856, %v6858
    %v6871 = vsel %vm2085, %v6860, %v6862
    %v6890 = vadd.f32 %v6727, %v6863
    %v6891 = vadd.f32 %v6728, %v6830
    %v6892 = vadd.f32 %v6729, %v6864
    %v6893 = vadd.f32 %v6730, %v6834
    %v6894 = vadd.f32 %v6731, %v6865
    %v6895 = vadd.f32 %v6732, %v6838
    %v6896 = vadd.f32 %v6733, %v6866
    %v6897 = vadd.f32 %v6734, %v6842
    %v6898 = vadd.f32 %v6735, %v6867
    %v6899 = vadd.f32 %v6736, %v6846
    %v6900 = vadd.f32 %v6737, %v6868
    %v6901 = vadd.f32 %v6738, %v6850
    %v6902 = vadd.f32 %v6739, %v6869
    %v6903 = vadd.f32 %v6740, %v6854
    %v6904 = vadd.f32 %v6741, %v6870
    %v6905 = vadd.f32 %v6742, %v6858
    %v6906 = vadd.f32 %v6743, %v6871
    %v6907 = vadd.f32 %v6744, %v6862
    %v6908 = vld [vmem:[#allocation5] sm:$0xff]
    %v6909 = vld [vmem:[#allocation5 + $0x8] sm:$0xff]
    %v6910 = vld [vmem:[#allocation5 + $0x10] sm:$0xff]
    %v6911 = vld [vmem:[#allocation5 + $0x18] sm:$0xff]
    %v6912 = vld [vmem:[#allocation5 + $0x20] sm:$0xff]
    %v6913 = vld [vmem:[#allocation5 + $0x28] sm:$0xff]
    %v6914 = vld [vmem:[#allocation5 + $0x30] sm:$0xff]
    %v6915 = vld [vmem:[#allocation5 + $0x38] sm:$0xff]
    %v6916 = vld [vmem:[#allocation5 + $0x40] sm:$0xff]
    %v6917 = vld [vmem:[#allocation5 + $0x48] sm:$0xff]
    %v6918 = vld [vmem:[#allocation5 + $0x50] sm:$0xff]
    %v6919 = vld [vmem:[#allocation5 + $0x58] sm:$0xff]
    %v6920 = vld [vmem:[#allocation5 + $0x60] sm:$0xff]
    %v6921 = vld [vmem:[#allocation5 + $0x68] sm:$0xff]
    %v6922 = vld [vmem:[#allocation5 + $0x70] sm:$0xff]
    %v6923 = vld [vmem:[#allocation5 + $0x78] sm:$0xff]
    %v6924 = vld [vmem:[#allocation5 + $0x80] sm:$0x3]
    %v6925 = vld [vmem:[#allocation5 + $0x88] sm:$0x3]
    %v6926 = vadd.f32 %v6908, %v6890
    %v6927 = vadd.f32 %v6909, %v6891
    %v6928 = vadd.f32 %v6910, %v6892
    %v6929 = vadd.f32 %v6911, %v6893
    %v6930 = vadd.f32 %v6912, %v6894
    %v6931 = vadd.f32 %v6913, %v6895
    %v6932 = vadd.f32 %v6914, %v6896
    %v6933 = vadd.f32 %v6915, %v6897
    %v6934 = vadd.f32 %v6916, %v6898
    %v6935 = vadd.f32 %v6917, %v6899
    %v6936 = vadd.f32 %v6918, %v6900
    %v6937 = vadd.f32 %v6919, %v6901
    %v6938 = vadd.f32 %v6920, %v6902
    %v6939 = vadd.f32 %v6921, %v6903
    %v6940 = vadd.f32 %v6922, %v6904
    %v6941 = vadd.f32 %v6923, %v6905
    %v6942 = vadd.f32 %v6924, %v6906
    %v6943 = vadd.f32 %v6925, %v6907
    %6944 = vst [vmem:[#allocation5] sm:$0xff] %v6926
    %6945 = vst.msk [vmem:[#allocation5 + $0x8] sm:$0xff] %vm4364, %v6927
    %6946 = vst [vmem:[#allocation5 + $0x10] sm:$0xff] %v6928
    %6947 = vst.msk [vmem:[#allocation5 + $0x18] sm:$0xff] %vm4364, %v6929
    %6948 = vst [vmem:[#allocation5 + $0x20] sm:$0xff] %v6930
    %6949 = vst.msk [vmem:[#allocation5 + $0x28] sm:$0xff] %vm4364, %v6931
    %6950 = vst [vmem:[#allocation5 + $0x30] sm:$0xff] %v6932
    %6951 = vst.msk [vmem:[#allocation5 + $0x38] sm:$0xff] %vm4364, %v6933
    %6952 = vst [vmem:[#allocation5 + $0x40] sm:$0xff] %v6934
    %6953 = vst.msk [vmem:[#allocation5 + $0x48] sm:$0xff] %vm4364, %v6935
    %6954 = vst [vmem:[#allocation5 + $0x50] sm:$0xff] %v6936
    %6955 = vst.msk [vmem:[#allocation5 + $0x58] sm:$0xff] %vm4364, %v6937
    %6956 = vst [vmem:[#allocation5 + $0x60] sm:$0xff] %v6938
    %6957 = vst.msk [vmem:[#allocation5 + $0x68] sm:$0xff] %vm4364, %v6939
    %6958 = vst [vmem:[#allocation5 + $0x70] sm:$0xff] %v6940
    %6959 = vst.msk [vmem:[#allocation5 + $0x78] sm:$0xff] %vm4364, %v6941
    %6960 = vst [vmem:[#allocation5 + $0x80] sm:$0x3] %v6942
    %6961 = vst.msk [vmem:[#allocation5 + $0x88] sm:$0x3] %vm4381, %v6943
    %v6962 = vld [vmem:[#allocation5] sm:$0xff]
    %v6963 = vld [vmem:[#allocation5 + $0x10] sm:$0xff]
    %v6964 = vld [vmem:[#allocation5 + $0x20] sm:$0xff]
    %v6965 = vld [vmem:[#allocation5 + $0x30] sm:$0xff]
    %v6966 = vld [vmem:[#allocation5 + $0x8] sm:$0xff]
    %v6967 = vld [vmem:[#allocation5 + $0x18] sm:$0xff]
    %v6968 = vld [vmem:[#allocation5 + $0x28] sm:$0xff]
    %v6969 = vld [vmem:[#allocation5 + $0x38] sm:$0xff]
    %v6970 = vld [vmem:[#allocation5 + $0x40] sm:$0xfc]
    %v6971 = vld [vmem:[#allocation5 + $0x50] sm:$0xff]
    %v6972 = vld [vmem:[#allocation5 + $0x60] sm:$0xff]
    %v6973 = vld [vmem:[#allocation5 + $0x70] sm:$0xff]
    %v6974 = vld [vmem:[#allocation5 + $0x80] sm:$0x3]
    %v6975 = vld [vmem:[#allocation5 + $0x48] sm:$0xfc]
    %v6976 = vld [vmem:[#allocation5 + $0x58] sm:$0xff]
    %v6977 = vld [vmem:[#allocation5 + $0x68] sm:$0xff]
    %v6978 = vld [vmem:[#allocation5 + $0x78] sm:$0xff]
    %v6979 = vld [vmem:[#allocation5 + $0x88] sm:$0x3]
    %v6980 = vsel %vm877, %v6962, 0.0
    %v6981 = vsel %vm877, %v6963, 0.0
    %v6982 = vadd.f32 %v6980, %v6981
    %v6983 = vsel %vm877, %v6964, 0.0
    %v6984 = vadd.f32 %v6982, %v6983
    %v6985 = vsel %vm877, %v6965, 0.0
    %v6986 = vadd.f32 %v6984, %v6985
    %6987 = vadd.xlane.f32.xlu0 %v6986
    %v6988 = vpop.xlane.xlu0 %6987
    %v6989 = vrot.slane %v6988, 4
    %v6990 = vadd.f32 %v6988, %v6989
    %v6991 = vrot.slane %v6990, 2
    %v6992 = vadd.f32 %v6990, %v6991
    %v6993 = vrot.slane %v6992, 1
    %v6994 = vadd.f32 %v6992, %v6993
    %s6995 = vtos %v6994
    %v6996 = vstv %s6995
    %v6997 = vadd.f32 %v6996, 0.0
    %v7003 = vrot.slane %v6970, 2
    %v7004 = vrot.slane %v6971, 2
    %v7005 = vsel %vm2622, %v7003, %v7004
    %v7006 = vrot.slane %v6972, 2
    %v7007 = vsel %vm2622, %v7004, %v7006
    %v7008 = vrot.slane %v6973, 2
    %v7009 = vsel %vm2622, %v7006, %v7008
    %v7010 = vrot.slane %v6974, 2
    %v7011 = vsel %vm2622, %v7008, %v7010
    %v7016 = vsel %vm877, %v7005, 0.0
    %v7017 = vsel %vm877, %v7007, 0.0
    %v7018 = vadd.f32 %v7016, %v7017
    %v7019 = vsel %vm877, %v7009, 0.0
    %v7020 = vadd.f32 %v7018, %v7019
    %v7021 = vsel %vm877, %v7011, 0.0
    %v7022 = vadd.f32 %v7020, %v7021
    %7023 = vadd.xlane.f32.xlu0 %v7022
    %v7024 = vpop.xlane.xlu0 %7023
    %v7025 = vrot.slane %v7024, 4
    %v7026 = vadd.f32 %v7024, %v7025
    %v7027 = vrot.slane %v7026, 2
    %v7028 = vadd.f32 %v7026, %v7027
    %v7029 = vrot.slane %v7028, 1
    %v7030 = vadd.f32 %v7028, %v7029
    %s7031 = vtos %v7030
    %v7032 = vstv %s7031
    %v7033 = vadd.f32 %v6997, %v7032
    %v7034 = vmul.f32 %v7033, 0.00048828125
    %v7035 = vsub.f32 %v6962, %v7034
    %v7036 = vsub.f32 %v6963, %v7034
    %v7037 = vsub.f32 %v6964, %v7034
    %v7038 = vsub.f32 %v6965, %v7034
    %v7039 = vmul.f32 %v7035, %v7035
    %v7040 = vmul.f32 %v7036, %v7036
    %v7041 = vmul.f32 %v7037, %v7037
    %v7042 = vmul.f32 %v7038, %v7038
    %v7043 = vsel %vm877, %v7039, 0.0
    %v7044 = vsel %vm877, %v7040, 0.0
    %v7045 = vadd.f32 %v7043, %v7044
    %v7046 = vsel %vm877, %v7041, 0.0
    %v7047 = vadd.f32 %v7045, %v7046
    %v7048 = vsel %vm877, %v7042, 0.0
    %v7049 = vadd.f32 %v7047, %v7048
    %7050 = vadd.xlane.f32.xlu0 %v7049
    %v7051 = vpop.xlane.xlu0 %7050
    %v7052 = vrot.slane %v7051, 4
    %v7053 = vadd.f32 %v7051, %v7052
    %v7054 = vrot.slane %v7053, 2
    %v7055 = vadd.f32 %v7053, %v7054
    %v7056 = vrot.slane %v7055, 1
    %v7057 = vadd.f32 %v7055, %v7056
    %s7058 = vtos %v7057
    %v7059 = vstv %s7058
    %v7060 = vadd.f32 %v7059, 0.0
    %v7061 = vsub.f32 %v6970, %v7034
    %v7062 = vsub.f32 %v6971, %v7034
    %v7063 = vsub.f32 %v6972, %v7034
    %v7064 = vsub.f32 %v6973, %v7034
    %v7065 = vsub.f32 %v6974, %v7034
    %v7066 = vmul.f32 %v7061, %v7061
    %v7067 = vmul.f32 %v7062, %v7062
    %v7068 = vmul.f32 %v7063, %v7063
    %v7069 = vmul.f32 %v7064, %v7064
    %v7070 = vmul.f32 %v7065, %v7065
    %v7076 = vrot.slane %v7066, 2
    %v7077 = vrot.slane %v7067, 2
    %v7078 = vsel %vm2622, %v7076, %v7077
    %v7079 = vrot.slane %v7068, 2
    %v7080 = vsel %vm2622, %v7077, %v7079
    %v7081 = vrot.slane %v7069, 2
    %v7082 = vsel %vm2622, %v7079, %v7081
    %v7083 = vrot.slane %v7070, 2
    %v7084 = vsel %vm2622, %v7081, %v7083
    %v7089 = vsel %vm877, %v7078, 0.0
    %v7090 = vsel %vm877, %v7080, 0.0
    %v7091 = vadd.f32 %v7089, %v7090
    %v7092 = vsel %vm877, %v7082, 0.0
    %v7093 = vadd.f32 %v7091, %v7092
    %v7094 = vsel %vm877, %v7084, 0.0
    %v7095 = vadd.f32 %v7093, %v7094
    %7096 = vadd.xlane.f32.xlu0 %v7095
    %v7097 = vpop.xlane.xlu0 %7096
    %v7098 = vrot.slane %v7097, 4
    %v7099 = vadd.f32 %v7097, %v7098
    %v7100 = vrot.slane %v7099, 2
    %v7101 = vadd.f32 %v7099, %v7100
    %v7102 = vrot.slane %v7101, 1
    %v7103 = vadd.f32 %v7101, %v7102
    %s7104 = vtos %v7103
    %v7105 = vstv %s7104
    %v7106 = vadd.f32 %v7060, %v7105
    %v7107 = vmul.f32 %v7106, 0.00048828125
    %s7108 = sld [smem:[#allocation6]]
    %v7109 = vadd.f32 %v7107, 1e-05
    %v7110 = vrsqrt.pop %v7109
    %v7111 = vmul.f32 %v7110, %v7109
    %v7112 = vmul.f32 %v7111, %v7110
    %v7113 = vmul.f32 0.5, %v7112
    %v7114 = vsub.f32 1.5, %v7113
    %v7115 = vmul.f32 %v7110, %v7114
    %vm7116 = vweird.f32 %v7109
    %vm7117 = vweird.f32 %v7110
    %vm7118 = vmor %vm7116, %vm7117
    %v7119 = vsel %vm7118, %v7110, %v7115
    %v7120 = vstv %s7108
    %v7121 = vmul.f32 %v7120, %v7119
    %s7122 = sld [smem:[#allocation9]]
    %v7123 = vmul.f32 %v7034, %v7121
    %v7124 = vstv %s7122
    %v7125 = vsub.f32 %v7124, %v7123
    %v7126 = vmul.f32 %v6962, %v7121
    %v7127 = vmul.f32 %v6963, %v7121
    %v7128 = vmul.f32 %v6964, %v7121
    %v7129 = vmul.f32 %v6965, %v7121
    %v7130 = vadd.f32 %v7126, %v7125
    %v7131 = vadd.f32 %v7127, %v7125
    %v7132 = vadd.f32 %v7128, %v7125
    %v7133 = vadd.f32 %v7129, %v7125
    %v7134 = vmax.f32 %v7130, 0.0
    %v7135 = vmax.f32 %v7131, 0.0
    %v7136 = vmax.f32 %v7132, 0.0
    %v7137 = vmax.f32 %v7133, 0.0
    %v7138 = vmul.f32 %v6970, %v7121
    %v7139 = vmul.f32 %v6971, %v7121
    %v7140 = vmul.f32 %v6972, %v7121
    %v7141 = vmul.f32 %v6973, %v7121
    %v7142 = vmul.f32 %v6974, %v7121
    %v7143 = vadd.f32 %v7138, %v7125
    %v7144 = vadd.f32 %v7139, %v7125
    %v7145 = vadd.f32 %v7140, %v7125
    %v7146 = vadd.f32 %v7141, %v7125
    %v7147 = vadd.f32 %v7142, %v7125
    %v7148 = vmax.f32 %v7143, 0.0
    %v7149 = vmax.f32 %v7144, 0.0
    %v7150 = vmax.f32 %v7145, 0.0
    %v7151 = vmax.f32 %v7146, 0.0
    %v7152 = vmax.f32 %v7147, 0.0
    %7157 = vrot.lane.b32.xlu0 %v6962, 94
    %v7158 = vpop.permute.xlu0 %7157
    %7159 = vrot.lane.b32.xlu0 %v6963, 94
    %v7160 = vpop.permute.xlu0 %7159
    %7161 = vrot.lane.b32.xlu0 %v6964, 94
    %v7162 = vpop.permute.xlu0 %7161
    %7163 = vrot.lane.b32.xlu0 %v6965, 94
    %v7164 = vpop.permute.xlu0 %7163
    %v7169 = vsel %vm877, %v7158, 0.0
    %v7170 = vsel %vm877, %v7160, 0.0
    %v7171 = vadd.f32 %v7169, %v7170
    %v7172 = vsel %vm877, %v7162, 0.0
    %v7173 = vadd.f32 %v7171, %v7172
    %v7174 = vsel %vm877, %v7164, 0.0
    %v7175 = vadd.f32 %v7173, %v7174
    %7176 = vadd.xlane.f32.xlu0 %v7175
    %v7177 = vpop.xlane.xlu0 %7176
    %v7178 = vrot.slane %v7177, 4
    %v7179 = vadd.f32 %v7177, %v7178
    %v7180 = vrot.slane %v7179, 2
    %v7181 = vadd.f32 %v7179, %v7180
    %v7182 = vrot.slane %v7181, 1
    %v7183 = vadd.f32 %v7181, %v7182
    %s7184 = vtos %v7183
    %v7185 = vstv %s7184
    %v7186 = vadd.f32 %v7185, 0.0
    %7187 = vrot.lane.b32.xlu0 %v7005, 94
    %v7188 = vpop.permute.xlu0 %7187
    %7189 = vrot.lane.b32.xlu0 %v7007, 94
    %v7190 = vpop.permute.xlu0 %7189
    %7191 = vrot.lane.b32.xlu0 %v7009, 94
    %v7192 = vpop.permute.xlu0 %7191
    %7193 = vrot.lane.b32.xlu0 %v7011, 94
    %v7194 = vpop.permute.xlu0 %7193
    %v7199 = vsel %vm877, %v7188, 0.0
    %v7200 = vsel %vm877, %v7190, 0.0
    %v7201 = vadd.f32 %v7199, %v7200
    %v7202 = vsel %vm877, %v7192, 0.0
    %v7203 = vadd.f32 %v7201, %v7202
    %v7204 = vsel %vm877, %v7194, 0.0
    %v7205 = vadd.f32 %v7203, %v7204
    %7206 = vadd.xlane.f32.xlu0 %v7205
    %v7207 = vpop.xlane.xlu0 %7206
    %v7208 = vrot.slane %v7207, 4
    %v7209 = vadd.f32 %v7207, %v7208
    %v7210 = vrot.slane %v7209, 2
    %v7211 = vadd.f32 %v7209, %v7210
    %v7212 = vrot.slane %v7211, 1
    %v7213 = vadd.f32 %v7211, %v7212
    %s7214 = vtos %v7213
    %v7215 = vstv %s7214
    %v7216 = vadd.f32 %v7186, %v7215
    %v7217 = vmul.f32 %v7216, 0.00048828125
    %v7218 = vsub.f32 %v6962, %v7217
    %v7219 = vsub.f32 %v6963, %v7217
    %v7220 = vsub.f32 %v6964, %v7217
    %v7221 = vsub.f32 %v6965, %v7217
    %v7222 = vmul.f32 %v7218, %v7218
    %v7223 = vmul.f32 %v7219, %v7219
    %v7224 = vmul.f32 %v7220, %v7220
    %v7225 = vmul.f32 %v7221, %v7221
    %7230 = vrot.lane.b32.xlu0 %v7222, 94
    %v7231 = vpop.permute.xlu0 %7230
    %7232 = vrot.lane.b32.xlu0 %v7223, 94
    %v7233 = vpop.permute.xlu0 %7232
    %7234 = vrot.lane.b32.xlu0 %v7224, 94
    %v7235 = vpop.permute.xlu0 %7234
    %7236 = vrot.lane.b32.xlu0 %v7225, 94
    %v7237 = vpop.permute.xlu0 %7236
    %v7242 = vsel %vm877, %v7231, 0.0
    %v7243 = vsel %vm877, %v7233, 0.0
    %v7244 = vadd.f32 %v7242, %v7243
    %v7245 = vsel %vm877, %v7235, 0.0
    %v7246 = vadd.f32 %v7244, %v7245
    %v7247 = vsel %vm877, %v7237, 0.0
    %v7248 = vadd.f32 %v7246, %v7247
    %7249 = vadd.xlane.f32.xlu0 %v7248
    %v7250 = vpop.xlane.xlu0 %7249
    %v7251 = vrot.slane %v7250, 4
    %v7252 = vadd.f32 %v7250, %v7251
    %v7253 = vrot.slane %v7252, 2
    %v7254 = vadd.f32 %v7252, %v7253
    %v7255 = vrot.slane %v7254, 1
    %v7256 = vadd.f32 %v7254, %v7255
    %s7257 = vtos %v7256
    %v7258 = vstv %s7257
    %v7259 = vadd.f32 %v7258, 0.0
    %v7260 = vsub.f32 %v6970, %v7217
    %v7261 = vsub.f32 %v6971, %v7217
    %v7262 = vsub.f32 %v6972, %v7217
    %v7263 = vsub.f32 %v6973, %v7217
    %v7264 = vsub.f32 %v6974, %v7217
    %v7265 = vmul.f32 %v7260, %v7260
    %v7266 = vmul.f32 %v7261, %v7261
    %v7267 = vmul.f32 %v7262, %v7262
    %v7268 = vmul.f32 %v7263, %v7263
    %v7269 = vmul.f32 %v7264, %v7264
    %v7275 = vrot.slane %v7265, 2
    %v7276 = vrot.slane %v7266, 2
    %v7277 = vsel %vm2622, %v7275, %v7276
    %v7278 = vrot.slane %v7267, 2
    %v7279 = vsel %vm2622, %v7276, %v7278
    %v7280 = vrot.slane %v7268, 2
    %v7281 = vsel %vm2622, %v7278, %v7280
    %v7282 = vrot.slane %v7269, 2
    %v7283 = vsel %vm2622, %v7280, %v7282
    %7284 = vrot.lane.b32.xlu0 %v7277, 94
    %v7285 = vpop.permute.xlu0 %7284
    %7286 = vrot.lane.b32.xlu0 %v7279, 94
    %v7287 = vpop.permute.xlu0 %7286
    %7288 = vrot.lane.b32.xlu0 %v7281, 94
    %v7289 = vpop.permute.xlu0 %7288
    %7290 = vrot.lane.b32.xlu0 %v7283, 94
    %v7291 = vpop.permute.xlu0 %7290
    %v7296 = vsel %vm877, %v7285, 0.0
    %v7297 = vsel %vm877, %v7287, 0.0
    %v7298 = vadd.f32 %v7296, %v7297
    %v7299 = vsel %vm877, %v7289, 0.0
    %v7300 = vadd.f32 %v7298, %v7299
    %v7301 = vsel %vm877, %v7291, 0.0
    %v7302 = vadd.f32 %v7300, %v7301
    %7303 = vadd.xlane.f32.xlu0 %v7302
    %v7304 = vpop.xlane.xlu0 %7303
    %v7305 = vrot.slane %v7304, 4
    %v7306 = vadd.f32 %v7304, %v7305
    %v7307 = vrot.slane %v7306, 2
    %v7308 = vadd.f32 %v7306, %v7307
    %v7309 = vrot.slane %v7308, 1
    %v7310 = vadd.f32 %v7308, %v7309
    %s7311 = vtos %v7310
    %v7312 = vstv %s7311
    %v7313 = vadd.f32 %v7259, %v7312
    %v7314 = vmul.f32 %v7313, 0.00048828125
    %s7315 = sld [smem:[#allocation6 + $0x1]]
    %v7316 = vadd.f32 %v7314, 1e-05
    %v7317 = vrsqrt.pop %v7316
    %v7318 = vmul.f32 %v7317, %v7316
    %v7319 = vmul.f32 %v7318, %v7317
    %v7320 = vmul.f32 0.5, %v7319
    %v7321 = vsub.f32 1.5, %v7320
    %v7322 = vmul.f32 %v7317, %v7321
    %vm7323 = vweird.f32 %v7316
    %vm7324 = vweird.f32 %v7317
    %vm7325 = vmor %vm7323, %vm7324
    %v7326 = vsel %vm7325, %v7317, %v7322
    %v7327 = vstv %s7315
    %v7328 = vmul.f32 %v7327, %v7326
    %s7329 = sld [smem:[#allocation9 + $0x1]]
    %v7330 = vmul.f32 %v7217, %v7328
    %v7331 = vstv %s7329
    %v7332 = vsub.f32 %v7331, %v7330
    %v7333 = vmul.f32 %v6962, %v7328
    %v7334 = vmul.f32 %v6963, %v7328
    %v7335 = vmul.f32 %v6964, %v7328
    %v7336 = vmul.f32 %v6965, %v7328
    %v7337 = vadd.f32 %v7333, %v7332
    %v7338 = vadd.f32 %v7334, %v7332
    %v7339 = vadd.f32 %v7335, %v7332
    %v7340 = vadd.f32 %v7336, %v7332
    %v7341 = vmax.f32 %v7337, 0.0
    %v7342 = vmax.f32 %v7338, 0.0
    %v7343 = vmax.f32 %v7339, 0.0
    %v7344 = vmax.f32 %v7340, 0.0
    %v7345 = vmul.f32 %v6970, %v7328
    %v7346 = vmul.f32 %v6971, %v7328
    %v7347 = vmul.f32 %v6972, %v7328
    %v7348 = vmul.f32 %v6973, %v7328
    %v7349 = vmul.f32 %v6974, %v7328
    %v7350 = vadd.f32 %v7345, %v7332
    %v7351 = vadd.f32 %v7346, %v7332
    %v7352 = vadd.f32 %v7347, %v7332
    %v7353 = vadd.f32 %v7348, %v7332
    %v7354 = vadd.f32 %v7349, %v7332
    %v7355 = vmax.f32 %v7350, 0.0
    %v7356 = vmax.f32 %v7351, 0.0
    %v7357 = vmax.f32 %v7352, 0.0
    %v7358 = vmax.f32 %v7353, 0.0
    %v7359 = vmax.f32 %v7354, 0.0
    %7360 = vrot.lane.b32.xlu0 %v6962, 60
    %v7361 = vpop.permute.xlu0 %7360
    %7362 = vrot.lane.b32.xlu0 %v6963, 60
    %v7363 = vpop.permute.xlu0 %7362
    %7364 = vrot.lane.b32.xlu0 %v6964, 60
    %v7365 = vpop.permute.xlu0 %7364
    %7366 = vrot.lane.b32.xlu0 %v6965, 60
    %v7367 = vpop.permute.xlu0 %7366
    %v7372 = vsel %vm877, %v7361, 0.0
    %v7373 = vsel %vm877, %v7363, 0.0
    %v7374 = vadd.f32 %v7372, %v7373
    %v7375 = vsel %vm877, %v7365, 0.0
    %v7376 = vadd.f32 %v7374, %v7375
    %v7377 = vsel %vm877, %v7367, 0.0
    %v7378 = vadd.f32 %v7376, %v7377
    %7379 = vadd.xlane.f32.xlu0 %v7378
    %v7380 = vpop.xlane.xlu0 %7379
    %v7381 = vrot.slane %v7380, 4
    %v7382 = vadd.f32 %v7380, %v7381
    %v7383 = vrot.slane %v7382, 2
    %v7384 = vadd.f32 %v7382, %v7383
    %v7385 = vrot.slane %v7384, 1
    %v7386 = vadd.f32 %v7384, %v7385
    %s7387 = vtos %v7386
    %v7388 = vstv %s7387
    %v7389 = vadd.f32 %v7388, 0.0
    %7390 = vrot.lane.b32.xlu0 %v7005, 60
    %v7391 = vpop.permute.xlu0 %7390
    %7392 = vrot.lane.b32.xlu0 %v7007, 60
    %v7393 = vpop.permute.xlu0 %7392
    %7394 = vrot.lane.b32.xlu0 %v7009, 60
    %v7395 = vpop.permute.xlu0 %7394
    %7396 = vrot.lane.b32.xlu0 %v7011, 60
    %v7397 = vpop.permute.xlu0 %7396
    %v7402 = vsel %vm877, %v7391, 0.0
    %v7403 = vsel %vm877, %v7393, 0.0
    %v7404 = vadd.f32 %v7402, %v7403
    %v7405 = vsel %vm877, %v7395, 0.0
    %v7406 = vadd.f32 %v7404, %v7405
    %v7407 = vsel %vm877, %v7397, 0.0
    %v7408 = vadd.f32 %v7406, %v7407
    %7409 = vadd.xlane.f32.xlu0 %v7408
    %v7410 = vpop.xlane.xlu0 %7409
    %v7411 = vrot.slane %v7410, 4
    %v7412 = vadd.f32 %v7410, %v7411
    %v7413 = vrot.slane %v7412, 2
    %v7414 = vadd.f32 %v7412, %v7413
    %v7415 = vrot.slane %v7414, 1
    %v7416 = vadd.f32 %v7414, %v7415
    %s7417 = vtos %v7416
    %v7418 = vstv %s7417
    %v7419 = vadd.f32 %v7389, %v7418
    %v7420 = vmul.f32 %v7419, 0.00048828125
    %v7421 = vsub.f32 %v6962, %v7420
    %v7422 = vsub.f32 %v6963, %v7420
    %v7423 = vsub.f32 %v6964, %v7420
    %v7424 = vsub.f32 %v6965, %v7420
    %v7425 = vmul.f32 %v7421, %v7421
    %v7426 = vmul.f32 %v7422, %v7422
    %v7427 = vmul.f32 %v7423, %v7423
    %v7428 = vmul.f32 %v7424, %v7424
    %7433 = vrot.lane.b32.xlu0 %v7425, 60
    %v7434 = vpop.permute.xlu0 %7433
    %7435 = vrot.lane.b32.xlu0 %v7426, 60
    %v7436 = vpop.permute.xlu0 %7435
    %7437 = vrot.lane.b32.xlu0 %v7427, 60
    %v7438 = vpop.permute.xlu0 %7437
    %7439 = vrot.lane.b32.xlu0 %v7428, 60
    %v7440 = vpop.permute.xlu0 %7439
    %v7445 = vsel %vm877, %v7434, 0.0
    %v7446 = vsel %vm877, %v7436, 0.0
    %v7447 = vadd.f32 %v7445, %v7446
    %v7448 = vsel %vm877, %v7438, 0.0
    %v7449 = vadd.f32 %v7447, %v7448
    %v7450 = vsel %vm877, %v7440, 0.0
    %v7451 = vadd.f32 %v7449, %v7450
    %7452 = vadd.xlane.f32.xlu0 %v7451
    %v7453 = vpop.xlane.xlu0 %7452
    %v7454 = vrot.slane %v7453, 4
    %v7455 = vadd.f32 %v7453, %v7454
    %v7456 = vrot.slane %v7455, 2
    %v7457 = vadd.f32 %v7455, %v7456
    %v7458 = vrot.slane %v7457, 1
    %v7459 = vadd.f32 %v7457, %v7458
    %s7460 = vtos %v7459
    %v7461 = vstv %s7460
    %v7462 = vadd.f32 %v7461, 0.0
    %v7463 = vsub.f32 %v6970, %v7420
    %v7464 = vsub.f32 %v6971, %v7420
    %v7465 = vsub.f32 %v6972, %v7420
    %v7466 = vsub.f32 %v6973, %v7420
    %v7467 = vsub.f32 %v6974, %v7420
    %v7468 = vmul.f32 %v7463, %v7463
    %v7469 = vmul.f32 %v7464, %v7464
    %v7470 = vmul.f32 %v7465, %v7465
    %v7471 = vmul.f32 %v7466, %v7466
    %v7472 = vmul.f32 %v7467, %v7467
    %v7478 = vrot.slane %v7468, 2
    %v7479 = vrot.slane %v7469, 2
    %v7480 = vsel %vm2622, %v7478, %v7479
    %v7481 = vrot.slane %v7470, 2
    %v7482 = vsel %vm2622, %v7479, %v7481
    %v7483 = vrot.slane %v7471, 2
    %v7484 = vsel %vm2622, %v7481, %v7483
    %v7485 = vrot.slane %v7472, 2
    %v7486 = vsel %vm2622, %v7483, %v7485
    %7487 = vrot.lane.b32.xlu0 %v7480, 60
    %v7488 = vpop.permute.xlu0 %7487
    %7489 = vrot.lane.b32.xlu0 %v7482, 60
    %v7490 = vpop.permute.xlu0 %7489
    %7491 = vrot.lane.b32.xlu0 %v7484, 60
    %v7492 = vpop.permute.xlu0 %7491
    %7493 = vrot.lane.b32.xlu0 %v7486, 60
    %v7494 = vpop.permute.xlu0 %7493
    %v7499 = vsel %vm877, %v7488, 0.0
    %v7500 = vsel %vm877, %v7490, 0.0
    %v7501 = vadd.f32 %v7499, %v7500
    %v7502 = vsel %vm877, %v7492, 0.0
    %v7503 = vadd.f32 %v7501, %v7502
    %v7504 = vsel %vm877, %v7494, 0.0
    %v7505 = vadd.f32 %v7503, %v7504
    %7506 = vadd.xlane.f32.xlu0 %v7505
    %v7507 = vpop.xlane.xlu0 %7506
    %v7508 = vrot.slane %v7507, 4
    %v7509 = vadd.f32 %v7507, %v7508
    %v7510 = vrot.slane %v7509, 2
    %v7511 = vadd.f32 %v7509, %v7510
    %v7512 = vrot.slane %v7511, 1
    %v7513 = vadd.f32 %v7511, %v7512
    %s7514 = vtos %v7513
    %v7515 = vstv %s7514
    %v7516 = vadd.f32 %v7462, %v7515
    %v7517 = vmul.f32 %v7516, 0.00048828125
    %s7518 = sld [smem:[#allocation6 + $0x2]]
    %v7519 = vadd.f32 %v7517, 1e-05
    %v7520 = vrsqrt.pop %v7519
    %v7521 = vmul.f32 %v7520, %v7519
    %v7522 = vmul.f32 %v7521, %v7520
    %v7523 = vmul.f32 0.5, %v7522
    %v7524 = vsub.f32 1.5, %v7523
    %v7525 = vmul.f32 %v7520, %v7524
    %vm7526 = vweird.f32 %v7519
    %vm7527 = vweird.f32 %v7520
    %vm7528 = vmor %vm7526, %vm7527
    %v7529 = vsel %vm7528, %v7520, %v7525
    %v7530 = vstv %s7518
    %v7531 = vmul.f32 %v7530, %v7529
    %s7532 = sld [smem:[#allocation9 + $0x2]]
    %v7533 = vmul.f32 %v7420, %v7531
    %v7534 = vstv %s7532
    %v7535 = vsub.f32 %v7534, %v7533
    %v7536 = vmul.f32 %v6962, %v7531
    %v7537 = vmul.f32 %v6963, %v7531
    %v7538 = vmul.f32 %v6964, %v7531
    %v7539 = vmul.f32 %v6965, %v7531
    %v7540 = vadd.f32 %v7536, %v7535
    %v7541 = vadd.f32 %v7537, %v7535
    %v7542 = vadd.f32 %v7538, %v7535
    %v7543 = vadd.f32 %v7539, %v7535
    %v7544 = vmax.f32 %v7540, 0.0
    %v7545 = vmax.f32 %v7541, 0.0
    %v7546 = vmax.f32 %v7542, 0.0
    %v7547 = vmax.f32 %v7543, 0.0
    %v7548 = vmul.f32 %v6970, %v7531
    %v7549 = vmul.f32 %v6971, %v7531
    %v7550 = vmul.f32 %v6972, %v7531
    %v7551 = vmul.f32 %v6973, %v7531
    %v7552 = vmul.f32 %v6974, %v7531
    %v7553 = vadd.f32 %v7548, %v7535
    %v7554 = vadd.f32 %v7549, %v7535
    %v7555 = vadd.f32 %v7550, %v7535
    %v7556 = vadd.f32 %v7551, %v7535
    %v7557 = vadd.f32 %v7552, %v7535
    %v7558 = vmax.f32 %v7553, 0.0
    %v7559 = vmax.f32 %v7554, 0.0
    %v7560 = vmax.f32 %v7555, 0.0
    %v7561 = vmax.f32 %v7556, 0.0
    %v7562 = vmax.f32 %v7557, 0.0
    %7567 = vrot.lane.b32.xlu0 %v6962, 26
    %v7568 = vpop.permute.xlu0 %7567
    %7569 = vrot.lane.b32.xlu0 %v6966, 26
    %v7570 = vpop.permute.xlu0 %7569
    %7571 = vrot.lane.b32.xlu0 %v6963, 26
    %v7572 = vpop.permute.xlu0 %7571
    %7573 = vrot.lane.b32.xlu0 %v6967, 26
    %v7574 = vpop.permute.xlu0 %7573
    %7575 = vrot.lane.b32.xlu0 %v6964, 26
    %v7576 = vpop.permute.xlu0 %7575
    %7577 = vrot.lane.b32.xlu0 %v6968, 26
    %v7578 = vpop.permute.xlu0 %7577
    %7579 = vrot.lane.b32.xlu0 %v6965, 26
    %v7580 = vpop.permute.xlu0 %7579
    %7581 = vrot.lane.b32.xlu0 %v6969, 26
    %v7582 = vpop.permute.xlu0 %7581
    %vm7583 = vcmask 211968
    %v7584 = vsel %vm7583, %v7568, %v7570
    %v7585 = vsel %vm7583, %v7572, %v7574
    %v7586 = vsel %vm7583, %v7576, %v7578
    %v7587 = vsel %vm7583, %v7580, %v7582
    %v7592 = vsel %vm877, %v7584, 0.0
    %v7593 = vsel %vm877, %v7585, 0.0
    %v7594 = vadd.f32 %v7592, %v7593
    %v7595 = vsel %vm877, %v7586, 0.0
    %v7596 = vadd.f32 %v7594, %v7595
    %v7597 = vsel %vm877, %v7587, 0.0
    %v7598 = vadd.f32 %v7596, %v7597
    %7599 = vadd.xlane.f32.xlu0 %v7598
    %v7600 = vpop.xlane.xlu0 %7599
    %v7601 = vrot.slane %v7600, 4
    %v7602 = vadd.f32 %v7600, %v7601
    %v7603 = vrot.slane %v7602, 2
    %v7604 = vadd.f32 %v7602, %v7603
    %v7605 = vrot.slane %v7604, 1
    %v7606 = vadd.f32 %v7604, %v7605
    %s7607 = vtos %v7606
    %v7608 = vstv %s7607
    %v7609 = vadd.f32 %v7608, 0.0
    %v7615 = vrot.slane %v6975, 2
    %v7616 = vrot.slane %v6976, 2
    %v7617 = vsel %vm2622, %v7615, %v7616
    %v7618 = vrot.slane %v6977, 2
    %v7619 = vsel %vm2622, %v7616, %v7618
    %v7620 = vrot.slane %v6978, 2
    %v7621 = vsel %vm2622, %v7618, %v7620
    %v7622 = vrot.slane %v6979, 2
    %v7623 = vsel %vm2622, %v7620, %v7622
    %7624 = vrot.lane.b32.xlu0 %v7005, 26
    %v7625 = vpop.permute.xlu0 %7624
    %7626 = vrot.lane.b32.xlu0 %v7617, 26
    %v7627 = vpop.permute.xlu0 %7626
    %7628 = vrot.lane.b32.xlu0 %v7007, 26
    %v7629 = vpop.permute.xlu0 %7628
    %7630 = vrot.lane.b32.xlu0 %v7619, 26
    %v7631 = vpop.permute.xlu0 %7630
    %7632 = vrot.lane.b32.xlu0 %v7009, 26
    %v7633 = vpop.permute.xlu0 %7632
    %7634 = vrot.lane.b32.xlu0 %v7621, 26
    %v7635 = vpop.permute.xlu0 %7634
    %7636 = vrot.lane.b32.xlu0 %v7011, 26
    %v7637 = vpop.permute.xlu0 %7636
    %7638 = vrot.lane.b32.xlu0 %v7623, 26
    %v7639 = vpop.permute.xlu0 %7638
    %v7640 = vsel %vm7583, %v7625, %v7627
    %v7641 = vsel %vm7583, %v7629, %v7631
    %v7642 = vsel %vm7583, %v7633, %v7635
    %v7643 = vsel %vm7583, %v7637, %v7639
    %v7648 = vsel %vm877, %v7640, 0.0
    %v7649 = vsel %vm877, %v7641, 0.0
    %v7650 = vadd.f32 %v7648, %v7649
    %v7651 = vsel %vm877, %v7642, 0.0
    %v7652 = vadd.f32 %v7650, %v7651
    %v7653 = vsel %vm877, %v7643, 0.0
    %v7654 = vadd.f32 %v7652, %v7653
    %7655 = vadd.xlane.f32.xlu0 %v7654
    %v7656 = vpop.xlane.xlu0 %7655
    %v7657 = vrot.slane %v7656, 4
    %v7658 = vadd.f32 %v7656, %v7657
    %v7659 = vrot.slane %v7658, 2
    %v7660 = vadd.f32 %v7658, %v7659
    %v7661 = vrot.slane %v7660, 1
    %v7662 = vadd.f32 %v7660, %v7661
    %s7663 = vtos %v7662
    %v7664 = vstv %s7663
    %v7665 = vadd.f32 %v7609, %v7664
    %v7666 = vmul.f32 %v7665, 0.00048828125
    %v7667 = vsub.f32 %v6962, %v7666
    %v7668 = vsub.f32 %v6966, %v7666
    %v7669 = vsub.f32 %v6963, %v7666
    %v7670 = vsub.f32 %v6967, %v7666
    %v7671 = vsub.f32 %v6964, %v7666
    %v7672 = vsub.f32 %v6968, %v7666
    %v7673 = vsub.f32 %v6965, %v7666
    %v7674 = vsub.f32 %v6969, %v7666
    %v7675 = vmul.f32 %v7667, %v7667
    %v7676 = vmul.f32 %v7668, %v7668
    %v7677 = vmul.f32 %v7669, %v7669
    %v7678 = vmul.f32 %v7670, %v7670
    %v7679 = vmul.f32 %v7671, %v7671
    %v7680 = vmul.f32 %v7672, %v7672
    %v7681 = vmul.f32 %v7673, %v7673
    %v7682 = vmul.f32 %v7674, %v7674
    %7691 = vrot.lane.b32.xlu0 %v7675, 26
    %v7692 = vpop.permute.xlu0 %7691
    %7693 = vrot.lane.b32.xlu0 %v7676, 26
    %v7694 = vpop.permute.xlu0 %7693
    %7695 = vrot.lane.b32.xlu0 %v7677, 26
    %v7696 = vpop.permute.xlu0 %7695
    %7697 = vrot.lane.b32.xlu0 %v7678, 26
    %v7698 = vpop.permute.xlu0 %7697
    %7699 = vrot.lane.b32.xlu0 %v7679, 26
    %v7700 = vpop.permute.xlu0 %7699
    %7701 = vrot.lane.b32.xlu0 %v7680, 26
    %v7702 = vpop.permute.xlu0 %7701
    %7703 = vrot.lane.b32.xlu0 %v7681, 26
    %v7704 = vpop.permute.xlu0 %7703
    %7705 = vrot.lane.b32.xlu0 %v7682, 26
    %v7706 = vpop.permute.xlu0 %7705
    %v7707 = vsel %vm7583, %v7692, %v7694
    %v7708 = vsel %vm7583, %v7696, %v7698
    %v7709 = vsel %vm7583, %v7700, %v7702
    %v7710 = vsel %vm7583, %v7704, %v7706
    %v7715 = vsel %vm877, %v7707, 0.0
    %v7716 = vsel %vm877, %v7708, 0.0
    %v7717 = vadd.f32 %v7715, %v7716
    %v7718 = vsel %vm877, %v7709, 0.0
    %v7719 = vadd.f32 %v7717, %v7718
    %v7720 = vsel %vm877, %v7710, 0.0
    %v7721 = vadd.f32 %v7719, %v7720
    %7722 = vadd.xlane.f32.xlu0 %v7721
    %v7723 = vpop.xlane.xlu0 %7722
    %v7724 = vrot.slane %v7723, 4
    %v7725 = vadd.f32 %v7723, %v7724
    %v7726 = vrot.slane %v7725, 2
    %v7727 = vadd.f32 %v7725, %v7726
    %v7728 = vrot.slane %v7727, 1
    %v7729 = vadd.f32 %v7727, %v7728
    %s7730 = vtos %v7729
    %v7731 = vstv %s7730
    %v7732 = vadd.f32 %v7731, 0.0
    %v7733 = vsub.f32 %v6970, %v7666
    %v7734 = vsub.f32 %v6975, %v7666
    %v7735 = vsub.f32 %v6971, %v7666
    %v7736 = vsub.f32 %v6976, %v7666
    %v7737 = vsub.f32 %v6972, %v7666
    %v7738 = vsub.f32 %v6977, %v7666
    %v7739 = vsub.f32 %v6973, %v7666
    %v7740 = vsub.f32 %v6978, %v7666
    %v7741 = vsub.f32 %v6974, %v7666
    %v7742 = vsub.f32 %v6979, %v7666
    %v7743 = vmul.f32 %v7733, %v7733
    %v7744 = vmul.f32 %v7734, %v7734
    %v7745 = vmul.f32 %v7735, %v7735
    %v7746 = vmul.f32 %v7736, %v7736
    %v7747 = vmul.f32 %v7737, %v7737
    %v7748 = vmul.f32 %v7738, %v7738
    %v7749 = vmul.f32 %v7739, %v7739
    %v7750 = vmul.f32 %v7740, %v7740
    %v7751 = vmul.f32 %v7741, %v7741
    %v7752 = vmul.f32 %v7742, %v7742
    %v7763 = vrot.slane %v7743, 2
    %v7764 = vrot.slane %v7745, 2
    %v7765 = vsel %vm2622, %v7763, %v7764
    %v7766 = vrot.slane %v7744, 2
    %v7767 = vrot.slane %v7746, 2
    %v7768 = vsel %vm2622, %v7766, %v7767
    %v7769 = vrot.slane %v7747, 2
    %v7770 = vsel %vm2622, %v7764, %v7769
    %v7771 = vrot.slane %v7748, 2
    %v7772 = vsel %vm2622, %v7767, %v7771
    %v7773 = vrot.slane %v7749, 2
    %v7774 = vsel %vm2622, %v7769, %v7773
    %v7775 = vrot.slane %v7750, 2
    %v7776 = vsel %vm2622, %v7771, %v7775
    %v7777 = vrot.slane %v7751, 2
    %v7778 = vsel %vm2622, %v7773, %v7777
    %v7779 = vrot.slane %v7752, 2
    %v7780 = vsel %vm2622, %v7775, %v7779
    %7781 = vrot.lane.b32.xlu0 %v7765, 26
    %v7782 = vpop.permute.xlu0 %7781
    %7783 = vrot.lane.b32.xlu0 %v7768, 26
    %v7784 = vpop.permute.xlu0 %7783
    %7785 = vrot.lane.b32.xlu0 %v7770, 26
    %v7786 = vpop.permute.xlu0 %7785
    %7787 = vrot.lane.b32.xlu0 %v7772, 26
    %v7788 = vpop.permute.xlu0 %7787
    %7789 = vrot.lane.b32.xlu0 %v7774, 26
    %v7790 = vpop.permute.xlu0 %7789
    %7791 = vrot.lane.b32.xlu0 %v7776, 26
    %v7792 = vpop.permute.xlu0 %7791
    %7793 = vrot.lane.b32.xlu0 %v7778, 26
    %v7794 = vpop.permute.xlu0 %7793
    %7795 = vrot.lane.b32.xlu0 %v7780, 26
    %v7796 = vpop.permute.xlu0 %7795
    %v7797 = vsel %vm7583, %v7782, %v7784
    %v7798 = vsel %vm7583, %v7786, %v7788
    %v7799 = vsel %vm7583, %v7790, %v7792
    %v7800 = vsel %vm7583, %v7794, %v7796
    %v7805 = vsel %vm877, %v7797, 0.0
    %v7806 = vsel %vm877, %v7798, 0.0
    %v7807 = vadd.f32 %v7805, %v7806
    %v7808 = vsel %vm877, %v7799, 0.0
    %v7809 = vadd.f32 %v7807, %v7808
    %v7810 = vsel %vm877, %v7800, 0.0
    %v7811 = vadd.f32 %v7809, %v7810
    %7812 = vadd.xlane.f32.xlu0 %v7811
    %v7813 = vpop.xlane.xlu0 %7812
    %v7814 = vrot.slane %v7813, 4
    %v7815 = vadd.f32 %v7813, %v7814
    %v7816 = vrot.slane %v7815, 2
    %v7817 = vadd.f32 %v7815, %v7816
    %v7818 = vrot.slane %v7817, 1
    %v7819 = vadd.f32 %v7817, %v7818
    %s7820 = vtos %v7819
    %v7821 = vstv %s7820
    %v7822 = vadd.f32 %v7732, %v7821
    %v7823 = vmul.f32 %v7822, 0.00048828125
    %s7824 = sld [smem:[#allocation6 + $0x3]]
    %v7825 = vadd.f32 %v7823, 1e-05
    %v7826 = vrsqrt.pop %v7825
    %v7827 = vmul.f32 %v7826, %v7825
    %v7828 = vmul.f32 %v7827, %v7826
    %v7829 = vmul.f32 0.5, %v7828
    %v7830 = vsub.f32 1.5, %v7829
    %v7831 = vmul.f32 %v7826, %v7830
    %vm7832 = vweird.f32 %v7825
    %vm7833 = vweird.f32 %v7826
    %vm7834 = vmor %vm7832, %vm7833
    %v7835 = vsel %vm7834, %v7826, %v7831
    %v7836 = vstv %s7824
    %v7837 = vmul.f32 %v7836, %v7835
    %s7838 = sld [smem:[#allocation9 + $0x3]]
    %v7839 = vmul.f32 %v7666, %v7837
    %v7840 = vstv %s7838
    %v7841 = vsub.f32 %v7840, %v7839
    %v7842 = vmul.f32 %v6962, %v7837
    %v7843 = vmul.f32 %v6966, %v7837
    %v7844 = vmul.f32 %v6963, %v7837
    %v7845 = vmul.f32 %v6967, %v7837
    %v7846 = vmul.f32 %v6964, %v7837
    %v7847 = vmul.f32 %v6968, %v7837
    %v7848 = vmul.f32 %v6965, %v7837
    %v7849 = vmul.f32 %v6969, %v7837
    %v7850 = vadd.f32 %v7842, %v7841
    %v7851 = vadd.f32 %v7843, %v7841
    %v7852 = vadd.f32 %v7844, %v7841
    %v7853 = vadd.f32 %v7845, %v7841
    %v7854 = vadd.f32 %v7846, %v7841
    %v7855 = vadd.f32 %v7847, %v7841
    %v7856 = vadd.f32 %v7848, %v7841
    %v7857 = vadd.f32 %v7849, %v7841
    %v7858 = vmax.f32 %v7850, 0.0
    %v7859 = vmax.f32 %v7851, 0.0
    %v7860 = vmax.f32 %v7852, 0.0
    %v7861 = vmax.f32 %v7853, 0.0
    %v7862 = vmax.f32 %v7854, 0.0
    %v7863 = vmax.f32 %v7855, 0.0
    %v7864 = vmax.f32 %v7856, 0.0
    %v7865 = vmax.f32 %v7857, 0.0
    %v7866 = vmul.f32 %v6970, %v7837
    %v7867 = vmul.f32 %v6975, %v7837
    %v7868 = vmul.f32 %v6971, %v7837
    %v7869 = vmul.f32 %v6976, %v7837
    %v7870 = vmul.f32 %v6972, %v7837
    %v7871 = vmul.f32 %v6977, %v7837
    %v7872 = vmul.f32 %v6973, %v7837
    %v7873 = vmul.f32 %v6978, %v7837
    %v7874 = vmul.f32 %v6974, %v7837
    %v7875 = vmul.f32 %v6979, %v7837
    %v7876 = vadd.f32 %v7866, %v7841
    %v7877 = vadd.f32 %v7867, %v7841
    %v7878 = vadd.f32 %v7868, %v7841
    %v7879 = vadd.f32 %v7869, %v7841
    %v7880 = vadd.f32 %v7870, %v7841
    %v7881 = vadd.f32 %v7871, %v7841
    %v7882 = vadd.f32 %v7872, %v7841
    %v7883 = vadd.f32 %v7873, %v7841
    %v7884 = vadd.f32 %v7874, %v7841
    %v7885 = vadd.f32 %v7875, %v7841
    %v7886 = vmax.f32 %v7876, 0.0
    %v7887 = vmax.f32 %v7877, 0.0
    %v7888 = vmax.f32 %v7878, 0.0
    %v7889 = vmax.f32 %v7879, 0.0
    %v7890 = vmax.f32 %v7880, 0.0
    %v7891 = vmax.f32 %v7881, 0.0
    %v7892 = vmax.f32 %v7882, 0.0
    %v7893 = vmax.f32 %v7883, 0.0
    %v7894 = vmax.f32 %v7884, 0.0
    %v7895 = vmax.f32 %v7885, 0.0
    %s7896 = sld [smem:[#allocation11]]
    %v7897 = vstv %s7896
    %v7898 = vmul.f32 %v7134, %v7897
    %v7899 = vmul.f32 %v7135, %v7897
    %v7900 = vmul.f32 %v7136, %v7897
    %v7901 = vmul.f32 %v7137, %v7897
    %s7902 = sld [smem:[#allocation11 + $0x1]]
    %v7903 = vstv %s7902
    %v7904 = vmul.f32 %v7341, %v7903
    %v7905 = vmul.f32 %v7342, %v7903
    %v7906 = vmul.f32 %v7343, %v7903
    %v7907 = vmul.f32 %v7344, %v7903
    %7912 = vrot.lane.b32.xlu0 %v7904, 94
    %v7913 = vpop.permute.xlu0 %7912
    %7914 = vrot.lane.b32.xlu0 %v7905, 94
    %v7915 = vpop.permute.xlu0 %7914
    %7916 = vrot.lane.b32.xlu0 %v7906, 94
    %v7917 = vpop.permute.xlu0 %7916
    %7918 = vrot.lane.b32.xlu0 %v7907, 94
    %v7919 = vpop.permute.xlu0 %7918
    %v7924 = vadd.f32 %v7898, %v7913
    %v7925 = vadd.f32 %v7899, %v7915
    %v7926 = vadd.f32 %v7900, %v7917
    %v7927 = vadd.f32 %v7901, %v7919
    %s7928 = sld [smem:[#allocation11 + $0x2]]
    %v7929 = vstv %s7928
    %v7930 = vmul.f32 %v7544, %v7929
    %v7931 = vmul.f32 %v7545, %v7929
    %v7932 = vmul.f32 %v7546, %v7929
    %v7933 = vmul.f32 %v7547, %v7929
    %7938 = vrot.lane.b32.xlu0 %v7930, 60
    %v7939 = vpop.permute.xlu0 %7938
    %7940 = vrot.lane.b32.xlu0 %v7931, 60
    %v7941 = vpop.permute.xlu0 %7940
    %7942 = vrot.lane.b32.xlu0 %v7932, 60
    %v7943 = vpop.permute.xlu0 %7942
    %7944 = vrot.lane.b32.xlu0 %v7933, 60
    %v7945 = vpop.permute.xlu0 %7944
    %v7950 = vadd.f32 %v7924, %v7939
    %v7951 = vadd.f32 %v7925, %v7941
    %v7952 = vadd.f32 %v7926, %v7943
    %v7953 = vadd.f32 %v7927, %v7945
    %s7954 = sld [smem:[#allocation11 + $0x3]]
    %v7955 = vstv %s7954
    %v7956 = vmul.f32 %v7858, %v7955
    %v7957 = vmul.f32 %v7859, %v7955
    %v7958 = vmul.f32 %v7860, %v7955
    %v7959 = vmul.f32 %v7861, %v7955
    %v7960 = vmul.f32 %v7862, %v7955
    %v7961 = vmul.f32 %v7863, %v7955
    %v7962 = vmul.f32 %v7864, %v7955
    %v7963 = vmul.f32 %v7865, %v7955
    %7972 = vrot.lane.b32.xlu0 %v7956, 26
    %v7973 = vpop.permute.xlu0 %7972
    %7974 = vrot.lane.b32.xlu0 %v7957, 26
    %v7975 = vpop.permute.xlu0 %7974
    %7976 = vrot.lane.b32.xlu0 %v7958, 26
    %v7977 = vpop.permute.xlu0 %7976
    %7978 = vrot.lane.b32.xlu0 %v7959, 26
    %v7979 = vpop.permute.xlu0 %7978
    %7980 = vrot.lane.b32.xlu0 %v7960, 26
    %v7981 = vpop.permute.xlu0 %7980
    %7982 = vrot.lane.b32.xlu0 %v7961, 26
    %v7983 = vpop.permute.xlu0 %7982
    %7984 = vrot.lane.b32.xlu0 %v7962, 26
    %v7985 = vpop.permute.xlu0 %7984
    %7986 = vrot.lane.b32.xlu0 %v7963, 26
    %v7987 = vpop.permute.xlu0 %7986
    %v7988 = vsel %vm7583, %v7973, %v7975
    %v7989 = vsel %vm7583, %v7977, %v7979
    %v7990 = vsel %vm7583, %v7981, %v7983
    %v7991 = vsel %vm7583, %v7985, %v7987
    %v7996 = vadd.f32 %v7950, %v7988
    %v7997 = vadd.f32 %v7951, %v7989
    %v7998 = vadd.f32 %v7952, %v7990
    %v7999 = vadd.f32 %v7953, %v7991
    %s8000 = sld [smem:[#allocation12]]
    %v8001 = vstv %s8000
    %v8002 = vadd.f32 %v7996, %v8001
    %v8003 = vadd.f32 %v7997, %v8001
    %v8004 = vadd.f32 %v7998, %v8001
    %v8005 = vadd.f32 %v7999, %v8001
    %v8006 = vsub.f32 0.0, %v8002
    %v8007 = vsub.f32 0.0, %v8003
    %v8008 = vsub.f32 0.0, %v8004
    %v8009 = vsub.f32 0.0, %v8005
    %v8010 = vmul.f32 %v8006, 1.442695
    %v8011 = vpow.pop %v8010
    %v8012 = vmul.f32 %v8007, 1.442695
    %v8013 = vpow.pop %v8012
    %v8014 = vmul.f32 %v8008, 1.442695
    %v8015 = vpow.pop %v8014
    %v8016 = vmul.f32 %v8009, 1.442695
    %v8017 = vpow.pop %v8016
    %v8018 = vadd.f32 %v8011, 1.0
    %v8019 = vadd.f32 %v8013, 1.0
    %v8020 = vadd.f32 %v8015, 1.0
    %v8021 = vadd.f32 %v8017, 1.0
    %v8022 = vrcp.pop %v8018
    %v8023 = vmul.f32 %v8018, %v8022
    %v8024 = vsub.f32 1.0, %v8023
    %v8025 = vmul.f32 %v8022, %v8024
    %v8026 = vadd.f32 %v8022, %v8025
    %vm8027 = vweird.f32 %v8018
    %vm8028 = vweird.f32 %v8022
    %vm8029 = vmor %vm8027, %vm8028
    %v8030 = vsel %vm8029, %v8022, %v8026
    %v8031 = vand.u32 2147483647, %v8018
    %vm8032 = vcmp.eq.f32.partialorder %v8031, 8.507059e+37
    %v8033 = vand.u32 %v8018, 2147483648
    %v8034 = vor.u32 1.1754944e-38, %v8033
    %v8035 = vsel %vm8032, %v8034, %v8030
    %v8036 = vmul.f32 1.0, %v8035
    %v8037 = vrcp.pop %v8019
    %v8038 = vmul.f32 %v8019, %v8037
    %v8039 = vsub.f32 1.0, %v8038
    %v8040 = vmul.f32 %v8037, %v8039
    %v8041 = vadd.f32 %v8037, %v8040
    %vm8042 = vweird.f32 %v8019
    %vm8043 = vweird.f32 %v8037
    %vm8044 = vmor %vm8042, %vm8043
    %v8045 = vsel %vm8044, %v8037, %v8041
    %v8046 = vand.u32 2147483647, %v8019
    %vm8047 = vcmp.eq.f32.partialorder %v8046, 8.507059e+37
    %v8048 = vand.u32 %v8019, 2147483648
    %v8049 = vor.u32 1.1754944e-38, %v8048
    %v8050 = vsel %vm8047, %v8049, %v8045
    %v8051 = vmul.f32 1.0, %v8050
    %v8052 = vrcp.pop %v8020
    %v8053 = vmul.f32 %v8020, %v8052
    %v8054 = vsub.f32 1.0, %v8053
    %v8055 = vmul.f32 %v8052, %v8054
    %v8056 = vadd.f32 %v8052, %v8055
    %vm8057 = vweird.f32 %v8020
    %vm8058 = vweird.f32 %v8052
    %vm8059 = vmor %vm8057, %vm8058
    %v8060 = vsel %vm8059, %v8052, %v8056
    %v8061 = vand.u32 2147483647, %v8020
    %vm8062 = vcmp.eq.f32.partialorder %v8061, 8.507059e+37
    %v8063 = vand.u32 %v8020, 2147483648
    %v8064 = vor.u32 1.1754944e-38, %v8063
    %v8065 = vsel %vm8062, %v8064, %v8060
    %v8066 = vmul.f32 1.0, %v8065
    %v8067 = vrcp.pop %v8021
    %v8068 = vmul.f32 %v8021, %v8067
    %v8069 = vsub.f32 1.0, %v8068
    %v8070 = vmul.f32 %v8067, %v8069
    %v8071 = vadd.f32 %v8067, %v8070
    %vm8072 = vweird.f32 %v8021
    %vm8073 = vweird.f32 %v8067
    %vm8074 = vmor %vm8072, %vm8073
    %v8075 = vsel %vm8074, %v8067, %v8071
    %v8076 = vand.u32 2147483647, %v8021
    %vm8077 = vcmp.eq.f32.partialorder %v8076, 8.507059e+37
    %v8078 = vand.u32 %v8021, 2147483648
    %v8079 = vor.u32 1.1754944e-38, %v8078
    %v8080 = vsel %vm8077, %v8079, %v8075
    %v8081 = vmul.f32 1.0, %v8080
    %8082 = vst.msk [vmem:[#allocation14] sm:$0xff] %vm877, %v8036
    %8083 = vst.msk [vmem:[#allocation14 + $0x8] sm:$0xff] %vm877, %v8051
    %8084 = vst.msk [vmem:[#allocation14 + $0x10] sm:$0xff] %vm877, %v8066
    %8085 = vst.msk [vmem:[#allocation14 + $0x18] sm:$0xff] %vm877, %v8081
    %s8086 = sld [smem:[#allocation11 + $0x80]]
    %v8087 = vstv %s8086
    %v8088 = vmul.f32 %v7134, %v8087
    %v8089 = vmul.f32 %v7135, %v8087
    %v8090 = vmul.f32 %v7136, %v8087
    %v8091 = vmul.f32 %v7137, %v8087
    %s8092 = sld [smem:[#allocation11 + $0x81]]
    %v8093 = vstv %s8092
    %v8094 = vmul.f32 %v7341, %v8093
    %v8095 = vmul.f32 %v7342, %v8093
    %v8096 = vmul.f32 %v7343, %v8093
    %v8097 = vmul.f32 %v7344, %v8093
    %8102 = vrot.lane.b32.xlu0 %v8094, 94
    %v8103 = vpop.permute.xlu0 %8102
    %8104 = vrot.lane.b32.xlu0 %v8095, 94
    %v8105 = vpop.permute.xlu0 %8104
    %8106 = vrot.lane.b32.xlu0 %v8096, 94
    %v8107 = vpop.permute.xlu0 %8106
    %8108 = vrot.lane.b32.xlu0 %v8097, 94
    %v8109 = vpop.permute.xlu0 %8108
    %v8114 = vadd.f32 %v8088, %v8103
    %v8115 = vadd.f32 %v8089, %v8105
    %v8116 = vadd.f32 %v8090, %v8107
    %v8117 = vadd.f32 %v8091, %v8109
    %s8118 = sld [smem:[#allocation11 + $0x82]]
    %v8119 = vstv %s8118
    %v8120 = vmul.f32 %v7544, %v8119
    %v8121 = vmul.f32 %v7545, %v8119
    %v8122 = vmul.f32 %v7546, %v8119
    %v8123 = vmul.f32 %v7547, %v8119
    %8128 = vrot.lane.b32.xlu0 %v8120, 60
    %v8129 = vpop.permute.xlu0 %8128
    %8130 = vrot.lane.b32.xlu0 %v8121, 60
    %v8131 = vpop.permute.xlu0 %8130
    %8132 = vrot.lane.b32.xlu0 %v8122, 60
    %v8133 = vpop.permute.xlu0 %8132
    %8134 = vrot.lane.b32.xlu0 %v8123, 60
    %v8135 = vpop.permute.xlu0 %8134
    %v8140 = vadd.f32 %v8114, %v8129
    %v8141 = vadd.f32 %v8115, %v8131
    %v8142 = vadd.f32 %v8116, %v8133
    %v8143 = vadd.f32 %v8117, %v8135
    %s8144 = sld [smem:[#allocation11 + $0x83]]
    %v8145 = vstv %s8144
    %v8146 = vmul.f32 %v7858, %v8145
    %v8147 = vmul.f32 %v7859, %v8145
    %v8148 = vmul.f32 %v7860, %v8145
    %v8149 = vmul.f32 %v7861, %v8145
    %v8150 = vmul.f32 %v7862, %v8145
    %v8151 = vmul.f32 %v7863, %v8145
    %v8152 = vmul.f32 %v7864, %v8145
    %v8153 = vmul.f32 %v7865, %v8145
    %8162 = vrot.lane.b32.xlu0 %v8146, 26
    %v8163 = vpop.permute.xlu0 %8162
    %8164 = vrot.lane.b32.xlu0 %v8147, 26
    %v8165 = vpop.permute.xlu0 %8164
    %8166 = vrot.lane.b32.xlu0 %v8148, 26
    %v8167 = vpop.permute.xlu0 %8166
    %8168 = vrot.lane.b32.xlu0 %v8149, 26
    %v8169 = vpop.permute.xlu0 %8168
    %8170 = vrot.lane.b32.xlu0 %v8150, 26
    %v8171 = vpop.permute.xlu0 %8170
    %8172 = vrot.lane.b32.xlu0 %v8151, 26
    %v8173 = vpop.permute.xlu0 %8172
    %8174 = vrot.lane.b32.xlu0 %v8152, 26
    %v8175 = vpop.permute.xlu0 %8174
    %8176 = vrot.lane.b32.xlu0 %v8153, 26
    %v8177 = vpop.permute.xlu0 %8176
    %v8178 = vsel %vm7583, %v8163, %v8165
    %v8179 = vsel %vm7583, %v8167, %v8169
    %v8180 = vsel %vm7583, %v8171, %v8173
    %v8181 = vsel %vm7583, %v8175, %v8177
    %v8186 = vadd.f32 %v8140, %v8178
    %v8187 = vadd.f32 %v8141, %v8179
    %v8188 = vadd.f32 %v8142, %v8180
    %v8189 = vadd.f32 %v8143, %v8181
    %s8190 = sld [smem:[#allocation12 + $0x1]]
    %v8191 = vstv %s8190
    %v8192 = vadd.f32 %v8186, %v8191
    %v8193 = vadd.f32 %v8187, %v8191
    %v8194 = vadd.f32 %v8188, %v8191
    %v8195 = vadd.f32 %v8189, %v8191
    %v8196 = vsub.f32 0.0, %v8192
    %v8197 = vsub.f32 0.0, %v8193
    %v8198 = vsub.f32 0.0, %v8194
    %v8199 = vsub.f32 0.0, %v8195
    %v8200 = vmul.f32 %v8196, 1.442695
    %v8201 = vpow.pop %v8200
    %v8202 = vmul.f32 %v8197, 1.442695
    %v8203 = vpow.pop %v8202
    %v8204 = vmul.f32 %v8198, 1.442695
    %v8205 = vpow.pop %v8204
    %v8206 = vmul.f32 %v8199, 1.442695
    %v8207 = vpow.pop %v8206
    %v8208 = vadd.f32 %v8201, 1.0
    %v8209 = vadd.f32 %v8203, 1.0
    %v8210 = vadd.f32 %v8205, 1.0
    %v8211 = vadd.f32 %v8207, 1.0
    %v8212 = vrcp.pop %v8208
    %v8213 = vmul.f32 %v8208, %v8212
    %v8214 = vsub.f32 1.0, %v8213
    %v8215 = vmul.f32 %v8212, %v8214
    %v8216 = vadd.f32 %v8212, %v8215
    %vm8217 = vweird.f32 %v8208
    %vm8218 = vweird.f32 %v8212
    %vm8219 = vmor %vm8217, %vm8218
    %v8220 = vsel %vm8219, %v8212, %v8216
    %v8221 = vand.u32 2147483647, %v8208
    %vm8222 = vcmp.eq.f32.partialorder %v8221, 8.507059e+37
    %v8223 = vand.u32 %v8208, 2147483648
    %v8224 = vor.u32 1.1754944e-38, %v8223
    %v8225 = vsel %vm8222, %v8224, %v8220
    %v8226 = vmul.f32 1.0, %v8225
    %v8227 = vrcp.pop %v8209
    %v8228 = vmul.f32 %v8209, %v8227
    %v8229 = vsub.f32 1.0, %v8228
    %v8230 = vmul.f32 %v8227, %v8229
    %v8231 = vadd.f32 %v8227, %v8230
    %vm8232 = vweird.f32 %v8209
    %vm8233 = vweird.f32 %v8227
    %vm8234 = vmor %vm8232, %vm8233
    %v8235 = vsel %vm8234, %v8227, %v8231
    %v8236 = vand.u32 2147483647, %v8209
    %vm8237 = vcmp.eq.f32.partialorder %v8236, 8.507059e+37
    %v8238 = vand.u32 %v8209, 2147483648
    %v8239 = vor.u32 1.1754944e-38, %v8238
    %v8240 = vsel %vm8237, %v8239, %v8235
    %v8241 = vmul.f32 1.0, %v8240
    %v8242 = vrcp.pop %v8210
    %v8243 = vmul.f32 %v8210, %v8242
    %v8244 = vsub.f32 1.0, %v8243
    %v8245 = vmul.f32 %v8242, %v8244
    %v8246 = vadd.f32 %v8242, %v8245
    %vm8247 = vweird.f32 %v8210
    %vm8248 = vweird.f32 %v8242
    %vm8249 = vmor %vm8247, %vm8248
    %v8250 = vsel %vm8249, %v8242, %v8246
    %v8251 = vand.u32 2147483647, %v8210
    %vm8252 = vcmp.eq.f32.partialorder %v8251, 8.507059e+37
    %v8253 = vand.u32 %v8210, 2147483648
    %v8254 = vor.u32 1.1754944e-38, %v8253
    %v8255 = vsel %vm8252, %v8254, %v8250
    %v8256 = vmul.f32 1.0, %v8255
    %v8257 = vrcp.pop %v8211
    %v8258 = vmul.f32 %v8211, %v8257
    %v8259 = vsub.f32 1.0, %v8258
    %v8260 = vmul.f32 %v8257, %v8259
    %v8261 = vadd.f32 %v8257, %v8260
    %vm8262 = vweird.f32 %v8211
    %vm8263 = vweird.f32 %v8257
    %vm8264 = vmor %vm8262, %vm8263
    %v8265 = vsel %vm8264, %v8257, %v8261
    %v8266 = vand.u32 2147483647, %v8211
    %vm8267 = vcmp.eq.f32.partialorder %v8266, 8.507059e+37
    %v8268 = vand.u32 %v8211, 2147483648
    %v8269 = vor.u32 1.1754944e-38, %v8268
    %v8270 = vsel %vm8267, %v8269, %v8265
    %v8271 = vmul.f32 1.0, %v8270
    %s8272 = scalar_lea.vmem [#allocation14], 32
    %8273 = vst.msk [vmem:[%s8272] sm:$0xff] %vm877, %v8226
    %8274 = vst.msk [vmem:[%s8272 + $0x8] sm:$0xff] %vm877, %v8241
    %8275 = vst.msk [vmem:[%s8272 + $0x10] sm:$0xff] %vm877, %v8256
    %8276 = vst.msk [vmem:[%s8272 + $0x18] sm:$0xff] %vm877, %v8271
    %s8277 = sld [smem:[#allocation11 + $0x100]]
    %v8278 = vstv %s8277
    %v8279 = vmul.f32 %v7134, %v8278
    %v8280 = vmul.f32 %v7135, %v8278
    %v8281 = vmul.f32 %v7136, %v8278
    %v8282 = vmul.f32 %v7137, %v8278
    %s8283 = sld [smem:[#allocation11 + $0x101]]
    %v8284 = vstv %s8283
    %v8285 = vmul.f32 %v7341, %v8284
    %v8286 = vmul.f32 %v7342, %v8284
    %v8287 = vmul.f32 %v7343, %v8284
    %v8288 = vmul.f32 %v7344, %v8284
    %8293 = vrot.lane.b32.xlu0 %v8285, 94
    %v8294 = vpop.permute.xlu0 %8293
    %8295 = vrot.lane.b32.xlu0 %v8286, 94
    %v8296 = vpop.permute.xlu0 %8295
    %8297 = vrot.lane.b32.xlu0 %v8287, 94
    %v8298 = vpop.permute.xlu0 %8297
    %8299 = vrot.lane.b32.xlu0 %v8288, 94
    %v8300 = vpop.permute.xlu0 %8299
    %v8305 = vadd.f32 %v8279, %v8294
    %v8306 = vadd.f32 %v8280, %v8296
    %v8307 = vadd.f32 %v8281, %v8298
    %v8308 = vadd.f32 %v8282, %v8300
    %s8309 = sld [smem:[#allocation11 + $0x102]]
    %v8310 = vstv %s8309
    %v8311 = vmul.f32 %v7544, %v8310
    %v8312 = vmul.f32 %v7545, %v8310
    %v8313 = vmul.f32 %v7546, %v8310
    %v8314 = vmul.f32 %v7547, %v8310
    %8319 = vrot.lane.b32.xlu0 %v8311, 60
    %v8320 = vpop.permute.xlu0 %8319
    %8321 = vrot.lane.b32.xlu0 %v8312, 60
    %v8322 = vpop.permute.xlu0 %8321
    %8323 = vrot.lane.b32.xlu0 %v8313, 60
    %v8324 = vpop.permute.xlu0 %8323
    %8325 = vrot.lane.b32.xlu0 %v8314, 60
    %v8326 = vpop.permute.xlu0 %8325
    %v8331 = vadd.f32 %v8305, %v8320
    %v8332 = vadd.f32 %v8306, %v8322
    %v8333 = vadd.f32 %v8307, %v8324
    %v8334 = vadd.f32 %v8308, %v8326
    %s8335 = sld [smem:[#allocation11 + $0x103]]
    %v8336 = vstv %s8335
    %v8337 = vmul.f32 %v7858, %v8336
    %v8338 = vmul.f32 %v7859, %v8336
    %v8339 = vmul.f32 %v7860, %v8336
    %v8340 = vmul.f32 %v7861, %v8336
    %v8341 = vmul.f32 %v7862, %v8336
    %v8342 = vmul.f32 %v7863, %v8336
    %v8343 = vmul.f32 %v7864, %v8336
    %v8344 = vmul.f32 %v7865, %v8336
    %8353 = vrot.lane.b32.xlu0 %v8337, 26
    %v8354 = vpop.permute.xlu0 %8353
    %8355 = vrot.lane.b32.xlu0 %v8338, 26
    %v8356 = vpop.permute.xlu0 %8355
    %8357 = vrot.lane.b32.xlu0 %v8339, 26
    %v8358 = vpop.permute.xlu0 %8357
    %8359 = vrot.lane.b32.xlu0 %v8340, 26
    %v8360 = vpop.permute.xlu0 %8359
    %8361 = vrot.lane.b32.xlu0 %v8341, 26
    %v8362 = vpop.permute.xlu0 %8361
    %8363 = vrot.lane.b32.xlu0 %v8342, 26
    %v8364 = vpop.permute.xlu0 %8363
    %8365 = vrot.lane.b32.xlu0 %v8343, 26
    %v8366 = vpop.permute.xlu0 %8365
    %8367 = vrot.lane.b32.xlu0 %v8344, 26
    %v8368 = vpop.permute.xlu0 %8367
    %v8369 = vsel %vm7583, %v8354, %v8356
    %v8370 = vsel %vm7583, %v8358, %v8360
    %v8371 = vsel %vm7583, %v8362, %v8364
    %v8372 = vsel %vm7583, %v8366, %v8368
    %v8377 = vadd.f32 %v8331, %v8369
    %v8378 = vadd.f32 %v8332, %v8370
    %v8379 = vadd.f32 %v8333, %v8371
    %v8380 = vadd.f32 %v8334, %v8372
    %s8381 = sld [smem:[#allocation12 + $0x2]]
    %v8382 = vstv %s8381
    %v8383 = vadd.f32 %v8377, %v8382
    %v8384 = vadd.f32 %v8378, %v8382
    %v8385 = vadd.f32 %v8379, %v8382
    %v8386 = vadd.f32 %v8380, %v8382
    %v8387 = vsub.f32 0.0, %v8383
    %v8388 = vsub.f32 0.0, %v8384
    %v8389 = vsub.f32 0.0, %v8385
    %v8390 = vsub.f32 0.0, %v8386
    %v8391 = vmul.f32 %v8387, 1.442695
    %v8392 = vpow.pop %v8391
    %v8393 = vmul.f32 %v8388, 1.442695
    %v8394 = vpow.pop %v8393
    %v8395 = vmul.f32 %v8389, 1.442695
    %v8396 = vpow.pop %v8395
    %v8397 = vmul.f32 %v8390, 1.442695
    %v8398 = vpow.pop %v8397
    %v8399 = vadd.f32 %v8392, 1.0
    %v8400 = vadd.f32 %v8394, 1.0
    %v8401 = vadd.f32 %v8396, 1.0
    %v8402 = vadd.f32 %v8398, 1.0
    %v8403 = vrcp.pop %v8399
    %v8404 = vmul.f32 %v8399, %v8403
    %v8405 = vsub.f32 1.0, %v8404
    %v8406 = vmul.f32 %v8403, %v8405
    %v8407 = vadd.f32 %v8403, %v8406
    %vm8408 = vweird.f32 %v8399
    %vm8409 = vweird.f32 %v8403
    %vm8410 = vmor %vm8408, %vm8409
    %v8411 = vsel %vm8410, %v8403, %v8407
    %v8412 = vand.u32 2147483647, %v8399
    %vm8413 = vcmp.eq.f32.partialorder %v8412, 8.507059e+37
    %v8414 = vand.u32 %v8399, 2147483648
    %v8415 = vor.u32 1.1754944e-38, %v8414
    %v8416 = vsel %vm8413, %v8415, %v8411
    %v8417 = vmul.f32 1.0, %v8416
    %v8418 = vrcp.pop %v8400
    %v8419 = vmul.f32 %v8400, %v8418
    %v8420 = vsub.f32 1.0, %v8419
    %v8421 = vmul.f32 %v8418, %v8420
    %v8422 = vadd.f32 %v8418, %v8421
    %vm8423 = vweird.f32 %v8400
    %vm8424 = vweird.f32 %v8418
    %vm8425 = vmor %vm8423, %vm8424
    %v8426 = vsel %vm8425, %v8418, %v8422
    %v8427 = vand.u32 2147483647, %v8400
    %vm8428 = vcmp.eq.f32.partialorder %v8427, 8.507059e+37
    %v8429 = vand.u32 %v8400, 2147483648
    %v8430 = vor.u32 1.1754944e-38, %v8429
    %v8431 = vsel %vm8428, %v8430, %v8426
    %v8432 = vmul.f32 1.0, %v8431
    %v8433 = vrcp.pop %v8401
    %v8434 = vmul.f32 %v8401, %v8433
    %v8435 = vsub.f32 1.0, %v8434
    %v8436 = vmul.f32 %v8433, %v8435
    %v8437 = vadd.f32 %v8433, %v8436
    %vm8438 = vweird.f32 %v8401
    %vm8439 = vweird.f32 %v8433
    %vm8440 = vmor %vm8438, %vm8439
    %v8441 = vsel %vm8440, %v8433, %v8437
    %v8442 = vand.u32 2147483647, %v8401
    %vm8443 = vcmp.eq.f32.partialorder %v8442, 8.507059e+37
    %v8444 = vand.u32 %v8401, 2147483648
    %v8445 = vor.u32 1.1754944e-38, %v8444
    %v8446 = vsel %vm8443, %v8445, %v8441
    %v8447 = vmul.f32 1.0, %v8446
    %v8448 = vrcp.pop %v8402
    %v8449 = vmul.f32 %v8402, %v8448
    %v8450 = vsub.f32 1.0, %v8449
    %v8451 = vmul.f32 %v8448, %v8450
    %v8452 = vadd.f32 %v8448, %v8451
    %vm8453 = vweird.f32 %v8402
    %vm8454 = vweird.f32 %v8448
    %vm8455 = vmor %vm8453, %vm8454
    %v8456 = vsel %vm8455, %v8448, %v8452
    %v8457 = vand.u32 2147483647, %v8402
    %vm8458 = vcmp.eq.f32.partialorder %v8457, 8.507059e+37
    %v8459 = vand.u32 %v8402, 2147483648
    %v8460 = vor.u32 1.1754944e-38, %v8459
    %v8461 = vsel %vm8458, %v8460, %v8456
    %v8462 = vmul.f32 1.0, %v8461
    %s8463 = scalar_lea.vmem [#allocation14], 64
    %8464 = vst.msk [vmem:[%s8463] sm:$0xff] %vm877, %v8417
    %8465 = vst.msk [vmem:[%s8463 + $0x8] sm:$0xff] %vm877, %v8432
    %8466 = vst.msk [vmem:[%s8463 + $0x10] sm:$0xff] %vm877, %v8447
    %8467 = vst.msk [vmem:[%s8463 + $0x18] sm:$0xff] %vm877, %v8462
    %s8468 = sld [smem:[#allocation11 + $0x180]]
    %v8469 = vstv %s8468
    %v8470 = vmul.f32 %v7134, %v8469
    %v8471 = vmul.f32 %v7135, %v8469
    %v8472 = vmul.f32 %v7136, %v8469
    %v8473 = vmul.f32 %v7137, %v8469
    %s8474 = sld [smem:[#allocation11 + $0x181]]
    %v8475 = vstv %s8474
    %v8476 = vmul.f32 %v7341, %v8475
    %v8477 = vmul.f32 %v7342, %v8475
    %v8478 = vmul.f32 %v7343, %v8475
    %v8479 = vmul.f32 %v7344, %v8475
    %8484 = vrot.lane.b32.xlu0 %v8476, 94
    %v8485 = vpop.permute.xlu0 %8484
    %8486 = vrot.lane.b32.xlu0 %v8477, 94
    %v8487 = vpop.permute.xlu0 %8486
    %8488 = vrot.lane.b32.xlu0 %v8478, 94
    %v8489 = vpop.permute.xlu0 %8488
    %8490 = vrot.lane.b32.xlu0 %v8479, 94
    %v8491 = vpop.permute.xlu0 %8490
    %v8496 = vadd.f32 %v8470, %v8485
    %v8497 = vadd.f32 %v8471, %v8487
    %v8498 = vadd.f32 %v8472, %v8489
    %v8499 = vadd.f32 %v8473, %v8491
    %s8500 = sld [smem:[#allocation11 + $0x182]]
    %v8501 = vstv %s8500
    %v8502 = vmul.f32 %v7544, %v8501
    %v8503 = vmul.f32 %v7545, %v8501
    %v8504 = vmul.f32 %v7546, %v8501
    %v8505 = vmul.f32 %v7547, %v8501
    %8510 = vrot.lane.b32.xlu0 %v8502, 60
    %v8511 = vpop.permute.xlu0 %8510
    %8512 = vrot.lane.b32.xlu0 %v8503, 60
    %v8513 = vpop.permute.xlu0 %8512
    %8514 = vrot.lane.b32.xlu0 %v8504, 60
    %v8515 = vpop.permute.xlu0 %8514
    %8516 = vrot.lane.b32.xlu0 %v8505, 60
    %v8517 = vpop.permute.xlu0 %8516
    %v8522 = vadd.f32 %v8496, %v8511
    %v8523 = vadd.f32 %v8497, %v8513
    %v8524 = vadd.f32 %v8498, %v8515
    %v8525 = vadd.f32 %v8499, %v8517
    %s8526 = sld [smem:[#allocation11 + $0x183]]
    %v8527 = vstv %s8526
    %v8528 = vmul.f32 %v7858, %v8527
    %v8529 = vmul.f32 %v7859, %v8527
    %v8530 = vmul.f32 %v7860, %v8527
    %v8531 = vmul.f32 %v7861, %v8527
    %v8532 = vmul.f32 %v7862, %v8527
    %v8533 = vmul.f32 %v7863, %v8527
    %v8534 = vmul.f32 %v7864, %v8527
    %v8535 = vmul.f32 %v7865, %v8527
    %8544 = vrot.lane.b32.xlu0 %v8528, 26
    %v8545 = vpop.permute.xlu0 %8544
    %8546 = vrot.lane.b32.xlu0 %v8529, 26
    %v8547 = vpop.permute.xlu0 %8546
    %8548 = vrot.lane.b32.xlu0 %v8530, 26
    %v8549 = vpop.permute.xlu0 %8548
    %8550 = vrot.lane.b32.xlu0 %v8531, 26
    %v8551 = vpop.permute.xlu0 %8550
    %8552 = vrot.lane.b32.xlu0 %v8532, 26
    %v8553 = vpop.permute.xlu0 %8552
    %8554 = vrot.lane.b32.xlu0 %v8533, 26
    %v8555 = vpop.permute.xlu0 %8554
    %8556 = vrot.lane.b32.xlu0 %v8534, 26
    %v8557 = vpop.permute.xlu0 %8556
    %8558 = vrot.lane.b32.xlu0 %v8535, 26
    %v8559 = vpop.permute.xlu0 %8558
    %v8560 = vsel %vm7583, %v8545, %v8547
    %v8561 = vsel %vm7583, %v8549, %v8551
    %v8562 = vsel %vm7583, %v8553, %v8555
    %v8563 = vsel %vm7583, %v8557, %v8559
    %v8568 = vadd.f32 %v8522, %v8560
    %v8569 = vadd.f32 %v8523, %v8561
    %v8570 = vadd.f32 %v8524, %v8562
    %v8571 = vadd.f32 %v8525, %v8563
    %s8572 = sld [smem:[#allocation12 + $0x3]]
    %v8573 = vstv %s8572
    %v8574 = vadd.f32 %v8568, %v8573
    %v8575 = vadd.f32 %v8569, %v8573
    %v8576 = vadd.f32 %v8570, %v8573
    %v8577 = vadd.f32 %v8571, %v8573
    %v8578 = vsub.f32 0.0, %v8574
    %v8579 = vsub.f32 0.0, %v8575
    %v8580 = vsub.f32 0.0, %v8576
    %v8581 = vsub.f32 0.0, %v8577
    %v8582 = vmul.f32 %v8578, 1.442695
    %v8583 = vpow.pop %v8582
    %v8584 = vmul.f32 %v8579, 1.442695
    %v8585 = vpow.pop %v8584
    %v8586 = vmul.f32 %v8580, 1.442695
    %v8587 = vpow.pop %v8586
    %v8588 = vmul.f32 %v8581, 1.442695
    %v8589 = vpow.pop %v8588
    %v8590 = vadd.f32 %v8583, 1.0
    %v8591 = vadd.f32 %v8585, 1.0
    %v8592 = vadd.f32 %v8587, 1.0
    %v8593 = vadd.f32 %v8589, 1.0
    %v8594 = vrcp.pop %v8590
    %v8595 = vmul.f32 %v8590, %v8594
    %v8596 = vsub.f32 1.0, %v8595
    %v8597 = vmul.f32 %v8594, %v8596
    %v8598 = vadd.f32 %v8594, %v8597
    %vm8599 = vweird.f32 %v8590
    %vm8600 = vweird.f32 %v8594
    %vm8601 = vmor %vm8599, %vm8600
    %v8602 = vsel %vm8601, %v8594, %v8598
    %v8603 = vand.u32 2147483647, %v8590
    %vm8604 = vcmp.eq.f32.partialorder %v8603, 8.507059e+37
    %v8605 = vand.u32 %v8590, 2147483648
    %v8606 = vor.u32 1.1754944e-38, %v8605
    %v8607 = vsel %vm8604, %v8606, %v8602
    %v8608 = vmul.f32 1.0, %v8607
    %v8609 = vrcp.pop %v8591
    %v8610 = vmul.f32 %v8591, %v8609
    %v8611 = vsub.f32 1.0, %v8610
    %v8612 = vmul.f32 %v8609, %v8611
    %v8613 = vadd.f32 %v8609, %v8612
    %vm8614 = vweird.f32 %v8591
    %vm8615 = vweird.f32 %v8609
    %vm8616 = vmor %vm8614, %vm8615
    %v8617 = vsel %vm8616, %v8609, %v8613
    %v8618 = vand.u32 2147483647, %v8591
    %vm8619 = vcmp.eq.f32.partialorder %v8618, 8.507059e+37
    %v8620 = vand.u32 %v8591, 2147483648
    %v8621 = vor.u32 1.1754944e-38, %v8620
    %v8622 = vsel %vm8619, %v8621, %v8617
    %v8623 = vmul.f32 1.0, %v8622
    %v8624 = vrcp.pop %v8592
    %v8625 = vmul.f32 %v8592, %v8624
    %v8626 = vsub.f32 1.0, %v8625
    %v8627 = vmul.f32 %v8624, %v8626
    %v8628 = vadd.f32 %v8624, %v8627
    %vm8629 = vweird.f32 %v8592
    %vm8630 = vweird.f32 %v8624
    %vm8631 = vmor %vm8629, %vm8630
    %v8632 = vsel %vm8631, %v8624, %v8628
    %v8633 = vand.u32 2147483647, %v8592
    %vm8634 = vcmp.eq.f32.partialorder %v8633, 8.507059e+37
    %v8635 = vand.u32 %v8592, 2147483648
    %v8636 = vor.u32 1.1754944e-38, %v8635
    %v8637 = vsel %vm8634, %v8636, %v8632
    %v8638 = vmul.f32 1.0, %v8637
    %v8639 = vrcp.pop %v8593
    %v8640 = vmul.f32 %v8593, %v8639
    %v8641 = vsub.f32 1.0, %v8640
    %v8642 = vmul.f32 %v8639, %v8641
    %v8643 = vadd.f32 %v8639, %v8642
    %vm8644 = vweird.f32 %v8593
    %vm8645 = vweird.f32 %v8639
    %vm8646 = vmor %vm8644, %vm8645
    %v8647 = vsel %vm8646, %v8639, %v8643
    %v8648 = vand.u32 2147483647, %v8593
    %vm8649 = vcmp.eq.f32.partialorder %v8648, 8.507059e+37
    %v8650 = vand.u32 %v8593, 2147483648
    %v8651 = vor.u32 1.1754944e-38, %v8650
    %v8652 = vsel %vm8649, %v8651, %v8647
    %v8653 = vmul.f32 1.0, %v8652
    %s8654 = scalar_lea.vmem [#allocation14], 96
    %8655 = vst.msk [vmem:[%s8654] sm:$0xff] %vm877, %v8608
    %8656 = vst.msk [vmem:[%s8654 + $0x8] sm:$0xff] %vm877, %v8623
    %8657 = vst.msk [vmem:[%s8654 + $0x10] sm:$0xff] %vm877, %v8638
    %8658 = vst.msk [vmem:[%s8654 + $0x18] sm:$0xff] %vm877, %v8653
    %s8659 = sld [smem:[#allocation11 + $0x200]]
    %v8660 = vstv %s8659
    %v8661 = vmul.f32 %v7134, %v8660
    %v8662 = vmul.f32 %v7135, %v8660
    %v8663 = vmul.f32 %v7136, %v8660
    %v8664 = vmul.f32 %v7137, %v8660
    %s8665 = sld [smem:[#allocation11 + $0x201]]
    %v8666 = vstv %s8665
    %v8667 = vmul.f32 %v7341, %v8666
    %v8668 = vmul.f32 %v7342, %v8666
    %v8669 = vmul.f32 %v7343, %v8666
    %v8670 = vmul.f32 %v7344, %v8666
    %8675 = vrot.lane.b32.xlu0 %v8667, 94
    %v8676 = vpop.permute.xlu0 %8675
    %8677 = vrot.lane.b32.xlu0 %v8668, 94
    %v8678 = vpop.permute.xlu0 %8677
    %8679 = vrot.lane.b32.xlu0 %v8669, 94
    %v8680 = vpop.permute.xlu0 %8679
    %8681 = vrot.lane.b32.xlu0 %v8670, 94
    %v8682 = vpop.permute.xlu0 %8681
    %v8687 = vadd.f32 %v8661, %v8676
    %v8688 = vadd.f32 %v8662, %v8678
    %v8689 = vadd.f32 %v8663, %v8680
    %v8690 = vadd.f32 %v8664, %v8682
    %s8691 = sld [smem:[#allocation11 + $0x202]]
    %v8692 = vstv %s8691
    %v8693 = vmul.f32 %v7544, %v8692
    %v8694 = vmul.f32 %v7545, %v8692
    %v8695 = vmul.f32 %v7546, %v8692
    %v8696 = vmul.f32 %v7547, %v8692
    %8701 = vrot.lane.b32.xlu0 %v8693, 60
    %v8702 = vpop.permute.xlu0 %8701
    %8703 = vrot.lane.b32.xlu0 %v8694, 60
    %v8704 = vpop.permute.xlu0 %8703
    %8705 = vrot.lane.b32.xlu0 %v8695, 60
    %v8706 = vpop.permute.xlu0 %8705
    %8707 = vrot.lane.b32.xlu0 %v8696, 60
    %v8708 = vpop.permute.xlu0 %8707
    %v8713 = vadd.f32 %v8687, %v8702
    %v8714 = vadd.f32 %v8688, %v8704
    %v8715 = vadd.f32 %v8689, %v8706
    %v8716 = vadd.f32 %v8690, %v8708
    %s8717 = sld [smem:[#allocation11 + $0x203]]
    %v8718 = vstv %s8717
    %v8719 = vmul.f32 %v7858, %v8718
    %v8720 = vmul.f32 %v7859, %v8718
    %v8721 = vmul.f32 %v7860, %v8718
    %v8722 = vmul.f32 %v7861, %v8718
    %v8723 = vmul.f32 %v7862, %v8718
    %v8724 = vmul.f32 %v7863, %v8718
    %v8725 = vmul.f32 %v7864, %v8718
    %v8726 = vmul.f32 %v7865, %v8718
    %8735 = vrot.lane.b32.xlu0 %v8719, 26
    %v8736 = vpop.permute.xlu0 %8735
    %8737 = vrot.lane.b32.xlu0 %v8720, 26
    %v8738 = vpop.permute.xlu0 %8737
    %8739 = vrot.lane.b32.xlu0 %v8721, 26
    %v8740 = vpop.permute.xlu0 %8739
    %8741 = vrot.lane.b32.xlu0 %v8722, 26
    %v8742 = vpop.permute.xlu0 %8741
    %8743 = vrot.lane.b32.xlu0 %v8723, 26
    %v8744 = vpop.permute.xlu0 %8743
    %8745 = vrot.lane.b32.xlu0 %v8724, 26
    %v8746 = vpop.permute.xlu0 %8745
    %8747 = vrot.lane.b32.xlu0 %v8725, 26
    %v8748 = vpop.permute.xlu0 %8747
    %8749 = vrot.lane.b32.xlu0 %v8726, 26
    %v8750 = vpop.permute.xlu0 %8749
    %v8751 = vsel %vm7583, %v8736, %v8738
    %v8752 = vsel %vm7583, %v8740, %v8742
    %v8753 = vsel %vm7583, %v8744, %v8746
    %v8754 = vsel %vm7583, %v8748, %v8750
    %v8759 = vadd.f32 %v8713, %v8751
    %v8760 = vadd.f32 %v8714, %v8752
    %v8761 = vadd.f32 %v8715, %v8753
    %v8762 = vadd.f32 %v8716, %v8754
    %s8763 = sld [smem:[#allocation12 + $0x4]]
    %v8764 = vstv %s8763
    %v8765 = vadd.f32 %v8759, %v8764
    %v8766 = vadd.f32 %v8760, %v8764
    %v8767 = vadd.f32 %v8761, %v8764
    %v8768 = vadd.f32 %v8762, %v8764
    %v8769 = vsub.f32 0.0, %v8765
    %v8770 = vsub.f32 0.0, %v8766
    %v8771 = vsub.f32 0.0, %v8767
    %v8772 = vsub.f32 0.0, %v8768
    %v8773 = vmul.f32 %v8769, 1.442695
    %v8774 = vpow.pop %v8773
    %v8775 = vmul.f32 %v8770, 1.442695
    %v8776 = vpow.pop %v8775
    %v8777 = vmul.f32 %v8771, 1.442695
    %v8778 = vpow.pop %v8777
    %v8779 = vmul.f32 %v8772, 1.442695
    %v8780 = vpow.pop %v8779
    %v8781 = vadd.f32 %v8774, 1.0
    %v8782 = vadd.f32 %v8776, 1.0
    %v8783 = vadd.f32 %v8778, 1.0
    %v8784 = vadd.f32 %v8780, 1.0
    %v8785 = vrcp.pop %v8781
    %v8786 = vmul.f32 %v8781, %v8785
    %v8787 = vsub.f32 1.0, %v8786
    %v8788 = vmul.f32 %v8785, %v8787
    %v8789 = vadd.f32 %v8785, %v8788
    %vm8790 = vweird.f32 %v8781
    %vm8791 = vweird.f32 %v8785
    %vm8792 = vmor %vm8790, %vm8791
    %v8793 = vsel %vm8792, %v8785, %v8789
    %v8794 = vand.u32 2147483647, %v8781
    %vm8795 = vcmp.eq.f32.partialorder %v8794, 8.507059e+37
    %v8796 = vand.u32 %v8781, 2147483648
    %v8797 = vor.u32 1.1754944e-38, %v8796
    %v8798 = vsel %vm8795, %v8797, %v8793
    %v8799 = vmul.f32 1.0, %v8798
    %v8800 = vrcp.pop %v8782
    %v8801 = vmul.f32 %v8782, %v8800
    %v8802 = vsub.f32 1.0, %v8801
    %v8803 = vmul.f32 %v8800, %v8802
    %v8804 = vadd.f32 %v8800, %v8803
    %vm8805 = vweird.f32 %v8782
    %vm8806 = vweird.f32 %v8800
    %vm8807 = vmor %vm8805, %vm8806
    %v8808 = vsel %vm8807, %v8800, %v8804
    %v8809 = vand.u32 2147483647, %v8782
    %vm8810 = vcmp.eq.f32.partialorder %v8809, 8.507059e+37
    %v8811 = vand.u32 %v8782, 2147483648
    %v8812 = vor.u32 1.1754944e-38, %v8811
    %v8813 = vsel %vm8810, %v8812, %v8808
    %v8814 = vmul.f32 1.0, %v8813
    %v8815 = vrcp.pop %v8783
    %v8816 = vmul.f32 %v8783, %v8815
    %v8817 = vsub.f32 1.0, %v8816
    %v8818 = vmul.f32 %v8815, %v8817
    %v8819 = vadd.f32 %v8815, %v8818
    %vm8820 = vweird.f32 %v8783
    %vm8821 = vweird.f32 %v8815
    %vm8822 = vmor %vm8820, %vm8821
    %v8823 = vsel %vm8822, %v8815, %v8819
    %v8824 = vand.u32 2147483647, %v8783
    %vm8825 = vcmp.eq.f32.partialorder %v8824, 8.507059e+37
    %v8826 = vand.u32 %v8783, 2147483648
    %v8827 = vor.u32 1.1754944e-38, %v8826
    %v8828 = vsel %vm8825, %v8827, %v8823
    %v8829 = vmul.f32 1.0, %v8828
    %v8830 = vrcp.pop %v8784
    %v8831 = vmul.f32 %v8784, %v8830
    %v8832 = vsub.f32 1.0, %v8831
    %v8833 = vmul.f32 %v8830, %v8832
    %v8834 = vadd.f32 %v8830, %v8833
    %vm8835 = vweird.f32 %v8784
    %vm8836 = vweird.f32 %v8830
    %vm8837 = vmor %vm8835, %vm8836
    %v8838 = vsel %vm8837, %v8830, %v8834
    %v8839 = vand.u32 2147483647, %v8784
    %vm8840 = vcmp.eq.f32.partialorder %v8839, 8.507059e+37
    %v8841 = vand.u32 %v8784, 2147483648
    %v8842 = vor.u32 1.1754944e-38, %v8841
    %v8843 = vsel %vm8840, %v8842, %v8838
    %v8844 = vmul.f32 1.0, %v8843
    %s8845 = scalar_lea.vmem [#allocation14], 128
    %8846 = vst.msk [vmem:[%s8845] sm:$0xff] %vm877, %v8799
    %8847 = vst.msk [vmem:[%s8845 + $0x8] sm:$0xff] %vm877, %v8814
    %8848 = vst.msk [vmem:[%s8845 + $0x10] sm:$0xff] %vm877, %v8829
    %8849 = vst.msk [vmem:[%s8845 + $0x18] sm:$0xff] %vm877, %v8844
    %s8850 = sld [smem:[#allocation11 + $0x280]]
    %v8851 = vstv %s8850
    %v8852 = vmul.f32 %v7134, %v8851
    %v8853 = vmul.f32 %v7135, %v8851
    %v8854 = vmul.f32 %v7136, %v8851
    %v8855 = vmul.f32 %v7137, %v8851
    %s8856 = sld [smem:[#allocation11 + $0x281]]
    %v8857 = vstv %s8856
    %v8858 = vmul.f32 %v7341, %v8857
    %v8859 = vmul.f32 %v7342, %v8857
    %v8860 = vmul.f32 %v7343, %v8857
    %v8861 = vmul.f32 %v7344, %v8857
    %8866 = vrot.lane.b32.xlu0 %v8858, 94
    %v8867 = vpop.permute.xlu0 %8866
    %8868 = vrot.lane.b32.xlu0 %v8859, 94
    %v8869 = vpop.permute.xlu0 %8868
    %8870 = vrot.lane.b32.xlu0 %v8860, 94
    %v8871 = vpop.permute.xlu0 %8870
    %8872 = vrot.lane.b32.xlu0 %v8861, 94
    %v8873 = vpop.permute.xlu0 %8872
    %v8878 = vadd.f32 %v8852, %v8867
    %v8879 = vadd.f32 %v8853, %v8869
    %v8880 = vadd.f32 %v8854, %v8871
    %v8881 = vadd.f32 %v8855, %v8873
    %s8882 = sld [smem:[#allocation11 + $0x282]]
    %v8883 = vstv %s8882
    %v8884 = vmul.f32 %v7544, %v8883
    %v8885 = vmul.f32 %v7545, %v8883
    %v8886 = vmul.f32 %v7546, %v8883
    %v8887 = vmul.f32 %v7547, %v8883
    %8892 = vrot.lane.b32.xlu0 %v8884, 60
    %v8893 = vpop.permute.xlu0 %8892
    %8894 = vrot.lane.b32.xlu0 %v8885, 60
    %v8895 = vpop.permute.xlu0 %8894
    %8896 = vrot.lane.b32.xlu0 %v8886, 60
    %v8897 = vpop.permute.xlu0 %8896
    %8898 = vrot.lane.b32.xlu0 %v8887, 60
    %v8899 = vpop.permute.xlu0 %8898
    %v8904 = vadd.f32 %v8878, %v8893
    %v8905 = vadd.f32 %v8879, %v8895
    %v8906 = vadd.f32 %v8880, %v8897
    %v8907 = vadd.f32 %v8881, %v8899
    %s8908 = sld [smem:[#allocation11 + $0x283]]
    %v8909 = vstv %s8908
    %v8910 = vmul.f32 %v7858, %v8909
    %v8911 = vmul.f32 %v7859, %v8909
    %v8912 = vmul.f32 %v7860, %v8909
    %v8913 = vmul.f32 %v7861, %v8909
    %v8914 = vmul.f32 %v7862, %v8909
    %v8915 = vmul.f32 %v7863, %v8909
    %v8916 = vmul.f32 %v7864, %v8909
    %v8917 = vmul.f32 %v7865, %v8909
    %8926 = vrot.lane.b32.xlu0 %v8910, 26
    %v8927 = vpop.permute.xlu0 %8926
    %8928 = vrot.lane.b32.xlu0 %v8911, 26
    %v8929 = vpop.permute.xlu0 %8928
    %8930 = vrot.lane.b32.xlu0 %v8912, 26
    %v8931 = vpop.permute.xlu0 %8930
    %8932 = vrot.lane.b32.xlu0 %v8913, 26
    %v8933 = vpop.permute.xlu0 %8932
    %8934 = vrot.lane.b32.xlu0 %v8914, 26
    %v8935 = vpop.permute.xlu0 %8934
    %8936 = vrot.lane.b32.xlu0 %v8915, 26
    %v8937 = vpop.permute.xlu0 %8936
    %8938 = vrot.lane.b32.xlu0 %v8916, 26
    %v8939 = vpop.permute.xlu0 %8938
    %8940 = vrot.lane.b32.xlu0 %v8917, 26
    %v8941 = vpop.permute.xlu0 %8940
    %v8942 = vsel %vm7583, %v8927, %v8929
    %v8943 = vsel %vm7583, %v8931, %v8933
    %v8944 = vsel %vm7583, %v8935, %v8937
    %v8945 = vsel %vm7583, %v8939, %v8941
    %v8950 = vadd.f32 %v8904, %v8942
    %v8951 = vadd.f32 %v8905, %v8943
    %v8952 = vadd.f32 %v8906, %v8944
    %v8953 = vadd.f32 %v8907, %v8945
    %s8954 = sld [smem:[#allocation12 + $0x5]]
    %v8955 = vstv %s8954
    %v8956 = vadd.f32 %v8950, %v8955
    %v8957 = vadd.f32 %v8951, %v8955
    %v8958 = vadd.f32 %v8952, %v8955
    %v8959 = vadd.f32 %v8953, %v8955
    %v8960 = vsub.f32 0.0, %v8956
    %v8961 = vsub.f32 0.0, %v8957
    %v8962 = vsub.f32 0.0, %v8958
    %v8963 = vsub.f32 0.0, %v8959
    %v8964 = vmul.f32 %v8960, 1.442695
    %v8965 = vpow.pop %v8964
    %v8966 = vmul.f32 %v8961, 1.442695
    %v8967 = vpow.pop %v8966
    %v8968 = vmul.f32 %v8962, 1.442695
    %v8969 = vpow.pop %v8968
    %v8970 = vmul.f32 %v8963, 1.442695
    %v8971 = vpow.pop %v8970
    %v8972 = vadd.f32 %v8965, 1.0
    %v8973 = vadd.f32 %v8967, 1.0
    %v8974 = vadd.f32 %v8969, 1.0
    %v8975 = vadd.f32 %v8971, 1.0
    %v8976 = vrcp.pop %v8972
    %v8977 = vmul.f32 %v8972, %v8976
    %v8978 = vsub.f32 1.0, %v8977
    %v8979 = vmul.f32 %v8976, %v8978
    %v8980 = vadd.f32 %v8976, %v8979
    %vm8981 = vweird.f32 %v8972
    %vm8982 = vweird.f32 %v8976
    %vm8983 = vmor %vm8981, %vm8982
    %v8984 = vsel %vm8983, %v8976, %v8980
    %v8985 = vand.u32 2147483647, %v8972
    %vm8986 = vcmp.eq.f32.partialorder %v8985, 8.507059e+37
    %v8987 = vand.u32 %v8972, 2147483648
    %v8988 = vor.u32 1.1754944e-38, %v8987
    %v8989 = vsel %vm8986, %v8988, %v8984
    %v8990 = vmul.f32 1.0, %v8989
    %v8991 = vrcp.pop %v8973
    %v8992 = vmul.f32 %v8973, %v8991
    %v8993 = vsub.f32 1.0, %v8992
    %v8994 = vmul.f32 %v8991, %v8993
    %v8995 = vadd.f32 %v8991, %v8994
    %vm8996 = vweird.f32 %v8973
    %vm8997 = vweird.f32 %v8991
    %vm8998 = vmor %vm8996, %vm8997
    %v8999 = vsel %vm8998, %v8991, %v8995
    %v9000 = vand.u32 2147483647, %v8973
    %vm9001 = vcmp.eq.f32.partialorder %v9000, 8.507059e+37
    %v9002 = vand.u32 %v8973, 2147483648
    %v9003 = vor.u32 1.1754944e-38, %v9002
    %v9004 = vsel %vm9001, %v9003, %v8999
    %v9005 = vmul.f32 1.0, %v9004
    %v9006 = vrcp.pop %v8974
    %v9007 = vmul.f32 %v8974, %v9006
    %v9008 = vsub.f32 1.0, %v9007
    %v9009 = vmul.f32 %v9006, %v9008
    %v9010 = vadd.f32 %v9006, %v9009
    %vm9011 = vweird.f32 %v8974
    %vm9012 = vweird.f32 %v9006
    %vm9013 = vmor %vm9011, %vm9012
    %v9014 = vsel %vm9013, %v9006, %v9010
    %v9015 = vand.u32 2147483647, %v8974
    %vm9016 = vcmp.eq.f32.partialorder %v9015, 8.507059e+37
    %v9017 = vand.u32 %v8974, 2147483648
    %v9018 = vor.u32 1.1754944e-38, %v9017
    %v9019 = vsel %vm9016, %v9018, %v9014
    %v9020 = vmul.f32 1.0, %v9019
    %v9021 = vrcp.pop %v8975
    %v9022 = vmul.f32 %v8975, %v9021
    %v9023 = vsub.f32 1.0, %v9022
    %v9024 = vmul.f32 %v9021, %v9023
    %v9025 = vadd.f32 %v9021, %v9024
    %vm9026 = vweird.f32 %v8975
    %vm9027 = vweird.f32 %v9021
    %vm9028 = vmor %vm9026, %vm9027
    %v9029 = vsel %vm9028, %v9021, %v9025
    %v9030 = vand.u32 2147483647, %v8975
    %vm9031 = vcmp.eq.f32.partialorder %v9030, 8.507059e+37
    %v9032 = vand.u32 %v8975, 2147483648
    %v9033 = vor.u32 1.1754944e-38, %v9032
    %v9034 = vsel %vm9031, %v9033, %v9029
    %v9035 = vmul.f32 1.0, %v9034
    %s9036 = scalar_lea.vmem [#allocation14], 160
    %9037 = vst.msk [vmem:[%s9036] sm:$0xff] %vm877, %v8990
    %9038 = vst.msk [vmem:[%s9036 + $0x8] sm:$0xff] %vm877, %v9005
    %9039 = vst.msk [vmem:[%s9036 + $0x10] sm:$0xff] %vm877, %v9020
    %9040 = vst.msk [vmem:[%s9036 + $0x18] sm:$0xff] %vm877, %v9035
    %s9041 = sld [smem:[#allocation11 + $0x300]]
    %v9042 = vstv %s9041
    %v9043 = vmul.f32 %v7134, %v9042
    %v9044 = vmul.f32 %v7135, %v9042
    %v9045 = vmul.f32 %v7136, %v9042
    %v9046 = vmul.f32 %v7137, %v9042
    %s9047 = sld [smem:[#allocation11 + $0x301]]
    %v9048 = vstv %s9047
    %v9049 = vmul.f32 %v7341, %v9048
    %v9050 = vmul.f32 %v7342, %v9048
    %v9051 = vmul.f32 %v7343, %v9048
    %v9052 = vmul.f32 %v7344, %v9048
    %9057 = vrot.lane.b32.xlu0 %v9049, 94
    %v9058 = vpop.permute.xlu0 %9057
    %9059 = vrot.lane.b32.xlu0 %v9050, 94
    %v9060 = vpop.permute.xlu0 %9059
    %9061 = vrot.lane.b32.xlu0 %v9051, 94
    %v9062 = vpop.permute.xlu0 %9061
    %9063 = vrot.lane.b32.xlu0 %v9052, 94
    %v9064 = vpop.permute.xlu0 %9063
    %v9069 = vadd.f32 %v9043, %v9058
    %v9070 = vadd.f32 %v9044, %v9060
    %v9071 = vadd.f32 %v9045, %v9062
    %v9072 = vadd.f32 %v9046, %v9064
    %s9073 = sld [smem:[#allocation11 + $0x302]]
    %v9074 = vstv %s9073
    %v9075 = vmul.f32 %v7544, %v9074
    %v9076 = vmul.f32 %v7545, %v9074
    %v9077 = vmul.f32 %v7546, %v9074
    %v9078 = vmul.f32 %v7547, %v9074
    %9083 = vrot.lane.b32.xlu0 %v9075, 60
    %v9084 = vpop.permute.xlu0 %9083
    %9085 = vrot.lane.b32.xlu0 %v9076, 60
    %v9086 = vpop.permute.xlu0 %9085
    %9087 = vrot.lane.b32.xlu0 %v9077, 60
    %v9088 = vpop.permute.xlu0 %9087
    %9089 = vrot.lane.b32.xlu0 %v9078, 60
    %v9090 = vpop.permute.xlu0 %9089
    %v9095 = vadd.f32 %v9069, %v9084
    %v9096 = vadd.f32 %v9070, %v9086
    %v9097 = vadd.f32 %v9071, %v9088
    %v9098 = vadd.f32 %v9072, %v9090
    %s9099 = sld [smem:[#allocation11 + $0x303]]
    %v9100 = vstv %s9099
    %v9101 = vmul.f32 %v7858, %v9100
    %v9102 = vmul.f32 %v7859, %v9100
    %v9103 = vmul.f32 %v7860, %v9100
    %v9104 = vmul.f32 %v7861, %v9100
    %v9105 = vmul.f32 %v7862, %v9100
    %v9106 = vmul.f32 %v7863, %v9100
    %v9107 = vmul.f32 %v7864, %v9100
    %v9108 = vmul.f32 %v7865, %v9100
    %9117 = vrot.lane.b32.xlu0 %v9101, 26
    %v9118 = vpop.permute.xlu0 %9117
    %9119 = vrot.lane.b32.xlu0 %v9102, 26
    %v9120 = vpop.permute.xlu0 %9119
    %9121 = vrot.lane.b32.xlu0 %v9103, 26
    %v9122 = vpop.permute.xlu0 %9121
    %9123 = vrot.lane.b32.xlu0 %v9104, 26
    %v9124 = vpop.permute.xlu0 %9123
    %9125 = vrot.lane.b32.xlu0 %v9105, 26
    %v9126 = vpop.permute.xlu0 %9125
    %9127 = vrot.lane.b32.xlu0 %v9106, 26
    %v9128 = vpop.permute.xlu0 %9127
    %9129 = vrot.lane.b32.xlu0 %v9107, 26
    %v9130 = vpop.permute.xlu0 %9129
    %9131 = vrot.lane.b32.xlu0 %v9108, 26
    %v9132 = vpop.permute.xlu0 %9131
    %v9133 = vsel %vm7583, %v9118, %v9120
    %v9134 = vsel %vm7583, %v9122, %v9124
    %v9135 = vsel %vm7583, %v9126, %v9128
    %v9136 = vsel %vm7583, %v9130, %v9132
    %v9141 = vadd.f32 %v9095, %v9133
    %v9142 = vadd.f32 %v9096, %v9134
    %v9143 = vadd.f32 %v9097, %v9135
    %v9144 = vadd.f32 %v9098, %v9136
    %s9145 = sld [smem:[#allocation12 + $0x6]]
    %v9146 = vstv %s9145
    %v9147 = vadd.f32 %v9141, %v9146
    %v9148 = vadd.f32 %v9142, %v9146
    %v9149 = vadd.f32 %v9143, %v9146
    %v9150 = vadd.f32 %v9144, %v9146
    %v9151 = vsub.f32 0.0, %v9147
    %v9152 = vsub.f32 0.0, %v9148
    %v9153 = vsub.f32 0.0, %v9149
    %v9154 = vsub.f32 0.0, %v9150
    %v9155 = vmul.f32 %v9151, 1.442695
    %v9156 = vpow.pop %v9155
    %v9157 = vmul.f32 %v9152, 1.442695
    %v9158 = vpow.pop %v9157
    %v9159 = vmul.f32 %v9153, 1.442695
    %v9160 = vpow.pop %v9159
    %v9161 = vmul.f32 %v9154, 1.442695
    %v9162 = vpow.pop %v9161
    %v9163 = vadd.f32 %v9156, 1.0
    %v9164 = vadd.f32 %v9158, 1.0
    %v9165 = vadd.f32 %v9160, 1.0
    %v9166 = vadd.f32 %v9162, 1.0
    %v9167 = vrcp.pop %v9163
    %v9168 = vmul.f32 %v9163, %v9167
    %v9169 = vsub.f32 1.0, %v9168
    %v9170 = vmul.f32 %v9167, %v9169
    %v9171 = vadd.f32 %v9167, %v9170
    %vm9172 = vweird.f32 %v9163
    %vm9173 = vweird.f32 %v9167
    %vm9174 = vmor %vm9172, %vm9173
    %v9175 = vsel %vm9174, %v9167, %v9171
    %v9176 = vand.u32 2147483647, %v9163
    %vm9177 = vcmp.eq.f32.partialorder %v9176, 8.507059e+37
    %v9178 = vand.u32 %v9163, 2147483648
    %v9179 = vor.u32 1.1754944e-38, %v9178
    %v9180 = vsel %vm9177, %v9179, %v9175
    %v9181 = vmul.f32 1.0, %v9180
    %v9182 = vrcp.pop %v9164
    %v9183 = vmul.f32 %v9164, %v9182
    %v9184 = vsub.f32 1.0, %v9183
    %v9185 = vmul.f32 %v9182, %v9184
    %v9186 = vadd.f32 %v9182, %v9185
    %vm9187 = vweird.f32 %v9164
    %vm9188 = vweird.f32 %v9182
    %vm9189 = vmor %vm9187, %vm9188
    %v9190 = vsel %vm9189, %v9182, %v9186
    %v9191 = vand.u32 2147483647, %v9164
    %vm9192 = vcmp.eq.f32.partialorder %v9191, 8.507059e+37
    %v9193 = vand.u32 %v9164, 2147483648
    %v9194 = vor.u32 1.1754944e-38, %v9193
    %v9195 = vsel %vm9192, %v9194, %v9190
    %v9196 = vmul.f32 1.0, %v9195
    %v9197 = vrcp.pop %v9165
    %v9198 = vmul.f32 %v9165, %v9197
    %v9199 = vsub.f32 1.0, %v9198
    %v9200 = vmul.f32 %v9197, %v9199
    %v9201 = vadd.f32 %v9197, %v9200
    %vm9202 = vweird.f32 %v9165
    %vm9203 = vweird.f32 %v9197
    %vm9204 = vmor %vm9202, %vm9203
    %v9205 = vsel %vm9204, %v9197, %v9201
    %v9206 = vand.u32 2147483647, %v9165
    %vm9207 = vcmp.eq.f32.partialorder %v9206, 8.507059e+37
    %v9208 = vand.u32 %v9165, 2147483648
    %v9209 = vor.u32 1.1754944e-38, %v9208
    %v9210 = vsel %vm9207, %v9209, %v9205
    %v9211 = vmul.f32 1.0, %v9210
    %v9212 = vrcp.pop %v9166
    %v9213 = vmul.f32 %v9166, %v9212
    %v9214 = vsub.f32 1.0, %v9213
    %v9215 = vmul.f32 %v9212, %v9214
    %v9216 = vadd.f32 %v9212, %v9215
    %vm9217 = vweird.f32 %v9166
    %vm9218 = vweird.f32 %v9212
    %vm9219 = vmor %vm9217, %vm9218
    %v9220 = vsel %vm9219, %v9212, %v9216
    %v9221 = vand.u32 2147483647, %v9166
    %vm9222 = vcmp.eq.f32.partialorder %v9221, 8.507059e+37
    %v9223 = vand.u32 %v9166, 2147483648
    %v9224 = vor.u32 1.1754944e-38, %v9223
    %v9225 = vsel %vm9222, %v9224, %v9220
    %v9226 = vmul.f32 1.0, %v9225
    %s9227 = scalar_lea.vmem [#allocation14], 192
    %9228 = vst.msk [vmem:[%s9227] sm:$0xff] %vm877, %v9181
    %9229 = vst.msk [vmem:[%s9227 + $0x8] sm:$0xff] %vm877, %v9196
    %9230 = vst.msk [vmem:[%s9227 + $0x10] sm:$0xff] %vm877, %v9211
    %9231 = vst.msk [vmem:[%s9227 + $0x18] sm:$0xff] %vm877, %v9226
    %s9232 = sld [smem:[#allocation11 + $0x380]]
    %v9233 = vstv %s9232
    %v9234 = vmul.f32 %v7134, %v9233
    %v9235 = vmul.f32 %v7135, %v9233
    %v9236 = vmul.f32 %v7136, %v9233
    %v9237 = vmul.f32 %v7137, %v9233
    %s9238 = sld [smem:[#allocation11 + $0x381]]
    %v9239 = vstv %s9238
    %v9240 = vmul.f32 %v7341, %v9239
    %v9241 = vmul.f32 %v7342, %v9239
    %v9242 = vmul.f32 %v7343, %v9239
    %v9243 = vmul.f32 %v7344, %v9239
    %9248 = vrot.lane.b32.xlu0 %v9240, 94
    %v9249 = vpop.permute.xlu0 %9248
    %9250 = vrot.lane.b32.xlu0 %v9241, 94
    %v9251 = vpop.permute.xlu0 %9250
    %9252 = vrot.lane.b32.xlu0 %v9242, 94
    %v9253 = vpop.permute.xlu0 %9252
    %9254 = vrot.lane.b32.xlu0 %v9243, 94
    %v9255 = vpop.permute.xlu0 %9254
    %v9260 = vadd.f32 %v9234, %v9249
    %v9261 = vadd.f32 %v9235, %v9251
    %v9262 = vadd.f32 %v9236, %v9253
    %v9263 = vadd.f32 %v9237, %v9255
    %s9264 = sld [smem:[#allocation11 + $0x382]]
    %v9265 = vstv %s9264
    %v9266 = vmul.f32 %v7544, %v9265
    %v9267 = vmul.f32 %v7545, %v9265
    %v9268 = vmul.f32 %v7546, %v9265
    %v9269 = vmul.f32 %v7547, %v9265
    %9274 = vrot.lane.b32.xlu0 %v9266, 60
    %v9275 = vpop.permute.xlu0 %9274
    %9276 = vrot.lane.b32.xlu0 %v9267, 60
    %v9277 = vpop.permute.xlu0 %9276
    %9278 = vrot.lane.b32.xlu0 %v9268, 60
    %v9279 = vpop.permute.xlu0 %9278
    %9280 = vrot.lane.b32.xlu0 %v9269, 60
    %v9281 = vpop.permute.xlu0 %9280
    %v9286 = vadd.f32 %v9260, %v9275
    %v9287 = vadd.f32 %v9261, %v9277
    %v9288 = vadd.f32 %v9262, %v9279
    %v9289 = vadd.f32 %v9263, %v9281
    %s9290 = sld [smem:[#allocation11 + $0x383]]
    %v9291 = vstv %s9290
    %v9292 = vmul.f32 %v7858, %v9291
    %v9293 = vmul.f32 %v7859, %v9291
    %v9294 = vmul.f32 %v7860, %v9291
    %v9295 = vmul.f32 %v7861, %v9291
    %v9296 = vmul.f32 %v7862, %v9291
    %v9297 = vmul.f32 %v7863, %v9291
    %v9298 = vmul.f32 %v7864, %v9291
    %v9299 = vmul.f32 %v7865, %v9291
    %9308 = vrot.lane.b32.xlu0 %v9292, 26
    %v9309 = vpop.permute.xlu0 %9308
    %9310 = vrot.lane.b32.xlu0 %v9293, 26
    %v9311 = vpop.permute.xlu0 %9310
    %9312 = vrot.lane.b32.xlu0 %v9294, 26
    %v9313 = vpop.permute.xlu0 %9312
    %9314 = vrot.lane.b32.xlu0 %v9295, 26
    %v9315 = vpop.permute.xlu0 %9314
    %9316 = vrot.lane.b32.xlu0 %v9296, 26
    %v9317 = vpop.permute.xlu0 %9316
    %9318 = vrot.lane.b32.xlu0 %v9297, 26
    %v9319 = vpop.permute.xlu0 %9318
    %9320 = vrot.lane.b32.xlu0 %v9298, 26
    %v9321 = vpop.permute.xlu0 %9320
    %9322 = vrot.lane.b32.xlu0 %v9299, 26
    %v9323 = vpop.permute.xlu0 %9322
    %v9324 = vsel %vm7583, %v9309, %v9311
    %v9325 = vsel %vm7583, %v9313, %v9315
    %v9326 = vsel %vm7583, %v9317, %v9319
    %v9327 = vsel %vm7583, %v9321, %v9323
    %v9332 = vadd.f32 %v9286, %v9324
    %v9333 = vadd.f32 %v9287, %v9325
    %v9334 = vadd.f32 %v9288, %v9326
    %v9335 = vadd.f32 %v9289, %v9327
    %s9336 = sld [smem:[#allocation12 + $0x7]]
    %v9337 = vstv %s9336
    %v9338 = vadd.f32 %v9332, %v9337
    %v9339 = vadd.f32 %v9333, %v9337
    %v9340 = vadd.f32 %v9334, %v9337
    %v9341 = vadd.f32 %v9335, %v9337
    %v9342 = vsub.f32 0.0, %v9338
    %v9343 = vsub.f32 0.0, %v9339
    %v9344 = vsub.f32 0.0, %v9340
    %v9345 = vsub.f32 0.0, %v9341
    %v9346 = vmul.f32 %v9342, 1.442695
    %v9347 = vpow.pop %v9346
    %v9348 = vmul.f32 %v9343, 1.442695
    %v9349 = vpow.pop %v9348
    %v9350 = vmul.f32 %v9344, 1.442695
    %v9351 = vpow.pop %v9350
    %v9352 = vmul.f32 %v9345, 1.442695
    %v9353 = vpow.pop %v9352
    %v9354 = vadd.f32 %v9347, 1.0
    %v9355 = vadd.f32 %v9349, 1.0
    %v9356 = vadd.f32 %v9351, 1.0
    %v9357 = vadd.f32 %v9353, 1.0
    %v9358 = vrcp.pop %v9354
    %v9359 = vmul.f32 %v9354, %v9358
    %v9360 = vsub.f32 1.0, %v9359
    %v9361 = vmul.f32 %v9358, %v9360
    %v9362 = vadd.f32 %v9358, %v9361
    %vm9363 = vweird.f32 %v9354
    %vm9364 = vweird.f32 %v9358
    %vm9365 = vmor %vm9363, %vm9364
    %v9366 = vsel %vm9365, %v9358, %v9362
    %v9367 = vand.u32 2147483647, %v9354
    %vm9368 = vcmp.eq.f32.partialorder %v9367, 8.507059e+37
    %v9369 = vand.u32 %v9354, 2147483648
    %v9370 = vor.u32 1.1754944e-38, %v9369
    %v9371 = vsel %vm9368, %v9370, %v9366
    %v9372 = vmul.f32 1.0, %v9371
    %v9373 = vrcp.pop %v9355
    %v9374 = vmul.f32 %v9355, %v9373
    %v9375 = vsub.f32 1.0, %v9374
    %v9376 = vmul.f32 %v9373, %v9375
    %v9377 = vadd.f32 %v9373, %v9376
    %vm9378 = vweird.f32 %v9355
    %vm9379 = vweird.f32 %v9373
    %vm9380 = vmor %vm9378, %vm9379
    %v9381 = vsel %vm9380, %v9373, %v9377
    %v9382 = vand.u32 2147483647, %v9355
    %vm9383 = vcmp.eq.f32.partialorder %v9382, 8.507059e+37
    %v9384 = vand.u32 %v9355, 2147483648
    %v9385 = vor.u32 1.1754944e-38, %v9384
    %v9386 = vsel %vm9383, %v9385, %v9381
    %v9387 = vmul.f32 1.0, %v9386
    %v9388 = vrcp.pop %v9356
    %v9389 = vmul.f32 %v9356, %v9388
    %v9390 = vsub.f32 1.0, %v9389
    %v9391 = vmul.f32 %v9388, %v9390
    %v9392 = vadd.f32 %v9388, %v9391
    %vm9393 = vweird.f32 %v9356
    %vm9394 = vweird.f32 %v9388
    %vm9395 = vmor %vm9393, %vm9394
    %v9396 = vsel %vm9395, %v9388, %v9392
    %v9397 = vand.u32 2147483647, %v9356
    %vm9398 = vcmp.eq.f32.partialorder %v9397, 8.507059e+37
    %v9399 = vand.u32 %v9356, 2147483648
    %v9400 = vor.u32 1.1754944e-38, %v9399
    %v9401 = vsel %vm9398, %v9400, %v9396
    %v9402 = vmul.f32 1.0, %v9401
    %v9403 = vrcp.pop %v9357
    %v9404 = vmul.f32 %v9357, %v9403
    %v9405 = vsub.f32 1.0, %v9404
    %v9406 = vmul.f32 %v9403, %v9405
    %v9407 = vadd.f32 %v9403, %v9406
    %vm9408 = vweird.f32 %v9357
    %vm9409 = vweird.f32 %v9403
    %vm9410 = vmor %vm9408, %vm9409
    %v9411 = vsel %vm9410, %v9403, %v9407
    %v9412 = vand.u32 2147483647, %v9357
    %vm9413 = vcmp.eq.f32.partialorder %v9412, 8.507059e+37
    %v9414 = vand.u32 %v9357, 2147483648
    %v9415 = vor.u32 1.1754944e-38, %v9414
    %v9416 = vsel %vm9413, %v9415, %v9411
    %v9417 = vmul.f32 1.0, %v9416
    %s9418 = scalar_lea.vmem [#allocation14], 224
    %9419 = vst.msk [vmem:[%s9418] sm:$0xff] %vm877, %v9372
    %9420 = vst.msk [vmem:[%s9418 + $0x8] sm:$0xff] %vm877, %v9387
    %9421 = vst.msk [vmem:[%s9418 + $0x10] sm:$0xff] %vm877, %v9402
    %9422 = vst.msk [vmem:[%s9418 + $0x18] sm:$0xff] %vm877, %v9417
    %s9423 = sld [smem:[#allocation11]]
    %v9424 = vstv %s9423
    %v9425 = vmul.f32 %v7148, %v9424
    %v9426 = vmul.f32 %v7149, %v9424
    %v9427 = vmul.f32 %v7150, %v9424
    %v9428 = vmul.f32 %v7151, %v9424
    %v9429 = vmul.f32 %v7152, %v9424
    %s9430 = sld [smem:[#allocation11 + $0x1]]
    %v9431 = vstv %s9430
    %v9432 = vmul.f32 %v7355, %v9431
    %v9433 = vmul.f32 %v7356, %v9431
    %v9434 = vmul.f32 %v7357, %v9431
    %v9435 = vmul.f32 %v7358, %v9431
    %v9436 = vmul.f32 %v7359, %v9431
    %9442 = vrot.lane.b32.xlu0 %v9432, 94
    %v9443 = vpop.permute.xlu0 %9442
    %9444 = vrot.lane.b32.xlu0 %v9433, 94
    %v9445 = vpop.permute.xlu0 %9444
    %9446 = vrot.lane.b32.xlu0 %v9434, 94
    %v9447 = vpop.permute.xlu0 %9446
    %9448 = vrot.lane.b32.xlu0 %v9435, 94
    %v9449 = vpop.permute.xlu0 %9448
    %9450 = vrot.lane.b32.xlu0 %v9436, 94
    %v9451 = vpop.permute.xlu0 %9450
    %v9457 = vadd.f32 %v9425, %v9443
    %v9458 = vadd.f32 %v9426, %v9445
    %v9459 = vadd.f32 %v9427, %v9447
    %v9460 = vadd.f32 %v9428, %v9449
    %v9461 = vadd.f32 %v9429, %v9451
    %s9462 = sld [smem:[#allocation11 + $0x2]]
    %v9463 = vstv %s9462
    %v9464 = vmul.f32 %v7558, %v9463
    %v9465 = vmul.f32 %v7559, %v9463
    %v9466 = vmul.f32 %v7560, %v9463
    %v9467 = vmul.f32 %v7561, %v9463
    %v9468 = vmul.f32 %v7562, %v9463
    %9474 = vrot.lane.b32.xlu0 %v9464, 60
    %v9475 = vpop.permute.xlu0 %9474
    %9476 = vrot.lane.b32.xlu0 %v9465, 60
    %v9477 = vpop.permute.xlu0 %9476
    %9478 = vrot.lane.b32.xlu0 %v9466, 60
    %v9479 = vpop.permute.xlu0 %9478
    %9480 = vrot.lane.b32.xlu0 %v9467, 60
    %v9481 = vpop.permute.xlu0 %9480
    %9482 = vrot.lane.b32.xlu0 %v9468, 60
    %v9483 = vpop.permute.xlu0 %9482
    %v9489 = vadd.f32 %v9457, %v9475
    %v9490 = vadd.f32 %v9458, %v9477
    %v9491 = vadd.f32 %v9459, %v9479
    %v9492 = vadd.f32 %v9460, %v9481
    %v9493 = vadd.f32 %v9461, %v9483
    %s9494 = sld [smem:[#allocation11 + $0x3]]
    %v9495 = vstv %s9494
    %v9496 = vmul.f32 %v7886, %v9495
    %v9497 = vmul.f32 %v7887, %v9495
    %v9498 = vmul.f32 %v7888, %v9495
    %v9499 = vmul.f32 %v7889, %v9495
    %v9500 = vmul.f32 %v7890, %v9495
    %v9501 = vmul.f32 %v7891, %v9495
    %v9502 = vmul.f32 %v7892, %v9495
    %v9503 = vmul.f32 %v7893, %v9495
    %v9504 = vmul.f32 %v7894, %v9495
    %v9505 = vmul.f32 %v7895, %v9495
    %9516 = vrot.lane.b32.xlu0 %v9496, 26
    %v9517 = vpop.permute.xlu0 %9516
    %9518 = vrot.lane.b32.xlu0 %v9497, 26
    %v9519 = vpop.permute.xlu0 %9518
    %9520 = vrot.lane.b32.xlu0 %v9498, 26
    %v9521 = vpop.permute.xlu0 %9520
    %9522 = vrot.lane.b32.xlu0 %v9499, 26
    %v9523 = vpop.permute.xlu0 %9522
    %9524 = vrot.lane.b32.xlu0 %v9500, 26
    %v9525 = vpop.permute.xlu0 %9524
    %9526 = vrot.lane.b32.xlu0 %v9501, 26
    %v9527 = vpop.permute.xlu0 %9526
    %9528 = vrot.lane.b32.xlu0 %v9502, 26
    %v9529 = vpop.permute.xlu0 %9528
    %9530 = vrot.lane.b32.xlu0 %v9503, 26
    %v9531 = vpop.permute.xlu0 %9530
    %9532 = vrot.lane.b32.xlu0 %v9504, 26
    %v9533 = vpop.permute.xlu0 %9532
    %9534 = vrot.lane.b32.xlu0 %v9505, 26
    %v9535 = vpop.permute.xlu0 %9534
    %v9536 = vsel %vm7583, %v9517, %v9519
    %v9537 = vsel %vm7583, %v9521, %v9523
    %v9538 = vsel %vm7583, %v9525, %v9527
    %v9539 = vsel %vm7583, %v9529, %v9531
    %v9540 = vsel %vm7583, %v9533, %v9535
    %v9546 = vadd.f32 %v9489, %v9536
    %v9547 = vadd.f32 %v9490, %v9537
    %v9548 = vadd.f32 %v9491, %v9538
    %v9549 = vadd.f32 %v9492, %v9539
    %v9550 = vadd.f32 %v9493, %v9540
    %s9551 = sld [smem:[#allocation12]]
    %v9552 = vstv %s9551
    %v9553 = vadd.f32 %v9546, %v9552
    %v9554 = vadd.f32 %v9547, %v9552
    %v9555 = vadd.f32 %v9548, %v9552
    %v9556 = vadd.f32 %v9549, %v9552
    %v9557 = vadd.f32 %v9550, %v9552
    %v9558 = vsub.f32 0.0, %v9553
    %v9559 = vsub.f32 0.0, %v9554
    %v9560 = vsub.f32 0.0, %v9555
    %v9561 = vsub.f32 0.0, %v9556
    %v9562 = vsub.f32 0.0, %v9557
    %v9563 = vmul.f32 %v9558, 1.442695
    %v9564 = vpow.pop %v9563
    %v9565 = vmul.f32 %v9559, 1.442695
    %v9566 = vpow.pop %v9565
    %v9567 = vmul.f32 %v9560, 1.442695
    %v9568 = vpow.pop %v9567
    %v9569 = vmul.f32 %v9561, 1.442695
    %v9570 = vpow.pop %v9569
    %v9571 = vmul.f32 %v9562, 1.442695
    %v9572 = vpow.pop %v9571
    %v9573 = vadd.f32 %v9564, 1.0
    %v9574 = vadd.f32 %v9566, 1.0
    %v9575 = vadd.f32 %v9568, 1.0
    %v9576 = vadd.f32 %v9570, 1.0
    %v9577 = vadd.f32 %v9572, 1.0
    %v9578 = vrcp.pop %v9573
    %v9579 = vmul.f32 %v9573, %v9578
    %v9580 = vsub.f32 1.0, %v9579
    %v9581 = vmul.f32 %v9578, %v9580
    %v9582 = vadd.f32 %v9578, %v9581
    %vm9583 = vweird.f32 %v9573
    %vm9584 = vweird.f32 %v9578
    %vm9585 = vmor %vm9583, %vm9584
    %v9586 = vsel %vm9585, %v9578, %v9582
    %v9587 = vand.u32 2147483647, %v9573
    %vm9588 = vcmp.eq.f32.partialorder %v9587, 8.507059e+37
    %v9589 = vand.u32 %v9573, 2147483648
    %v9590 = vor.u32 1.1754944e-38, %v9589
    %v9591 = vsel %vm9588, %v9590, %v9586
    %v9592 = vmul.f32 1.0, %v9591
    %v9593 = vrcp.pop %v9574
    %v9594 = vmul.f32 %v9574, %v9593
    %v9595 = vsub.f32 1.0, %v9594
    %v9596 = vmul.f32 %v9593, %v9595
    %v9597 = vadd.f32 %v9593, %v9596
    %vm9598 = vweird.f32 %v9574
    %vm9599 = vweird.f32 %v9593
    %vm9600 = vmor %vm9598, %vm9599
    %v9601 = vsel %vm9600, %v9593, %v9597
    %v9602 = vand.u32 2147483647, %v9574
    %vm9603 = vcmp.eq.f32.partialorder %v9602, 8.507059e+37
    %v9604 = vand.u32 %v9574, 2147483648
    %v9605 = vor.u32 1.1754944e-38, %v9604
    %v9606 = vsel %vm9603, %v9605, %v9601
    %v9607 = vmul.f32 1.0, %v9606
    %v9608 = vrcp.pop %v9575
    %v9609 = vmul.f32 %v9575, %v9608
    %v9610 = vsub.f32 1.0, %v9609
    %v9611 = vmul.f32 %v9608, %v9610
    %v9612 = vadd.f32 %v9608, %v9611
    %vm9613 = vweird.f32 %v9575
    %vm9614 = vweird.f32 %v9608
    %vm9615 = vmor %vm9613, %vm9614
    %v9616 = vsel %vm9615, %v9608, %v9612
    %v9617 = vand.u32 2147483647, %v9575
    %vm9618 = vcmp.eq.f32.partialorder %v9617, 8.507059e+37
    %v9619 = vand.u32 %v9575, 2147483648
    %v9620 = vor.u32 1.1754944e-38, %v9619
    %v9621 = vsel %vm9618, %v9620, %v9616
    %v9622 = vmul.f32 1.0, %v9621
    %v9623 = vrcp.pop %v9576
    %v9624 = vmul.f32 %v9576, %v9623
    %v9625 = vsub.f32 1.0, %v9624
    %v9626 = vmul.f32 %v9623, %v9625
    %v9627 = vadd.f32 %v9623, %v9626
    %vm9628 = vweird.f32 %v9576
    %vm9629 = vweird.f32 %v9623
    %vm9630 = vmor %vm9628, %vm9629
    %v9631 = vsel %vm9630, %v9623, %v9627
    %v9632 = vand.u32 2147483647, %v9576
    %vm9633 = vcmp.eq.f32.partialorder %v9632, 8.507059e+37
    %v9634 = vand.u32 %v9576, 2147483648
    %v9635 = vor.u32 1.1754944e-38, %v9634
    %v9636 = vsel %vm9633, %v9635, %v9631
    %v9637 = vmul.f32 1.0, %v9636
    %v9638 = vrcp.pop %v9577
    %v9639 = vmul.f32 %v9577, %v9638
    %v9640 = vsub.f32 1.0, %v9639
    %v9641 = vmul.f32 %v9638, %v9640
    %v9642 = vadd.f32 %v9638, %v9641
    %vm9643 = vweird.f32 %v9577
    %vm9644 = vweird.f32 %v9638
    %vm9645 = vmor %vm9643, %vm9644
    %v9646 = vsel %vm9645, %v9638, %v9642
    %v9647 = vand.u32 2147483647, %v9577
    %vm9648 = vcmp.eq.f32.partialorder %v9647, 8.507059e+37
    %v9649 = vand.u32 %v9577, 2147483648
    %v9650 = vor.u32 1.1754944e-38, %v9649
    %v9651 = vsel %vm9648, %v9650, %v9646
    %v9652 = vmul.f32 1.0, %v9651
    %s9653 = scalar_lea.vmem [#allocation14], 256
    %vm9654 = vcmask 261122
    %9655 = vst.msk [vmem:[%s9653 - $0x2] sm:$0xfc] %vm9654, %v9592
    %9656 = vst.msk [vmem:[%s9653 + $0x6] sm:$0xff] %vm877, %v9607
    %9657 = vst.msk [vmem:[%s9653 + $0xe] sm:$0xff] %vm877, %v9622
    %9658 = vst.msk [vmem:[%s9653 + $0x16] sm:$0xff] %vm877, %v9637
    %vm9659 = vcmask 254976
    %9660 = vst.msk [vmem:[%s9653 + $0x1e] sm:$0x3] %vm9659, %v9652
    %s9661 = sld [smem:[#allocation11 + $0x80]]
    %v9662 = vstv %s9661
    %v9663 = vmul.f32 %v7148, %v9662
    %v9664 = vmul.f32 %v7149, %v9662
    %v9665 = vmul.f32 %v7150, %v9662
    %v9666 = vmul.f32 %v7151, %v9662
    %v9667 = vmul.f32 %v7152, %v9662
    %s9668 = sld [smem:[#allocation11 + $0x81]]
    %v9669 = vstv %s9668
    %v9670 = vmul.f32 %v7355, %v9669
    %v9671 = vmul.f32 %v7356, %v9669
    %v9672 = vmul.f32 %v7357, %v9669
    %v9673 = vmul.f32 %v7358, %v9669
    %v9674 = vmul.f32 %v7359, %v9669
    %9680 = vrot.lane.b32.xlu0 %v9670, 94
    %v9681 = vpop.permute.xlu0 %9680
    %9682 = vrot.lane.b32.xlu0 %v9671, 94
    %v9683 = vpop.permute.xlu0 %9682
    %9684 = vrot.lane.b32.xlu0 %v9672, 94
    %v9685 = vpop.permute.xlu0 %9684
    %9686 = vrot.lane.b32.xlu0 %v9673, 94
    %v9687 = vpop.permute.xlu0 %9686
    %9688 = vrot.lane.b32.xlu0 %v9674, 94
    %v9689 = vpop.permute.xlu0 %9688
    %v9695 = vadd.f32 %v9663, %v9681
    %v9696 = vadd.f32 %v9664, %v9683
    %v9697 = vadd.f32 %v9665, %v9685
    %v9698 = vadd.f32 %v9666, %v9687
    %v9699 = vadd.f32 %v9667, %v9689
    %s9700 = sld [smem:[#allocation11 + $0x82]]
    %v9701 = vstv %s9700
    %v9702 = vmul.f32 %v7558, %v9701
    %v9703 = vmul.f32 %v7559, %v9701
    %v9704 = vmul.f32 %v7560, %v9701
    %v9705 = vmul.f32 %v7561, %v9701
    %v9706 = vmul.f32 %v7562, %v9701
    %9712 = vrot.lane.b32.xlu0 %v9702, 60
    %v9713 = vpop.permute.xlu0 %9712
    %9714 = vrot.lane.b32.xlu0 %v9703, 60
    %v9715 = vpop.permute.xlu0 %9714
    %9716 = vrot.lane.b32.xlu0 %v9704, 60
    %v9717 = vpop.permute.xlu0 %9716
    %9718 = vrot.lane.b32.xlu0 %v9705, 60
    %v9719 = vpop.permute.xlu0 %9718
    %9720 = vrot.lane.b32.xlu0 %v9706, 60
    %v9721 = vpop.permute.xlu0 %9720
    %v9727 = vadd.f32 %v9695, %v9713
    %v9728 = vadd.f32 %v9696, %v9715
    %v9729 = vadd.f32 %v9697, %v9717
    %v9730 = vadd.f32 %v9698, %v9719
    %v9731 = vadd.f32 %v9699, %v9721
    %s9732 = sld [smem:[#allocation11 + $0x83]]
    %v9733 = vstv %s9732
    %v9734 = vmul.f32 %v7886, %v9733
    %v9735 = vmul.f32 %v7887, %v9733
    %v9736 = vmul.f32 %v7888, %v9733
    %v9737 = vmul.f32 %v7889, %v9733
    %v9738 = vmul.f32 %v7890, %v9733
    %v9739 = vmul.f32 %v7891, %v9733
    %v9740 = vmul.f32 %v7892, %v9733
    %v9741 = vmul.f32 %v7893, %v9733
    %v9742 = vmul.f32 %v7894, %v9733
    %v9743 = vmul.f32 %v7895, %v9733
    %9754 = vrot.lane.b32.xlu0 %v9734, 26
    %v9755 = vpop.permute.xlu0 %9754
    %9756 = vrot.lane.b32.xlu0 %v9735, 26
    %v9757 = vpop.permute.xlu0 %9756
    %9758 = vrot.lane.b32.xlu0 %v9736, 26
    %v9759 = vpop.permute.xlu0 %9758
    %9760 = vrot.lane.b32.xlu0 %v9737, 26
    %v9761 = vpop.permute.xlu0 %9760
    %9762 = vrot.lane.b32.xlu0 %v9738, 26
    %v9763 = vpop.permute.xlu0 %9762
    %9764 = vrot.lane.b32.xlu0 %v9739, 26
    %v9765 = vpop.permute.xlu0 %9764
    %9766 = vrot.lane.b32.xlu0 %v9740, 26
    %v9767 = vpop.permute.xlu0 %9766
    %9768 = vrot.lane.b32.xlu0 %v9741, 26
    %v9769 = vpop.permute.xlu0 %9768
    %9770 = vrot.lane.b32.xlu0 %v9742, 26
    %v9771 = vpop.permute.xlu0 %9770
    %9772 = vrot.lane.b32.xlu0 %v9743, 26
    %v9773 = vpop.permute.xlu0 %9772
    %v9774 = vsel %vm7583, %v9755, %v9757
    %v9775 = vsel %vm7583, %v9759, %v9761
    %v9776 = vsel %vm7583, %v9763, %v9765
    %v9777 = vsel %vm7583, %v9767, %v9769
    %v9778 = vsel %vm7583, %v9771, %v9773
    %v9784 = vadd.f32 %v9727, %v9774
    %v9785 = vadd.f32 %v9728, %v9775
    %v9786 = vadd.f32 %v9729, %v9776
    %v9787 = vadd.f32 %v9730, %v9777
    %v9788 = vadd.f32 %v9731, %v9778
    %s9789 = sld [smem:[#allocation12 + $0x1]]
    %v9790 = vstv %s9789
    %v9791 = vadd.f32 %v9784, %v9790
    %v9792 = vadd.f32 %v9785, %v9790
    %v9793 = vadd.f32 %v9786, %v9790
    %v9794 = vadd.f32 %v9787, %v9790
    %v9795 = vadd.f32 %v9788, %v9790
    %v9796 = vsub.f32 0.0, %v9791
    %v9797 = vsub.f32 0.0, %v9792
    %v9798 = vsub.f32 0.0, %v9793
    %v9799 = vsub.f32 0.0, %v9794
    %v9800 = vsub.f32 0.0, %v9795
    %v9801 = vmul.f32 %v9796, 1.442695
    %v9802 = vpow.pop %v9801
    %v9803 = vmul.f32 %v9797, 1.442695
    %v9804 = vpow.pop %v9803
    %v9805 = vmul.f32 %v9798, 1.442695
    %v9806 = vpow.pop %v9805
    %v9807 = vmul.f32 %v9799, 1.442695
    %v9808 = vpow.pop %v9807
    %v9809 = vmul.f32 %v9800, 1.442695
    %v9810 = vpow.pop %v9809
    %v9811 = vadd.f32 %v9802, 1.0
    %v9812 = vadd.f32 %v9804, 1.0
    %v9813 = vadd.f32 %v9806, 1.0
    %v9814 = vadd.f32 %v9808, 1.0
    %v9815 = vadd.f32 %v9810, 1.0
    %v9816 = vrcp.pop %v9811
    %v9817 = vmul.f32 %v9811, %v9816
    %v9818 = vsub.f32 1.0, %v9817
    %v9819 = vmul.f32 %v9816, %v9818
    %v9820 = vadd.f32 %v9816, %v9819
    %vm9821 = vweird.f32 %v9811
    %vm9822 = vweird.f32 %v9816
    %vm9823 = vmor %vm9821, %vm9822
    %v9824 = vsel %vm9823, %v9816, %v9820
    %v9825 = vand.u32 2147483647, %v9811
    %vm9826 = vcmp.eq.f32.partialorder %v9825, 8.507059e+37
    %v9827 = vand.u32 %v9811, 2147483648
    %v9828 = vor.u32 1.1754944e-38, %v9827
    %v9829 = vsel %vm9826, %v9828, %v9824
    %v9830 = vmul.f32 1.0, %v9829
    %v9831 = vrcp.pop %v9812
    %v9832 = vmul.f32 %v9812, %v9831
    %v9833 = vsub.f32 1.0, %v9832
    %v9834 = vmul.f32 %v9831, %v9833
    %v9835 = vadd.f32 %v9831, %v9834
    %vm9836 = vweird.f32 %v9812
    %vm9837 = vweird.f32 %v9831
    %vm9838 = vmor %vm9836, %vm9837
    %v9839 = vsel %vm9838, %v9831, %v9835
    %v9840 = vand.u32 2147483647, %v9812
    %vm9841 = vcmp.eq.f32.partialorder %v9840, 8.507059e+37
    %v9842 = vand.u32 %v9812, 2147483648
    %v9843 = vor.u32 1.1754944e-38, %v9842
    %v9844 = vsel %vm9841, %v9843, %v9839
    %v9845 = vmul.f32 1.0, %v9844
    %v9846 = vrcp.pop %v9813
    %v9847 = vmul.f32 %v9813, %v9846
    %v9848 = vsub.f32 1.0, %v9847
    %v9849 = vmul.f32 %v9846, %v9848
    %v9850 = vadd.f32 %v9846, %v9849
    %vm9851 = vweird.f32 %v9813
    %vm9852 = vweird.f32 %v9846
    %vm9853 = vmor %vm9851, %vm9852
    %v9854 = vsel %vm9853, %v9846, %v9850
    %v9855 = vand.u32 2147483647, %v9813
    %vm9856 = vcmp.eq.f32.partialorder %v9855, 8.507059e+37
    %v9857 = vand.u32 %v9813, 2147483648
    %v9858 = vor.u32 1.1754944e-38, %v9857
    %v9859 = vsel %vm9856, %v9858, %v9854
    %v9860 = vmul.f32 1.0, %v9859
    %v9861 = vrcp.pop %v9814
    %v9862 = vmul.f32 %v9814, %v9861
    %v9863 = vsub.f32 1.0, %v9862
    %v9864 = vmul.f32 %v9861, %v9863
    %v9865 = vadd.f32 %v9861, %v9864
    %vm9866 = vweird.f32 %v9814
    %vm9867 = vweird.f32 %v9861
    %vm9868 = vmor %vm9866, %vm9867
    %v9869 = vsel %vm9868, %v9861, %v9865
    %v9870 = vand.u32 2147483647, %v9814
    %vm9871 = vcmp.eq.f32.partialorder %v9870, 8.507059e+37
    %v9872 = vand.u32 %v9814, 2147483648
    %v9873 = vor.u32 1.1754944e-38, %v9872
    %v9874 = vsel %vm9871, %v9873, %v9869
    %v9875 = vmul.f32 1.0, %v9874
    %v9876 = vrcp.pop %v9815
    %v9877 = vmul.f32 %v9815, %v9876
    %v9878 = vsub.f32 1.0, %v9877
    %v9879 = vmul.f32 %v9876, %v9878
    %v9880 = vadd.f32 %v9876, %v9879
    %vm9881 = vweird.f32 %v9815
    %vm9882 = vweird.f32 %v9876
    %vm9883 = vmor %vm9881, %vm9882
    %v9884 = vsel %vm9883, %v9876, %v9880
    %v9885 = vand.u32 2147483647, %v9815
    %vm9886 = vcmp.eq.f32.partialorder %v9885, 8.507059e+37
    %v9887 = vand.u32 %v9815, 2147483648
    %v9888 = vor.u32 1.1754944e-38, %v9887
    %v9889 = vsel %vm9886, %v9888, %v9884
    %v9890 = vmul.f32 1.0, %v9889
    %s9891 = scalar_lea.vmem [#allocation14], 288
    %9892 = vst.msk [vmem:[%s9891 - $0x2] sm:$0xfc] %vm9654, %v9830
    %9893 = vst.msk [vmem:[%s9891 + $0x6] sm:$0xff] %vm877, %v9845
    %9894 = vst.msk [vmem:[%s9891 + $0xe] sm:$0xff] %vm877, %v9860
    %9895 = vst.msk [vmem:[%s9891 + $0x16] sm:$0xff] %vm877, %v9875
    %9896 = vst.msk [vmem:[%s9891 + $0x1e] sm:$0x3] %vm9659, %v9890
    %s9897 = sld [smem:[#allocation11 + $0x100]]
    %v9898 = vstv %s9897
    %v9899 = vmul.f32 %v7148, %v9898
    %v9900 = vmul.f32 %v7149, %v9898
    %v9901 = vmul.f32 %v7150, %v9898
    %v9902 = vmul.f32 %v7151, %v9898
    %v9903 = vmul.f32 %v7152, %v9898
    %s9904 = sld [smem:[#allocation11 + $0x101]]
    %v9905 = vstv %s9904
    %v9906 = vmul.f32 %v7355, %v9905
    %v9907 = vmul.f32 %v7356, %v9905
    %v9908 = vmul.f32 %v7357, %v9905
    %v9909 = vmul.f32 %v7358, %v9905
    %v9910 = vmul.f32 %v7359, %v9905
    %9916 = vrot.lane.b32.xlu0 %v9906, 94
    %v9917 = vpop.permute.xlu0 %9916
    %9918 = vrot.lane.b32.xlu0 %v9907, 94
    %v9919 = vpop.permute.xlu0 %9918
    %9920 = vrot.lane.b32.xlu0 %v9908, 94
    %v9921 = vpop.permute.xlu0 %9920
    %9922 = vrot.lane.b32.xlu0 %v9909, 94
    %v9923 = vpop.permute.xlu0 %9922
    %9924 = vrot.lane.b32.xlu0 %v9910, 94
    %v9925 = vpop.permute.xlu0 %9924
    %v9931 = vadd.f32 %v9899, %v9917
    %v9932 = vadd.f32 %v9900, %v9919
    %v9933 = vadd.f32 %v9901, %v9921
    %v9934 = vadd.f32 %v9902, %v9923
    %v9935 = vadd.f32 %v9903, %v9925
    %s9936 = sld [smem:[#allocation11 + $0x102]]
    %v9937 = vstv %s9936
    %v9938 = vmul.f32 %v7558, %v9937
    %v9939 = vmul.f32 %v7559, %v9937
    %v9940 = vmul.f32 %v7560, %v9937
    %v9941 = vmul.f32 %v7561, %v9937
    %v9942 = vmul.f32 %v7562, %v9937
    %9948 = vrot.lane.b32.xlu0 %v9938, 60
    %v9949 = vpop.permute.xlu0 %9948
    %9950 = vrot.lane.b32.xlu0 %v9939, 60
    %v9951 = vpop.permute.xlu0 %9950
    %9952 = vrot.lane.b32.xlu0 %v9940, 60
    %v9953 = vpop.permute.xlu0 %9952
    %9954 = vrot.lane.b32.xlu0 %v9941, 60
    %v9955 = vpop.permute.xlu0 %9954
    %9956 = vrot.lane.b32.xlu0 %v9942, 60
    %v9957 = vpop.permute.xlu0 %9956
    %v9963 = vadd.f32 %v9931, %v9949
    %v9964 = vadd.f32 %v9932, %v9951
    %v9965 = vadd.f32 %v9933, %v9953
    %v9966 = vadd.f32 %v9934, %v9955
    %v9967 = vadd.f32 %v9935, %v9957
    %s9968 = sld [smem:[#allocation11 + $0x103]]
    %v9969 = vstv %s9968
    %v9970 = vmul.f32 %v7886, %v9969
    %v9971 = vmul.f32 %v7887, %v9969
    %v9972 = vmul.f32 %v7888, %v9969
    %v9973 = vmul.f32 %v7889, %v9969
    %v9974 = vmul.f32 %v7890, %v9969
    %v9975 = vmul.f32 %v7891, %v9969
    %v9976 = vmul.f32 %v7892, %v9969
    %v9977 = vmul.f32 %v7893, %v9969
    %v9978 = vmul.f32 %v7894, %v9969
    %v9979 = vmul.f32 %v7895, %v9969
    %9990 = vrot.lane.b32.xlu0 %v9970, 26
    %v9991 = vpop.permute.xlu0 %9990
    %9992 = vrot.lane.b32.xlu0 %v9971, 26
    %v9993 = vpop.permute.xlu0 %9992
    %9994 = vrot.lane.b32.xlu0 %v9972, 26
    %v9995 = vpop.permute.xlu0 %9994
    %9996 = vrot.lane.b32.xlu0 %v9973, 26
    %v9997 = vpop.permute.xlu0 %9996
    %9998 = vrot.lane.b32.xlu0 %v9974, 26
    %v9999 = vpop.permute.xlu0 %9998
    %10000 = vrot.lane.b32.xlu0 %v9975, 26
    %v10001 = vpop.permute.xlu0 %10000
    %10002 = vrot.lane.b32.xlu0 %v9976, 26
    %v10003 = vpop.permute.xlu0 %10002
    %10004 = vrot.lane.b32.xlu0 %v9977, 26
    %v10005 = vpop.permute.xlu0 %10004
    %10006 = vrot.lane.b32.xlu0 %v9978, 26
    %v10007 = vpop.permute.xlu0 %10006
    %10008 = vrot.lane.b32.xlu0 %v9979, 26
    %v10009 = vpop.permute.xlu0 %10008
    %v10010 = vsel %vm7583, %v9991, %v9993
    %v10011 = vsel %vm7583, %v9995, %v9997
    %v10012 = vsel %vm7583, %v9999, %v10001
    %v10013 = vsel %vm7583, %v10003, %v10005
    %v10014 = vsel %vm7583, %v10007, %v10009
    %v10020 = vadd.f32 %v9963, %v10010
    %v10021 = vadd.f32 %v9964, %v10011
    %v10022 = vadd.f32 %v9965, %v10012
    %v10023 = vadd.f32 %v9966, %v10013
    %v10024 = vadd.f32 %v9967, %v10014
    %s10025 = sld [smem:[#allocation12 + $0x2]]
    %v10026 = vstv %s10025
    %v10027 = vadd.f32 %v10020, %v10026
    %v10028 = vadd.f32 %v10021, %v10026
    %v10029 = vadd.f32 %v10022, %v10026
    %v10030 = vadd.f32 %v10023, %v10026
    %v10031 = vadd.f32 %v10024, %v10026
    %v10032 = vsub.f32 0.0, %v10027
    %v10033 = vsub.f32 0.0, %v10028
    %v10034 = vsub.f32 0.0, %v10029
    %v10035 = vsub.f32 0.0, %v10030
    %v10036 = vsub.f32 0.0, %v10031
    %v10037 = vmul.f32 %v10032, 1.442695
    %v10038 = vpow.pop %v10037
    %v10039 = vmul.f32 %v10033, 1.442695
    %v10040 = vpow.pop %v10039
    %v10041 = vmul.f32 %v10034, 1.442695
    %v10042 = vpow.pop %v10041
    %v10043 = vmul.f32 %v10035, 1.442695
    %v10044 = vpow.pop %v10043
    %v10045 = vmul.f32 %v10036, 1.442695
    %v10046 = vpow.pop %v10045
    %v10047 = vadd.f32 %v10038, 1.0
    %v10048 = vadd.f32 %v10040, 1.0
    %v10049 = vadd.f32 %v10042, 1.0
    %v10050 = vadd.f32 %v10044, 1.0
    %v10051 = vadd.f32 %v10046, 1.0
    %v10052 = vrcp.pop %v10047
    %v10053 = vmul.f32 %v10047, %v10052
    %v10054 = vsub.f32 1.0, %v10053
    %v10055 = vmul.f32 %v10052, %v10054
    %v10056 = vadd.f32 %v10052, %v10055
    %vm10057 = vweird.f32 %v10047
    %vm10058 = vweird.f32 %v10052
    %vm10059 = vmor %vm10057, %vm10058
    %v10060 = vsel %vm10059, %v10052, %v10056
    %v10061 = vand.u32 2147483647, %v10047
    %vm10062 = vcmp.eq.f32.partialorder %v10061, 8.507059e+37
    %v10063 = vand.u32 %v10047, 2147483648
    %v10064 = vor.u32 1.1754944e-38, %v10063
    %v10065 = vsel %vm10062, %v10064, %v10060
    %v10066 = vmul.f32 1.0, %v10065
    %v10067 = vrcp.pop %v10048
    %v10068 = vmul.f32 %v10048, %v10067
    %v10069 = vsub.f32 1.0, %v10068
    %v10070 = vmul.f32 %v10067, %v10069
    %v10071 = vadd.f32 %v10067, %v10070
    %vm10072 = vweird.f32 %v10048
    %vm10073 = vweird.f32 %v10067
    %vm10074 = vmor %vm10072, %vm10073
    %v10075 = vsel %vm10074, %v10067, %v10071
    %v10076 = vand.u32 2147483647, %v10048
    %vm10077 = vcmp.eq.f32.partialorder %v10076, 8.507059e+37
    %v10078 = vand.u32 %v10048, 2147483648
    %v10079 = vor.u32 1.1754944e-38, %v10078
    %v10080 = vsel %vm10077, %v10079, %v10075
    %v10081 = vmul.f32 1.0, %v10080
    %v10082 = vrcp.pop %v10049
    %v10083 = vmul.f32 %v10049, %v10082
    %v10084 = vsub.f32 1.0, %v10083
    %v10085 = vmul.f32 %v10082, %v10084
    %v10086 = vadd.f32 %v10082, %v10085
    %vm10087 = vweird.f32 %v10049
    %vm10088 = vweird.f32 %v10082
    %vm10089 = vmor %vm10087, %vm10088
    %v10090 = vsel %vm10089, %v10082, %v10086
    %v10091 = vand.u32 2147483647, %v10049
    %vm10092 = vcmp.eq.f32.partialorder %v10091, 8.507059e+37
    %v10093 = vand.u32 %v10049, 2147483648
    %v10094 = vor.u32 1.1754944e-38, %v10093
    %v10095 = vsel %vm10092, %v10094, %v10090
    %v10096 = vmul.f32 1.0, %v10095
    %v10097 = vrcp.pop %v10050
    %v10098 = vmul.f32 %v10050, %v10097
    %v10099 = vsub.f32 1.0, %v10098
    %v10100 = vmul.f32 %v10097, %v10099
    %v10101 = vadd.f32 %v10097, %v10100
    %vm10102 = vweird.f32 %v10050
    %vm10103 = vweird.f32 %v10097
    %vm10104 = vmor %vm10102, %vm10103
    %v10105 = vsel %vm10104, %v10097, %v10101
    %v10106 = vand.u32 2147483647, %v10050
    %vm10107 = vcmp.eq.f32.partialorder %v10106, 8.507059e+37
    %v10108 = vand.u32 %v10050, 2147483648
    %v10109 = vor.u32 1.1754944e-38, %v10108
    %v10110 = vsel %vm10107, %v10109, %v10105
    %v10111 = vmul.f32 1.0, %v10110
    %v10112 = vrcp.pop %v10051
    %v10113 = vmul.f32 %v10051, %v10112
    %v10114 = vsub.f32 1.0, %v10113
    %v10115 = vmul.f32 %v10112, %v10114
    %v10116 = vadd.f32 %v10112, %v10115
    %vm10117 = vweird.f32 %v10051
    %vm10118 = vweird.f32 %v10112
    %vm10119 = vmor %vm10117, %vm10118
    %v10120 = vsel %vm10119, %v10112, %v10116
    %v10121 = vand.u32 2147483647, %v10051
    %vm10122 = vcmp.eq.f32.partialorder %v10121, 8.507059e+37
    %v10123 = vand.u32 %v10051, 2147483648
    %v10124 = vor.u32 1.1754944e-38, %v10123
    %v10125 = vsel %vm10122, %v10124, %v10120
    %v10126 = vmul.f32 1.0, %v10125
    %s10127 = scalar_lea.vmem [#allocation14], 320
    %10128 = vst.msk [vmem:[%s10127 - $0x2] sm:$0xfc] %vm9654, %v10066
    %10129 = vst.msk [vmem:[%s10127 + $0x6] sm:$0xff] %vm877, %v10081
    %10130 = vst.msk [vmem:[%s10127 + $0xe] sm:$0xff] %vm877, %v10096
    %10131 = vst.msk [vmem:[%s10127 + $0x16] sm:$0xff] %vm877, %v10111
    %10132 = vst.msk [vmem:[%s10127 + $0x1e] sm:$0x3] %vm9659, %v10126
    %s10133 = sld [smem:[#allocation11 + $0x180]]
    %v10134 = vstv %s10133
    %v10135 = vmul.f32 %v7148, %v10134
    %v10136 = vmul.f32 %v7149, %v10134
    %v10137 = vmul.f32 %v7150, %v10134
    %v10138 = vmul.f32 %v7151, %v10134
    %v10139 = vmul.f32 %v7152, %v10134
    %s10140 = sld [smem:[#allocation11 + $0x181]]
    %v10141 = vstv %s10140
    %v10142 = vmul.f32 %v7355, %v10141
    %v10143 = vmul.f32 %v7356, %v10141
    %v10144 = vmul.f32 %v7357, %v10141
    %v10145 = vmul.f32 %v7358, %v10141
    %v10146 = vmul.f32 %v7359, %v10141
    %10152 = vrot.lane.b32.xlu0 %v10142, 94
    %v10153 = vpop.permute.xlu0 %10152
    %10154 = vrot.lane.b32.xlu0 %v10143, 94
    %v10155 = vpop.permute.xlu0 %10154
    %10156 = vrot.lane.b32.xlu0 %v10144, 94
    %v10157 = vpop.permute.xlu0 %10156
    %10158 = vrot.lane.b32.xlu0 %v10145, 94
    %v10159 = vpop.permute.xlu0 %10158
    %10160 = vrot.lane.b32.xlu0 %v10146, 94
    %v10161 = vpop.permute.xlu0 %10160
    %v10167 = vadd.f32 %v10135, %v10153
    %v10168 = vadd.f32 %v10136, %v10155
    %v10169 = vadd.f32 %v10137, %v10157
    %v10170 = vadd.f32 %v10138, %v10159
    %v10171 = vadd.f32 %v10139, %v10161
    %s10172 = sld [smem:[#allocation11 + $0x182]]
    %v10173 = vstv %s10172
    %v10174 = vmul.f32 %v7558, %v10173
    %v10175 = vmul.f32 %v7559, %v10173
    %v10176 = vmul.f32 %v7560, %v10173
    %v10177 = vmul.f32 %v7561, %v10173
    %v10178 = vmul.f32 %v7562, %v10173
    %10184 = vrot.lane.b32.xlu0 %v10174, 60
    %v10185 = vpop.permute.xlu0 %10184
    %10186 = vrot.lane.b32.xlu0 %v10175, 60
    %v10187 = vpop.permute.xlu0 %10186
    %10188 = vrot.lane.b32.xlu0 %v10176, 60
    %v10189 = vpop.permute.xlu0 %10188
    %10190 = vrot.lane.b32.xlu0 %v10177, 60
    %v10191 = vpop.permute.xlu0 %10190
    %10192 = vrot.lane.b32.xlu0 %v10178, 60
    %v10193 = vpop.permute.xlu0 %10192
    %v10199 = vadd.f32 %v10167, %v10185
    %v10200 = vadd.f32 %v10168, %v10187
    %v10201 = vadd.f32 %v10169, %v10189
    %v10202 = vadd.f32 %v10170, %v10191
    %v10203 = vadd.f32 %v10171, %v10193
    %s10204 = sld [smem:[#allocation11 + $0x183]]
    %v10205 = vstv %s10204
    %v10206 = vmul.f32 %v7886, %v10205
    %v10207 = vmul.f32 %v7887, %v10205
    %v10208 = vmul.f32 %v7888, %v10205
    %v10209 = vmul.f32 %v7889, %v10205
    %v10210 = vmul.f32 %v7890, %v10205
    %v10211 = vmul.f32 %v7891, %v10205
    %v10212 = vmul.f32 %v7892, %v10205
    %v10213 = vmul.f32 %v7893, %v10205
    %v10214 = vmul.f32 %v7894, %v10205
    %v10215 = vmul.f32 %v7895, %v10205
    %10226 = vrot.lane.b32.xlu0 %v10206, 26
    %v10227 = vpop.permute.xlu0 %10226
    %10228 = vrot.lane.b32.xlu0 %v10207, 26
    %v10229 = vpop.permute.xlu0 %10228
    %10230 = vrot.lane.b32.xlu0 %v10208, 26
    %v10231 = vpop.permute.xlu0 %10230
    %10232 = vrot.lane.b32.xlu0 %v10209, 26
    %v10233 = vpop.permute.xlu0 %10232
    %10234 = vrot.lane.b32.xlu0 %v10210, 26
    %v10235 = vpop.permute.xlu0 %10234
    %10236 = vrot.lane.b32.xlu0 %v10211, 26
    %v10237 = vpop.permute.xlu0 %10236
    %10238 = vrot.lane.b32.xlu0 %v10212, 26
    %v10239 = vpop.permute.xlu0 %10238
    %10240 = vrot.lane.b32.xlu0 %v10213, 26
    %v10241 = vpop.permute.xlu0 %10240
    %10242 = vrot.lane.b32.xlu0 %v10214, 26
    %v10243 = vpop.permute.xlu0 %10242
    %10244 = vrot.lane.b32.xlu0 %v10215, 26
    %v10245 = vpop.permute.xlu0 %10244
    %v10246 = vsel %vm7583, %v10227, %v10229
    %v10247 = vsel %vm7583, %v10231, %v10233
    %v10248 = vsel %vm7583, %v10235, %v10237
    %v10249 = vsel %vm7583, %v10239, %v10241
    %v10250 = vsel %vm7583, %v10243, %v10245
    %v10256 = vadd.f32 %v10199, %v10246
    %v10257 = vadd.f32 %v10200, %v10247
    %v10258 = vadd.f32 %v10201, %v10248
    %v10259 = vadd.f32 %v10202, %v10249
    %v10260 = vadd.f32 %v10203, %v10250
    %s10261 = sld [smem:[#allocation12 + $0x3]]
    %v10262 = vstv %s10261
    %v10263 = vadd.f32 %v10256, %v10262
    %v10264 = vadd.f32 %v10257, %v10262
    %v10265 = vadd.f32 %v10258, %v10262
    %v10266 = vadd.f32 %v10259, %v10262
    %v10267 = vadd.f32 %v10260, %v10262
    %v10268 = vsub.f32 0.0, %v10263
    %v10269 = vsub.f32 0.0, %v10264
    %v10270 = vsub.f32 0.0, %v10265
    %v10271 = vsub.f32 0.0, %v10266
    %v10272 = vsub.f32 0.0, %v10267
    %v10273 = vmul.f32 %v10268, 1.442695
    %v10274 = vpow.pop %v10273
    %v10275 = vmul.f32 %v10269, 1.442695
    %v10276 = vpow.pop %v10275
    %v10277 = vmul.f32 %v10270, 1.442695
    %v10278 = vpow.pop %v10277
    %v10279 = vmul.f32 %v10271, 1.442695
    %v10280 = vpow.pop %v10279
    %v10281 = vmul.f32 %v10272, 1.442695
    %v10282 = vpow.pop %v10281
    %v10283 = vadd.f32 %v10274, 1.0
    %v10284 = vadd.f32 %v10276, 1.0
    %v10285 = vadd.f32 %v10278, 1.0
    %v10286 = vadd.f32 %v10280, 1.0
    %v10287 = vadd.f32 %v10282, 1.0
    %v10288 = vrcp.pop %v10283
    %v10289 = vmul.f32 %v10283, %v10288
    %v10290 = vsub.f32 1.0, %v10289
    %v10291 = vmul.f32 %v10288, %v10290
    %v10292 = vadd.f32 %v10288, %v10291
    %vm10293 = vweird.f32 %v10283
    %vm10294 = vweird.f32 %v10288
    %vm10295 = vmor %vm10293, %vm10294
    %v10296 = vsel %vm10295, %v10288, %v10292
    %v10297 = vand.u32 2147483647, %v10283
    %vm10298 = vcmp.eq.f32.partialorder %v10297, 8.507059e+37
    %v10299 = vand.u32 %v10283, 2147483648
    %v10300 = vor.u32 1.1754944e-38, %v10299
    %v10301 = vsel %vm10298, %v10300, %v10296
    %v10302 = vmul.f32 1.0, %v10301
    %v10303 = vrcp.pop %v10284
    %v10304 = vmul.f32 %v10284, %v10303
    %v10305 = vsub.f32 1.0, %v10304
    %v10306 = vmul.f32 %v10303, %v10305
    %v10307 = vadd.f32 %v10303, %v10306
    %vm10308 = vweird.f32 %v10284
    %vm10309 = vweird.f32 %v10303
    %vm10310 = vmor %vm10308, %vm10309
    %v10311 = vsel %vm10310, %v10303, %v10307
    %v10312 = vand.u32 2147483647, %v10284
    %vm10313 = vcmp.eq.f32.partialorder %v10312, 8.507059e+37
    %v10314 = vand.u32 %v10284, 2147483648
    %v10315 = vor.u32 1.1754944e-38, %v10314
    %v10316 = vsel %vm10313, %v10315, %v10311
    %v10317 = vmul.f32 1.0, %v10316
    %v10318 = vrcp.pop %v10285
    %v10319 = vmul.f32 %v10285, %v10318
    %v10320 = vsub.f32 1.0, %v10319
    %v10321 = vmul.f32 %v10318, %v10320
    %v10322 = vadd.f32 %v10318, %v10321
    %vm10323 = vweird.f32 %v10285
    %vm10324 = vweird.f32 %v10318
    %vm10325 = vmor %vm10323, %vm10324
    %v10326 = vsel %vm10325, %v10318, %v10322
    %v10327 = vand.u32 2147483647, %v10285
    %vm10328 = vcmp.eq.f32.partialorder %v10327, 8.507059e+37
    %v10329 = vand.u32 %v10285, 2147483648
    %v10330 = vor.u32 1.1754944e-38, %v10329
    %v10331 = vsel %vm10328, %v10330, %v10326
    %v10332 = vmul.f32 1.0, %v10331
    %v10333 = vrcp.pop %v10286
    %v10334 = vmul.f32 %v10286, %v10333
    %v10335 = vsub.f32 1.0, %v10334
    %v10336 = vmul.f32 %v10333, %v10335
    %v10337 = vadd.f32 %v10333, %v10336
    %vm10338 = vweird.f32 %v10286
    %vm10339 = vweird.f32 %v10333
    %vm10340 = vmor %vm10338, %vm10339
    %v10341 = vsel %vm10340, %v10333, %v10337
    %v10342 = vand.u32 2147483647, %v10286
    %vm10343 = vcmp.eq.f32.partialorder %v10342, 8.507059e+37
    %v10344 = vand.u32 %v10286, 2147483648
    %v10345 = vor.u32 1.1754944e-38, %v10344
    %v10346 = vsel %vm10343, %v10345, %v10341
    %v10347 = vmul.f32 1.0, %v10346
    %v10348 = vrcp.pop %v10287
    %v10349 = vmul.f32 %v10287, %v10348
    %v10350 = vsub.f32 1.0, %v10349
    %v10351 = vmul.f32 %v10348, %v10350
    %v10352 = vadd.f32 %v10348, %v10351
    %vm10353 = vweird.f32 %v10287
    %vm10354 = vweird.f32 %v10348
    %vm10355 = vmor %vm10353, %vm10354
    %v10356 = vsel %vm10355, %v10348, %v10352
    %v10357 = vand.u32 2147483647, %v10287
    %vm10358 = vcmp.eq.f32.partialorder %v10357, 8.507059e+37
    %v10359 = vand.u32 %v10287, 2147483648
    %v10360 = vor.u32 1.1754944e-38, %v10359
    %v10361 = vsel %vm10358, %v10360, %v10356
    %v10362 = vmul.f32 1.0, %v10361
    %s10363 = scalar_lea.vmem [#allocation14], 352
    %10364 = vst.msk [vmem:[%s10363 - $0x2] sm:$0xfc] %vm9654, %v10302
    %10365 = vst.msk [vmem:[%s10363 + $0x6] sm:$0xff] %vm877, %v10317
    %10366 = vst.msk [vmem:[%s10363 + $0xe] sm:$0xff] %vm877, %v10332
    %10367 = vst.msk [vmem:[%s10363 + $0x16] sm:$0xff] %vm877, %v10347
    %10368 = vst.msk [vmem:[%s10363 + $0x1e] sm:$0x3] %vm9659, %v10362
    %s10369 = sld [smem:[#allocation11 + $0x200]]
    %v10370 = vstv %s10369
    %v10371 = vmul.f32 %v7148, %v10370
    %v10372 = vmul.f32 %v7149, %v10370
    %v10373 = vmul.f32 %v7150, %v10370
    %v10374 = vmul.f32 %v7151, %v10370
    %v10375 = vmul.f32 %v7152, %v10370
    %s10376 = sld [smem:[#allocation11 + $0x201]]
    %v10377 = vstv %s10376
    %v10378 = vmul.f32 %v7355, %v10377
    %v10379 = vmul.f32 %v7356, %v10377
    %v10380 = vmul.f32 %v7357, %v10377
    %v10381 = vmul.f32 %v7358, %v10377
    %v10382 = vmul.f32 %v7359, %v10377
    %10388 = vrot.lane.b32.xlu0 %v10378, 94
    %v10389 = vpop.permute.xlu0 %10388
    %10390 = vrot.lane.b32.xlu0 %v10379, 94
    %v10391 = vpop.permute.xlu0 %10390
    %10392 = vrot.lane.b32.xlu0 %v10380, 94
    %v10393 = vpop.permute.xlu0 %10392
    %10394 = vrot.lane.b32.xlu0 %v10381, 94
    %v10395 = vpop.permute.xlu0 %10394
    %10396 = vrot.lane.b32.xlu0 %v10382, 94
    %v10397 = vpop.permute.xlu0 %10396
    %v10403 = vadd.f32 %v10371, %v10389
    %v10404 = vadd.f32 %v10372, %v10391
    %v10405 = vadd.f32 %v10373, %v10393
    %v10406 = vadd.f32 %v10374, %v10395
    %v10407 = vadd.f32 %v10375, %v10397
    %s10408 = sld [smem:[#allocation11 + $0x202]]
    %v10409 = vstv %s10408
    %v10410 = vmul.f32 %v7558, %v10409
    %v10411 = vmul.f32 %v7559, %v10409
    %v10412 = vmul.f32 %v7560, %v10409
    %v10413 = vmul.f32 %v7561, %v10409
    %v10414 = vmul.f32 %v7562, %v10409
    %10420 = vrot.lane.b32.xlu0 %v10410, 60
    %v10421 = vpop.permute.xlu0 %10420
    %10422 = vrot.lane.b32.xlu0 %v10411, 60
    %v10423 = vpop.permute.xlu0 %10422
    %10424 = vrot.lane.b32.xlu0 %v10412, 60
    %v10425 = vpop.permute.xlu0 %10424
    %10426 = vrot.lane.b32.xlu0 %v10413, 60
    %v10427 = vpop.permute.xlu0 %10426
    %10428 = vrot.lane.b32.xlu0 %v10414, 60
    %v10429 = vpop.permute.xlu0 %10428
    %v10435 = vadd.f32 %v10403, %v10421
    %v10436 = vadd.f32 %v10404, %v10423
    %v10437 = vadd.f32 %v10405, %v10425
    %v10438 = vadd.f32 %v10406, %v10427
    %v10439 = vadd.f32 %v10407, %v10429
    %s10440 = sld [smem:[#allocation11 + $0x203]]
    %v10441 = vstv %s10440
    %v10442 = vmul.f32 %v7886, %v10441
    %v10443 = vmul.f32 %v7887, %v10441
    %v10444 = vmul.f32 %v7888, %v10441
    %v10445 = vmul.f32 %v7889, %v10441
    %v10446 = vmul.f32 %v7890, %v10441
    %v10447 = vmul.f32 %v7891, %v10441
    %v10448 = vmul.f32 %v7892, %v10441
    %v10449 = vmul.f32 %v7893, %v10441
    %v10450 = vmul.f32 %v7894, %v10441
    %v10451 = vmul.f32 %v7895, %v10441
    %10462 = vrot.lane.b32.xlu0 %v10442, 26
    %v10463 = vpop.permute.xlu0 %10462
    %10464 = vrot.lane.b32.xlu0 %v10443, 26
    %v10465 = vpop.permute.xlu0 %10464
    %10466 = vrot.lane.b32.xlu0 %v10444, 26
    %v10467 = vpop.permute.xlu0 %10466
    %10468 = vrot.lane.b32.xlu0 %v10445, 26
    %v10469 = vpop.permute.xlu0 %10468
    %10470 = vrot.lane.b32.xlu0 %v10446, 26
    %v10471 = vpop.permute.xlu0 %10470
    %10472 = vrot.lane.b32.xlu0 %v10447, 26
    %v10473 = vpop.permute.xlu0 %10472
    %10474 = vrot.lane.b32.xlu0 %v10448, 26
    %v10475 = vpop.permute.xlu0 %10474
    %10476 = vrot.lane.b32.xlu0 %v10449, 26
    %v10477 = vpop.permute.xlu0 %10476
    %10478 = vrot.lane.b32.xlu0 %v10450, 26
    %v10479 = vpop.permute.xlu0 %10478
    %10480 = vrot.lane.b32.xlu0 %v10451, 26
    %v10481 = vpop.permute.xlu0 %10480
    %v10482 = vsel %vm7583, %v10463, %v10465
    %v10483 = vsel %vm7583, %v10467, %v10469
    %v10484 = vsel %vm7583, %v10471, %v10473
    %v10485 = vsel %vm7583, %v10475, %v10477
    %v10486 = vsel %vm7583, %v10479, %v10481
    %v10492 = vadd.f32 %v10435, %v10482
    %v10493 = vadd.f32 %v10436, %v10483
    %v10494 = vadd.f32 %v10437, %v10484
    %v10495 = vadd.f32 %v10438, %v10485
    %v10496 = vadd.f32 %v10439, %v10486
    %s10497 = sld [smem:[#allocation12 + $0x4]]
    %v10498 = vstv %s10497
    %v10499 = vadd.f32 %v10492, %v10498
    %v10500 = vadd.f32 %v10493, %v10498
    %v10501 = vadd.f32 %v10494, %v10498
    %v10502 = vadd.f32 %v10495, %v10498
    %v10503 = vadd.f32 %v10496, %v10498
    %v10504 = vsub.f32 0.0, %v10499
    %v10505 = vsub.f32 0.0, %v10500
    %v10506 = vsub.f32 0.0, %v10501
    %v10507 = vsub.f32 0.0, %v10502
    %v10508 = vsub.f32 0.0, %v10503
    %v10509 = vmul.f32 %v10504, 1.442695
    %v10510 = vpow.pop %v10509
    %v10511 = vmul.f32 %v10505, 1.442695
    %v10512 = vpow.pop %v10511
    %v10513 = vmul.f32 %v10506, 1.442695
    %v10514 = vpow.pop %v10513
    %v10515 = vmul.f32 %v10507, 1.442695
    %v10516 = vpow.pop %v10515
    %v10517 = vmul.f32 %v10508, 1.442695
    %v10518 = vpow.pop %v10517
    %v10519 = vadd.f32 %v10510, 1.0
    %v10520 = vadd.f32 %v10512, 1.0
    %v10521 = vadd.f32 %v10514, 1.0
    %v10522 = vadd.f32 %v10516, 1.0
    %v10523 = vadd.f32 %v10518, 1.0
    %v10524 = vrcp.pop %v10519
    %v10525 = vmul.f32 %v10519, %v10524
    %v10526 = vsub.f32 1.0, %v10525
    %v10527 = vmul.f32 %v10524, %v10526
    %v10528 = vadd.f32 %v10524, %v10527
    %vm10529 = vweird.f32 %v10519
    %vm10530 = vweird.f32 %v10524
    %vm10531 = vmor %vm10529, %vm10530
    %v10532 = vsel %vm10531, %v10524, %v10528
    %v10533 = vand.u32 2147483647, %v10519
    %vm10534 = vcmp.eq.f32.partialorder %v10533, 8.507059e+37
    %v10535 = vand.u32 %v10519, 2147483648
    %v10536 = vor.u32 1.1754944e-38, %v10535
    %v10537 = vsel %vm10534, %v10536, %v10532
    %v10538 = vmul.f32 1.0, %v10537
    %v10539 = vrcp.pop %v10520
    %v10540 = vmul.f32 %v10520, %v10539
    %v10541 = vsub.f32 1.0, %v10540
    %v10542 = vmul.f32 %v10539, %v10541
    %v10543 = vadd.f32 %v10539, %v10542
    %vm10544 = vweird.f32 %v10520
    %vm10545 = vweird.f32 %v10539
    %vm10546 = vmor %vm10544, %vm10545
    %v10547 = vsel %vm10546, %v10539, %v10543
    %v10548 = vand.u32 2147483647, %v10520
    %vm10549 = vcmp.eq.f32.partialorder %v10548, 8.507059e+37
    %v10550 = vand.u32 %v10520, 2147483648
    %v10551 = vor.u32 1.1754944e-38, %v10550
    %v10552 = vsel %vm10549, %v10551, %v10547
    %v10553 = vmul.f32 1.0, %v10552
    %v10554 = vrcp.pop %v10521
    %v10555 = vmul.f32 %v10521, %v10554
    %v10556 = vsub.f32 1.0, %v10555
    %v10557 = vmul.f32 %v10554, %v10556
    %v10558 = vadd.f32 %v10554, %v10557
    %vm10559 = vweird.f32 %v10521
    %vm10560 = vweird.f32 %v10554
    %vm10561 = vmor %vm10559, %vm10560
    %v10562 = vsel %vm10561, %v10554, %v10558
    %v10563 = vand.u32 2147483647, %v10521
    %vm10564 = vcmp.eq.f32.partialorder %v10563, 8.507059e+37
    %v10565 = vand.u32 %v10521, 2147483648
    %v10566 = vor.u32 1.1754944e-38, %v10565
    %v10567 = vsel %vm10564, %v10566, %v10562
    %v10568 = vmul.f32 1.0, %v10567
    %v10569 = vrcp.pop %v10522
    %v10570 = vmul.f32 %v10522, %v10569
    %v10571 = vsub.f32 1.0, %v10570
    %v10572 = vmul.f32 %v10569, %v10571
    %v10573 = vadd.f32 %v10569, %v10572
    %vm10574 = vweird.f32 %v10522
    %vm10575 = vweird.f32 %v10569
    %vm10576 = vmor %vm10574, %vm10575
    %v10577 = vsel %vm10576, %v10569, %v10573
    %v10578 = vand.u32 2147483647, %v10522
    %vm10579 = vcmp.eq.f32.partialorder %v10578, 8.507059e+37
    %v10580 = vand.u32 %v10522, 2147483648
    %v10581 = vor.u32 1.1754944e-38, %v10580
    %v10582 = vsel %vm10579, %v10581, %v10577
    %v10583 = vmul.f32 1.0, %v10582
    %v10584 = vrcp.pop %v10523
    %v10585 = vmul.f32 %v10523, %v10584
    %v10586 = vsub.f32 1.0, %v10585
    %v10587 = vmul.f32 %v10584, %v10586
    %v10588 = vadd.f32 %v10584, %v10587
    %vm10589 = vweird.f32 %v10523
    %vm10590 = vweird.f32 %v10584
    %vm10591 = vmor %vm10589, %vm10590
    %v10592 = vsel %vm10591, %v10584, %v10588
    %v10593 = vand.u32 2147483647, %v10523
    %vm10594 = vcmp.eq.f32.partialorder %v10593, 8.507059e+37
    %v10595 = vand.u32 %v10523, 2147483648
    %v10596 = vor.u32 1.1754944e-38, %v10595
    %v10597 = vsel %vm10594, %v10596, %v10592
    %v10598 = vmul.f32 1.0, %v10597
    %s10599 = scalar_lea.vmem [#allocation14], 384
    %10600 = vst.msk [vmem:[%s10599 - $0x2] sm:$0xfc] %vm9654, %v10538
    %10601 = vst.msk [vmem:[%s10599 + $0x6] sm:$0xff] %vm877, %v10553
    %10602 = vst.msk [vmem:[%s10599 + $0xe] sm:$0xff] %vm877, %v10568
    %10603 = vst.msk [vmem:[%s10599 + $0x16] sm:$0xff] %vm877, %v10583
    %10604 = vst.msk [vmem:[%s10599 + $0x1e] sm:$0x3] %vm9659, %v10598
    %s10605 = sld [smem:[#allocation11 + $0x280]]
    %v10606 = vstv %s10605
    %v10607 = vmul.f32 %v7148, %v10606
    %v10608 = vmul.f32 %v7149, %v10606
    %v10609 = vmul.f32 %v7150, %v10606
    %v10610 = vmul.f32 %v7151, %v10606
    %v10611 = vmul.f32 %v7152, %v10606
    %s10612 = sld [smem:[#allocation11 + $0x281]]
    %v10613 = vstv %s10612
    %v10614 = vmul.f32 %v7355, %v10613
    %v10615 = vmul.f32 %v7356, %v10613
    %v10616 = vmul.f32 %v7357, %v10613
    %v10617 = vmul.f32 %v7358, %v10613
    %v10618 = vmul.f32 %v7359, %v10613
    %10624 = vrot.lane.b32.xlu0 %v10614, 94
    %v10625 = vpop.permute.xlu0 %10624
    %10626 = vrot.lane.b32.xlu0 %v10615, 94
    %v10627 = vpop.permute.xlu0 %10626
    %10628 = vrot.lane.b32.xlu0 %v10616, 94
    %v10629 = vpop.permute.xlu0 %10628
    %10630 = vrot.lane.b32.xlu0 %v10617, 94
    %v10631 = vpop.permute.xlu0 %10630
    %10632 = vrot.lane.b32.xlu0 %v10618, 94
    %v10633 = vpop.permute.xlu0 %10632
    %v10639 = vadd.f32 %v10607, %v10625
    %v10640 = vadd.f32 %v10608, %v10627
    %v10641 = vadd.f32 %v10609, %v10629
    %v10642 = vadd.f32 %v10610, %v10631
    %v10643 = vadd.f32 %v10611, %v10633
    %s10644 = sld [smem:[#allocation11 + $0x282]]
    %v10645 = vstv %s10644
    %v10646 = vmul.f32 %v7558, %v10645
    %v10647 = vmul.f32 %v7559, %v10645
    %v10648 = vmul.f32 %v7560, %v10645
    %v10649 = vmul.f32 %v7561, %v10645
    %v10650 = vmul.f32 %v7562, %v10645
    %10656 = vrot.lane.b32.xlu0 %v10646, 60
    %v10657 = vpop.permute.xlu0 %10656
    %10658 = vrot.lane.b32.xlu0 %v10647, 60
    %v10659 = vpop.permute.xlu0 %10658
    %10660 = vrot.lane.b32.xlu0 %v10648, 60
    %v10661 = vpop.permute.xlu0 %10660
    %10662 = vrot.lane.b32.xlu0 %v10649, 60
    %v10663 = vpop.permute.xlu0 %10662
    %10664 = vrot.lane.b32.xlu0 %v10650, 60
    %v10665 = vpop.permute.xlu0 %10664
    %v10671 = vadd.f32 %v10639, %v10657
    %v10672 = vadd.f32 %v10640, %v10659
    %v10673 = vadd.f32 %v10641, %v10661
    %v10674 = vadd.f32 %v10642, %v10663
    %v10675 = vadd.f32 %v10643, %v10665
    %s10676 = sld [smem:[#allocation11 + $0x283]]
    %v10677 = vstv %s10676
    %v10678 = vmul.f32 %v7886, %v10677
    %v10679 = vmul.f32 %v7887, %v10677
    %v10680 = vmul.f32 %v7888, %v10677
    %v10681 = vmul.f32 %v7889, %v10677
    %v10682 = vmul.f32 %v7890, %v10677
    %v10683 = vmul.f32 %v7891, %v10677
    %v10684 = vmul.f32 %v7892, %v10677
    %v10685 = vmul.f32 %v7893, %v10677
    %v10686 = vmul.f32 %v7894, %v10677
    %v10687 = vmul.f32 %v7895, %v10677
    %10698 = vrot.lane.b32.xlu0 %v10678, 26
    %v10699 = vpop.permute.xlu0 %10698
    %10700 = vrot.lane.b32.xlu0 %v10679, 26
    %v10701 = vpop.permute.xlu0 %10700
    %10702 = vrot.lane.b32.xlu0 %v10680, 26
    %v10703 = vpop.permute.xlu0 %10702
    %10704 = vrot.lane.b32.xlu0 %v10681, 26
    %v10705 = vpop.permute.xlu0 %10704
    %10706 = vrot.lane.b32.xlu0 %v10682, 26
    %v10707 = vpop.permute.xlu0 %10706
    %10708 = vrot.lane.b32.xlu0 %v10683, 26
    %v10709 = vpop.permute.xlu0 %10708
    %10710 = vrot.lane.b32.xlu0 %v10684, 26
    %v10711 = vpop.permute.xlu0 %10710
    %10712 = vrot.lane.b32.xlu0 %v10685, 26
    %v10713 = vpop.permute.xlu0 %10712
    %10714 = vrot.lane.b32.xlu0 %v10686, 26
    %v10715 = vpop.permute.xlu0 %10714
    %10716 = vrot.lane.b32.xlu0 %v10687, 26
    %v10717 = vpop.permute.xlu0 %10716
    %v10718 = vsel %vm7583, %v10699, %v10701
    %v10719 = vsel %vm7583, %v10703, %v10705
    %v10720 = vsel %vm7583, %v10707, %v10709
    %v10721 = vsel %vm7583, %v10711, %v10713
    %v10722 = vsel %vm7583, %v10715, %v10717
    %v10728 = vadd.f32 %v10671, %v10718
    %v10729 = vadd.f32 %v10672, %v10719
    %v10730 = vadd.f32 %v10673, %v10720
    %v10731 = vadd.f32 %v10674, %v10721
    %v10732 = vadd.f32 %v10675, %v10722
    %s10733 = sld [smem:[#allocation12 + $0x5]]
    %v10734 = vstv %s10733
    %v10735 = vadd.f32 %v10728, %v10734
    %v10736 = vadd.f32 %v10729, %v10734
    %v10737 = vadd.f32 %v10730, %v10734
    %v10738 = vadd.f32 %v10731, %v10734
    %v10739 = vadd.f32 %v10732, %v10734
    %v10740 = vsub.f32 0.0, %v10735
    %v10741 = vsub.f32 0.0, %v10736
    %v10742 = vsub.f32 0.0, %v10737
    %v10743 = vsub.f32 0.0, %v10738
    %v10744 = vsub.f32 0.0, %v10739
    %v10745 = vmul.f32 %v10740, 1.442695
    %v10746 = vpow.pop %v10745
    %v10747 = vmul.f32 %v10741, 1.442695
    %v10748 = vpow.pop %v10747
    %v10749 = vmul.f32 %v10742, 1.442695
    %v10750 = vpow.pop %v10749
    %v10751 = vmul.f32 %v10743, 1.442695
    %v10752 = vpow.pop %v10751
    %v10753 = vmul.f32 %v10744, 1.442695
    %v10754 = vpow.pop %v10753
    %v10755 = vadd.f32 %v10746, 1.0
    %v10756 = vadd.f32 %v10748, 1.0
    %v10757 = vadd.f32 %v10750, 1.0
    %v10758 = vadd.f32 %v10752, 1.0
    %v10759 = vadd.f32 %v10754, 1.0
    %v10760 = vrcp.pop %v10755
    %v10761 = vmul.f32 %v10755, %v10760
    %v10762 = vsub.f32 1.0, %v10761
    %v10763 = vmul.f32 %v10760, %v10762
    %v10764 = vadd.f32 %v10760, %v10763
    %vm10765 = vweird.f32 %v10755
    %vm10766 = vweird.f32 %v10760
    %vm10767 = vmor %vm10765, %vm10766
    %v10768 = vsel %vm10767, %v10760, %v10764
    %v10769 = vand.u32 2147483647, %v10755
    %vm10770 = vcmp.eq.f32.partialorder %v10769, 8.507059e+37
    %v10771 = vand.u32 %v10755, 2147483648
    %v10772 = vor.u32 1.1754944e-38, %v10771
    %v10773 = vsel %vm10770, %v10772, %v10768
    %v10774 = vmul.f32 1.0, %v10773
    %v10775 = vrcp.pop %v10756
    %v10776 = vmul.f32 %v10756, %v10775
    %v10777 = vsub.f32 1.0, %v10776
    %v10778 = vmul.f32 %v10775, %v10777
    %v10779 = vadd.f32 %v10775, %v10778
    %vm10780 = vweird.f32 %v10756
    %vm10781 = vweird.f32 %v10775
    %vm10782 = vmor %vm10780, %vm10781
    %v10783 = vsel %vm10782, %v10775, %v10779
    %v10784 = vand.u32 2147483647, %v10756
    %vm10785 = vcmp.eq.f32.partialorder %v10784, 8.507059e+37
    %v10786 = vand.u32 %v10756, 2147483648
    %v10787 = vor.u32 1.1754944e-38, %v10786
    %v10788 = vsel %vm10785, %v10787, %v10783
    %v10789 = vmul.f32 1.0, %v10788
    %v10790 = vrcp.pop %v10757
    %v10791 = vmul.f32 %v10757, %v10790
    %v10792 = vsub.f32 1.0, %v10791
    %v10793 = vmul.f32 %v10790, %v10792
    %v10794 = vadd.f32 %v10790, %v10793
    %vm10795 = vweird.f32 %v10757
    %vm10796 = vweird.f32 %v10790
    %vm10797 = vmor %vm10795, %vm10796
    %v10798 = vsel %vm10797, %v10790, %v10794
    %v10799 = vand.u32 2147483647, %v10757
    %vm10800 = vcmp.eq.f32.partialorder %v10799, 8.507059e+37
    %v10801 = vand.u32 %v10757, 2147483648
    %v10802 = vor.u32 1.1754944e-38, %v10801
    %v10803 = vsel %vm10800, %v10802, %v10798
    %v10804 = vmul.f32 1.0, %v10803
    %v10805 = vrcp.pop %v10758
    %v10806 = vmul.f32 %v10758, %v10805
    %v10807 = vsub.f32 1.0, %v10806
    %v10808 = vmul.f32 %v10805, %v10807
    %v10809 = vadd.f32 %v10805, %v10808
    %vm10810 = vweird.f32 %v10758
    %vm10811 = vweird.f32 %v10805
    %vm10812 = vmor %vm10810, %vm10811
    %v10813 = vsel %vm10812, %v10805, %v10809
    %v10814 = vand.u32 2147483647, %v10758
    %vm10815 = vcmp.eq.f32.partialorder %v10814, 8.507059e+37
    %v10816 = vand.u32 %v10758, 2147483648
    %v10817 = vor.u32 1.1754944e-38, %v10816
    %v10818 = vsel %vm10815, %v10817, %v10813
    %v10819 = vmul.f32 1.0, %v10818
    %v10820 = vrcp.pop %v10759
    %v10821 = vmul.f32 %v10759, %v10820
    %v10822 = vsub.f32 1.0, %v10821
    %v10823 = vmul.f32 %v10820, %v10822
    %v10824 = vadd.f32 %v10820, %v10823
    %vm10825 = vweird.f32 %v10759
    %vm10826 = vweird.f32 %v10820
    %vm10827 = vmor %vm10825, %vm10826
    %v10828 = vsel %vm10827, %v10820, %v10824
    %v10829 = vand.u32 2147483647, %v10759
    %vm10830 = vcmp.eq.f32.partialorder %v10829, 8.507059e+37
    %v10831 = vand.u32 %v10759, 2147483648
    %v10832 = vor.u32 1.1754944e-38, %v10831
    %v10833 = vsel %vm10830, %v10832, %v10828
    %v10834 = vmul.f32 1.0, %v10833
    %s10835 = scalar_lea.vmem [#allocation14], 416
    %10836 = vst.msk [vmem:[%s10835 - $0x2] sm:$0xfc] %vm9654, %v10774
    %10837 = vst.msk [vmem:[%s10835 + $0x6] sm:$0xff] %vm877, %v10789
    %10838 = vst.msk [vmem:[%s10835 + $0xe] sm:$0xff] %vm877, %v10804
    %10839 = vst.msk [vmem:[%s10835 + $0x16] sm:$0xff] %vm877, %v10819
    %10840 = vst.msk [vmem:[%s10835 + $0x1e] sm:$0x3] %vm9659, %v10834
    %s10841 = sld [smem:[#allocation11 + $0x300]]
    %v10842 = vstv %s10841
    %v10843 = vmul.f32 %v7148, %v10842
    %v10844 = vmul.f32 %v7149, %v10842
    %v10845 = vmul.f32 %v7150, %v10842
    %v10846 = vmul.f32 %v7151, %v10842
    %v10847 = vmul.f32 %v7152, %v10842
    %s10848 = sld [smem:[#allocation11 + $0x301]]
    %v10849 = vstv %s10848
    %v10850 = vmul.f32 %v7355, %v10849
    %v10851 = vmul.f32 %v7356, %v10849
    %v10852 = vmul.f32 %v7357, %v10849
    %v10853 = vmul.f32 %v7358, %v10849
    %v10854 = vmul.f32 %v7359, %v10849
    %10860 = vrot.lane.b32.xlu0 %v10850, 94
    %v10861 = vpop.permute.xlu0 %10860
    %10862 = vrot.lane.b32.xlu0 %v10851, 94
    %v10863 = vpop.permute.xlu0 %10862
    %10864 = vrot.lane.b32.xlu0 %v10852, 94
    %v10865 = vpop.permute.xlu0 %10864
    %10866 = vrot.lane.b32.xlu0 %v10853, 94
    %v10867 = vpop.permute.xlu0 %10866
    %10868 = vrot.lane.b32.xlu0 %v10854, 94
    %v10869 = vpop.permute.xlu0 %10868
    %v10875 = vadd.f32 %v10843, %v10861
    %v10876 = vadd.f32 %v10844, %v10863
    %v10877 = vadd.f32 %v10845, %v10865
    %v10878 = vadd.f32 %v10846, %v10867
    %v10879 = vadd.f32 %v10847, %v10869
    %s10880 = sld [smem:[#allocation11 + $0x302]]
    %v10881 = vstv %s10880
    %v10882 = vmul.f32 %v7558, %v10881
    %v10883 = vmul.f32 %v7559, %v10881
    %v10884 = vmul.f32 %v7560, %v10881
    %v10885 = vmul.f32 %v7561, %v10881
    %v10886 = vmul.f32 %v7562, %v10881
    %10892 = vrot.lane.b32.xlu0 %v10882, 60
    %v10893 = vpop.permute.xlu0 %10892
    %10894 = vrot.lane.b32.xlu0 %v10883, 60
    %v10895 = vpop.permute.xlu0 %10894
    %10896 = vrot.lane.b32.xlu0 %v10884, 60
    %v10897 = vpop.permute.xlu0 %10896
    %10898 = vrot.lane.b32.xlu0 %v10885, 60
    %v10899 = vpop.permute.xlu0 %10898
    %10900 = vrot.lane.b32.xlu0 %v10886, 60
    %v10901 = vpop.permute.xlu0 %10900
    %v10907 = vadd.f32 %v10875, %v10893
    %v10908 = vadd.f32 %v10876, %v10895
    %v10909 = vadd.f32 %v10877, %v10897
    %v10910 = vadd.f32 %v10878, %v10899
    %v10911 = vadd.f32 %v10879, %v10901
    %s10912 = sld [smem:[#allocation11 + $0x303]]
    %v10913 = vstv %s10912
    %v10914 = vmul.f32 %v7886, %v10913
    %v10915 = vmul.f32 %v7887, %v10913
    %v10916 = vmul.f32 %v7888, %v10913
    %v10917 = vmul.f32 %v7889, %v10913
    %v10918 = vmul.f32 %v7890, %v10913
    %v10919 = vmul.f32 %v7891, %v10913
    %v10920 = vmul.f32 %v7892, %v10913
    %v10921 = vmul.f32 %v7893, %v10913
    %v10922 = vmul.f32 %v7894, %v10913
    %v10923 = vmul.f32 %v7895, %v10913
    %10934 = vrot.lane.b32.xlu0 %v10914, 26
    %v10935 = vpop.permute.xlu0 %10934
    %10936 = vrot.lane.b32.xlu0 %v10915, 26
    %v10937 = vpop.permute.xlu0 %10936
    %10938 = vrot.lane.b32.xlu0 %v10916, 26
    %v10939 = vpop.permute.xlu0 %10938
    %10940 = vrot.lane.b32.xlu0 %v10917, 26
    %v10941 = vpop.permute.xlu0 %10940
    %10942 = vrot.lane.b32.xlu0 %v10918, 26
    %v10943 = vpop.permute.xlu0 %10942
    %10944 = vrot.lane.b32.xlu0 %v10919, 26
    %v10945 = vpop.permute.xlu0 %10944
    %10946 = vrot.lane.b32.xlu0 %v10920, 26
    %v10947 = vpop.permute.xlu0 %10946
    %10948 = vrot.lane.b32.xlu0 %v10921, 26
    %v10949 = vpop.permute.xlu0 %10948
    %10950 = vrot.lane.b32.xlu0 %v10922, 26
    %v10951 = vpop.permute.xlu0 %10950
    %10952 = vrot.lane.b32.xlu0 %v10923, 26
    %v10953 = vpop.permute.xlu0 %10952
    %v10954 = vsel %vm7583, %v10935, %v10937
    %v10955 = vsel %vm7583, %v10939, %v10941
    %v10956 = vsel %vm7583, %v10943, %v10945
    %v10957 = vsel %vm7583, %v10947, %v10949
    %v10958 = vsel %vm7583, %v10951, %v10953
    %v10964 = vadd.f32 %v10907, %v10954
    %v10965 = vadd.f32 %v10908, %v10955
    %v10966 = vadd.f32 %v10909, %v10956
    %v10967 = vadd.f32 %v10910, %v10957
    %v10968 = vadd.f32 %v10911, %v10958
    %s10969 = sld [smem:[#allocation12 + $0x6]]
    %v10970 = vstv %s10969
    %v10971 = vadd.f32 %v10964, %v10970
    %v10972 = vadd.f32 %v10965, %v10970
    %v10973 = vadd.f32 %v10966, %v10970
    %v10974 = vadd.f32 %v10967, %v10970
    %v10975 = vadd.f32 %v10968, %v10970
    %v10976 = vsub.f32 0.0, %v10971
    %v10977 = vsub.f32 0.0, %v10972
    %v10978 = vsub.f32 0.0, %v10973
    %v10979 = vsub.f32 0.0, %v10974
    %v10980 = vsub.f32 0.0, %v10975
    %v10981 = vmul.f32 %v10976, 1.442695
    %v10982 = vpow.pop %v10981
    %v10983 = vmul.f32 %v10977, 1.442695
    %v10984 = vpow.pop %v10983
    %v10985 = vmul.f32 %v10978, 1.442695
    %v10986 = vpow.pop %v10985
    %v10987 = vmul.f32 %v10979, 1.442695
    %v10988 = vpow.pop %v10987
    %v10989 = vmul.f32 %v10980, 1.442695
    %v10990 = vpow.pop %v10989
    %v10991 = vadd.f32 %v10982, 1.0
    %v10992 = vadd.f32 %v10984, 1.0
    %v10993 = vadd.f32 %v10986, 1.0
    %v10994 = vadd.f32 %v10988, 1.0
    %v10995 = vadd.f32 %v10990, 1.0
    %v10996 = vrcp.pop %v10991
    %v10997 = vmul.f32 %v10991, %v10996
    %v10998 = vsub.f32 1.0, %v10997
    %v10999 = vmul.f32 %v10996, %v10998
    %v11000 = vadd.f32 %v10996, %v10999
    %vm11001 = vweird.f32 %v10991
    %vm11002 = vweird.f32 %v10996
    %vm11003 = vmor %vm11001, %vm11002
    %v11004 = vsel %vm11003, %v10996, %v11000
    %v11005 = vand.u32 2147483647, %v10991
    %vm11006 = vcmp.eq.f32.partialorder %v11005, 8.507059e+37
    %v11007 = vand.u32 %v10991, 2147483648
    %v11008 = vor.u32 1.1754944e-38, %v11007
    %v11009 = vsel %vm11006, %v11008, %v11004
    %v11010 = vmul.f32 1.0, %v11009
    %v11011 = vrcp.pop %v10992
    %v11012 = vmul.f32 %v10992, %v11011
    %v11013 = vsub.f32 1.0, %v11012
    %v11014 = vmul.f32 %v11011, %v11013
    %v11015 = vadd.f32 %v11011, %v11014
    %vm11016 = vweird.f32 %v10992
    %vm11017 = vweird.f32 %v11011
    %vm11018 = vmor %vm11016, %vm11017
    %v11019 = vsel %vm11018, %v11011, %v11015
    %v11020 = vand.u32 2147483647, %v10992
    %vm11021 = vcmp.eq.f32.partialorder %v11020, 8.507059e+37
    %v11022 = vand.u32 %v10992, 2147483648
    %v11023 = vor.u32 1.1754944e-38, %v11022
    %v11024 = vsel %vm11021, %v11023, %v11019
    %v11025 = vmul.f32 1.0, %v11024
    %v11026 = vrcp.pop %v10993
    %v11027 = vmul.f32 %v10993, %v11026
    %v11028 = vsub.f32 1.0, %v11027
    %v11029 = vmul.f32 %v11026, %v11028
    %v11030 = vadd.f32 %v11026, %v11029
    %vm11031 = vweird.f32 %v10993
    %vm11032 = vweird.f32 %v11026
    %vm11033 = vmor %vm11031, %vm11032
    %v11034 = vsel %vm11033, %v11026, %v11030
    %v11035 = vand.u32 2147483647, %v10993
    %vm11036 = vcmp.eq.f32.partialorder %v11035, 8.507059e+37
    %v11037 = vand.u32 %v10993, 2147483648
    %v11038 = vor.u32 1.1754944e-38, %v11037
    %v11039 = vsel %vm11036, %v11038, %v11034
    %v11040 = vmul.f32 1.0, %v11039
    %v11041 = vrcp.pop %v10994
    %v11042 = vmul.f32 %v10994, %v11041
    %v11043 = vsub.f32 1.0, %v11042
    %v11044 = vmul.f32 %v11041, %v11043
    %v11045 = vadd.f32 %v11041, %v11044
    %vm11046 = vweird.f32 %v10994
    %vm11047 = vweird.f32 %v11041
    %vm11048 = vmor %vm11046, %vm11047
    %v11049 = vsel %vm11048, %v11041, %v11045
    %v11050 = vand.u32 2147483647, %v10994
    %vm11051 = vcmp.eq.f32.partialorder %v11050, 8.507059e+37
    %v11052 = vand.u32 %v10994, 2147483648
    %v11053 = vor.u32 1.1754944e-38, %v11052
    %v11054 = vsel %vm11051, %v11053, %v11049
    %v11055 = vmul.f32 1.0, %v11054
    %v11056 = vrcp.pop %v10995
    %v11057 = vmul.f32 %v10995, %v11056
    %v11058 = vsub.f32 1.0, %v11057
    %v11059 = vmul.f32 %v11056, %v11058
    %v11060 = vadd.f32 %v11056, %v11059
    %vm11061 = vweird.f32 %v10995
    %vm11062 = vweird.f32 %v11056
    %vm11063 = vmor %vm11061, %vm11062
    %v11064 = vsel %vm11063, %v11056, %v11060
    %v11065 = vand.u32 2147483647, %v10995
    %vm11066 = vcmp.eq.f32.partialorder %v11065, 8.507059e+37
    %v11067 = vand.u32 %v10995, 2147483648
    %v11068 = vor.u32 1.1754944e-38, %v11067
    %v11069 = vsel %vm11066, %v11068, %v11064
    %v11070 = vmul.f32 1.0, %v11069
    %s11071 = scalar_lea.vmem [#allocation14], 448
    %11072 = vst.msk [vmem:[%s11071 - $0x2] sm:$0xfc] %vm9654, %v11010
    %11073 = vst.msk [vmem:[%s11071 + $0x6] sm:$0xff] %vm877, %v11025
    %11074 = vst.msk [vmem:[%s11071 + $0xe] sm:$0xff] %vm877, %v11040
    %11075 = vst.msk [vmem:[%s11071 + $0x16] sm:$0xff] %vm877, %v11055
    %11076 = vst.msk [vmem:[%s11071 + $0x1e] sm:$0x3] %vm9659, %v11070
    %s11077 = sld [smem:[#allocation11 + $0x380]]
    %v11078 = vstv %s11077
    %v11079 = vmul.f32 %v7148, %v11078
    %v11080 = vmul.f32 %v7149, %v11078
    %v11081 = vmul.f32 %v7150, %v11078
    %v11082 = vmul.f32 %v7151, %v11078
    %v11083 = vmul.f32 %v7152, %v11078
    %s11084 = sld [smem:[#allocation11 + $0x381]]
    %v11085 = vstv %s11084
    %v11086 = vmul.f32 %v7355, %v11085
    %v11087 = vmul.f32 %v7356, %v11085
    %v11088 = vmul.f32 %v7357, %v11085
    %v11089 = vmul.f32 %v7358, %v11085
    %v11090 = vmul.f32 %v7359, %v11085
    %11096 = vrot.lane.b32.xlu0 %v11086, 94
    %v11097 = vpop.permute.xlu0 %11096
    %11098 = vrot.lane.b32.xlu0 %v11087, 94
    %v11099 = vpop.permute.xlu0 %11098
    %11100 = vrot.lane.b32.xlu0 %v11088, 94
    %v11101 = vpop.permute.xlu0 %11100
    %11102 = vrot.lane.b32.xlu0 %v11089, 94
    %v11103 = vpop.permute.xlu0 %11102
    %11104 = vrot.lane.b32.xlu0 %v11090, 94
    %v11105 = vpop.permute.xlu0 %11104
    %v11111 = vadd.f32 %v11079, %v11097
    %v11112 = vadd.f32 %v11080, %v11099
    %v11113 = vadd.f32 %v11081, %v11101
    %v11114 = vadd.f32 %v11082, %v11103
    %v11115 = vadd.f32 %v11083, %v11105
    %s11116 = sld [smem:[#allocation11 + $0x382]]
    %v11117 = vstv %s11116
    %v11118 = vmul.f32 %v7558, %v11117
    %v11119 = vmul.f32 %v7559, %v11117
    %v11120 = vmul.f32 %v7560, %v11117
    %v11121 = vmul.f32 %v7561, %v11117
    %v11122 = vmul.f32 %v7562, %v11117
    %11128 = vrot.lane.b32.xlu0 %v11118, 60
    %v11129 = vpop.permute.xlu0 %11128
    %11130 = vrot.lane.b32.xlu0 %v11119, 60
    %v11131 = vpop.permute.xlu0 %11130
    %11132 = vrot.lane.b32.xlu0 %v11120, 60
    %v11133 = vpop.permute.xlu0 %11132
    %11134 = vrot.lane.b32.xlu0 %v11121, 60
    %v11135 = vpop.permute.xlu0 %11134
    %11136 = vrot.lane.b32.xlu0 %v11122, 60
    %v11137 = vpop.permute.xlu0 %11136
    %v11143 = vadd.f32 %v11111, %v11129
    %v11144 = vadd.f32 %v11112, %v11131
    %v11145 = vadd.f32 %v11113, %v11133
    %v11146 = vadd.f32 %v11114, %v11135
    %v11147 = vadd.f32 %v11115, %v11137
    %s11148 = sld [smem:[#allocation11 + $0x383]]
    %v11149 = vstv %s11148
    %v11150 = vmul.f32 %v7886, %v11149
    %v11151 = vmul.f32 %v7887, %v11149
    %v11152 = vmul.f32 %v7888, %v11149
    %v11153 = vmul.f32 %v7889, %v11149
    %v11154 = vmul.f32 %v7890, %v11149
    %v11155 = vmul.f32 %v7891, %v11149
    %v11156 = vmul.f32 %v7892, %v11149
    %v11157 = vmul.f32 %v7893, %v11149
    %v11158 = vmul.f32 %v7894, %v11149
    %v11159 = vmul.f32 %v7895, %v11149
    %11170 = vrot.lane.b32.xlu0 %v11150, 26
    %v11171 = vpop.permute.xlu0 %11170
    %11172 = vrot.lane.b32.xlu0 %v11151, 26
    %v11173 = vpop.permute.xlu0 %11172
    %11174 = vrot.lane.b32.xlu0 %v11152, 26
    %v11175 = vpop.permute.xlu0 %11174
    %11176 = vrot.lane.b32.xlu0 %v11153, 26
    %v11177 = vpop.permute.xlu0 %11176
    %11178 = vrot.lane.b32.xlu0 %v11154, 26
    %v11179 = vpop.permute.xlu0 %11178
    %11180 = vrot.lane.b32.xlu0 %v11155, 26
    %v11181 = vpop.permute.xlu0 %11180
    %11182 = vrot.lane.b32.xlu0 %v11156, 26
    %v11183 = vpop.permute.xlu0 %11182
    %11184 = vrot.lane.b32.xlu0 %v11157, 26
    %v11185 = vpop.permute.xlu0 %11184
    %11186 = vrot.lane.b32.xlu0 %v11158, 26
    %v11187 = vpop.permute.xlu0 %11186
    %11188 = vrot.lane.b32.xlu0 %v11159, 26
    %v11189 = vpop.permute.xlu0 %11188
    %v11190 = vsel %vm7583, %v11171, %v11173
    %v11191 = vsel %vm7583, %v11175, %v11177
    %v11192 = vsel %vm7583, %v11179, %v11181
    %v11193 = vsel %vm7583, %v11183, %v11185
    %v11194 = vsel %vm7583, %v11187, %v11189
    %v11200 = vadd.f32 %v11143, %v11190
    %v11201 = vadd.f32 %v11144, %v11191
    %v11202 = vadd.f32 %v11145, %v11192
    %v11203 = vadd.f32 %v11146, %v11193
    %v11204 = vadd.f32 %v11147, %v11194
    %s11205 = sld [smem:[#allocation12 + $0x7]]
    %v11206 = vstv %s11205
    %v11207 = vadd.f32 %v11200, %v11206
    %v11208 = vadd.f32 %v11201, %v11206
    %v11209 = vadd.f32 %v11202, %v11206
    %v11210 = vadd.f32 %v11203, %v11206
    %v11211 = vadd.f32 %v11204, %v11206
    %v11212 = vsub.f32 0.0, %v11207
    %v11213 = vsub.f32 0.0, %v11208
    %v11214 = vsub.f32 0.0, %v11209
    %v11215 = vsub.f32 0.0, %v11210
    %v11216 = vsub.f32 0.0, %v11211
    %v11217 = vmul.f32 %v11212, 1.442695
    %v11218 = vpow.pop %v11217
    %v11219 = vmul.f32 %v11213, 1.442695
    %v11220 = vpow.pop %v11219
    %v11221 = vmul.f32 %v11214, 1.442695
    %v11222 = vpow.pop %v11221
    %v11223 = vmul.f32 %v11215, 1.442695
    %v11224 = vpow.pop %v11223
    %v11225 = vmul.f32 %v11216, 1.442695
    %v11226 = vpow.pop %v11225
    %v11227 = vadd.f32 %v11218, 1.0
    %v11228 = vadd.f32 %v11220, 1.0
    %v11229 = vadd.f32 %v11222, 1.0
    %v11230 = vadd.f32 %v11224, 1.0
    %v11231 = vadd.f32 %v11226, 1.0
    %v11232 = vrcp.pop %v11227
    %v11233 = vmul.f32 %v11227, %v11232
    %v11234 = vsub.f32 1.0, %v11233
    %v11235 = vmul.f32 %v11232, %v11234
    %v11236 = vadd.f32 %v11232, %v11235
    %vm11237 = vweird.f32 %v11227
    %vm11238 = vweird.f32 %v11232
    %vm11239 = vmor %vm11237, %vm11238
    %v11240 = vsel %vm11239, %v11232, %v11236
    %v11241 = vand.u32 2147483647, %v11227
    %vm11242 = vcmp.eq.f32.partialorder %v11241, 8.507059e+37
    %v11243 = vand.u32 %v11227, 2147483648
    %v11244 = vor.u32 1.1754944e-38, %v11243
    %v11245 = vsel %vm11242, %v11244, %v11240
    %v11246 = vmul.f32 1.0, %v11245
    %v11247 = vrcp.pop %v11228
    %v11248 = vmul.f32 %v11228, %v11247
    %v11249 = vsub.f32 1.0, %v11248
    %v11250 = vmul.f32 %v11247, %v11249
    %v11251 = vadd.f32 %v11247, %v11250
    %vm11252 = vweird.f32 %v11228
    %vm11253 = vweird.f32 %v11247
    %vm11254 = vmor %vm11252, %vm11253
    %v11255 = vsel %vm11254, %v11247, %v11251
    %v11256 = vand.u32 2147483647, %v11228
    %vm11257 = vcmp.eq.f32.partialorder %v11256, 8.507059e+37
    %v11258 = vand.u32 %v11228, 2147483648
    %v11259 = vor.u32 1.1754944e-38, %v11258
    %v11260 = vsel %vm11257, %v11259, %v11255
    %v11261 = vmul.f32 1.0, %v11260
    %v11262 = vrcp.pop %v11229
    %v11263 = vmul.f32 %v11229, %v11262
    %v11264 = vsub.f32 1.0, %v11263
    %v11265 = vmul.f32 %v11262, %v11264
    %v11266 = vadd.f32 %v11262, %v11265
    %vm11267 = vweird.f32 %v11229
    %vm11268 = vweird.f32 %v11262
    %vm11269 = vmor %vm11267, %vm11268
    %v11270 = vsel %vm11269, %v11262, %v11266
    %v11271 = vand.u32 2147483647, %v11229
    %vm11272 = vcmp.eq.f32.partialorder %v11271, 8.507059e+37
    %v11273 = vand.u32 %v11229, 2147483648
    %v11274 = vor.u32 1.1754944e-38, %v11273
    %v11275 = vsel %vm11272, %v11274, %v11270
    %v11276 = vmul.f32 1.0, %v11275
    %v11277 = vrcp.pop %v11230
    %v11278 = vmul.f32 %v11230, %v11277
    %v11279 = vsub.f32 1.0, %v11278
    %v11280 = vmul.f32 %v11277, %v11279
    %v11281 = vadd.f32 %v11277, %v11280
    %vm11282 = vweird.f32 %v11230
    %vm11283 = vweird.f32 %v11277
    %vm11284 = vmor %vm11282, %vm11283
    %v11285 = vsel %vm11284, %v11277, %v11281
    %v11286 = vand.u32 2147483647, %v11230
    %vm11287 = vcmp.eq.f32.partialorder %v11286, 8.507059e+37
    %v11288 = vand.u32 %v11230, 2147483648
    %v11289 = vor.u32 1.1754944e-38, %v11288
    %v11290 = vsel %vm11287, %v11289, %v11285
    %v11291 = vmul.f32 1.0, %v11290
    %v11292 = vrcp.pop %v11231
    %v11293 = vmul.f32 %v11231, %v11292
    %v11294 = vsub.f32 1.0, %v11293
    %v11295 = vmul.f32 %v11292, %v11294
    %v11296 = vadd.f32 %v11292, %v11295
    %vm11297 = vweird.f32 %v11231
    %vm11298 = vweird.f32 %v11292
    %vm11299 = vmor %vm11297, %vm11298
    %v11300 = vsel %vm11299, %v11292, %v11296
    %v11301 = vand.u32 2147483647, %v11231
    %vm11302 = vcmp.eq.f32.partialorder %v11301, 8.507059e+37
    %v11303 = vand.u32 %v11231, 2147483648
    %v11304 = vor.u32 1.1754944e-38, %v11303
    %v11305 = vsel %vm11302, %v11304, %v11300
    %v11306 = vmul.f32 1.0, %v11305
    %s11307 = scalar_lea.vmem [#allocation14], 480
    %11308 = vst.msk [vmem:[%s11307 - $0x2] sm:$0xfc] %vm9654, %v11246
    %11309 = vst.msk [vmem:[%s11307 + $0x6] sm:$0xff] %vm877, %v11261
    %11310 = vst.msk [vmem:[%s11307 + $0xe] sm:$0xff] %vm877, %v11276
    %11311 = vst.msk [vmem:[%s11307 + $0x16] sm:$0xff] %vm877, %v11291
    %11312 = vst.msk [vmem:[%s11307 + $0x1e] sm:$0x3] %vm9659, %v11306
    // Predicated region
    $region58: #{dhfe_forward.1} parent=1 // pred_check
      _
    $region59: #{dhfe_forward.1} parent=1 // pred_check_branch
      %11314 = sbr.rel (0) target = $region61
    $region60: #{dhfe_forward.1} parent=1 // pred_region
      %11316 = vsyncadd [#allocation7], 0
      %s11317 = sshll.u32 [#allocation14], 4
      %s11318 = int_to_ptr.vmem [resolvable:$true] %s11317
      %s11319 = sshll.u32 %s10, 4
      %s11320 = int_to_ptr.hbm [resolvable:$true] %s11319
      %11325 = dma.vmem_to_hbm [thread:$0]  %s11318, 8192, %s11320, [#allocation7], 128, 128, 8
    $region61: #{dhfe_forward.1} parent=1 // pred_fallthru
      _
    // Predicated region
    $region62: #{dhfe_forward.1} parent=1 // pred_check
      _
    $region63: #{dhfe_forward.1} parent=1 // pred_check_branch
      %11327 = sbr.rel (0) target = $region65
    $region64: #{dhfe_forward.1} parent=1 // pred_region
      %11329 = dma.done [#allocation7], 8192
    $region65: #{dhfe_forward.1} parent=1 // pred_fallthru
      _
    %11330 = vsyncpa [#allocation7], 1
    %11331 = vsyncpa [#allocation8], 1
    %11332 = vsyncpa [#allocation10], 1
    %11333 = vsyncpa [#allocation13], 1

</llo_original>
